<compile_context>
chip_gen: v7x
topology: tpu7x:2x2x1
jax: 0.10.0
libtpu: 0.0.40
codegen_flags: <defaults>
</compile_context>

<pallas_src>
import functools

import jax
import jax.numpy as jnp
from jax.experimental import pallas as pl
from jax.experimental.pallas import tpu as pltpu


def _round_up(v, m):
    return (v + m - 1) // m * m


# ---------------------------------------------------------------------------
# Bidirectional LSTM layer kernel.
# grid=(2,) over direction (0 = forward, 1 = backward), "parallel".
# Per grid step:
#   1. hoisted input projection over all T*Bp rows -> xg scratch (T*Bp, 4Hp)
#   2. lax.fori_loop over time: gates = xg[t] + h @ W_hh ; LSTM cell update
#   3. hidden state written to the lane-dense (T*Bp, Hp) output block.
# ---------------------------------------------------------------------------
def _bilstm_layer_kernel(x_ref, wih_ref, whh_ref, b_ref, out_ref, xg_ref,
                         *, seq_len, batch_p, hidden_p):
    T, Bp, Hp = seq_len, batch_p, hidden_p
    d = pl.program_id(0)  # 0 = forward, 1 = backward

    # Hoisted input projection: one large MXU matmul, bias folded in once.
    x_bf = x_ref[...].astype(jnp.bfloat16)                    # (T*Bp, Din)
    xg_ref[...] = (
        jnp.dot(x_bf, wih_ref[...], preferred_element_type=jnp.float32)
        + b_ref[...]                                          # (1, 4Hp) f32
    )

    def step(s, carry):
        h, c = carry                                          # f32 (Bp, Hp)
        # Backward direction walks the sequence in reverse; output goes to the
        # original time index (PyTorch bidirectional semantics).
        t = jnp.where(d == 0, s, T - 1 - s)
        row = pl.multiple_of(t * Bp, 8)                       # sublane aligned
        xg = xg_ref[pl.ds(row, Bp), :]                        # (Bp, 4Hp) f32
        gates = xg + jnp.dot(
            h.astype(jnp.bfloat16), whh_ref[...],
            preferred_element_type=jnp.float32)               # (Bp, 4Hp)
        # PyTorch gate order [i, f, g, o]; each gate occupies a 128-aligned
        # lane block of width Hp (padding lanes are exactly zero).
        i = jax.nn.sigmoid(gates[:, 0 * Hp:1 * Hp])
        f = jax.nn.sigmoid(gates[:, 1 * Hp:2 * Hp])
        g = jnp.tanh(gates[:, 2 * Hp:3 * Hp])
        o = jax.nn.sigmoid(gates[:, 3 * Hp:4 * Hp])
        c = f * c + i * g
        h = o * jnp.tanh(c)
        out_ref[pl.ds(row, Bp), :] = h                        # aligned store
        return h, c

    init = (jnp.zeros((Bp, Hp), jnp.float32),
            jnp.zeros((Bp, Hp), jnp.float32))
    jax.lax.fori_loop(0, T, step, init, unroll=(T <= 16))


def bilstm_layer(x_flat, wih, whh, bias, *, T, Bp, Hp):
    """x_flat: (T*Bp, Din) f32; wih: (2, Din, 4Hp) bf16; whh: (2, Hp, 4Hp) bf16;
    bias: (2, 1, 4Hp) f32.  Returns (2, T*Bp, Hp) f32 (dir 0 = fwd, 1 = bwd)."""
    TB = T * Bp
    Din = x_flat.shape[-1]
    kernel = functools.partial(
        _bilstm_layer_kernel, seq_len=T, batch_p=Bp, hidden_p=Hp)
    return pl.pallas_call(
        kernel,
        out_shape=jax.ShapeDtypeStruct((2, TB, Hp), jnp.float32),
        grid_spec=pltpu.PrefetchScalarGridSpec(
            num_scalar_prefetch=0,
            grid=(2,),
            in_specs=[
                pl.BlockSpec((TB, Din), lambda d: (0, 0)),          # shared x
                pl.BlockSpec((None, Din, 4 * Hp), lambda d: (d, 0, 0)),
                pl.BlockSpec((None, Hp, 4 * Hp), lambda d: (d, 0, 0)),
                pl.BlockSpec((None, 1, 4 * Hp), lambda d: (d, 0, 0)),
            ],
            out_specs=pl.BlockSpec((None, TB, Hp), lambda d: (d, 0, 0)),
            scratch_shapes=[pltpu.VMEM((TB, 4 * Hp), jnp.float32)],  # xg slab
        ),
        compiler_params=pltpu.CompilerParams(
            dimension_semantics=("parallel",)),   # fwd/bwd can split across TCs
    )(x_flat, wih, whh, bias)


# ---------------------------------------------------------------------------
# FC head kernel: Linear -> LayerNorm -> SiLU -> Linear -> LayerNorm -> SiLU
# -> Linear(., 1). Dropout layers are identity (inference semantics).
# ---------------------------------------------------------------------------
def _fc_kernel(
    x_ref,
    w1_ref, b1_ref, g1_ref, be1_ref,
    w2_ref, b2_ref, g2_ref, be2_ref,
    w3_ref, b3_ref,
    out_ref,
):
    eps = 1e-5

    def layer_norm(h, gamma, beta):
        mu = jnp.mean(h, axis=-1, keepdims=True)
        var = jnp.mean(h * h, axis=-1, keepdims=True) - mu * mu  # one-pass LN
        return (h - mu) * jax.lax.rsqrt(var + eps) * gamma + beta

    h = jnp.dot(x_ref[...].astype(jnp.bfloat16), w1_ref[...],
                preferred_element_type=jnp.float32) + b1_ref[...]
    h = layer_norm(h, g1_ref[...], be1_ref[...])
    h = h * jax.nn.sigmoid(h)                                    # SiLU

    h = jnp.dot(h.astype(jnp.bfloat16), w2_ref[...],
                preferred_element_type=jnp.float32) + b2_ref[...]
    h = layer_norm(h, g2_ref[...], be2_ref[...])
    h = h * jax.nn.sigmoid(h)                                    # SiLU

    out_ref[...] = (
        jnp.dot(h.astype(jnp.bfloat16), w3_ref[...],
                preferred_element_type=jnp.float32) + b3_ref[...]
    )


def fc_head(last_output, fcp):
    # TODO(synk): for large batch, tile the batch dimension with a parallel grid.
    Bp = last_output.shape[0]
    return pl.pallas_call(
        _fc_kernel,
        out_shape=jax.ShapeDtypeStruct((Bp, 1), jnp.float32),
    )(
        last_output,
        fcp["w1"].astype(jnp.bfloat16), fcp["b1"], fcp["g1"], fcp["be1"],
        fcp["w2"].astype(jnp.bfloat16), fcp["b2"], fcp["g2"], fcp["be2"],
        fcp["w3"].astype(jnp.bfloat16), fcp["b3"],
    )


# ---------------------------------------------------------------------------
# Weight padding / re-layout: PyTorch (4H, K) weights -> (K, 4*Hp) with each
# gate occupying a 128-lane-aligned block; padding columns/rows are zero so
# padded hidden lanes stay exactly 0 through the recurrence.
# ---------------------------------------------------------------------------
def _pad_lstm_dir(w_ih, w_hh, b_ih, b_hh, H, Hp):
    Din = w_ih.shape[1]
    pad_h = Hp - H
    wih = jnp.transpose(w_ih).reshape(Din, 4, H)
    wih = jnp.pad(wih, ((0, 0), (0, 0), (0, pad_h))).reshape(Din, 4 * Hp)
    whh = jnp.transpose(w_hh).reshape(H, 4, H)
    whh = jnp.pad(whh, ((0, pad_h), (0, 0), (0, pad_h))).reshape(Hp, 4 * Hp)
    b = (b_ih + b_hh).reshape(4, H)
    b = jnp.pad(b, ((0, 0), (0, pad_h))).reshape(1, 4 * Hp)
    return wih, whh, b


# ---------------------------------------------------------------------------
# Parameter init (deterministic, PyTorch-like uniform ranges) and forward.
# ---------------------------------------------------------------------------
def init_params(key, input_size, hidden_size, num_layers=2):
    params = {"lstm": {}, "fc": {}}
    k_lstm = 1.0 / float(hidden_size) ** 0.5

    def unif(key, shape, bound):
        return jax.random.uniform(
            key, shape, dtype=jnp.float32, minval=-bound, maxval=bound
        )

    keys = jax.random.split(key, num_layers * 2 * 4 + 16)
    ki = 0
    for layer in range(num_layers):
        d_in = input_size if layer == 0 else 2 * hidden_size
        for direction in range(2):  # 0 = forward, 1 = backward
            w_ih = unif(keys[ki], (4 * hidden_size, d_in), k_lstm); ki += 1
            w_hh = unif(keys[ki], (4 * hidden_size, hidden_size), k_lstm); ki += 1
            b_ih = unif(keys[ki], (4 * hidden_size,), k_lstm); ki += 1
            b_hh = unif(keys[ki], (4 * hidden_size,), k_lstm); ki += 1
            params["lstm"][(layer, direction)] = (w_ih, w_hh, b_ih, b_hh)

    H2 = 2 * hidden_size
    k1 = 1.0 / float(H2) ** 0.5
    k2 = 1.0 / float(H2) ** 0.5
    k3 = 1.0 / float(hidden_size) ** 0.5
    fc = params["fc"]
    fc["w1"] = unif(keys[ki], (H2, H2), k1); ki += 1            # (in, out) layout
    fc["b1"] = unif(keys[ki], (1, H2), k1); ki += 1
    fc["g1"] = jnp.ones((1, H2), jnp.float32)
    fc["be1"] = jnp.zeros((1, H2), jnp.float32)
    fc["w2"] = unif(keys[ki], (H2, hidden_size), k2); ki += 1
    fc["b2"] = unif(keys[ki], (1, hidden_size), k2); ki += 1
    fc["g2"] = jnp.ones((1, hidden_size), jnp.float32)
    fc["be2"] = jnp.zeros((1, hidden_size), jnp.float32)
    fc["w3"] = unif(keys[ki], (hidden_size, 1), k3); ki += 1
    fc["b3"] = unif(keys[ki], (1, 1), k3); ki += 1
    return params


def optimized_lstm_forward(x, params, hidden_size, num_layers=2):
    # x: (B, T, Din) batch_first, or (B, Din) which is unsqueezed to T=1.
    if x.ndim == 2:
        x = x[:, None, :]
    B, T, _ = x.shape
    H = hidden_size
    Hp = _round_up(H, 128)   # per-gate lane padding
    Bp = _round_up(B, 8)     # sublane padding of the batch

    # time-major + batch padded so every per-step tile is (8k, 128k) aligned.
    h = jnp.transpose(x, (1, 0, 2)).astype(jnp.float32)        # (T, B, Din)
    h = jnp.pad(h, ((0, 0), (0, Bp - B), (0, 0)))              # (T, Bp, Din)

    for layer in range(num_layers):
        Din = h.shape[-1]
        wih_f, whh_f, b_f = _pad_lstm_dir(*params["lstm"][(layer, 0)], H, Hp)
        wih_b, whh_b, b_b = _pad_lstm_dir(*params["lstm"][(layer, 1)], H, Hp)
        wih = jnp.stack([wih_f, wih_b]).astype(jnp.bfloat16)   # (2, Din, 4Hp)
        whh = jnp.stack([whh_f, whh_b]).astype(jnp.bfloat16)   # (2, Hp, 4Hp)
        bias = jnp.stack([b_f, b_b])                           # (2, 1, 4Hp) f32

        out2 = bilstm_layer(h.reshape(T * Bp, Din), wih, whh, bias,
                            T=T, Bp=Bp, Hp=Hp)                 # (2, T*Bp, Hp)
        out2 = out2.reshape(2, T, Bp, Hp)[..., :H]             # drop gate pad
        h = jnp.concatenate([out2[0], out2[1]], axis=-1)       # (T, Bp, 2H)
        # TODO(synk): nn.LSTM inter-layer dropout omitted (inference semantics).

    last_output = h[-1]                                        # == output[:, -1, :]
    out = fc_head(last_output, params["fc"])                   # (Bp, 1)
    return out[:B]                                             # drop batch pad


if __name__ == "__main__":
    input_size = 16
    hidden_size = 32
    num_layers = 2
    batch = 2
    seq = 8

    root = jax.random.PRNGKey(0)
    k_x, k_p = jax.random.split(root)
    x = jax.random.normal(k_x, (batch, seq, input_size), dtype=jnp.float32)
    params = init_params(k_p, input_size, hidden_size, num_layers)

    fwd = jax.jit(
        functools.partial(
            optimized_lstm_forward, hidden_size=hidden_size, num_layers=num_layers
        )
    )
    out = fwd(x, params)
    jax.block_until_ready(out)
    assert out.shape == (batch, 1), out.shape
    print("KERNEL_OK")
</pallas_src>

<mosaic_0001>
module attributes {stable_mosaic.version = 11 : i64} {
  func.func @_bilstm_layer_kernel(%arg0: i32, %arg1: memref<64x16xf32, #tpu.memory_space<vmem>>, %arg2: memref<1x16x512xbf16, #tpu.memory_space<vmem>>, %arg3: memref<1x128x512xbf16, #tpu.memory_space<vmem>>, %arg4: memref<1x1x512xf32, #tpu.memory_space<vmem>>, %arg5: memref<1x64x128xf32, #tpu.memory_space<vmem>>, %arg6: memref<64x512xf32, #tpu.memory_space<vmem>>) attributes {dimension_semantics = [#tpu.dimension_semantics<parallel>], iteration_bounds = array<i64: 2>, scalar_prefetch = 0 : i64, scratch_operands = 1 : i64, tpu.core_type = #tpu.core_type<tc>, window_params = [{pipeline_mode = #tpu.pipeline_mode<synchronous>, transform_indices = @transform_0, window_bounds = array<i64: 64, 16>}, {transform_indices = @transform_1, window_bounds = array<i64: 1, 16, 512>}, {transform_indices = @transform_2, window_bounds = array<i64: 1, 128, 512>}, {transform_indices = @transform_3, window_bounds = array<i64: 1, 1, 512>}, {transform_indices = @transform_4, window_bounds = array<i64: 1, 64, 128>}]} {
    %c0 = arith.constant 0 : index
    %c0_0 = arith.constant 0 : index
    %0 = vector.load %arg1[%c0, %c0_0] : memref<64x16xf32, #tpu.memory_space<vmem>>, vector<64x16xf32>
    %1 = arith.truncf %0 : vector<64x16xf32> to vector<64x16xbf16>
    %c0_1 = arith.constant 0 : index
    %c0_2 = arith.constant 0 : index
    %c0_3 = arith.constant 0 : index
    %2 = vector.load %arg2[%c0_1, %c0_2, %c0_3] : memref<1x16x512xbf16, #tpu.memory_space<vmem>>, vector<1x16x512xbf16>
    %3 = vector.shape_cast %2 : vector<1x16x512xbf16> to vector<16x512xbf16>
    %cst = arith.constant dense<0.000000e+00> : vector<64x512xf32>
    %4 = tpu.matmul %1, %3, %cst {dimension_numbers = #tpu.dot_dimension_numbers<[1], [0], [0], [1], [0, 0, 1, 1], [], []>} : vector<64x16xbf16>, vector<16x512xbf16>, vector<64x512xf32> -> vector<64x512xf32>
    %c0_4 = arith.constant 0 : index
    %c0_5 = arith.constant 0 : index
    %c0_6 = arith.constant 0 : index
    %5 = vector.load %arg4[%c0_4, %c0_5, %c0_6] : memref<1x1x512xf32, #tpu.memory_space<vmem>>, vector<1x1x512xf32>
    %6 = vector.shape_cast %5 : vector<1x1x512xf32> to vector<1x512xf32>
    %7 = vector.broadcast %6 : vector<1x512xf32> to vector<64x512xf32>
    %8 = arith.addf %4, %7 : vector<64x512xf32>
    %c0_7 = arith.constant 0 : index
    %c0_8 = arith.constant 0 : index
    %9 = vector.load %arg6[%c0_7, %c0_8] : memref<64x512xf32, #tpu.memory_space<vmem>>, vector<64x512xf32>
    tpu.vector_store %arg6[%c0_7, %c0_8], %8 {strides = array<i32>} : memref<64x512xf32, #tpu.memory_space<vmem>>, vector<64x512xf32>,
    %cst_9 = arith.constant 0.000000e+00 : f32
    %10 = vector.broadcast %cst_9 : f32 to vector<8x128xf32>
    %cst_10 = arith.constant 0.000000e+00 : f32
    %11 = vector.broadcast %cst_10 : f32 to vector<8x128xf32>
    %c0_i32 = arith.constant 0 : i32
    %c0_i32_11 = arith.constant 0 : i32
    %12 = arith.cmpi eq, %arg0, %c0_i32_11 : i32
    %c7_i32 = arith.constant 7 : i32
    %13 = arith.subi %c7_i32, %c0_i32 : i32
    %14 = arith.select %12, %c0_i32, %13 : i32
    %c8_i32 = arith.constant 8 : i32
    %15 = arith.muli %14, %c8_i32 : i32
    %16 = tpu.assume_multiple %15, 8 : i32
    %17 = arith.index_cast %16 : i32 to index
    %c0_12 = arith.constant 0 : index
    %18 = vector.load %arg6[%17, %c0_12] : memref<64x512xf32, #tpu.memory_space<vmem>>, vector<8x512xf32>
    %19 = arith.truncf %10 : vector<8x128xf32> to vector<8x128xbf16>
    %c0_13 = arith.constant 0 : index
    %c0_14 = arith.constant 0 : index
    %c0_15 = arith.constant 0 : index
    %20 = vector.load %arg3[%c0_13, %c0_14, %c0_15] : memref<1x128x512xbf16, #tpu.memory_space<vmem>>, vector<1x128x512xbf16>
    %21 = vector.shape_cast %20 : vector<1x128x512xbf16> to vector<128x512xbf16>
    %cst_16 = arith.constant dense<0.000000e+00> : vector<8x512xf32>
    %22 = tpu.matmul %19, %21, %cst_16 {dimension_numbers = #tpu.dot_dimension_numbers<[1], [0], [0], [1], [0, 0, 1, 1], [], []>} : vector<8x128xbf16>, vector<128x512xbf16>, vector<8x512xf32> -> vector<8x512xf32>
    %23 = arith.addf %18, %22 : vector<8x512xf32>
    %24 = vector.extract_strided_slice %23 {offsets = [0, 0], sizes = [8, 128], strides = [1, 1]} : vector<8x512xf32> to vector<8x128xf32>
    %25 = arith.negf %24 : vector<8x128xf32>
    %26 = math.exp %25 : vector<8x128xf32>
    %cst_17 = arith.constant 1.000000e+00 : f32
    %27 = vector.broadcast %cst_17 : f32 to vector<8x128xf32>
    %28 = arith.addf %27, %26 : vector<8x128xf32>
    %29 = arith.divf %27, %28 : vector<8x128xf32>
    %30 = vector.extract_strided_slice %23 {offsets = [0, 128], sizes = [8, 128], strides = [1, 1]} : vector<8x512xf32> to vector<8x128xf32>
    %31 = arith.negf %30 : vector<8x128xf32>
    %32 = math.exp %31 : vector<8x128xf32>
    %cst_18 = arith.constant 1.000000e+00 : f32
    %33 = vector.broadcast %cst_18 : f32 to vector<8x128xf32>
    %34 = arith.addf %33, %32 : vector<8x128xf32>
    %35 = arith.divf %33, %34 : vector<8x128xf32>
    %36 = vector.extract_strided_slice %23 {offsets = [0, 256], sizes = [8, 128], strides = [1, 1]} : vector<8x512xf32> to vector<8x128xf32>
    %37 = math.tanh %36 : vector<8x128xf32>
    %38 = vector.extract_strided_slice %23 {offsets = [0, 384], sizes = [8, 128], strides = [1, 1]} : vector<8x512xf32> to vector<8x128xf32>
    %39 = arith.negf %38 : vector<8x128xf32>
    %40 = math.exp %39 : vector<8x128xf32>
    %cst_19 = arith.constant 1.000000e+00 : f32
    %41 = vector.broadcast %cst_19 : f32 to vector<8x128xf32>
    %42 = arith.addf %41, %40 : vector<8x128xf32>
    %43 = arith.divf %41, %42 : vector<8x128xf32>
    %44 = arith.mulf %35, %11 : vector<8x128xf32>
    %45 = arith.mulf %29, %37 : vector<8x128xf32>
    %46 = arith.addf %44, %45 : vector<8x128xf32>
    %47 = math.tanh %46 : vector<8x128xf32>
    %48 = arith.mulf %43, %47 : vector<8x128xf32>
    %c0_20 = arith.constant 0 : index
    %49 = arith.index_cast %16 : i32 to index
    %c0_21 = arith.constant 0 : index
    %50 = vector.load %arg5[%c0_20, %49, %c0_21] : memref<1x64x128xf32, #tpu.memory_space<vmem>>, vector<1x8x128xf32>
    %51 = vector.shape_cast %50 : vector<1x8x128xf32> to vector<8x128xf32>
    %52 = vector.shape_cast %48 : vector<8x128xf32> to vector<1x8x128xf32>
    tpu.vector_store %arg5[%c0_20, %49, %c0_21], %52 {strides = array<i32>} : memref<1x64x128xf32, #tpu.memory_space<vmem>>, vector<1x8x128xf32>,
    %c1_i32 = arith.constant 1 : i32
    %c0_i32_22 = arith.constant 0 : i32
    %53 = arith.cmpi eq, %arg0, %c0_i32_22 : i32
    %c7_i32_23 = arith.constant 7 : i32
    %54 = arith.subi %c7_i32_23, %c1_i32 : i32
    %55 = arith.select %53, %c1_i32, %54 : i32
    %c8_i32_24 = arith.constant 8 : i32
    %56 = arith.muli %55, %c8_i32_24 : i32
    %57 = tpu.assume_multiple %56, 8 : i32
    %58 = arith.index_cast %57 : i32 to index
    %c0_25 = arith.constant 0 : index
    %59 = vector.load %arg6[%58, %c0_25] : memref<64x512xf32, #tpu.memory_space<vmem>>, vector<8x512xf32>
    %60 = arith.truncf %48 : vector<8x128xf32> to vector<8x128xbf16>
    %c0_26 = arith.constant 0 : index
    %c0_27 = arith.constant 0 : index
    %c0_28 = arith.constant 0 : index
    %61 = vector.load %arg3[%c0_26, %c0_27, %c0_28] : memref<1x128x512xbf16, #tpu.memory_space<vmem>>, vector<1x128x512xbf16>
    %62 = vector.shape_cast %61 : vector<1x128x512xbf16> to vector<128x512xbf16>
    %cst_29 = arith.constant dense<0.000000e+00> : vector<8x512xf32>
    %63 = tpu.matmul %60, %62, %cst_29 {dimension_numbers = #tpu.dot_dimension_numbers<[1], [0], [0], [1], [0, 0, 1, 1], [], []>} : vector<8x128xbf16>, vector<128x512xbf16>, vector<8x512xf32> -> vector<8x512xf32>
    %64 = arith.addf %59, %63 : vector<8x512xf32>
    %65 = vector.extract_strided_slice %64 {offsets = [0, 0], sizes = [8, 128], strides = [1, 1]} : vector<8x512xf32> to vector<8x128xf32>
    %66 = arith.negf %65 : vector<8x128xf32>
    %67 = math.exp %66 : vector<8x128xf32>
    %cst_30 = arith.constant 1.000000e+00 : f32
    %68 = vector.broadcast %cst_30 : f32 to vector<8x128xf32>
    %69 = arith.addf %68, %67 : vector<8x128xf32>
    %70 = arith.divf %68, %69 : vector<8x128xf32>
    %71 = vector.extract_strided_slice %64 {offsets = [0, 128], sizes = [8, 128], strides = [1, 1]} : vector<8x512xf32> to vector<8x128xf32>
    %72 = arith.negf %71 : vector<8x128xf32>
    %73 = math.exp %72 : vector<8x128xf32>
    %cst_31 = arith.constant 1.000000e+00 : f32
    %74 = vector.broadcast %cst_31 : f32 to vector<8x128xf32>
    %75 = arith.addf %74, %73 : vector<8x128xf32>
    %76 = arith.divf %74, %75 : vector<8x128xf32>
    %77 = vector.extract_strided_slice %64 {offsets = [0, 256], sizes = [8, 128], strides = [1, 1]} : vector<8x512xf32> to vector<8x128xf32>
    %78 = math.tanh %77 : vector<8x128xf32>
    %79 = vector.extract_strided_slice %64 {offsets = [0, 384], sizes = [8, 128], strides = [1, 1]} : vector<8x512xf32> to vector<8x128xf32>
    %80 = arith.negf %79 : vector<8x128xf32>
    %81 = math.exp %80 : vector<8x128xf32>
    %cst_32 = arith.constant 1.000000e+00 : f32
    %82 = vector.broadcast %cst_32 : f32 to vector<8x128xf32>
    %83 = arith.addf %82, %81 : vector<8x128xf32>
    %84 = arith.divf %82, %83 : vector<8x128xf32>
    %85 = arith.mulf %76, %46 : vector<8x128xf32>
    %86 = arith.mulf %70, %78 : vector<8x128xf32>
    %87 = arith.addf %85, %86 : vector<8x128xf32>
    %88 = math.tanh %87 : vector<8x128xf32>
    %89 = arith.mulf %84, %88 : vector<8x128xf32>
    %c0_33 = arith.constant 0 : index
    %90 = arith.index_cast %57 : i32 to index
    %c0_34 = arith.constant 0 : index
    %91 = vector.load %arg5[%c0_33, %90, %c0_34] : memref<1x64x128xf32, #tpu.memory_space<vmem>>, vector<1x8x128xf32>
    %92 = vector.shape_cast %91 : vector<1x8x128xf32> to vector<8x128xf32>
    %93 = vector.shape_cast %89 : vector<8x128xf32> to vector<1x8x128xf32>
    tpu.vector_store %arg5[%c0_33, %90, %c0_34], %93 {strides = array<i32>} : memref<1x64x128xf32, #tpu.memory_space<vmem>>, vector<1x8x128xf32>,
    %c2_i32 = arith.constant 2 : i32
    %c0_i32_35 = arith.constant 0 : i32
    %94 = arith.cmpi eq, %arg0, %c0_i32_35 : i32
    %c7_i32_36 = arith.constant 7 : i32
    %95 = arith.subi %c7_i32_36, %c2_i32 : i32
    %96 = arith.select %94, %c2_i32, %95 : i32
    %c8_i32_37 = arith.constant 8 : i32
    %97 = arith.muli %96, %c8_i32_37 : i32
    %98 = tpu.assume_multiple %97, 8 : i32
    %99 = arith.index_cast %98 : i32 to index
    %c0_38 = arith.constant 0 : index
    %100 = vector.load %arg6[%99, %c0_38] : memref<64x512xf32, #tpu.memory_space<vmem>>, vector<8x512xf32>
    %101 = arith.truncf %89 : vector<8x128xf32> to vector<8x128xbf16>
    %c0_39 = arith.constant 0 : index
    %c0_40 = arith.constant 0 : index
    %c0_41 = arith.constant 0 : index
    %102 = vector.load %arg3[%c0_39, %c0_40, %c0_41] : memref<1x128x512xbf16, #tpu.memory_space<vmem>>, vector<1x128x512xbf16>
    %103 = vector.shape_cast %102 : vector<1x128x512xbf16> to vector<128x512xbf16>
    %cst_42 = arith.constant dense<0.000000e+00> : vector<8x512xf32>
    %104 = tpu.matmul %101, %103, %cst_42 {dimension_numbers = #tpu.dot_dimension_numbers<[1], [0], [0], [1], [0, 0, 1, 1], [], []>} : vector<8x128xbf16>, vector<128x512xbf16>, vector<8x512xf32> -> vector<8x512xf32>
    %105 = arith.addf %100, %104 : vector<8x512xf32>
    %106 = vector.extract_strided_slice %105 {offsets = [0, 0], sizes = [8, 128], strides = [1, 1]} : vector<8x512xf32> to vector<8x128xf32>
    %107 = arith.negf %106 : vector<8x128xf32>
    %108 = math.exp %107 : vector<8x128xf32>
    %cst_43 = arith.constant 1.000000e+00 : f32
    %109 = vector.broadcast %cst_43 : f32 to vector<8x128xf32>
    %110 = arith.addf %109, %108 : vector<8x128xf32>
    %111 = arith.divf %109, %110 : vector<8x128xf32>
    %112 = vector.extract_strided_slice %105 {offsets = [0, 128], sizes = [8, 128], strides = [1, 1]} : vector<8x512xf32> to vector<8x128xf32>
    %113 = arith.negf %112 : vector<8x128xf32>
    %114 = math.exp %113 : vector<8x128xf32>
    %cst_44 = arith.constant 1.000000e+00 : f32
    %115 = vector.broadcast %cst_44 : f32 to vector<8x128xf32>
    %116 = arith.addf %115, %114 : vector<8x128xf32>
    %117 = arith.divf %115, %116 : vector<8x128xf32>
    %118 = vector.extract_strided_slice %105 {offsets = [0, 256], sizes = [8, 128], strides = [1, 1]} : vector<8x512xf32> to vector<8x128xf32>
    %119 = math.tanh %118 : vector<8x128xf32>
    %120 = vector.extract_strided_slice %105 {offsets = [0, 384], sizes = [8, 128], strides = [1, 1]} : vector<8x512xf32> to vector<8x128xf32>
    %121 = arith.negf %120 : vector<8x128xf32>
    %122 = math.exp %121 : vector<8x128xf32>
    %cst_45 = arith.constant 1.000000e+00 : f32
    %123 = vector.broadcast %cst_45 : f32 to vector<8x128xf32>
    %124 = arith.addf %123, %122 : vector<8x128xf32>
    %125 = arith.divf %123, %124 : vector<8x128xf32>
    %126 = arith.mulf %117, %87 : vector<8x128xf32>
    %127 = arith.mulf %111, %119 : vector<8x128xf32>
    %128 = arith.addf %126, %127 : vector<8x128xf32>
    %129 = math.tanh %128 : vector<8x128xf32>
    %130 = arith.mulf %125, %129 : vector<8x128xf32>
    %c0_46 = arith.constant 0 : index
    %131 = arith.index_cast %98 : i32 to index
    %c0_47 = arith.constant 0 : index
    %132 = vector.load %arg5[%c0_46, %131, %c0_47] : memref<1x64x128xf32, #tpu.memory_space<vmem>>, vector<1x8x128xf32>
    %133 = vector.shape_cast %132 : vector<1x8x128xf32> to vector<8x128xf32>
    %134 = vector.shape_cast %130 : vector<8x128xf32> to vector<1x8x128xf32>
    tpu.vector_store %arg5[%c0_46, %131, %c0_47], %134 {strides = array<i32>} : memref<1x64x128xf32, #tpu.memory_space<vmem>>, vector<1x8x128xf32>,
    %c3_i32 = arith.constant 3 : i32
    %c0_i32_48 = arith.constant 0 : i32
    %135 = arith.cmpi eq, %arg0, %c0_i32_48 : i32
    %c7_i32_49 = arith.constant 7 : i32
    %136 = arith.subi %c7_i32_49, %c3_i32 : i32
    %137 = arith.select %135, %c3_i32, %136 : i32
    %c8_i32_50 = arith.constant 8 : i32
    %138 = arith.muli %137, %c8_i32_50 : i32
    %139 = tpu.assume_multiple %138, 8 : i32
    %140 = arith.index_cast %139 : i32 to index
    %c0_51 = arith.constant 0 : index
    %141 = vector.load %arg6[%140, %c0_51] : memref<64x512xf32, #tpu.memory_space<vmem>>, vector<8x512xf32>
    %142 = arith.truncf %130 : vector<8x128xf32> to vector<8x128xbf16>
    %c0_52 = arith.constant 0 : index
    %c0_53 = arith.constant 0 : index
    %c0_54 = arith.constant 0 : index
    %143 = vector.load %arg3[%c0_52, %c0_53, %c0_54] : memref<1x128x512xbf16, #tpu.memory_space<vmem>>, vector<1x128x512xbf16>
    %144 = vector.shape_cast %143 : vector<1x128x512xbf16> to vector<128x512xbf16>
    %cst_55 = arith.constant dense<0.000000e+00> : vector<8x512xf32>
    %145 = tpu.matmul %142, %144, %cst_55 {dimension_numbers = #tpu.dot_dimension_numbers<[1], [0], [0], [1], [0, 0, 1, 1], [], []>} : vector<8x128xbf16>, vector<128x512xbf16>, vector<8x512xf32> -> vector<8x512xf32>
    %146 = arith.addf %141, %145 : vector<8x512xf32>
    %147 = vector.extract_strided_slice %146 {offsets = [0, 0], sizes = [8, 128], strides = [1, 1]} : vector<8x512xf32> to vector<8x128xf32>
    %148 = arith.negf %147 : vector<8x128xf32>
    %149 = math.exp %148 : vector<8x128xf32>
    %cst_56 = arith.constant 1.000000e+00 : f32
    %150 = vector.broadcast %cst_56 : f32 to vector<8x128xf32>
    %151 = arith.addf %150, %149 : vector<8x128xf32>
    %152 = arith.divf %150, %151 : vector<8x128xf32>
    %153 = vector.extract_strided_slice %146 {offsets = [0, 128], sizes = [8, 128], strides = [1, 1]} : vector<8x512xf32> to vector<8x128xf32>
    %154 = arith.negf %153 : vector<8x128xf32>
    %155 = math.exp %154 : vector<8x128xf32>
    %cst_57 = arith.constant 1.000000e+00 : f32
    %156 = vector.broadcast %cst_57 : f32 to vector<8x128xf32>
    %157 = arith.addf %156, %155 : vector<8x128xf32>
    %158 = arith.divf %156, %157 : vector<8x128xf32>
    %159 = vector.extract_strided_slice %146 {offsets = [0, 256], sizes = [8, 128], strides = [1, 1]} : vector<8x512xf32> to vector<8x128xf32>
    %160 = math.tanh %159 : vector<8x128xf32>
    %161 = vector.extract_strided_slice %146 {offsets = [0, 384], sizes = [8, 128], strides = [1, 1]} : vector<8x512xf32> to vector<8x128xf32>
    %162 = arith.negf %161 : vector<8x128xf32>
    %163 = math.exp %162 : vector<8x128xf32>
    %cst_58 = arith.constant 1.000000e+00 : f32
    %164 = vector.broadcast %cst_58 : f32 to vector<8x128xf32>
    %165 = arith.addf %164, %163 : vector<8x128xf32>
    %166 = arith.divf %164, %165 : vector<8x128xf32>
    %167 = arith.mulf %158, %128 : vector<8x128xf32>
    %168 = arith.mulf %152, %160 : vector<8x128xf32>
    %169 = arith.addf %167, %168 : vector<8x128xf32>
    %170 = math.tanh %169 : vector<8x128xf32>
    %171 = arith.mulf %166, %170 : vector<8x128xf32>
    %c0_59 = arith.constant 0 : index
    %172 = arith.index_cast %139 : i32 to index
    %c0_60 = arith.constant 0 : index
    %173 = vector.load %arg5[%c0_59, %172, %c0_60] : memref<1x64x128xf32, #tpu.memory_space<vmem>>, vector<1x8x128xf32>
    %174 = vector.shape_cast %173 : vector<1x8x128xf32> to vector<8x128xf32>
    %175 = vector.shape_cast %171 : vector<8x128xf32> to vector<1x8x128xf32>
    tpu.vector_store %arg5[%c0_59, %172, %c0_60], %175 {strides = array<i32>} : memref<1x64x128xf32, #tpu.memory_space<vmem>>, vector<1x8x128xf32>,
    %c4_i32 = arith.constant 4 : i32
    %c0_i32_61 = arith.constant 0 : i32
    %176 = arith.cmpi eq, %arg0, %c0_i32_61 : i32
    %c7_i32_62 = arith.constant 7 : i32
    %177 = arith.subi %c7_i32_62, %c4_i32 : i32
    %178 = arith.select %176, %c4_i32, %177 : i32
    %c8_i32_63 = arith.constant 8 : i32
    %179 = arith.muli %178, %c8_i32_63 : i32
    %180 = tpu.assume_multiple %179, 8 : i32
    %181 = arith.index_cast %180 : i32 to index
    %c0_64 = arith.constant 0 : index
    %182 = vector.load %arg6[%181, %c0_64] : memref<64x512xf32, #tpu.memory_space<vmem>>, vector<8x512xf32>
    %183 = arith.truncf %171 : vector<8x128xf32> to vector<8x128xbf16>
    %c0_65 = arith.constant 0 : index
    %c0_66 = arith.constant 0 : index
    %c0_67 = arith.constant 0 : index
    %184 = vector.load %arg3[%c0_65, %c0_66, %c0_67] : memref<1x128x512xbf16, #tpu.memory_space<vmem>>, vector<1x128x512xbf16>
    %185 = vector.shape_cast %184 : vector<1x128x512xbf16> to vector<128x512xbf16>
    %cst_68 = arith.constant dense<0.000000e+00> : vector<8x512xf32>
    %186 = tpu.matmul %183, %185, %cst_68 {dimension_numbers = #tpu.dot_dimension_numbers<[1], [0], [0], [1], [0, 0, 1, 1], [], []>} : vector<8x128xbf16>, vector<128x512xbf16>, vector<8x512xf32> -> vector<8x512xf32>
    %187 = arith.addf %182, %186 : vector<8x512xf32>
    %188 = vector.extract_strided_slice %187 {offsets = [0, 0], sizes = [8, 128], strides = [1, 1]} : vector<8x512xf32> to vector<8x128xf32>
    %189 = arith.negf %188 : vector<8x128xf32>
    %190 = math.exp %189 : vector<8x128xf32>
    %cst_69 = arith.constant 1.000000e+00 : f32
    %191 = vector.broadcast %cst_69 : f32 to vector<8x128xf32>
    %192 = arith.addf %191, %190 : vector<8x128xf32>
    %193 = arith.divf %191, %192 : vector<8x128xf32>
    %194 = vector.extract_strided_slice %187 {offsets = [0, 128], sizes = [8, 128], strides = [1, 1]} : vector<8x512xf32> to vector<8x128xf32>
    %195 = arith.negf %194 : vector<8x128xf32>
    %196 = math.exp %195 : vector<8x128xf32>
    %cst_70 = arith.constant 1.000000e+00 : f32
    %197 = vector.broadcast %cst_70 : f32 to vector<8x128xf32>
    %198 = arith.addf %197, %196 : vector<8x128xf32>
    %199 = arith.divf %197, %198 : vector<8x128xf32>
    %200 = vector.extract_strided_slice %187 {offsets = [0, 256], sizes = [8, 128], strides = [1, 1]} : vector<8x512xf32> to vector<8x128xf32>
    %201 = math.tanh %200 : vector<8x128xf32>
    %202 = vector.extract_strided_slice %187 {offsets = [0, 384], sizes = [8, 128], strides = [1, 1]} : vector<8x512xf32> to vector<8x128xf32>
    %203 = arith.negf %202 : vector<8x128xf32>
    %204 = math.exp %203 : vector<8x128xf32>
    %cst_71 = arith.constant 1.000000e+00 : f32
    %205 = vector.broadcast %cst_71 : f32 to vector<8x128xf32>
    %206 = arith.addf %205, %204 : vector<8x128xf32>
    %207 = arith.divf %205, %206 : vector<8x128xf32>
    %208 = arith.mulf %199, %169 : vector<8x128xf32>
    %209 = arith.mulf %193, %201 : vector<8x128xf32>
    %210 = arith.addf %208, %209 : vector<8x128xf32>
    %211 = math.tanh %210 : vector<8x128xf32>
    %212 = arith.mulf %207, %211 : vector<8x128xf32>
    %c0_72 = arith.constant 0 : index
    %213 = arith.index_cast %180 : i32 to index
    %c0_73 = arith.constant 0 : index
    %214 = vector.load %arg5[%c0_72, %213, %c0_73] : memref<1x64x128xf32, #tpu.memory_space<vmem>>, vector<1x8x128xf32>
    %215 = vector.shape_cast %214 : vector<1x8x128xf32> to vector<8x128xf32>
    %216 = vector.shape_cast %212 : vector<8x128xf32> to vector<1x8x128xf32>
    tpu.vector_store %arg5[%c0_72, %213, %c0_73], %216 {strides = array<i32>} : memref<1x64x128xf32, #tpu.memory_space<vmem>>, vector<1x8x128xf32>,
    %c5_i32 = arith.constant 5 : i32
    %c0_i32_74 = arith.constant 0 : i32
    %217 = arith.cmpi eq, %arg0, %c0_i32_74 : i32
    %c7_i32_75 = arith.constant 7 : i32
    %218 = arith.subi %c7_i32_75, %c5_i32 : i32
    %219 = arith.select %217, %c5_i32, %218 : i32
    %c8_i32_76 = arith.constant 8 : i32
    %220 = arith.muli %219, %c8_i32_76 : i32
    %221 = tpu.assume_multiple %220, 8 : i32
    %222 = arith.index_cast %221 : i32 to index
    %c0_77 = arith.constant 0 : index
    %223 = vector.load %arg6[%222, %c0_77] : memref<64x512xf32, #tpu.memory_space<vmem>>, vector<8x512xf32>
    %224 = arith.truncf %212 : vector<8x128xf32> to vector<8x128xbf16>
    %c0_78 = arith.constant 0 : index
    %c0_79 = arith.constant 0 : index
    %c0_80 = arith.constant 0 : index
    %225 = vector.load %arg3[%c0_78, %c0_79, %c0_80] : memref<1x128x512xbf16, #tpu.memory_space<vmem>>, vector<1x128x512xbf16>
    %226 = vector.shape_cast %225 : vector<1x128x512xbf16> to vector<128x512xbf16>
    %cst_81 = arith.constant dense<0.000000e+00> : vector<8x512xf32>
    %227 = tpu.matmul %224, %226, %cst_81 {dimension_numbers = #tpu.dot_dimension_numbers<[1], [0], [0], [1], [0, 0, 1, 1], [], []>} : vector<8x128xbf16>, vector<128x512xbf16>, vector<8x512xf32> -> vector<8x512xf32>
    %228 = arith.addf %223, %227 : vector<8x512xf32>
    %229 = vector.extract_strided_slice %228 {offsets = [0, 0], sizes = [8, 128], strides = [1, 1]} : vector<8x512xf32> to vector<8x128xf32>
    %230 = arith.negf %229 : vector<8x128xf32>
    %231 = math.exp %230 : vector<8x128xf32>
    %cst_82 = arith.constant 1.000000e+00 : f32
    %232 = vector.broadcast %cst_82 : f32 to vector<8x128xf32>
    %233 = arith.addf %232, %231 : vector<8x128xf32>
    %234 = arith.divf %232, %233 : vector<8x128xf32>
    %235 = vector.extract_strided_slice %228 {offsets = [0, 128], sizes = [8, 128], strides = [1, 1]} : vector<8x512xf32> to vector<8x128xf32>
    %236 = arith.negf %235 : vector<8x128xf32>
    %237 = math.exp %236 : vector<8x128xf32>
    %cst_83 = arith.constant 1.000000e+00 : f32
    %238 = vector.broadcast %cst_83 : f32 to vector<8x128xf32>
    %239 = arith.addf %238, %237 : vector<8x128xf32>
    %240 = arith.divf %238, %239 : vector<8x128xf32>
    %241 = vector.extract_strided_slice %228 {offsets = [0, 256], sizes = [8, 128], strides = [1, 1]} : vector<8x512xf32> to vector<8x128xf32>
    %242 = math.tanh %241 : vector<8x128xf32>
    %243 = vector.extract_strided_slice %228 {offsets = [0, 384], sizes = [8, 128], strides = [1, 1]} : vector<8x512xf32> to vector<8x128xf32>
    %244 = arith.negf %243 : vector<8x128xf32>
    %245 = math.exp %244 : vector<8x128xf32>
    %cst_84 = arith.constant 1.000000e+00 : f32
    %246 = vector.broadcast %cst_84 : f32 to vector<8x128xf32>
    %247 = arith.addf %246, %245 : vector<8x128xf32>
    %248 = arith.divf %246, %247 : vector<8x128xf32>
    %249 = arith.mulf %240, %210 : vector<8x128xf32>
    %250 = arith.mulf %234, %242 : vector<8x128xf32>
    %251 = arith.addf %249, %250 : vector<8x128xf32>
    %252 = math.tanh %251 : vector<8x128xf32>
    %253 = arith.mulf %248, %252 : vector<8x128xf32>
    %c0_85 = arith.constant 0 : index
    %254 = arith.index_cast %221 : i32 to index
    %c0_86 = arith.constant 0 : index
    %255 = vector.load %arg5[%c0_85, %254, %c0_86] : memref<1x64x128xf32, #tpu.memory_space<vmem>>, vector<1x8x128xf32>
    %256 = vector.shape_cast %255 : vector<1x8x128xf32> to vector<8x128xf32>
    %257 = vector.shape_cast %253 : vector<8x128xf32> to vector<1x8x128xf32>
    tpu.vector_store %arg5[%c0_85, %254, %c0_86], %257 {strides = array<i32>} : memref<1x64x128xf32, #tpu.memory_space<vmem>>, vector<1x8x128xf32>,
    %c6_i32 = arith.constant 6 : i32
    %c0_i32_87 = arith.constant 0 : i32
    %258 = arith.cmpi eq, %arg0, %c0_i32_87 : i32
    %c7_i32_88 = arith.constant 7 : i32
    %259 = arith.subi %c7_i32_88, %c6_i32 : i32
    %260 = arith.select %258, %c6_i32, %259 : i32
    %c8_i32_89 = arith.constant 8 : i32
    %261 = arith.muli %260, %c8_i32_89 : i32
    %262 = tpu.assume_multiple %261, 8 : i32
    %263 = arith.index_cast %262 : i32 to index
    %c0_90 = arith.constant 0 : index
    %264 = vector.load %arg6[%263, %c0_90] : memref<64x512xf32, #tpu.memory_space<vmem>>, vector<8x512xf32>
    %265 = arith.truncf %253 : vector<8x128xf32> to vector<8x128xbf16>
    %c0_91 = arith.constant 0 : index
    %c0_92 = arith.constant 0 : index
    %c0_93 = arith.constant 0 : index
    %266 = vector.load %arg3[%c0_91, %c0_92, %c0_93] : memref<1x128x512xbf16, #tpu.memory_space<vmem>>, vector<1x128x512xbf16>
    %267 = vector.shape_cast %266 : vector<1x128x512xbf16> to vector<128x512xbf16>
    %cst_94 = arith.constant dense<0.000000e+00> : vector<8x512xf32>
    %268 = tpu.matmul %265, %267, %cst_94 {dimension_numbers = #tpu.dot_dimension_numbers<[1], [0], [0], [1], [0, 0, 1, 1], [], []>} : vector<8x128xbf16>, vector<128x512xbf16>, vector<8x512xf32> -> vector<8x512xf32>
    %269 = arith.addf %264, %268 : vector<8x512xf32>
    %270 = vector.extract_strided_slice %269 {offsets = [0, 0], sizes = [8, 128], strides = [1, 1]} : vector<8x512xf32> to vector<8x128xf32>
    %271 = arith.negf %270 : vector<8x128xf32>
    %272 = math.exp %271 : vector<8x128xf32>
    %cst_95 = arith.constant 1.000000e+00 : f32
    %273 = vector.broadcast %cst_95 : f32 to vector<8x128xf32>
    %274 = arith.addf %273, %272 : vector<8x128xf32>
    %275 = arith.divf %273, %274 : vector<8x128xf32>
    %276 = vector.extract_strided_slice %269 {offsets = [0, 128], sizes = [8, 128], strides = [1, 1]} : vector<8x512xf32> to vector<8x128xf32>
    %277 = arith.negf %276 : vector<8x128xf32>
    %278 = math.exp %277 : vector<8x128xf32>
    %cst_96 = arith.constant 1.000000e+00 : f32
    %279 = vector.broadcast %cst_96 : f32 to vector<8x128xf32>
    %280 = arith.addf %279, %278 : vector<8x128xf32>
    %281 = arith.divf %279, %280 : vector<8x128xf32>
    %282 = vector.extract_strided_slice %269 {offsets = [0, 256], sizes = [8, 128], strides = [1, 1]} : vector<8x512xf32> to vector<8x128xf32>
    %283 = math.tanh %282 : vector<8x128xf32>
    %284 = vector.extract_strided_slice %269 {offsets = [0, 384], sizes = [8, 128], strides = [1, 1]} : vector<8x512xf32> to vector<8x128xf32>
    %285 = arith.negf %284 : vector<8x128xf32>
    %286 = math.exp %285 : vector<8x128xf32>
    %cst_97 = arith.constant 1.000000e+00 : f32
    %287 = vector.broadcast %cst_97 : f32 to vector<8x128xf32>
    %288 = arith.addf %287, %286 : vector<8x128xf32>
    %289 = arith.divf %287, %288 : vector<8x128xf32>
    %290 = arith.mulf %281, %251 : vector<8x128xf32>
    %291 = arith.mulf %275, %283 : vector<8x128xf32>
    %292 = arith.addf %290, %291 : vector<8x128xf32>
    %293 = math.tanh %292 : vector<8x128xf32>
    %294 = arith.mulf %289, %293 : vector<8x128xf32>
    %c0_98 = arith.constant 0 : index
    %295 = arith.index_cast %262 : i32 to index
    %c0_99 = arith.constant 0 : index
    %296 = vector.load %arg5[%c0_98, %295, %c0_99] : memref<1x64x128xf32, #tpu.memory_space<vmem>>, vector<1x8x128xf32>
    %297 = vector.shape_cast %296 : vector<1x8x128xf32> to vector<8x128xf32>
    %298 = vector.shape_cast %294 : vector<8x128xf32> to vector<1x8x128xf32>
    tpu.vector_store %arg5[%c0_98, %295, %c0_99], %298 {strides = array<i32>} : memref<1x64x128xf32, #tpu.memory_space<vmem>>, vector<1x8x128xf32>,
    %c7_i32_100 = arith.constant 7 : i32
    %c0_i32_101 = arith.constant 0 : i32
    %299 = arith.cmpi eq, %arg0, %c0_i32_101 : i32
    %c7_i32_102 = arith.constant 7 : i32
    %300 = arith.subi %c7_i32_102, %c7_i32_100 : i32
    %301 = arith.select %299, %c7_i32_100, %300 : i32
    %c8_i32_103 = arith.constant 8 : i32
    %302 = arith.muli %301, %c8_i32_103 : i32
    %303 = tpu.assume_multiple %302, 8 : i32
    %304 = arith.index_cast %303 : i32 to index
    %c0_104 = arith.constant 0 : index
    %305 = vector.load %arg6[%304, %c0_104] : memref<64x512xf32, #tpu.memory_space<vmem>>, vector<8x512xf32>
    %306 = arith.truncf %294 : vector<8x128xf32> to vector<8x128xbf16>
    %c0_105 = arith.constant 0 : index
    %c0_106 = arith.constant 0 : index
    %c0_107 = arith.constant 0 : index
    %307 = vector.load %arg3[%c0_105, %c0_106, %c0_107] : memref<1x128x512xbf16, #tpu.memory_space<vmem>>, vector<1x128x512xbf16>
    %308 = vector.shape_cast %307 : vector<1x128x512xbf16> to vector<128x512xbf16>
    %cst_108 = arith.constant dense<0.000000e+00> : vector<8x512xf32>
    %309 = tpu.matmul %306, %308, %cst_108 {dimension_numbers = #tpu.dot_dimension_numbers<[1], [0], [0], [1], [0, 0, 1, 1], [], []>} : vector<8x128xbf16>, vector<128x512xbf16>, vector<8x512xf32> -> vector<8x512xf32>
    %310 = arith.addf %305, %309 : vector<8x512xf32>
    %311 = vector.extract_strided_slice %310 {offsets = [0, 0], sizes = [8, 128], strides = [1, 1]} : vector<8x512xf32> to vector<8x128xf32>
    %312 = arith.negf %311 : vector<8x128xf32>
    %313 = math.exp %312 : vector<8x128xf32>
    %cst_109 = arith.constant 1.000000e+00 : f32
    %314 = vector.broadcast %cst_109 : f32 to vector<8x128xf32>
    %315 = arith.addf %314, %313 : vector<8x128xf32>
    %316 = arith.divf %314, %315 : vector<8x128xf32>
    %317 = vector.extract_strided_slice %310 {offsets = [0, 128], sizes = [8, 128], strides = [1, 1]} : vector<8x512xf32> to vector<8x128xf32>
    %318 = arith.negf %317 : vector<8x128xf32>
    %319 = math.exp %318 : vector<8x128xf32>
    %cst_110 = arith.constant 1.000000e+00 : f32
    %320 = vector.broadcast %cst_110 : f32 to vector<8x128xf32>
    %321 = arith.addf %320, %319 : vector<8x128xf32>
    %322 = arith.divf %320, %321 : vector<8x128xf32>
    %323 = vector.extract_strided_slice %310 {offsets = [0, 256], sizes = [8, 128], strides = [1, 1]} : vector<8x512xf32> to vector<8x128xf32>
    %324 = math.tanh %323 : vector<8x128xf32>
    %325 = vector.extract_strided_slice %310 {offsets = [0, 384], sizes = [8, 128], strides = [1, 1]} : vector<8x512xf32> to vector<8x128xf32>
    %326 = arith.negf %325 : vector<8x128xf32>
    %327 = math.exp %326 : vector<8x128xf32>
    %cst_111 = arith.constant 1.000000e+00 : f32
    %328 = vector.broadcast %cst_111 : f32 to vector<8x128xf32>
    %329 = arith.addf %328, %327 : vector<8x128xf32>
    %330 = arith.divf %328, %329 : vector<8x128xf32>
    %331 = arith.mulf %322, %292 : vector<8x128xf32>
    %332 = arith.mulf %316, %324 : vector<8x128xf32>
    %333 = arith.addf %331, %332 : vector<8x128xf32>
    %334 = math.tanh %333 : vector<8x128xf32>
    %335 = arith.mulf %330, %334 : vector<8x128xf32>
    %c0_112 = arith.constant 0 : index
    %336 = arith.index_cast %303 : i32 to index
    %c0_113 = arith.constant 0 : index
    %337 = vector.load %arg5[%c0_112, %336, %c0_113] : memref<1x64x128xf32, #tpu.memory_space<vmem>>, vector<1x8x128xf32>
    %338 = vector.shape_cast %337 : vector<1x8x128xf32> to vector<8x128xf32>
    %339 = vector.shape_cast %335 : vector<8x128xf32> to vector<1x8x128xf32>
    tpu.vector_store %arg5[%c0_112, %336, %c0_113], %339 {strides = array<i32>} : memref<1x64x128xf32, #tpu.memory_space<vmem>>, vector<1x8x128xf32>,
    %c8_i32_114 = arith.constant 8 : i32
    return
  }
  func.func @transform_0(%arg0: i32) -> (i32, i32) {
    %c0_i32 = arith.constant 0 : i32
    %c0_i32_0 = arith.constant 0 : i32
    %c0_i32_1 = arith.constant 0 : i32
    return %c0_i32, %c0_i32_0 : i32, i32
  }
  func.func @transform_1(%arg0: i32) -> (i32, i32, i32) {
    %c0_i32 = arith.constant 0 : i32
    %c0_i32_0 = arith.constant 0 : i32
    %c0_i32_1 = arith.constant 0 : i32
    return %arg0, %c0_i32, %c0_i32_0 : i32, i32, i32
  }
  func.func @transform_2(%arg0: i32) -> (i32, i32, i32) {
    %c0_i32 = arith.constant 0 : i32
    %c0_i32_0 = arith.constant 0 : i32
    %c0_i32_1 = arith.constant 0 : i32
    return %arg0, %c0_i32, %c0_i32_0 : i32, i32, i32
  }
  func.func @transform_3(%arg0: i32) -> (i32, i32, i32) {
    %c0_i32 = arith.constant 0 : i32
    %c0_i32_0 = arith.constant 0 : i32
    %c0_i32_1 = arith.constant 0 : i32
    return %arg0, %c0_i32, %c0_i32_0 : i32, i32, i32
  }
  func.func @transform_4(%arg0: i32) -> (i32, i32, i32) {
    %c0_i32 = arith.constant 0 : i32
    %c0_i32_0 = arith.constant 0 : i32
    %c0_i32_1 = arith.constant 0 : i32
    return %arg0, %c0_i32, %c0_i32_0 : i32, i32, i32
  }
}

module attributes {stable_mosaic.version = 11 : i64} {
  func.func @_bilstm_layer_kernel(%arg0: i32, %arg1: memref<64x64xf32, #tpu.memory_space<vmem>>, %arg2: memref<1x64x512xbf16, #tpu.memory_space<vmem>>, %arg3: memref<1x128x512xbf16, #tpu.memory_space<vmem>>, %arg4: memref<1x1x512xf32, #tpu.memory_space<vmem>>, %arg5: memref<1x64x128xf32, #tpu.memory_space<vmem>>, %arg6: memref<64x512xf32, #tpu.memory_space<vmem>>) attributes {dimension_semantics = [#tpu.dimension_semantics<parallel>], iteration_bounds = array<i64: 2>, scalar_prefetch = 0 : i64, scratch_operands = 1 : i64, tpu.core_type = #tpu.core_type<tc>, window_params = [{pipeline_mode = #tpu.pipeline_mode<synchronous>, transform_indices = @transform_0, window_bounds = array<i64: 64, 64>}, {transform_indices = @transform_1, window_bounds = array<i64: 1, 64, 512>}, {transform_indices = @transform_2, window_bounds = array<i64: 1, 128, 512>}, {transform_indices = @transform_3, window_bounds = array<i64: 1, 1, 512>}, {transform_indices = @transform_4, window_bounds = array<i64: 1, 64, 128>}]} {
    %c0 = arith.constant 0 : index
    %c0_0 = arith.constant 0 : index
    %0 = vector.load %arg1[%c0, %c0_0] : memref<64x64xf32, #tpu.memory_space<vmem>>, vector<64x64xf32>
    %1 = arith.truncf %0 : vector<64x64xf32> to vector<64x64xbf16>
    %c0_1 = arith.constant 0 : index
    %c0_2 = arith.constant 0 : index
    %c0_3 = arith.constant 0 : index
    %2 = vector.load %arg2[%c0_1, %c0_2, %c0_3] : memref<1x64x512xbf16, #tpu.memory_space<vmem>>, vector<1x64x512xbf16>
    %3 = vector.shape_cast %2 : vector<1x64x512xbf16> to vector<64x512xbf16>
    %cst = arith.constant dense<0.000000e+00> : vector<64x512xf32>
    %4 = tpu.matmul %1, %3, %cst {dimension_numbers = #tpu.dot_dimension_numbers<[1], [0], [0], [1], [0, 0, 1, 1], [], []>} : vector<64x64xbf16>, vector<64x512xbf16>, vector<64x512xf32> -> vector<64x512xf32>
    %c0_4 = arith.constant 0 : index
    %c0_5 = arith.constant 0 : index
    %c0_6 = arith.constant 0 : index
    %5 = vector.load %arg4[%c0_4, %c0_5, %c0_6] : memref<1x1x512xf32, #tpu.memory_space<vmem>>, vector<1x1x512xf32>
    %6 = vector.shape_cast %5 : vector<1x1x512xf32> to vector<1x512xf32>
    %7 = vector.broadcast %6 : vector<1x512xf32> to vector<64x512xf32>
    %8 = arith.addf %4, %7 : vector<64x512xf32>
    %c0_7 = arith.constant 0 : index
    %c0_8 = arith.constant 0 : index
    %9 = vector.load %arg6[%c0_7, %c0_8] : memref<64x512xf32, #tpu.memory_space<vmem>>, vector<64x512xf32>
    tpu.vector_store %arg6[%c0_7, %c0_8], %8 {strides = array<i32>} : memref<64x512xf32, #tpu.memory_space<vmem>>, vector<64x512xf32>,
    %cst_9 = arith.constant 0.000000e+00 : f32
    %10 = vector.broadcast %cst_9 : f32 to vector<8x128xf32>
    %cst_10 = arith.constant 0.000000e+00 : f32
    %11 = vector.broadcast %cst_10 : f32 to vector<8x128xf32>
    %c0_i32 = arith.constant 0 : i32
    %c0_i32_11 = arith.constant 0 : i32
    %12 = arith.cmpi eq, %arg0, %c0_i32_11 : i32
    %c7_i32 = arith.constant 7 : i32
    %13 = arith.subi %c7_i32, %c0_i32 : i32
    %14 = arith.select %12, %c0_i32, %13 : i32
    %c8_i32 = arith.constant 8 : i32
    %15 = arith.muli %14, %c8_i32 : i32
    %16 = tpu.assume_multiple %15, 8 : i32
    %17 = arith.index_cast %16 : i32 to index
    %c0_12 = arith.constant 0 : index
    %18 = vector.load %arg6[%17, %c0_12] : memref<64x512xf32, #tpu.memory_space<vmem>>, vector<8x512xf32>
    %19 = arith.truncf %10 : vector<8x128xf32> to vector<8x128xbf16>
    %c0_13 = arith.constant 0 : index
    %c0_14 = arith.constant 0 : index
    %c0_15 = arith.constant 0 : index
    %20 = vector.load %arg3[%c0_13, %c0_14, %c0_15] : memref<1x128x512xbf16, #tpu.memory_space<vmem>>, vector<1x128x512xbf16>
    %21 = vector.shape_cast %20 : vector<1x128x512xbf16> to vector<128x512xbf16>
    %cst_16 = arith.constant dense<0.000000e+00> : vector<8x512xf32>
    %22 = tpu.matmul %19, %21, %cst_16 {dimension_numbers = #tpu.dot_dimension_numbers<[1], [0], [0], [1], [0, 0, 1, 1], [], []>} : vector<8x128xbf16>, vector<128x512xbf16>, vector<8x512xf32> -> vector<8x512xf32>
    %23 = arith.addf %18, %22 : vector<8x512xf32>
    %24 = vector.extract_strided_slice %23 {offsets = [0, 0], sizes = [8, 128], strides = [1, 1]} : vector<8x512xf32> to vector<8x128xf32>
    %25 = arith.negf %24 : vector<8x128xf32>
    %26 = math.exp %25 : vector<8x128xf32>
    %cst_17 = arith.constant 1.000000e+00 : f32
    %27 = vector.broadcast %cst_17 : f32 to vector<8x128xf32>
    %28 = arith.addf %27, %26 : vector<8x128xf32>
    %29 = arith.divf %27, %28 : vector<8x128xf32>
    %30 = vector.extract_strided_slice %23 {offsets = [0, 128], sizes = [8, 128], strides = [1, 1]} : vector<8x512xf32> to vector<8x128xf32>
    %31 = arith.negf %30 : vector<8x128xf32>
    %32 = math.exp %31 : vector<8x128xf32>
    %cst_18 = arith.constant 1.000000e+00 : f32
    %33 = vector.broadcast %cst_18 : f32 to vector<8x128xf32>
    %34 = arith.addf %33, %32 : vector<8x128xf32>
    %35 = arith.divf %33, %34 : vector<8x128xf32>
    %36 = vector.extract_strided_slice %23 {offsets = [0, 256], sizes = [8, 128], strides = [1, 1]} : vector<8x512xf32> to vector<8x128xf32>
    %37 = math.tanh %36 : vector<8x128xf32>
    %38 = vector.extract_strided_slice %23 {offsets = [0, 384], sizes = [8, 128], strides = [1, 1]} : vector<8x512xf32> to vector<8x128xf32>
    %39 = arith.negf %38 : vector<8x128xf32>
    %40 = math.exp %39 : vector<8x128xf32>
    %cst_19 = arith.constant 1.000000e+00 : f32
    %41 = vector.broadcast %cst_19 : f32 to vector<8x128xf32>
    %42 = arith.addf %41, %40 : vector<8x128xf32>
    %43 = arith.divf %41, %42 : vector<8x128xf32>
    %44 = arith.mulf %35, %11 : vector<8x128xf32>
    %45 = arith.mulf %29, %37 : vector<8x128xf32>
    %46 = arith.addf %44, %45 : vector<8x128xf32>
    %47 = math.tanh %46 : vector<8x128xf32>
    %48 = arith.mulf %43, %47 : vector<8x128xf32>
    %c0_20 = arith.constant 0 : index
    %49 = arith.index_cast %16 : i32 to index
    %c0_21 = arith.constant 0 : index
    %50 = vector.load %arg5[%c0_20, %49, %c0_21] : memref<1x64x128xf32, #tpu.memory_space<vmem>>, vector<1x8x128xf32>
    %51 = vector.shape_cast %50 : vector<1x8x128xf32> to vector<8x128xf32>
    %52 = vector.shape_cast %48 : vector<8x128xf32> to vector<1x8x128xf32>
    tpu.vector_store %arg5[%c0_20, %49, %c0_21], %52 {strides = array<i32>} : memref<1x64x128xf32, #tpu.memory_space<vmem>>, vector<1x8x128xf32>,
    %c1_i32 = arith.constant 1 : i32
    %c0_i32_22 = arith.constant 0 : i32
    %53 = arith.cmpi eq, %arg0, %c0_i32_22 : i32
    %c7_i32_23 = arith.constant 7 : i32
    %54 = arith.subi %c7_i32_23, %c1_i32 : i32
    %55 = arith.select %53, %c1_i32, %54 : i32
    %c8_i32_24 = arith.constant 8 : i32
    %56 = arith.muli %55, %c8_i32_24 : i32
    %57 = tpu.assume_multiple %56, 8 : i32
    %58 = arith.index_cast %57 : i32 to index
    %c0_25 = arith.constant 0 : index
    %59 = vector.load %arg6[%58, %c0_25] : memref<64x512xf32, #tpu.memory_space<vmem>>, vector<8x512xf32>
    %60 = arith.truncf %48 : vector<8x128xf32> to vector<8x128xbf16>
    %c0_26 = arith.constant 0 : index
    %c0_27 = arith.constant 0 : index
    %c0_28 = arith.constant 0 : index
    %61 = vector.load %arg3[%c0_26, %c0_27, %c0_28] : memref<1x128x512xbf16, #tpu.memory_space<vmem>>, vector<1x128x512xbf16>
    %62 = vector.shape_cast %61 : vector<1x128x512xbf16> to vector<128x512xbf16>
    %cst_29 = arith.constant dense<0.000000e+00> : vector<8x512xf32>
    %63 = tpu.matmul %60, %62, %cst_29 {dimension_numbers = #tpu.dot_dimension_numbers<[1], [0], [0], [1], [0, 0, 1, 1], [], []>} : vector<8x128xbf16>, vector<128x512xbf16>, vector<8x512xf32> -> vector<8x512xf32>
    %64 = arith.addf %59, %63 : vector<8x512xf32>
    %65 = vector.extract_strided_slice %64 {offsets = [0, 0], sizes = [8, 128], strides = [1, 1]} : vector<8x512xf32> to vector<8x128xf32>
    %66 = arith.negf %65 : vector<8x128xf32>
    %67 = math.exp %66 : vector<8x128xf32>
    %cst_30 = arith.constant 1.000000e+00 : f32
    %68 = vector.broadcast %cst_30 : f32 to vector<8x128xf32>
    %69 = arith.addf %68, %67 : vector<8x128xf32>
    %70 = arith.divf %68, %69 : vector<8x128xf32>
    %71 = vector.extract_strided_slice %64 {offsets = [0, 128], sizes = [8, 128], strides = [1, 1]} : vector<8x512xf32> to vector<8x128xf32>
    %72 = arith.negf %71 : vector<8x128xf32>
    %73 = math.exp %72 : vector<8x128xf32>
    %cst_31 = arith.constant 1.000000e+00 : f32
    %74 = vector.broadcast %cst_31 : f32 to vector<8x128xf32>
    %75 = arith.addf %74, %73 : vector<8x128xf32>
    %76 = arith.divf %74, %75 : vector<8x128xf32>
    %77 = vector.extract_strided_slice %64 {offsets = [0, 256], sizes = [8, 128], strides = [1, 1]} : vector<8x512xf32> to vector<8x128xf32>
    %78 = math.tanh %77 : vector<8x128xf32>
    %79 = vector.extract_strided_slice %64 {offsets = [0, 384], sizes = [8, 128], strides = [1, 1]} : vector<8x512xf32> to vector<8x128xf32>
    %80 = arith.negf %79 : vector<8x128xf32>
    %81 = math.exp %80 : vector<8x128xf32>
    %cst_32 = arith.constant 1.000000e+00 : f32
    %82 = vector.broadcast %cst_32 : f32 to vector<8x128xf32>
    %83 = arith.addf %82, %81 : vector<8x128xf32>
    %84 = arith.divf %82, %83 : vector<8x128xf32>
    %85 = arith.mulf %76, %46 : vector<8x128xf32>
    %86 = arith.mulf %70, %78 : vector<8x128xf32>
    %87 = arith.addf %85, %86 : vector<8x128xf32>
    %88 = math.tanh %87 : vector<8x128xf32>
    %89 = arith.mulf %84, %88 : vector<8x128xf32>
    %c0_33 = arith.constant 0 : index
    %90 = arith.index_cast %57 : i32 to index
    %c0_34 = arith.constant 0 : index
    %91 = vector.load %arg5[%c0_33, %90, %c0_34] : memref<1x64x128xf32, #tpu.memory_space<vmem>>, vector<1x8x128xf32>
    %92 = vector.shape_cast %91 : vector<1x8x128xf32> to vector<8x128xf32>
    %93 = vector.shape_cast %89 : vector<8x128xf32> to vector<1x8x128xf32>
    tpu.vector_store %arg5[%c0_33, %90, %c0_34], %93 {strides = array<i32>} : memref<1x64x128xf32, #tpu.memory_space<vmem>>, vector<1x8x128xf32>,
    %c2_i32 = arith.constant 2 : i32
    %c0_i32_35 = arith.constant 0 : i32
    %94 = arith.cmpi eq, %arg0, %c0_i32_35 : i32
    %c7_i32_36 = arith.constant 7 : i32
    %95 = arith.subi %c7_i32_36, %c2_i32 : i32
    %96 = arith.select %94, %c2_i32, %95 : i32
    %c8_i32_37 = arith.constant 8 : i32
    %97 = arith.muli %96, %c8_i32_37 : i32
    %98 = tpu.assume_multiple %97, 8 : i32
    %99 = arith.index_cast %98 : i32 to index
    %c0_38 = arith.constant 0 : index
    %100 = vector.load %arg6[%99, %c0_38] : memref<64x512xf32, #tpu.memory_space<vmem>>, vector<8x512xf32>
    %101 = arith.truncf %89 : vector<8x128xf32> to vector<8x128xbf16>
    %c0_39 = arith.constant 0 : index
    %c0_40 = arith.constant 0 : index
    %c0_41 = arith.constant 0 : index
    %102 = vector.load %arg3[%c0_39, %c0_40, %c0_41] : memref<1x128x512xbf16, #tpu.memory_space<vmem>>, vector<1x128x512xbf16>
    %103 = vector.shape_cast %102 : vector<1x128x512xbf16> to vector<128x512xbf16>
    %cst_42 = arith.constant dense<0.000000e+00> : vector<8x512xf32>
    %104 = tpu.matmul %101, %103, %cst_42 {dimension_numbers = #tpu.dot_dimension_numbers<[1], [0], [0], [1], [0, 0, 1, 1], [], []>} : vector<8x128xbf16>, vector<128x512xbf16>, vector<8x512xf32> -> vector<8x512xf32>
    %105 = arith.addf %100, %104 : vector<8x512xf32>
    %106 = vector.extract_strided_slice %105 {offsets = [0, 0], sizes = [8, 128], strides = [1, 1]} : vector<8x512xf32> to vector<8x128xf32>
    %107 = arith.negf %106 : vector<8x128xf32>
    %108 = math.exp %107 : vector<8x128xf32>
    %cst_43 = arith.constant 1.000000e+00 : f32
    %109 = vector.broadcast %cst_43 : f32 to vector<8x128xf32>
    %110 = arith.addf %109, %108 : vector<8x128xf32>
    %111 = arith.divf %109, %110 : vector<8x128xf32>
    %112 = vector.extract_strided_slice %105 {offsets = [0, 128], sizes = [8, 128], strides = [1, 1]} : vector<8x512xf32> to vector<8x128xf32>
    %113 = arith.negf %112 : vector<8x128xf32>
    %114 = math.exp %113 : vector<8x128xf32>
    %cst_44 = arith.constant 1.000000e+00 : f32
    %115 = vector.broadcast %cst_44 : f32 to vector<8x128xf32>
    %116 = arith.addf %115, %114 : vector<8x128xf32>
    %117 = arith.divf %115, %116 : vector<8x128xf32>
    %118 = vector.extract_strided_slice %105 {offsets = [0, 256], sizes = [8, 128], strides = [1, 1]} : vector<8x512xf32> to vector<8x128xf32>
    %119 = math.tanh %118 : vector<8x128xf32>
    %120 = vector.extract_strided_slice %105 {offsets = [0, 384], sizes = [8, 128], strides = [1, 1]} : vector<8x512xf32> to vector<8x128xf32>
    %121 = arith.negf %120 : vector<8x128xf32>
    %122 = math.exp %121 : vector<8x128xf32>
    %cst_45 = arith.constant 1.000000e+00 : f32
    %123 = vector.broadcast %cst_45 : f32 to vector<8x128xf32>
    %124 = arith.addf %123, %122 : vector<8x128xf32>
    %125 = arith.divf %123, %124 : vector<8x128xf32>
    %126 = arith.mulf %117, %87 : vector<8x128xf32>
    %127 = arith.mulf %111, %119 : vector<8x128xf32>
    %128 = arith.addf %126, %127 : vector<8x128xf32>
    %129 = math.tanh %128 : vector<8x128xf32>
    %130 = arith.mulf %125, %129 : vector<8x128xf32>
    %c0_46 = arith.constant 0 : index
    %131 = arith.index_cast %98 : i32 to index
    %c0_47 = arith.constant 0 : index
    %132 = vector.load %arg5[%c0_46, %131, %c0_47] : memref<1x64x128xf32, #tpu.memory_space<vmem>>, vector<1x8x128xf32>
    %133 = vector.shape_cast %132 : vector<1x8x128xf32> to vector<8x128xf32>
    %134 = vector.shape_cast %130 : vector<8x128xf32> to vector<1x8x128xf32>
    tpu.vector_store %arg5[%c0_46, %131, %c0_47], %134 {strides = array<i32>} : memref<1x64x128xf32, #tpu.memory_space<vmem>>, vector<1x8x128xf32>,
    %c3_i32 = arith.constant 3 : i32
    %c0_i32_48 = arith.constant 0 : i32
    %135 = arith.cmpi eq, %arg0, %c0_i32_48 : i32
    %c7_i32_49 = arith.constant 7 : i32
    %136 = arith.subi %c7_i32_49, %c3_i32 : i32
    %137 = arith.select %135, %c3_i32, %136 : i32
    %c8_i32_50 = arith.constant 8 : i32
    %138 = arith.muli %137, %c8_i32_50 : i32
    %139 = tpu.assume_multiple %138, 8 : i32
    %140 = arith.index_cast %139 : i32 to index
    %c0_51 = arith.constant 0 : index
    %141 = vector.load %arg6[%140, %c0_51] : memref<64x512xf32, #tpu.memory_space<vmem>>, vector<8x512xf32>
    %142 = arith.truncf %130 : vector<8x128xf32> to vector<8x128xbf16>
    %c0_52 = arith.constant 0 : index
    %c0_53 = arith.constant 0 : index
    %c0_54 = arith.constant 0 : index
    %143 = vector.load %arg3[%c0_52, %c0_53, %c0_54] : memref<1x128x512xbf16, #tpu.memory_space<vmem>>, vector<1x128x512xbf16>
    %144 = vector.shape_cast %143 : vector<1x128x512xbf16> to vector<128x512xbf16>
    %cst_55 = arith.constant dense<0.000000e+00> : vector<8x512xf32>
    %145 = tpu.matmul %142, %144, %cst_55 {dimension_numbers = #tpu.dot_dimension_numbers<[1], [0], [0], [1], [0, 0, 1, 1], [], []>} : vector<8x128xbf16>, vector<128x512xbf16>, vector<8x512xf32> -> vector<8x512xf32>
    %146 = arith.addf %141, %145 : vector<8x512xf32>
    %147 = vector.extract_strided_slice %146 {offsets = [0, 0], sizes = [8, 128], strides = [1, 1]} : vector<8x512xf32> to vector<8x128xf32>
    %148 = arith.negf %147 : vector<8x128xf32>
    %149 = math.exp %148 : vector<8x128xf32>
    %cst_56 = arith.constant 1.000000e+00 : f32
    %150 = vector.broadcast %cst_56 : f32 to vector<8x128xf32>
    %151 = arith.addf %150, %149 : vector<8x128xf32>
    %152 = arith.divf %150, %151 : vector<8x128xf32>
    %153 = vector.extract_strided_slice %146 {offsets = [0, 128], sizes = [8, 128], strides = [1, 1]} : vector<8x512xf32> to vector<8x128xf32>
    %154 = arith.negf %153 : vector<8x128xf32>
    %155 = math.exp %154 : vector<8x128xf32>
    %cst_57 = arith.constant 1.000000e+00 : f32
    %156 = vector.broadcast %cst_57 : f32 to vector<8x128xf32>
    %157 = arith.addf %156, %155 : vector<8x128xf32>
    %158 = arith.divf %156, %157 : vector<8x128xf32>
    %159 = vector.extract_strided_slice %146 {offsets = [0, 256], sizes = [8, 128], strides = [1, 1]} : vector<8x512xf32> to vector<8x128xf32>
    %160 = math.tanh %159 : vector<8x128xf32>
    %161 = vector.extract_strided_slice %146 {offsets = [0, 384], sizes = [8, 128], strides = [1, 1]} : vector<8x512xf32> to vector<8x128xf32>
    %162 = arith.negf %161 : vector<8x128xf32>
    %163 = math.exp %162 : vector<8x128xf32>
    %cst_58 = arith.constant 1.000000e+00 : f32
    %164 = vector.broadcast %cst_58 : f32 to vector<8x128xf32>
    %165 = arith.addf %164, %163 : vector<8x128xf32>
    %166 = arith.divf %164, %165 : vector<8x128xf32>
    %167 = arith.mulf %158, %128 : vector<8x128xf32>
    %168 = arith.mulf %152, %160 : vector<8x128xf32>
    %169 = arith.addf %167, %168 : vector<8x128xf32>
    %170 = math.tanh %169 : vector<8x128xf32>
    %171 = arith.mulf %166, %170 : vector<8x128xf32>
    %c0_59 = arith.constant 0 : index
    %172 = arith.index_cast %139 : i32 to index
    %c0_60 = arith.constant 0 : index
    %173 = vector.load %arg5[%c0_59, %172, %c0_60] : memref<1x64x128xf32, #tpu.memory_space<vmem>>, vector<1x8x128xf32>
    %174 = vector.shape_cast %173 : vector<1x8x128xf32> to vector<8x128xf32>
    %175 = vector.shape_cast %171 : vector<8x128xf32> to vector<1x8x128xf32>
    tpu.vector_store %arg5[%c0_59, %172, %c0_60], %175 {strides = array<i32>} : memref<1x64x128xf32, #tpu.memory_space<vmem>>, vector<1x8x128xf32>,
    %c4_i32 = arith.constant 4 : i32
    %c0_i32_61 = arith.constant 0 : i32
    %176 = arith.cmpi eq, %arg0, %c0_i32_61 : i32
    %c7_i32_62 = arith.constant 7 : i32
    %177 = arith.subi %c7_i32_62, %c4_i32 : i32
    %178 = arith.select %176, %c4_i32, %177 : i32
    %c8_i32_63 = arith.constant 8 : i32
    %179 = arith.muli %178, %c8_i32_63 : i32
    %180 = tpu.assume_multiple %179, 8 : i32
    %181 = arith.index_cast %180 : i32 to index
    %c0_64 = arith.constant 0 : index
    %182 = vector.load %arg6[%181, %c0_64] : memref<64x512xf32, #tpu.memory_space<vmem>>, vector<8x512xf32>
    %183 = arith.truncf %171 : vector<8x128xf32> to vector<8x128xbf16>
    %c0_65 = arith.constant 0 : index
    %c0_66 = arith.constant 0 : index
    %c0_67 = arith.constant 0 : index
    %184 = vector.load %arg3[%c0_65, %c0_66, %c0_67] : memref<1x128x512xbf16, #tpu.memory_space<vmem>>, vector<1x128x512xbf16>
    %185 = vector.shape_cast %184 : vector<1x128x512xbf16> to vector<128x512xbf16>
    %cst_68 = arith.constant dense<0.000000e+00> : vector<8x512xf32>
    %186 = tpu.matmul %183, %185, %cst_68 {dimension_numbers = #tpu.dot_dimension_numbers<[1], [0], [0], [1], [0, 0, 1, 1], [], []>} : vector<8x128xbf16>, vector<128x512xbf16>, vector<8x512xf32> -> vector<8x512xf32>
    %187 = arith.addf %182, %186 : vector<8x512xf32>
    %188 = vector.extract_strided_slice %187 {offsets = [0, 0], sizes = [8, 128], strides = [1, 1]} : vector<8x512xf32> to vector<8x128xf32>
    %189 = arith.negf %188 : vector<8x128xf32>
    %190 = math.exp %189 : vector<8x128xf32>
    %cst_69 = arith.constant 1.000000e+00 : f32
    %191 = vector.broadcast %cst_69 : f32 to vector<8x128xf32>
    %192 = arith.addf %191, %190 : vector<8x128xf32>
    %193 = arith.divf %191, %192 : vector<8x128xf32>
    %194 = vector.extract_strided_slice %187 {offsets = [0, 128], sizes = [8, 128], strides = [1, 1]} : vector<8x512xf32> to vector<8x128xf32>
    %195 = arith.negf %194 : vector<8x128xf32>
    %196 = math.exp %195 : vector<8x128xf32>
    %cst_70 = arith.constant 1.000000e+00 : f32
    %197 = vector.broadcast %cst_70 : f32 to vector<8x128xf32>
    %198 = arith.addf %197, %196 : vector<8x128xf32>
    %199 = arith.divf %197, %198 : vector<8x128xf32>
    %200 = vector.extract_strided_slice %187 {offsets = [0, 256], sizes = [8, 128], strides = [1, 1]} : vector<8x512xf32> to vector<8x128xf32>
    %201 = math.tanh %200 : vector<8x128xf32>
    %202 = vector.extract_strided_slice %187 {offsets = [0, 384], sizes = [8, 128], strides = [1, 1]} : vector<8x512xf32> to vector<8x128xf32>
    %203 = arith.negf %202 : vector<8x128xf32>
    %204 = math.exp %203 : vector<8x128xf32>
    %cst_71 = arith.constant 1.000000e+00 : f32
    %205 = vector.broadcast %cst_71 : f32 to vector<8x128xf32>
    %206 = arith.addf %205, %204 : vector<8x128xf32>
    %207 = arith.divf %205, %206 : vector<8x128xf32>
    %208 = arith.mulf %199, %169 : vector<8x128xf32>
    %209 = arith.mulf %193, %201 : vector<8x128xf32>
    %210 = arith.addf %208, %209 : vector<8x128xf32>
    %211 = math.tanh %210 : vector<8x128xf32>
    %212 = arith.mulf %207, %211 : vector<8x128xf32>
    %c0_72 = arith.constant 0 : index
    %213 = arith.index_cast %180 : i32 to index
    %c0_73 = arith.constant 0 : index
    %214 = vector.load %arg5[%c0_72, %213, %c0_73] : memref<1x64x128xf32, #tpu.memory_space<vmem>>, vector<1x8x128xf32>
    %215 = vector.shape_cast %214 : vector<1x8x128xf32> to vector<8x128xf32>
    %216 = vector.shape_cast %212 : vector<8x128xf32> to vector<1x8x128xf32>
    tpu.vector_store %arg5[%c0_72, %213, %c0_73], %216 {strides = array<i32>} : memref<1x64x128xf32, #tpu.memory_space<vmem>>, vector<1x8x128xf32>,
    %c5_i32 = arith.constant 5 : i32
    %c0_i32_74 = arith.constant 0 : i32
    %217 = arith.cmpi eq, %arg0, %c0_i32_74 : i32
    %c7_i32_75 = arith.constant 7 : i32
    %218 = arith.subi %c7_i32_75, %c5_i32 : i32
    %219 = arith.select %217, %c5_i32, %218 : i32
    %c8_i32_76 = arith.constant 8 : i32
    %220 = arith.muli %219, %c8_i32_76 : i32
    %221 = tpu.assume_multiple %220, 8 : i32
    %222 = arith.index_cast %221 : i32 to index
    %c0_77 = arith.constant 0 : index
    %223 = vector.load %arg6[%222, %c0_77] : memref<64x512xf32, #tpu.memory_space<vmem>>, vector<8x512xf32>
    %224 = arith.truncf %212 : vector<8x128xf32> to vector<8x128xbf16>
    %c0_78 = arith.constant 0 : index
    %c0_79 = arith.constant 0 : index
    %c0_80 = arith.constant 0 : index
    %225 = vector.load %arg3[%c0_78, %c0_79, %c0_80] : memref<1x128x512xbf16, #tpu.memory_space<vmem>>, vector<1x128x512xbf16>
    %226 = vector.shape_cast %225 : vector<1x128x512xbf16> to vector<128x512xbf16>
    %cst_81 = arith.constant dense<0.000000e+00> : vector<8x512xf32>
    %227 = tpu.matmul %224, %226, %cst_81 {dimension_numbers = #tpu.dot_dimension_numbers<[1], [0], [0], [1], [0, 0, 1, 1], [], []>} : vector<8x128xbf16>, vector<128x512xbf16>, vector<8x512xf32> -> vector<8x512xf32>
    %228 = arith.addf %223, %227 : vector<8x512xf32>
    %229 = vector.extract_strided_slice %228 {offsets = [0, 0], sizes = [8, 128], strides = [1, 1]} : vector<8x512xf32> to vector<8x128xf32>
    %230 = arith.negf %229 : vector<8x128xf32>
    %231 = math.exp %230 : vector<8x128xf32>
    %cst_82 = arith.constant 1.000000e+00 : f32
    %232 = vector.broadcast %cst_82 : f32 to vector<8x128xf32>
    %233 = arith.addf %232, %231 : vector<8x128xf32>
    %234 = arith.divf %232, %233 : vector<8x128xf32>
    %235 = vector.extract_strided_slice %228 {offsets = [0, 128], sizes = [8, 128], strides = [1, 1]} : vector<8x512xf32> to vector<8x128xf32>
    %236 = arith.negf %235 : vector<8x128xf32>
    %237 = math.exp %236 : vector<8x128xf32>
    %cst_83 = arith.constant 1.000000e+00 : f32
    %238 = vector.broadcast %cst_83 : f32 to vector<8x128xf32>
    %239 = arith.addf %238, %237 : vector<8x128xf32>
    %240 = arith.divf %238, %239 : vector<8x128xf32>
    %241 = vector.extract_strided_slice %228 {offsets = [0, 256], sizes = [8, 128], strides = [1, 1]} : vector<8x512xf32> to vector<8x128xf32>
    %242 = math.tanh %241 : vector<8x128xf32>
    %243 = vector.extract_strided_slice %228 {offsets = [0, 384], sizes = [8, 128], strides = [1, 1]} : vector<8x512xf32> to vector<8x128xf32>
    %244 = arith.negf %243 : vector<8x128xf32>
    %245 = math.exp %244 : vector<8x128xf32>
    %cst_84 = arith.constant 1.000000e+00 : f32
    %246 = vector.broadcast %cst_84 : f32 to vector<8x128xf32>
    %247 = arith.addf %246, %245 : vector<8x128xf32>
    %248 = arith.divf %246, %247 : vector<8x128xf32>
    %249 = arith.mulf %240, %210 : vector<8x128xf32>
    %250 = arith.mulf %234, %242 : vector<8x128xf32>
    %251 = arith.addf %249, %250 : vector<8x128xf32>
    %252 = math.tanh %251 : vector<8x128xf32>
    %253 = arith.mulf %248, %252 : vector<8x128xf32>
    %c0_85 = arith.constant 0 : index
    %254 = arith.index_cast %221 : i32 to index
    %c0_86 = arith.constant 0 : index
    %255 = vector.load %arg5[%c0_85, %254, %c0_86] : memref<1x64x128xf32, #tpu.memory_space<vmem>>, vector<1x8x128xf32>
    %256 = vector.shape_cast %255 : vector<1x8x128xf32> to vector<8x128xf32>
    %257 = vector.shape_cast %253 : vector<8x128xf32> to vector<1x8x128xf32>
    tpu.vector_store %arg5[%c0_85, %254, %c0_86], %257 {strides = array<i32>} : memref<1x64x128xf32, #tpu.memory_space<vmem>>, vector<1x8x128xf32>,
    %c6_i32 = arith.constant 6 : i32
    %c0_i32_87 = arith.constant 0 : i32
    %258 = arith.cmpi eq, %arg0, %c0_i32_87 : i32
    %c7_i32_88 = arith.constant 7 : i32
    %259 = arith.subi %c7_i32_88, %c6_i32 : i32
    %260 = arith.select %258, %c6_i32, %259 : i32
    %c8_i32_89 = arith.constant 8 : i32
    %261 = arith.muli %260, %c8_i32_89 : i32
    %262 = tpu.assume_multiple %261, 8 : i32
    %263 = arith.index_cast %262 : i32 to index
    %c0_90 = arith.constant 0 : index
    %264 = vector.load %arg6[%263, %c0_90] : memref<64x512xf32, #tpu.memory_space<vmem>>, vector<8x512xf32>
    %265 = arith.truncf %253 : vector<8x128xf32> to vector<8x128xbf16>
    %c0_91 = arith.constant 0 : index
    %c0_92 = arith.constant 0 : index
    %c0_93 = arith.constant 0 : index
    %266 = vector.load %arg3[%c0_91, %c0_92, %c0_93] : memref<1x128x512xbf16, #tpu.memory_space<vmem>>, vector<1x128x512xbf16>
    %267 = vector.shape_cast %266 : vector<1x128x512xbf16> to vector<128x512xbf16>
    %cst_94 = arith.constant dense<0.000000e+00> : vector<8x512xf32>
    %268 = tpu.matmul %265, %267, %cst_94 {dimension_numbers = #tpu.dot_dimension_numbers<[1], [0], [0], [1], [0, 0, 1, 1], [], []>} : vector<8x128xbf16>, vector<128x512xbf16>, vector<8x512xf32> -> vector<8x512xf32>
    %269 = arith.addf %264, %268 : vector<8x512xf32>
    %270 = vector.extract_strided_slice %269 {offsets = [0, 0], sizes = [8, 128], strides = [1, 1]} : vector<8x512xf32> to vector<8x128xf32>
    %271 = arith.negf %270 : vector<8x128xf32>
    %272 = math.exp %271 : vector<8x128xf32>
    %cst_95 = arith.constant 1.000000e+00 : f32
    %273 = vector.broadcast %cst_95 : f32 to vector<8x128xf32>
    %274 = arith.addf %273, %272 : vector<8x128xf32>
    %275 = arith.divf %273, %274 : vector<8x128xf32>
    %276 = vector.extract_strided_slice %269 {offsets = [0, 128], sizes = [8, 128], strides = [1, 1]} : vector<8x512xf32> to vector<8x128xf32>
    %277 = arith.negf %276 : vector<8x128xf32>
    %278 = math.exp %277 : vector<8x128xf32>
    %cst_96 = arith.constant 1.000000e+00 : f32
    %279 = vector.broadcast %cst_96 : f32 to vector<8x128xf32>
    %280 = arith.addf %279, %278 : vector<8x128xf32>
    %281 = arith.divf %279, %280 : vector<8x128xf32>
    %282 = vector.extract_strided_slice %269 {offsets = [0, 256], sizes = [8, 128], strides = [1, 1]} : vector<8x512xf32> to vector<8x128xf32>
    %283 = math.tanh %282 : vector<8x128xf32>
    %284 = vector.extract_strided_slice %269 {offsets = [0, 384], sizes = [8, 128], strides = [1, 1]} : vector<8x512xf32> to vector<8x128xf32>
    %285 = arith.negf %284 : vector<8x128xf32>
    %286 = math.exp %285 : vector<8x128xf32>
    %cst_97 = arith.constant 1.000000e+00 : f32
    %287 = vector.broadcast %cst_97 : f32 to vector<8x128xf32>
    %288 = arith.addf %287, %286 : vector<8x128xf32>
    %289 = arith.divf %287, %288 : vector<8x128xf32>
    %290 = arith.mulf %281, %251 : vector<8x128xf32>
    %291 = arith.mulf %275, %283 : vector<8x128xf32>
    %292 = arith.addf %290, %291 : vector<8x128xf32>
    %293 = math.tanh %292 : vector<8x128xf32>
    %294 = arith.mulf %289, %293 : vector<8x128xf32>
    %c0_98 = arith.constant 0 : index
    %295 = arith.index_cast %262 : i32 to index
    %c0_99 = arith.constant 0 : index
    %296 = vector.load %arg5[%c0_98, %295, %c0_99] : memref<1x64x128xf32, #tpu.memory_space<vmem>>, vector<1x8x128xf32>
    %297 = vector.shape_cast %296 : vector<1x8x128xf32> to vector<8x128xf32>
    %298 = vector.shape_cast %294 : vector<8x128xf32> to vector<1x8x128xf32>
    tpu.vector_store %arg5[%c0_98, %295, %c0_99], %298 {strides = array<i32>} : memref<1x64x128xf32, #tpu.memory_space<vmem>>, vector<1x8x128xf32>,
    %c7_i32_100 = arith.constant 7 : i32
    %c0_i32_101 = arith.constant 0 : i32
    %299 = arith.cmpi eq, %arg0, %c0_i32_101 : i32
    %c7_i32_102 = arith.constant 7 : i32
    %300 = arith.subi %c7_i32_102, %c7_i32_100 : i32
    %301 = arith.select %299, %c7_i32_100, %300 : i32
    %c8_i32_103 = arith.constant 8 : i32
    %302 = arith.muli %301, %c8_i32_103 : i32
    %303 = tpu.assume_multiple %302, 8 : i32
    %304 = arith.index_cast %303 : i32 to index
    %c0_104 = arith.constant 0 : index
    %305 = vector.load %arg6[%304, %c0_104] : memref<64x512xf32, #tpu.memory_space<vmem>>, vector<8x512xf32>
    %306 = arith.truncf %294 : vector<8x128xf32> to vector<8x128xbf16>
    %c0_105 = arith.constant 0 : index
    %c0_106 = arith.constant 0 : index
    %c0_107 = arith.constant 0 : index
    %307 = vector.load %arg3[%c0_105, %c0_106, %c0_107] : memref<1x128x512xbf16, #tpu.memory_space<vmem>>, vector<1x128x512xbf16>
    %308 = vector.shape_cast %307 : vector<1x128x512xbf16> to vector<128x512xbf16>
    %cst_108 = arith.constant dense<0.000000e+00> : vector<8x512xf32>
    %309 = tpu.matmul %306, %308, %cst_108 {dimension_numbers = #tpu.dot_dimension_numbers<[1], [0], [0], [1], [0, 0, 1, 1], [], []>} : vector<8x128xbf16>, vector<128x512xbf16>, vector<8x512xf32> -> vector<8x512xf32>
    %310 = arith.addf %305, %309 : vector<8x512xf32>
    %311 = vector.extract_strided_slice %310 {offsets = [0, 0], sizes = [8, 128], strides = [1, 1]} : vector<8x512xf32> to vector<8x128xf32>
    %312 = arith.negf %311 : vector<8x128xf32>
    %313 = math.exp %312 : vector<8x128xf32>
    %cst_109 = arith.constant 1.000000e+00 : f32
    %314 = vector.broadcast %cst_109 : f32 to vector<8x128xf32>
    %315 = arith.addf %314, %313 : vector<8x128xf32>
    %316 = arith.divf %314, %315 : vector<8x128xf32>
    %317 = vector.extract_strided_slice %310 {offsets = [0, 128], sizes = [8, 128], strides = [1, 1]} : vector<8x512xf32> to vector<8x128xf32>
    %318 = arith.negf %317 : vector<8x128xf32>
    %319 = math.exp %318 : vector<8x128xf32>
    %cst_110 = arith.constant 1.000000e+00 : f32
    %320 = vector.broadcast %cst_110 : f32 to vector<8x128xf32>
    %321 = arith.addf %320, %319 : vector<8x128xf32>
    %322 = arith.divf %320, %321 : vector<8x128xf32>
    %323 = vector.extract_strided_slice %310 {offsets = [0, 256], sizes = [8, 128], strides = [1, 1]} : vector<8x512xf32> to vector<8x128xf32>
    %324 = math.tanh %323 : vector<8x128xf32>
    %325 = vector.extract_strided_slice %310 {offsets = [0, 384], sizes = [8, 128], strides = [1, 1]} : vector<8x512xf32> to vector<8x128xf32>
    %326 = arith.negf %325 : vector<8x128xf32>
    %327 = math.exp %326 : vector<8x128xf32>
    %cst_111 = arith.constant 1.000000e+00 : f32
    %328 = vector.broadcast %cst_111 : f32 to vector<8x128xf32>
    %329 = arith.addf %328, %327 : vector<8x128xf32>
    %330 = arith.divf %328, %329 : vector<8x128xf32>
    %331 = arith.mulf %322, %292 : vector<8x128xf32>
    %332 = arith.mulf %316, %324 : vector<8x128xf32>
    %333 = arith.addf %331, %332 : vector<8x128xf32>
    %334 = math.tanh %333 : vector<8x128xf32>
    %335 = arith.mulf %330, %334 : vector<8x128xf32>
    %c0_112 = arith.constant 0 : index
    %336 = arith.index_cast %303 : i32 to index
    %c0_113 = arith.constant 0 : index
    %337 = vector.load %arg5[%c0_112, %336, %c0_113] : memref<1x64x128xf32, #tpu.memory_space<vmem>>, vector<1x8x128xf32>
    %338 = vector.shape_cast %337 : vector<1x8x128xf32> to vector<8x128xf32>
    %339 = vector.shape_cast %335 : vector<8x128xf32> to vector<1x8x128xf32>
    tpu.vector_store %arg5[%c0_112, %336, %c0_113], %339 {strides = array<i32>} : memref<1x64x128xf32, #tpu.memory_space<vmem>>, vector<1x8x128xf32>,
    %c8_i32_114 = arith.constant 8 : i32
    return
  }
  func.func @transform_0(%arg0: i32) -> (i32, i32) {
    %c0_i32 = arith.constant 0 : i32
    %c0_i32_0 = arith.constant 0 : i32
    %c0_i32_1 = arith.constant 0 : i32
    return %c0_i32, %c0_i32_0 : i32, i32
  }
  func.func @transform_1(%arg0: i32) -> (i32, i32, i32) {
    %c0_i32 = arith.constant 0 : i32
    %c0_i32_0 = arith.constant 0 : i32
    %c0_i32_1 = arith.constant 0 : i32
    return %arg0, %c0_i32, %c0_i32_0 : i32, i32, i32
  }
  func.func @transform_2(%arg0: i32) -> (i32, i32, i32) {
    %c0_i32 = arith.constant 0 : i32
    %c0_i32_0 = arith.constant 0 : i32
    %c0_i32_1 = arith.constant 0 : i32
    return %arg0, %c0_i32, %c0_i32_0 : i32, i32, i32
  }
  func.func @transform_3(%arg0: i32) -> (i32, i32, i32) {
    %c0_i32 = arith.constant 0 : i32
    %c0_i32_0 = arith.constant 0 : i32
    %c0_i32_1 = arith.constant 0 : i32
    return %arg0, %c0_i32, %c0_i32_0 : i32, i32, i32
  }
  func.func @transform_4(%arg0: i32) -> (i32, i32, i32) {
    %c0_i32 = arith.constant 0 : i32
    %c0_i32_0 = arith.constant 0 : i32
    %c0_i32_1 = arith.constant 0 : i32
    return %arg0, %c0_i32, %c0_i32_0 : i32, i32, i32
  }
}

module attributes {stable_mosaic.version = 11 : i64} {
  func.func @_fc_kernel(%arg0: memref<8x64xf32, #tpu.memory_space<vmem>>, %arg1: memref<64x64xbf16, #tpu.memory_space<vmem>>, %arg2: memref<1x64xf32, #tpu.memory_space<vmem>>, %arg3: memref<1x64xf32, #tpu.memory_space<vmem>>, %arg4: memref<1x64xf32, #tpu.memory_space<vmem>>, %arg5: memref<64x32xbf16, #tpu.memory_space<vmem>>, %arg6: memref<1x32xf32, #tpu.memory_space<vmem>>, %arg7: memref<1x32xf32, #tpu.memory_space<vmem>>, %arg8: memref<1x32xf32, #tpu.memory_space<vmem>>, %arg9: memref<32x1xbf16, #tpu.memory_space<vmem>>, %arg10: memref<1x1xf32, #tpu.memory_space<vmem>>, %arg11: memref<8x1xf32, #tpu.memory_space<vmem>>) attributes {dimension_semantics = [], scalar_prefetch = 0 : i64, scratch_operands = 0 : i64, tpu.core_type = #tpu.core_type<tc>} {
    %c0 = arith.constant 0 : index
    %c0_0 = arith.constant 0 : index
    %0 = vector.load %arg0[%c0, %c0_0] : memref<8x64xf32, #tpu.memory_space<vmem>>, vector<8x64xf32>
    %1 = arith.truncf %0 : vector<8x64xf32> to vector<8x64xbf16>
    %c0_1 = arith.constant 0 : index
    %c0_2 = arith.constant 0 : index
    %2 = vector.load %arg1[%c0_1, %c0_2] : memref<64x64xbf16, #tpu.memory_space<vmem>>, vector<64x64xbf16>
    %cst = arith.constant dense<0.000000e+00> : vector<8x64xf32>
    %3 = tpu.matmul %1, %2, %cst {dimension_numbers = #tpu.dot_dimension_numbers<[1], [0], [0], [1], [0, 0, 1, 1], [], []>} : vector<8x64xbf16>, vector<64x64xbf16>, vector<8x64xf32> -> vector<8x64xf32>
    %c0_3 = arith.constant 0 : index
    %c0_4 = arith.constant 0 : index
    %4 = vector.load %arg2[%c0_3, %c0_4] : memref<1x64xf32, #tpu.memory_space<vmem>>, vector<1x64xf32>
    %5 = vector.broadcast %4 : vector<1x64xf32> to vector<8x64xf32>
    %6 = arith.addf %3, %5 : vector<8x64xf32>
    %c0_5 = arith.constant 0 : index
    %c0_6 = arith.constant 0 : index
    %7 = vector.load %arg3[%c0_5, %c0_6] : memref<1x64xf32, #tpu.memory_space<vmem>>, vector<1x64xf32>
    %c0_7 = arith.constant 0 : index
    %c0_8 = arith.constant 0 : index
    %8 = vector.load %arg4[%c0_7, %c0_8] : memref<1x64xf32, #tpu.memory_space<vmem>>, vector<1x64xf32>
    %cst_9 = arith.constant dense<0.000000e+00> : vector<8xf32>
    %9 = vector.multi_reduction <add>, %6, %cst_9 [1] : vector<8x64xf32> to vector<8xf32>
    %10 = vector.shape_cast %9 : vector<8xf32> to vector<8x1xf32>
    %cst_10 = arith.constant 6.400000e+01 : f32
    %11 = vector.broadcast %cst_10 : f32 to vector<8x1xf32>
    %12 = arith.divf %10, %11 : vector<8x1xf32>
    %13 = arith.mulf %6, %6 : vector<8x64xf32>
    %cst_11 = arith.constant dense<0.000000e+00> : vector<8xf32>
    %14 = vector.multi_reduction <add>, %13, %cst_11 [1] : vector<8x64xf32> to vector<8xf32>
    %15 = vector.shape_cast %14 : vector<8xf32> to vector<8x1xf32>
    %cst_12 = arith.constant 6.400000e+01 : f32
    %16 = vector.broadcast %cst_12 : f32 to vector<8x1xf32>
    %17 = arith.divf %15, %16 : vector<8x1xf32>
    %18 = arith.mulf %12, %12 : vector<8x1xf32>
    %19 = arith.subf %17, %18 : vector<8x1xf32>
    %20 = vector.broadcast %12 : vector<8x1xf32> to vector<8x64xf32>
    %21 = arith.subf %6, %20 : vector<8x64xf32>
    %cst_13 = arith.constant 9.99999974E-6 : f32
    %22 = vector.broadcast %cst_13 : f32 to vector<8x1xf32>
    %23 = arith.addf %19, %22 : vector<8x1xf32>
    %24 = math.rsqrt %23 : vector<8x1xf32>
    %25 = vector.broadcast %24 : vector<8x1xf32> to vector<8x64xf32>
    %26 = arith.mulf %21, %25 : vector<8x64xf32>
    %27 = vector.broadcast %7 : vector<1x64xf32> to vector<8x64xf32>
    %28 = arith.mulf %26, %27 : vector<8x64xf32>
    %29 = vector.broadcast %8 : vector<1x64xf32> to vector<8x64xf32>
    %30 = arith.addf %28, %29 : vector<8x64xf32>
    %31 = arith.negf %30 : vector<8x64xf32>
    %32 = math.exp %31 : vector<8x64xf32>
    %cst_14 = arith.constant 1.000000e+00 : f32
    %33 = vector.broadcast %cst_14 : f32 to vector<8x64xf32>
    %34 = arith.addf %33, %32 : vector<8x64xf32>
    %35 = arith.divf %33, %34 : vector<8x64xf32>
    %36 = arith.mulf %30, %35 : vector<8x64xf32>
    %37 = arith.truncf %36 : vector<8x64xf32> to vector<8x64xbf16>
    %c0_15 = arith.constant 0 : index
    %c0_16 = arith.constant 0 : index
    %38 = vector.load %arg5[%c0_15, %c0_16] : memref<64x32xbf16, #tpu.memory_space<vmem>>, vector<64x32xbf16>
    %cst_17 = arith.constant dense<0.000000e+00> : vector<8x32xf32>
    %39 = tpu.matmul %37, %38, %cst_17 {dimension_numbers = #tpu.dot_dimension_numbers<[1], [0], [0], [1], [0, 0, 1, 1], [], []>} : vector<8x64xbf16>, vector<64x32xbf16>, vector<8x32xf32> -> vector<8x32xf32>
    %c0_18 = arith.constant 0 : index
    %c0_19 = arith.constant 0 : index
    %40 = vector.load %arg6[%c0_18, %c0_19] : memref<1x32xf32, #tpu.memory_space<vmem>>, vector<1x32xf32>
    %41 = vector.broadcast %40 : vector<1x32xf32> to vector<8x32xf32>
    %42 = arith.addf %39, %41 : vector<8x32xf32>
    %c0_20 = arith.constant 0 : index
    %c0_21 = arith.constant 0 : index
    %43 = vector.load %arg7[%c0_20, %c0_21] : memref<1x32xf32, #tpu.memory_space<vmem>>, vector<1x32xf32>
    %c0_22 = arith.constant 0 : index
    %c0_23 = arith.constant 0 : index
    %44 = vector.load %arg8[%c0_22, %c0_23] : memref<1x32xf32, #tpu.memory_space<vmem>>, vector<1x32xf32>
    %cst_24 = arith.constant dense<0.000000e+00> : vector<8xf32>
    %45 = vector.multi_reduction <add>, %42, %cst_24 [1] : vector<8x32xf32> to vector<8xf32>
    %46 = vector.shape_cast %45 : vector<8xf32> to vector<8x1xf32>
    %cst_25 = arith.constant 3.200000e+01 : f32
    %47 = vector.broadcast %cst_25 : f32 to vector<8x1xf32>
    %48 = arith.divf %46, %47 : vector<8x1xf32>
    %49 = arith.mulf %42, %42 : vector<8x32xf32>
    %cst_26 = arith.constant dense<0.000000e+00> : vector<8xf32>
    %50 = vector.multi_reduction <add>, %49, %cst_26 [1] : vector<8x32xf32> to vector<8xf32>
    %51 = vector.shape_cast %50 : vector<8xf32> to vector<8x1xf32>
    %cst_27 = arith.constant 3.200000e+01 : f32
    %52 = vector.broadcast %cst_27 : f32 to vector<8x1xf32>
    %53 = arith.divf %51, %52 : vector<8x1xf32>
    %54 = arith.mulf %48, %48 : vector<8x1xf32>
    %55 = arith.subf %53, %54 : vector<8x1xf32>
    %56 = vector.broadcast %48 : vector<8x1xf32> to vector<8x32xf32>
    %57 = arith.subf %42, %56 : vector<8x32xf32>
    %cst_28 = arith.constant 9.99999974E-6 : f32
    %58 = vector.broadcast %cst_28 : f32 to vector<8x1xf32>
    %59 = arith.addf %55, %58 : vector<8x1xf32>
    %60 = math.rsqrt %59 : vector<8x1xf32>
    %61 = vector.broadcast %60 : vector<8x1xf32> to vector<8x32xf32>
    %62 = arith.mulf %57, %61 : vector<8x32xf32>
    %63 = vector.broadcast %43 : vector<1x32xf32> to vector<8x32xf32>
    %64 = arith.mulf %62, %63 : vector<8x32xf32>
    %65 = vector.broadcast %44 : vector<1x32xf32> to vector<8x32xf32>
    %66 = arith.addf %64, %65 : vector<8x32xf32>
    %67 = arith.negf %66 : vector<8x32xf32>
    %68 = math.exp %67 : vector<8x32xf32>
    %cst_29 = arith.constant 1.000000e+00 : f32
    %69 = vector.broadcast %cst_29 : f32 to vector<8x32xf32>
    %70 = arith.addf %69, %68 : vector<8x32xf32>
    %71 = arith.divf %69, %70 : vector<8x32xf32>
    %72 = arith.mulf %66, %71 : vector<8x32xf32>
    %73 = arith.truncf %72 : vector<8x32xf32> to vector<8x32xbf16>
    %c0_30 = arith.constant 0 : index
    %c0_31 = arith.constant 0 : index
    %74 = vector.load %arg9[%c0_30, %c0_31] : memref<32x1xbf16, #tpu.memory_space<vmem>>, vector<32x1xbf16>
    %cst_32 = arith.constant dense<0.000000e+00> : vector<8x1xf32>
    %75 = tpu.matmul %73, %74, %cst_32 {dimension_numbers = #tpu.dot_dimension_numbers<[1], [0], [0], [1], [0, 0, 1, 1], [], []>} : vector<8x32xbf16>, vector<32x1xbf16>, vector<8x1xf32> -> vector<8x1xf32>
    %c0_33 = arith.constant 0 : index
    %c0_34 = arith.constant 0 : index
    %76 = vector.load %arg10[%c0_33, %c0_34] : memref<1x1xf32, #tpu.memory_space<vmem>>, vector<1x1xf32>
    %77 = vector.broadcast %76 : vector<1x1xf32> to vector<8x1xf32>
    %78 = arith.addf %75, %77 : vector<8x1xf32>
    %c0_35 = arith.constant 0 : index
    %c0_36 = arith.constant 0 : index
    %79 = vector.load %arg11[%c0_35, %c0_36] : memref<8x1xf32, #tpu.memory_space<vmem>>, vector<8x1xf32>
    tpu.vector_store %arg11[%c0_35, %c0_36], %78 {strides = array<i32>} : memref<8x1xf32, #tpu.memory_space<vmem>>, vector<8x1xf32>,
    return
  }
}

</mosaic_0001>

<llo_original>
// kernel: optimized_lstm_forward.5
$region0: #{optimized_lstm_forward.5}
  #allocation0 [shape = 'u32[]', space=smem, size = 0x4, offset = 0x4, fixed_abs, tag = 'smem constant byte address 0x4 - core index']
  #allocation1 [shape = 'u32[144,128]{1,0:T(1,128)}', space=vmem, size = 0x12000, scoped, tag = 'internal scratch']
  #allocation2 [shape = 'f32[1,1]{1,0:T(1,128)S(1)}', space=vmem, size = 0x200, scoped, tag = 'scoped memory for optimized_lstm_forward.5']
  %s0 = inlined_call_operand.vmem [shape: f32[8,64], index: 0, kind: input, shape index: {}]
  %s1 = inlined_call_operand.vmem [shape: bf16[64,64], index: 1, kind: input, shape index: {}]
  %s2 = inlined_call_operand.vmem [shape: f32[1,64], index: 2, kind: input, shape index: {}]
  %s3 = inlined_call_operand.vmem [shape: f32[1,64], index: 3, kind: input, shape index: {}]
  %s4 = inlined_call_operand.vmem [shape: f32[1,64], index: 4, kind: input, shape index: {}]
  %s5 = inlined_call_operand.vmem [shape: bf16[64,32], index: 5, kind: input, shape index: {}]
  %s6 = inlined_call_operand.vmem [shape: f32[1,32], index: 6, kind: input, shape index: {}]
  %s7 = inlined_call_operand.vmem [shape: f32[1,32], index: 7, kind: input, shape index: {}]
  %s8 = inlined_call_operand.vmem [shape: f32[1,32], index: 8, kind: input, shape index: {}]
  %s9 = inlined_call_operand.vmem [shape: bf16[32,1], index: 9, kind: input, shape index: {}]
  %s10 = inlined_call_operand.<no memory space> [shape: f32[1,1], index: 10, kind: input, shape index: {}]
  %s11 = inlined_call_operand.vmem [shape: f32[8,1], index: 11, kind: output, shape index: {}]
  %s12 = sld [smem:[#allocation0]]
  $region54: #{optimized_lstm_forward.5} parent=0
    _
  %s14 = ssub.s32 1, %s12
  %s15 = scalar_select 0, %s14, %s12
  %v16 = vstv %s10
  %17 = vst [vmem:[#allocation2] sm:$0x1] %v16
  // Predicated region
  $region2: #{optimized_lstm_forward.5} parent=0 // pred_check
    _
  $region3: #{optimized_lstm_forward.5} parent=0 // pred_check_branch
    %19 = sbr.rel (0) target = $region5
  $region4: #{optimized_lstm_forward.5} parent=0 // pred_region
    _
  $region5: #{optimized_lstm_forward.5} parent=0 // pred_fallthru
    _
  // Predicated region
  $region6: #{optimized_lstm_forward.5} parent=0 // pred_check
    _
  $region7: #{optimized_lstm_forward.5} parent=0 // pred_check_branch
    %21 = sbr.rel (0) target = $region9
  $region8: #{optimized_lstm_forward.5} parent=0 // pred_region
    _
  $region9: #{optimized_lstm_forward.5} parent=0 // pred_fallthru
    _
  // Predicated region
  $region10: #{optimized_lstm_forward.5} parent=0 // pred_check
    _
  $region11: #{optimized_lstm_forward.5} parent=0 // pred_check_branch
    %23 = sbr.rel (0) target = $region13
  $region12: #{optimized_lstm_forward.5} parent=0 // pred_region
    _
  $region13: #{optimized_lstm_forward.5} parent=0 // pred_fallthru
    _
  // Predicated region
  $region14: #{optimized_lstm_forward.5} parent=0 // pred_check
    _
  $region15: #{optimized_lstm_forward.5} parent=0 // pred_check_branch
    %25 = sbr.rel (0) target = $region17
  $region16: #{optimized_lstm_forward.5} parent=0 // pred_region
    _
  $region17: #{optimized_lstm_forward.5} parent=0 // pred_fallthru
    _
  // Predicated region
  $region18: #{optimized_lstm_forward.5} parent=0 // pred_check
    _
  $region19: #{optimized_lstm_forward.5} parent=0 // pred_check_branch
    %27 = sbr.rel (0) target = $region21
  $region20: #{optimized_lstm_forward.5} parent=0 // pred_region
    _
  $region21: #{optimized_lstm_forward.5} parent=0 // pred_fallthru
    _
  // Predicated region
  $region22: #{optimized_lstm_forward.5} parent=0 // pred_check
    _
  $region23: #{optimized_lstm_forward.5} parent=0 // pred_check_branch
    %29 = sbr.rel (0) target = $region25
  $region24: #{optimized_lstm_forward.5} parent=0 // pred_region
    _
  $region25: #{optimized_lstm_forward.5} parent=0 // pred_fallthru
    _
  // Predicated region
  $region26: #{optimized_lstm_forward.5} parent=0 // pred_check
    _
  $region27: #{optimized_lstm_forward.5} parent=0 // pred_check_branch
    %31 = sbr.rel (0) target = $region29
  $region28: #{optimized_lstm_forward.5} parent=0 // pred_region
    _
  $region29: #{optimized_lstm_forward.5} parent=0 // pred_fallthru
    _
  // Predicated region
  $region30: #{optimized_lstm_forward.5} parent=0 // pred_check
    _
  $region31: #{optimized_lstm_forward.5} parent=0 // pred_check_branch
    %33 = sbr.rel (0) target = $region33
  $region32: #{optimized_lstm_forward.5} parent=0 // pred_region
    _
  $region33: #{optimized_lstm_forward.5} parent=0 // pred_fallthru
    _
  // Predicated region
  $region34: #{optimized_lstm_forward.5} parent=0 // pred_check
    _
  $region35: #{optimized_lstm_forward.5} parent=0 // pred_check_branch
    %35 = sbr.rel (0) target = $region37
  $region36: #{optimized_lstm_forward.5} parent=0 // pred_region
    _
  $region37: #{optimized_lstm_forward.5} parent=0 // pred_fallthru
    _
  // Predicated region
  $region38: #{optimized_lstm_forward.5} parent=0 // pred_check
    _
  $region39: #{optimized_lstm_forward.5} parent=0 // pred_check_branch
    %37 = sbr.rel (0) target = $region41
  $region40: #{optimized_lstm_forward.5} parent=0 // pred_region
    _
  $region41: #{optimized_lstm_forward.5} parent=0 // pred_fallthru
    _
  // Predicated region
  $region42: #{optimized_lstm_forward.5} parent=0 // pred_check
    _
  $region43: #{optimized_lstm_forward.5} parent=0 // pred_check_branch
    %39 = sbr.rel (0) target = $region45
  $region44: #{optimized_lstm_forward.5} parent=0 // pred_region
    _
  $region45: #{optimized_lstm_forward.5} parent=0 // pred_fallthru
    _
  %v41 = vld [vmem:[%s0] sm:$0xff]
  %v42 = vpack.c.bf16 %v41, %v41
  %v43 = vld [vmem:[%s1] sm:$0xf]
  %v44 = vld [vmem:[%s1 + $0x4] sm:$0xf]
  %v45 = vld [vmem:[%s1 + $0x8] sm:$0xf]
  %v46 = vld [vmem:[%s1 + $0xc] sm:$0xf]
  %v47 = vld [vmem:[%s1 + $0x10] sm:$0xf]
  %v48 = vld [vmem:[%s1 + $0x14] sm:$0xf]
  %v49 = vld [vmem:[%s1 + $0x18] sm:$0xf]
  %v50 = vld [vmem:[%s1 + $0x1c] sm:$0xf]
  %v51 = vld [vmem:[%s2] sm:$0x1]
  %v53 = vlaneseq
  %v54 = vshrl.u32 %v53, 7
  %v55 = vsub.s32 0, %v54
  %v56 = vrot.slane %v51, %v55
  %v66 = vunpack.c.l.b16 %v43
  %v67 = vunpack.c.l.b16 %v44
  %v68 = vunpack.c.l.b16 %v45
  %v69 = vunpack.c.l.b16 %v46
  %v70 = vunpack.c.l.b16 %v47
  %v71 = vunpack.c.l.b16 %v48
  %v72 = vunpack.c.l.b16 %v49
  %v73 = vunpack.c.l.b16 %v50
  %v74 = vpack.c.b16 %v67, %v66
  %v75 = vpack.c.b16 %v69, %v68
  %v76 = vpack.c.b16 %v71, %v70
  %v77 = vpack.c.b16 %v73, %v72
  %vm82 = vcmask 523264
  %v84 = vsel %vm82, %v42, 0
  %86 = vmatprep.subr.bf16.mxu0 0
  %87 = vmatpush1.bf16.msra.mxu0 %v74
  %88 = vmatprep.subr.bf16.mxu0 0
  %89 = vmatpush1.bf16.msra.mxu0 %v75
  %90 = vmatprep.subr.bf16.mxu0 0
  %91 = vmatpush1.bf16.msra.mxu0 %v76
  %92 = vmatprep.subr.bf16.mxu0 0
  %93 = vmatpush1.bf16.msra.mxu0 %v77
  %94 = vmatprep.subr.bf16.mxu0 0
  %95 = vmatpush1.bf16.msra.mxu0 0
  %96 = vmatprep.subr.bf16.mxu0 0
  %97 = vmatpush1.bf16.msra.mxu0 0
  %98 = vmatprep.subr.bf16.mxu0 0
  %99 = vmatpush1.bf16.msra.mxu0 0
  %100 = vmatprep.subr.bf16.mxu0 0
  %101 = vmatpush1.bf16.msra.mxu0 0
  %102 = vmatprep.subr.bf16.mxu0 0
  %103 = vmatpush1.bf16.msra.mxu0 0
  %104 = vmatprep.subr.bf16.mxu0 0
  %105 = vmatpush1.bf16.msra.mxu0 0
  %106 = vmatprep.subr.bf16.mxu0 0
  %107 = vmatpush1.bf16.msra.mxu0 0
  %108 = vmatprep.subr.bf16.mxu0 0
  %109 = vmatpush1.bf16.msra.mxu0 0
  %110 = vmatprep.subr.bf16.mxu0 0
  %111 = vmatpush1.bf16.msra.mxu0 0
  %112 = vmatprep.subr.bf16.mxu0 0
  %113 = vmatpush1.bf16.msra.mxu0 0
  %114 = vmatprep.subr.bf16.mxu0 0
  %115 = vmatpush1.bf16.msra.mxu0 0
  %116 = vmatprep.subr.bf16.mxu0 0
  %117 = vmatpush1.bf16.msra.mxu0 0
  %118 = vmatprep.mubr.bf16.mxu0 0
  %119 = vmatmul.mubr.bf16.gmra.mrb[0].mxu0 %v84
  %v120 = vpop.f32.mrb[0].mxu0
  %v121 = vadd.f32 %v56, %v120
  %v122 = vpop.f32.mrb[0].mxu0
  %v123 = vpop.f32.mrb[0].mxu0
  %v124 = vpop.f32.mrb[0].mxu0
  %125 = vdwg.mxu0
  %v126 = vld [vmem:[%s3] sm:$0x1]
  %v127 = vld [vmem:[%s4] sm:$0x1]
  %v128 = vsel %vm82, %v121, 0.0
  %129 = vadd.xlane.f32.xlu0 %v128
  %v130 = vpop.xlane.xlu0 %129
  %v131 = vrcp.pop 64.0
  %v132 = vmul.f32 %v130, %v131
  %v133 = vmul.f32 %v121, %v121
  %v134 = vsel %vm82, %v133, 0.0
  %135 = vadd.xlane.f32.xlu0 %v134
  %v136 = vpop.xlane.xlu0 %135
  %v137 = vmul.f32 %v136, %v131
  %v138 = vmul.f32 %v132, %v132
  %v139 = vsub.f32 %v137, %v138
  %v140 = vsub.f32 %v121, %v132
  %v141 = vadd.f32 %v139, 1e-05
  %v142 = vrsqrt.pop %v141
  %v143 = vmul.f32 %v140, %v142
  %v145 = vlaneseq
  %v146 = vshrl.u32 %v145, 7
  %v147 = vsub.s32 0, %v146
  %v148 = vrot.slane %v126, %v147
  %v150 = vmul.f32 %v143, %v148
  %v152 = vlaneseq
  %v153 = vshrl.u32 %v152, 7
  %v154 = vsub.s32 0, %v153
  %v155 = vrot.slane %v127, %v154
  %v157 = vadd.f32 %v150, %v155
  %v158 = vxor.u32 %v157, 2147483648
  %v159 = vmul.f32 %v158, 1.442695
  %v160 = vpow.pop %v159
  %v161 = vadd.f32 %v160, 1.0
  %v162 = vrcp.pop %v161
  %v163 = vmul.f32 1.0, %v162
  %v164 = vmul.f32 %v157, %v163
  %v165 = vpack.c.bf16 %v164, %v164
  %v166 = vld [vmem:[%s5] sm:$0xf]
  %v167 = vld [vmem:[%s5 + $0x4] sm:$0xf]
  %v168 = vld [vmem:[%s5 + $0x8] sm:$0xf]
  %v169 = vld [vmem:[%s5 + $0xc] sm:$0xf]
  %v170 = vld [vmem:[%s5 + $0x10] sm:$0xf]
  %v171 = vld [vmem:[%s5 + $0x14] sm:$0xf]
  %v172 = vld [vmem:[%s5 + $0x18] sm:$0xf]
  %v173 = vld [vmem:[%s5 + $0x1c] sm:$0xf]
  %v174 = vld [vmem:[%s6] sm:$0x1]
  %v176 = vlaneseq
  %v177 = vshrl.u32 %v176, 7
  %v178 = vsub.s32 0, %v177
  %v179 = vrot.slane %v174, %v178
  %v189 = vunpack.c.l.b16 %v166
  %v190 = vunpack.c.l.b16 %v167
  %v191 = vunpack.c.l.b16 %v168
  %v192 = vunpack.c.l.b16 %v169
  %v193 = vunpack.c.l.b16 %v170
  %v194 = vunpack.c.l.b16 %v171
  %v195 = vunpack.c.l.b16 %v172
  %v196 = vunpack.c.l.b16 %v173
  %v197 = vpack.c.b16 %v190, %v189
  %v198 = vpack.c.b16 %v192, %v191
  %v199 = vpack.c.b16 %v194, %v193
  %v200 = vpack.c.b16 %v196, %v195
  %v206 = vsel %vm82, %v165, 0
  %208 = vmatprep.subr.bf16.mxu0 0
  %209 = vmatpush1.bf16.msra.mxu0 %v197
  %210 = vmatprep.subr.bf16.mxu0 0
  %211 = vmatpush1.bf16.msra.mxu0 %v198
  %212 = vmatprep.subr.bf16.mxu0 0
  %213 = vmatpush1.bf16.msra.mxu0 %v199
  %214 = vmatprep.subr.bf16.mxu0 0
  %215 = vmatpush1.bf16.msra.mxu0 %v200
  %216 = vmatprep.subr.bf16.mxu0 0
  %217 = vmatpush1.bf16.msra.mxu0 0
  %218 = vmatprep.subr.bf16.mxu0 0
  %219 = vmatpush1.bf16.msra.mxu0 0
  %220 = vmatprep.subr.bf16.mxu0 0
  %221 = vmatpush1.bf16.msra.mxu0 0
  %222 = vmatprep.subr.bf16.mxu0 0
  %223 = vmatpush1.bf16.msra.mxu0 0
  %224 = vmatprep.subr.bf16.mxu0 0
  %225 = vmatpush1.bf16.msra.mxu0 0
  %226 = vmatprep.subr.bf16.mxu0 0
  %227 = vmatpush1.bf16.msra.mxu0 0
  %228 = vmatprep.subr.bf16.mxu0 0
  %229 = vmatpush1.bf16.msra.mxu0 0
  %230 = vmatprep.subr.bf16.mxu0 0
  %231 = vmatpush1.bf16.msra.mxu0 0
  %232 = vmatprep.subr.bf16.mxu0 0
  %233 = vmatpush1.bf16.msra.mxu0 0
  %234 = vmatprep.subr.bf16.mxu0 0
  %235 = vmatpush1.bf16.msra.mxu0 0
  %236 = vmatprep.subr.bf16.mxu0 0
  %237 = vmatpush1.bf16.msra.mxu0 0
  %238 = vmatprep.subr.bf16.mxu0 0
  %239 = vmatpush1.bf16.msra.mxu0 0
  %240 = vmatprep.mubr.bf16.mxu0 0
  %241 = vmatmul.mubr.bf16.gmra.mrb[0].mxu0 %v206
  %v242 = vpop.f32.mrb[0].mxu0
  %v243 = vadd.f32 %v179, %v242
  %v244 = vpop.f32.mrb[0].mxu0
  %v245 = vpop.f32.mrb[0].mxu0
  %v246 = vpop.f32.mrb[0].mxu0
  %247 = vdwg.mxu0
  %v248 = vld [vmem:[%s7] sm:$0x1]
  %v249 = vld [vmem:[%s8] sm:$0x1]
  %vm250 = vcmask 261120
  %v251 = vsel %vm250, %v243, 0.0
  %252 = vadd.xlane.f32.xlu0 %v251
  %v253 = vpop.xlane.xlu0 %252
  %v254 = vrcp.pop 32.0
  %v255 = vmul.f32 %v253, %v254
  %v256 = vmul.f32 %v243, %v243
  %v257 = vsel %vm250, %v256, 0.0
  %258 = vadd.xlane.f32.xlu0 %v257
  %v259 = vpop.xlane.xlu0 %258
  %v260 = vmul.f32 %v259, %v254
  %v261 = vmul.f32 %v255, %v255
  %v262 = vsub.f32 %v260, %v261
  %v263 = vsub.f32 %v243, %v255
  %v264 = vadd.f32 %v262, 1e-05
  %v265 = vrsqrt.pop %v264
  %v266 = vmul.f32 %v263, %v265
  %v268 = vlaneseq
  %v269 = vshrl.u32 %v268, 7
  %v270 = vsub.s32 0, %v269
  %v271 = vrot.slane %v248, %v270
  %v273 = vmul.f32 %v266, %v271
  %v275 = vlaneseq
  %v276 = vshrl.u32 %v275, 7
  %v277 = vsub.s32 0, %v276
  %v278 = vrot.slane %v249, %v277
  %v280 = vadd.f32 %v273, %v278
  %v281 = vxor.u32 %v280, 2147483648
  %v282 = vmul.f32 %v281, 1.442695
  %v283 = vpow.pop %v282
  %v284 = vadd.f32 %v283, 1.0
  %v285 = vrcp.pop %v284
  %v286 = vmul.f32 1.0, %v285
  %v287 = vmul.f32 %v280, %v286
  %v288 = vpack.c.bf16 %v287, %v287
  %v289 = vld [vmem:[%s9] sm:$0xf]
  %v290 = vld [vmem:[%s9 + $0x4] sm:$0xf]
  %v291 = vld [vmem:[%s9 + $0x8] sm:$0xf]
  %v292 = vld [vmem:[%s9 + $0xc] sm:$0xf]
  %v293 = vld [vmem:[#allocation2] sm:$0x1]
  %v295 = vlaneseq
  %v296 = vshrl.u32 %v295, 7
  %v297 = vsub.s32 0, %v296
  %v298 = vrot.slane %v293, %v297
  %v304 = vunpack.c.l.b16 %v289
  %v305 = vunpack.c.l.b16 %v290
  %v306 = vunpack.c.l.b16 %v291
  %v307 = vunpack.c.l.b16 %v292
  %v308 = vpack.c.b16 %v305, %v304
  %v309 = vpack.c.b16 %v307, %v306
  %v313 = vsel %vm250, %v288, 0
  %315 = vmatprep.subr.bf16.mxu0 0
  %316 = vmatpush1.bf16.msra.mxu0 %v308
  %317 = vmatprep.subr.bf16.mxu0 0
  %318 = vmatpush1.bf16.msra.mxu0 %v309
  %319 = vmatprep.subr.bf16.mxu0 0
  %320 = vmatpush1.bf16.msra.mxu0 0
  %321 = vmatprep.subr.bf16.mxu0 0
  %322 = vmatpush1.bf16.msra.mxu0 0
  %323 = vmatprep.subr.bf16.mxu0 0
  %324 = vmatpush1.bf16.msra.mxu0 0
  %325 = vmatprep.subr.bf16.mxu0 0
  %326 = vmatpush1.bf16.msra.mxu0 0
  %327 = vmatprep.subr.bf16.mxu0 0
  %328 = vmatpush1.bf16.msra.mxu0 0
  %329 = vmatprep.subr.bf16.mxu0 0
  %330 = vmatpush1.bf16.msra.mxu0 0
  %331 = vmatprep.subr.bf16.mxu0 0
  %332 = vmatpush1.bf16.msra.mxu0 0
  %333 = vmatprep.subr.bf16.mxu0 0
  %334 = vmatpush1.bf16.msra.mxu0 0
  %335 = vmatprep.subr.bf16.mxu0 0
  %336 = vmatpush1.bf16.msra.mxu0 0
  %337 = vmatprep.subr.bf16.mxu0 0
  %338 = vmatpush1.bf16.msra.mxu0 0
  %339 = vmatprep.subr.bf16.mxu0 0
  %340 = vmatpush1.bf16.msra.mxu0 0
  %341 = vmatprep.subr.bf16.mxu0 0
  %342 = vmatpush1.bf16.msra.mxu0 0
  %343 = vmatprep.subr.bf16.mxu0 0
  %344 = vmatpush1.bf16.msra.mxu0 0
  %345 = vmatprep.subr.bf16.mxu0 0
  %346 = vmatpush1.bf16.msra.mxu0 0
  %347 = vmatprep.mubr.bf16.mxu0 0
  %348 = vmatmul.mubr.bf16.gmra.mrb[0].mxu0 %v313
  %v349 = vpop.f32.mrb[0].mxu0
  %v350 = vadd.f32 %v298, %v349
  %v351 = vpop.f32.mrb[0].mxu0
  %v352 = vpop.f32.mrb[0].mxu0
  %v353 = vpop.f32.mrb[0].mxu0
  %354 = vdwg.mxu0
  %vm355 = vcmask 7168
  %356 = vst.msk [vmem:[%s11] sm:$0xff] %vm355, %v350
  // Predicated region
  $region46: #{optimized_lstm_forward.5} parent=0 // pred_check
    _
  $region47: #{optimized_lstm_forward.5} parent=0 // pred_check_branch
    %358 = sbr.rel (0) target = $region49
  $region48: #{optimized_lstm_forward.5} parent=0 // pred_region
    _
  $region49: #{optimized_lstm_forward.5} parent=0 // pred_fallthru
    _
  // Predicated region
  $region50: #{optimized_lstm_forward.5} parent=0 // pred_check
    _
  $region51: #{optimized_lstm_forward.5} parent=0 // pred_check_branch
    %360 = sbr.rel (0) target = $region53
  $region52: #{optimized_lstm_forward.5} parent=0 // pred_region
    _
  $region53: #{optimized_lstm_forward.5} parent=0 // pred_fallthru
    _

// kernel: optimized_lstm_forward.3
$region0: #{optimized_lstm_forward.3}
  #allocation0 [shape = 'u32[]', space=smem, size = 0x4, offset = 0x4, fixed_abs, tag = 'smem constant byte address 0x4 - core index']
  #allocation1 [shape = 'u32[144,128]{1,0:T(1,128)}', space=vmem, size = 0x12000, scoped, tag = 'internal scratch']
  #allocation2 [shape = 'f32[64,512]{1,0:T(8,128)}', space=vmem, size = 0x20000, scoped, tag = 'scratch operand']
  %s0 = inlined_call_operand.vmem [shape: f32[64,16], index: 0, kind: input, shape index: {}]
  %s1 = inlined_call_operand.vmem [shape: bf16[2,16,512], index: 1, kind: input, shape index: {}]
  %s2 = inlined_call_operand.vmem [shape: bf16[2,128,512], index: 2, kind: input, shape index: {}]
  %s3 = inlined_call_operand.vmem [shape: f32[2,1,512], index: 3, kind: input, shape index: {}]
  %s4 = inlined_call_operand.vmem [shape: f32[2,64,128], index: 4, kind: output, shape index: {}]
  %s5 = sld [smem:[#allocation0]]
  $region49: #{optimized_lstm_forward.3} parent=0
    _
  %s7 = ssub.s32 1, %s5
  %s8 = scalar_select 0, %s7, %s5
  loop: start=0, step=1, limit=4
  $region2: #{optimized_lstm_forward.3} parent=0 // loop_pre_header
    _
  $region3: #{optimized_lstm_forward.3} parent=0 // loop_header
    %s10 = sphi 0, %s14
    %p11 = scmp.ge.s32.totalorder %s10, 4
    %s18 = sphi 0, %s18
    %s20 = sphi 0, %s18
    %s21 = sphi 0, %s20
    %s35 = sphi 0, %s21
    %s41 = sphi 0, %s43
    %s44 = sphi 0, %s41
    %s45 = sphi 0, %s44
    %s61 = sphi 0, %s45
    %s67 = sphi 0, %s69
    %s70 = sphi 0, %s67
    %s71 = sphi 0, %s70
    %s87 = sphi 0, %s71
    %s93 = sphi 0, %s95
    %s96 = sphi 0, %s93
    %s97 = sphi 0, %s96
    %s113 = sphi 0, %s97
    %s119 = sphi 0, %s121
    %s122 = sphi 0, %s119
    %s123 = sphi 0, %s122
    %s139 = sphi 0, %s123
  $region4: #{optimized_lstm_forward.3} parent=0 // loop_header_branch
    %13 = sbr.rel (%p11) target = $region8
  $region5: #{optimized_lstm_forward.3} parent=0 // loop_body
    %s15 = ssub.s32 %s10, 1
    %s16 = ssub.s32 %s10, 2
    %s17 = sadd.s32 %s10, 1
    %s19 = sadd.s32 %s18, 1
    %p22 = scmp.eq.s32.totalorder %s10, 1
    %p23 = scmp.ne.s32.totalorder %s18, %s20
    %p24 = scmp.eq.s32.totalorder %s10, 0
    %p25 = por %p23, %p24
    %p26 = scmp.ne.s32.totalorder %s18, %s20
    %p27 = scmp.eq.s32.totalorder %s15, 1
    %p28 = por %p26, %p27
    %p29 = scmp.ne.s32.totalorder %s20, %s21
    %p30 = scmp.eq.s32.totalorder %s15, 0
    %p31 = por %p29, %p30
    %p32 = scmp.ne.s32.totalorder %s20, %s21
    %p33 = scmp.eq.s32.totalorder %s16, 1
    %p34 = por %p32, %p33
    %p36 = scmp.ne.s32.totalorder %s21, %s35
    %p37 = scmp.eq.s32.totalorder %s16, 0
    %p38 = por %p36, %p37
    %s39 = ssub.s32 %s10, %s17
    %p40 = scmp.eq.s32.totalorder %s39, 0
    %s42 = sadd.s32 %s41, 1
    %s43 = scalar_select %p40, %s41, %s42
    %p46 = pneg %p40
    %p47 = scmp.eq.s32.totalorder %s10, 1
    %p48 = por %p46, %p47
    %p49 = scmp.ne.s32.totalorder %s41, %s44
    %p50 = scmp.eq.s32.totalorder %s10, 0
    %p51 = por %p49, %p50
    %p52 = scmp.ne.s32.totalorder %s41, %s44
    %p53 = scmp.eq.s32.totalorder %s15, 1
    %p54 = por %p52, %p53
    %p55 = scmp.ne.s32.totalorder %s44, %s45
    %p56 = scmp.eq.s32.totalorder %s15, 0
    %p57 = por %p55, %p56
    %p58 = scmp.ne.s32.totalorder %s44, %s45
    %p59 = scmp.eq.s32.totalorder %s16, 1
    %p60 = por %p58, %p59
    %p62 = scmp.ne.s32.totalorder %s45, %s61
    %p63 = scmp.eq.s32.totalorder %s16, 0
    %p64 = por %p62, %p63
    %s65 = ssub.s32 %s10, %s17
    %p66 = scmp.eq.s32.totalorder %s65, 0
    %s68 = sadd.s32 %s67, 1
    %s69 = scalar_select %p66, %s67, %s68
    %p72 = pneg %p66
    %p73 = scmp.eq.s32.totalorder %s10, 1
    %p74 = por %p72, %p73
    %p75 = scmp.ne.s32.totalorder %s67, %s70
    %p76 = scmp.eq.s32.totalorder %s10, 0
    %p77 = por %p75, %p76
    %p78 = scmp.ne.s32.totalorder %s67, %s70
    %p79 = scmp.eq.s32.totalorder %s15, 1
    %p80 = por %p78, %p79
    %p81 = scmp.ne.s32.totalorder %s70, %s71
    %p82 = scmp.eq.s32.totalorder %s15, 0
    %p83 = por %p81, %p82
    %p84 = scmp.ne.s32.totalorder %s70, %s71
    %p85 = scmp.eq.s32.totalorder %s16, 1
    %p86 = por %p84, %p85
    %p88 = scmp.ne.s32.totalorder %s71, %s87
    %p89 = scmp.eq.s32.totalorder %s16, 0
    %p90 = por %p88, %p89
    %s91 = ssub.s32 %s10, %s17
    %p92 = scmp.eq.s32.totalorder %s91, 0
    %s94 = sadd.s32 %s93, 1
    %s95 = scalar_select %p92, %s93, %s94
    %p98 = pneg %p92
    %p99 = scmp.eq.s32.totalorder %s10, 1
    %p100 = por %p98, %p99
    %p101 = scmp.ne.s32.totalorder %s93, %s96
    %p102 = scmp.eq.s32.totalorder %s10, 0
    %p103 = por %p101, %p102
    %p104 = scmp.ne.s32.totalorder %s93, %s96
    %p105 = scmp.eq.s32.totalorder %s15, 1
    %p106 = por %p104, %p105
    %p107 = scmp.ne.s32.totalorder %s96, %s97
    %p108 = scmp.eq.s32.totalorder %s15, 0
    %p109 = por %p107, %p108
    %p110 = scmp.ne.s32.totalorder %s96, %s97
    %p111 = scmp.eq.s32.totalorder %s16, 1
    %p112 = por %p110, %p111
    %p114 = scmp.ne.s32.totalorder %s97, %s113
    %p115 = scmp.eq.s32.totalorder %s16, 0
    %p116 = por %p114, %p115
    %s117 = ssub.s32 %s10, %s17
    %p118 = scmp.eq.s32.totalorder %s117, 0
    %s120 = sadd.s32 %s119, 1
    %s121 = scalar_select %p118, %s119, %s120
    %p124 = pneg %p118
    %p125 = scmp.eq.s32.totalorder %s10, 1
    %p126 = por %p124, %p125
    %p127 = scmp.ne.s32.totalorder %s119, %s122
    %p128 = scmp.eq.s32.totalorder %s10, 0
    %p129 = por %p127, %p128
    %p130 = scmp.ne.s32.totalorder %s119, %s122
    %p131 = scmp.eq.s32.totalorder %s15, 1
    %p132 = por %p130, %p131
    %p133 = scmp.ne.s32.totalorder %s122, %s123
    %p134 = scmp.eq.s32.totalorder %s15, 0
    %p135 = por %p133, %p134
    %p136 = scmp.ne.s32.totalorder %s122, %s123
    %p137 = scmp.eq.s32.totalorder %s16, 1
    %p138 = por %p136, %p137
    %p140 = scmp.ne.s32.totalorder %s123, %s139
    %p141 = scmp.eq.s32.totalorder %s16, 0
    %p142 = por %p140, %p141
    %p143 = scmp.le.s32.totalorder 1, %s10
    %p144 = scmp.lt.s32.totalorder %s10, 3
    %p145 = pnand %p143, %p144
    %p146 = pneg %p145
    // Predicated region
    $region9: #{optimized_lstm_forward.3} parent=5 // pred_check
      _
    $region10: #{optimized_lstm_forward.3} parent=5 // pred_check_branch
      %148 = sbr.rel (%p145) target = $region12
    $region11: #{optimized_lstm_forward.3} parent=5 // pred_region
      %s149 = ssub.s32 %s10, 1
      // Predicated region
      $region13: #{optimized_lstm_forward.3} parent=11 // pred_check
        %p150 = pneg %p31
      $region14: #{optimized_lstm_forward.3} parent=11 // pred_check_branch
        %152 = sbr.rel (%p150) target = $region16
      $region15: #{optimized_lstm_forward.3} parent=11 // pred_region
        _
      $region16: #{optimized_lstm_forward.3} parent=11 // pred_fallthru
        _
    $region12: #{optimized_lstm_forward.3} parent=5 // pred_fallthru
      _
    %p153 = scmp.lt.s32.totalorder %s10, 2
    // Predicated region
    $region17: #{optimized_lstm_forward.3} parent=5 // pred_check
      %p154 = pneg %p153
    $region18: #{optimized_lstm_forward.3} parent=5 // pred_check_branch
      %156 = sbr.rel (%p154) target = $region20
    $region19: #{optimized_lstm_forward.3} parent=5 // pred_region
      // Predicated region
      $region21: #{optimized_lstm_forward.3} parent=19 // pred_check
        %p157 = pneg %p51
      $region22: #{optimized_lstm_forward.3} parent=19 // pred_check_branch
        %159 = sbr.rel (%p157) target = $region24
      $region23: #{optimized_lstm_forward.3} parent=19 // pred_region
        %p160 = scmp.lt.s32.totalorder %s10, 1
        %s161 = scalar_select %p160, %s10, 1
        %s162 = smul.addr %s161, 8
        %s163 = smul.addr %s162, 4
        %s164 = scalar_lea.vmem %s1, %s163
      $region24: #{optimized_lstm_forward.3} parent=19 // pred_fallthru
        _
      // Predicated region
      $region25: #{optimized_lstm_forward.3} parent=19 // pred_check
        %p165 = pneg %p77
      $region26: #{optimized_lstm_forward.3} parent=19 // pred_check_branch
        %167 = sbr.rel (%p165) target = $region28
      $region27: #{optimized_lstm_forward.3} parent=19 // pred_region
        %p168 = scmp.lt.s32.totalorder %s10, 1
        %s169 = scalar_select %p168, %s10, 1
        %s170 = smul.addr %s169, 64
        %s171 = smul.addr %s170, 4
        %s172 = scalar_lea.vmem %s2, %s171
      $region28: #{optimized_lstm_forward.3} parent=19 // pred_fallthru
        _
      // Predicated region
      $region29: #{optimized_lstm_forward.3} parent=19 // pred_check
        %p173 = pneg %p103
      $region30: #{optimized_lstm_forward.3} parent=19 // pred_check_branch
        %175 = sbr.rel (%p173) target = $region32
      $region31: #{optimized_lstm_forward.3} parent=19 // pred_region
        %p176 = scmp.lt.s32.totalorder %s10, 1
        %s177 = scalar_select %p176, %s10, 1
        %s178 = smul.addr %s177, 4
        %s179 = scalar_lea.vmem %s3, %s178
      $region32: #{optimized_lstm_forward.3} parent=19 // pred_fallthru
        _
    $region20: #{optimized_lstm_forward.3} parent=5 // pred_fallthru
      _
    %p180 = scmp.le.s32.totalorder 1, %s10
    %p181 = scmp.lt.s32.totalorder %s10, 3
    %p182 = pnand %p180, %p181
    %p183 = pneg %p182
    // Predicated region
    $region33: #{optimized_lstm_forward.3} parent=5 // pred_check
      _
    $region34: #{optimized_lstm_forward.3} parent=5 // pred_check_branch
      %185 = sbr.rel (%p182) target = $region36
    $region35: #{optimized_lstm_forward.3} parent=5 // pred_region
      %s186 = ssub.s32 %s10, 1
      %p187 = pneg %p31
      %p188 = pneg %p28
      %p189 = scmp.lt.s32.totalorder %s15, 1
      %s190 = scalar_select %p189, %s15, 1
      %s191 = smul.addr %s190, 8
      %s192 = smul.addr %s191, 4
      %s193 = scalar_lea.vmem %s1, %s192
      %p194 = pneg %p57
      %p195 = pneg %p54
      %p196 = scmp.lt.s32.totalorder %s15, 1
      %s197 = scalar_select %p196, %s15, 1
      %s198 = smul.addr %s197, 64
      %s199 = smul.addr %s198, 4
      %s200 = scalar_lea.vmem %s2, %s199
      %p201 = pneg %p83
      %p202 = pneg %p80
      %p203 = scmp.lt.s32.totalorder %s15, 1
      %s204 = scalar_select %p203, %s15, 1
      %s205 = smul.addr %s204, 4
      %s206 = scalar_lea.vmem %s3, %s205
      %p207 = pneg %p109
      %p208 = pneg %p106
      %p209 = pneg %p135
      %p210 = pneg %p132
      %p211 = scmp.lt.s32.totalorder %s15, 1
      %s212 = scalar_select %p211, %s15, 1
      %s213 = smul.addr %s212, 8
      %s214 = smul.addr %s213, 8
      %s215 = scalar_lea.vmem %s4, %s214
      %p216 = scmp.lt.s32.totalorder %s15, 1
      %s217 = scalar_select %p216, %s15, 1
      %s218 = smul.addr %s217, 8
      %s219 = smul.addr %s218, 4
      %s220 = scalar_lea.vmem %s1, %s219
      %p221 = scmp.lt.s32.totalorder %s15, 1
      %s222 = scalar_select %p221, %s15, 1
      %s223 = smul.addr %s222, 64
      %s224 = smul.addr %s223, 4
      %s225 = scalar_lea.vmem %s2, %s224
      %p226 = scmp.lt.s32.totalorder %s15, 1
      %s227 = scalar_select %p226, %s15, 1
      %s228 = smul.addr %s227, 4
      %s229 = scalar_lea.vmem %s3, %s228
      %p230 = scmp.lt.s32.totalorder %s15, 1
      %s231 = scalar_select %p230, %s15, 1
      %s232 = smul.addr %s231, 8
      %s233 = smul.addr %s232, 8
      %s234 = scalar_lea.vmem %s4, %s233
      %v236 = vld [vmem:[%s0] sm:$0xff]
      %v237 = vld [vmem:[%s0 + $0x8] sm:$0xff]
      %v238 = vld [vmem:[%s0 + $0x10] sm:$0xff]
      %v239 = vld [vmem:[%s0 + $0x18] sm:$0xff]
      %v240 = vld [vmem:[%s0 + $0x20] sm:$0xff]
      %v241 = vld [vmem:[%s0 + $0x28] sm:$0xff]
      %v242 = vld [vmem:[%s0 + $0x30] sm:$0xff]
      %v243 = vld [vmem:[%s0 + $0x38] sm:$0xff]
      %v244 = vpack.c.bf16 %v237, %v236
      %v245 = vpack.c.bf16 %v239, %v238
      %v246 = vpack.c.bf16 %v241, %v240
      %v247 = vpack.c.bf16 %v243, %v242
      %v248 = vld [vmem:[%s220] sm:$0xff]
      %v249 = vld [vmem:[%s220 + $0x8] sm:$0xff]
      %v250 = vld [vmem:[%s220 + $0x10] sm:$0xff]
      %v251 = vld [vmem:[%s220 + $0x18] sm:$0xff]
      %v252 = vld [vmem:[%s229] sm:$0xf]
      %v254 = vlaneseq
      %v255 = vshrl.u32 %v254, 7
      %v256 = vsub.s32 0, %v255
      %v257 = vrot.slane %v252, %v256
      %v258 = vlaneseq
      %v259 = vshrl.u32 %v258, 7
      %v260 = vsub.s32 1, %v259
      %v261 = vrot.slane %v252, %v260
      %v262 = vlaneseq
      %v263 = vshrl.u32 %v262, 7
      %v264 = vsub.s32 2, %v263
      %v265 = vrot.slane %v252, %v264
      %v266 = vlaneseq
      %v267 = vshrl.u32 %v266, 7
      %v268 = vsub.s32 3, %v267
      %v269 = vrot.slane %v252, %v268
      %v278 = vunpack.c.l.b16 %v248
      %v279 = vunpack.c.h.b16 %v248
      %v280 = vunpack.c.l.b16 %v249
      %v281 = vunpack.c.h.b16 %v249
      %v282 = vunpack.c.l.b16 %v250
      %v283 = vunpack.c.h.b16 %v250
      %v284 = vunpack.c.l.b16 %v251
      %v285 = vunpack.c.h.b16 %v251
      %v286 = vpack.c.b16 %v282, %v278
      %v287 = vpack.c.b16 %v283, %v279
      %v288 = vpack.c.b16 %v284, %v280
      %v289 = vpack.c.b16 %v285, %v281
      %vm294 = vcmask 130048
      %v296 = vsel %vm294, %v244, 0
      %v299 = vsel %vm294, %v245, 0
      %v302 = vsel %vm294, %v246, 0
      %v305 = vsel %vm294, %v247, 0
      %307 = vmatprep.subr.bf16.mxu0 %v287
      %308 = vmatpush1.bf16.msra.mxu0 %v286
      %309 = vmatprep.subr.bf16.mxu0 0
      %310 = vmatpush1.bf16.msra.mxu0 0
      %311 = vmatprep.subr.bf16.mxu0 0
      %312 = vmatpush1.bf16.msra.mxu0 0
      %313 = vmatprep.subr.bf16.mxu0 0
      %314 = vmatpush1.bf16.msra.mxu0 0
      %315 = vmatprep.subr.bf16.mxu0 0
      %316 = vmatpush1.bf16.msra.mxu0 0
      %317 = vmatprep.subr.bf16.mxu0 0
      %318 = vmatpush1.bf16.msra.mxu0 0
      %319 = vmatprep.subr.bf16.mxu0 0
      %320 = vmatpush1.bf16.msra.mxu0 0
      %321 = vmatprep.subr.bf16.mxu0 0
      %322 = vmatpush1.bf16.msra.mxu0 0
      %323 = vmatprep.subr.bf16.mxu0 0
      %324 = vmatpush1.bf16.msra.mxu0 0
      %325 = vmatprep.subr.bf16.mxu0 0
      %326 = vmatpush1.bf16.msra.mxu0 0
      %327 = vmatprep.subr.bf16.mxu0 0
      %328 = vmatpush1.bf16.msra.mxu0 0
      %329 = vmatprep.subr.bf16.mxu0 0
      %330 = vmatpush1.bf16.msra.mxu0 0
      %331 = vmatprep.subr.bf16.mxu0 0
      %332 = vmatpush1.bf16.msra.mxu0 0
      %333 = vmatprep.subr.bf16.mxu0 0
      %334 = vmatpush1.bf16.msra.mxu0 0
      %335 = vmatprep.subr.bf16.mxu0 0
      %336 = vmatpush1.bf16.msra.mxu0 0
      %337 = vmatprep.subr.bf16.mxu0 0
      %338 = vmatpush1.bf16.msra.mxu0 0
      %339 = vmatprep.mubr.bf16.mxu0 0
      %340 = vmatmul.mubr.bf16.gmra.mrb[0].mxu0 %v296
      %v341 = vpop.f32.mrb[0].mxu0
      %v342 = vadd.f32 %v257, %v341
      %v343 = vpop.f32.mrb[0].mxu0
      %v344 = vadd.f32 %v261, %v343
      %v345 = vpop.f32.mrb[0].mxu0
      %v346 = vadd.f32 %v257, %v345
      %v347 = vpop.f32.mrb[0].mxu0
      %v348 = vadd.f32 %v261, %v347
      %349 = vmatprep.mubr.bf16.mxu0 0
      %350 = vmatmul.mubr.bf16.gmra.mrb[0].mxu0 %v299
      %v351 = vpop.f32.mrb[0].mxu0
      %v352 = vadd.f32 %v257, %v351
      %v353 = vpop.f32.mrb[0].mxu0
      %v354 = vadd.f32 %v261, %v353
      %v355 = vpop.f32.mrb[0].mxu0
      %v356 = vadd.f32 %v257, %v355
      %v357 = vpop.f32.mrb[0].mxu0
      %v358 = vadd.f32 %v261, %v357
      %359 = vmatprep.mubr.bf16.mxu0 0
      %360 = vmatmul.mubr.bf16.gmra.mrb[0].mxu0 %v302
      %v361 = vpop.f32.mrb[0].mxu0
      %v362 = vadd.f32 %v257, %v361
      %v363 = vpop.f32.mrb[0].mxu0
      %v364 = vadd.f32 %v261, %v363
      %v365 = vpop.f32.mrb[0].mxu0
      %v366 = vadd.f32 %v257, %v365
      %v367 = vpop.f32.mrb[0].mxu0
      %v368 = vadd.f32 %v261, %v367
      %369 = vmatprep.mubr.bf16.mxu0 0
      %370 = vmatmul.mubr.bf16.gmra.mrb[0].mxu0 %v305
      %v371 = vpop.f32.mrb[0].mxu0
      %v372 = vadd.f32 %v257, %v371
      %v373 = vpop.f32.mrb[0].mxu0
      %v374 = vadd.f32 %v261, %v373
      %v375 = vpop.f32.mrb[0].mxu0
      %v376 = vadd.f32 %v257, %v375
      %v377 = vpop.f32.mrb[0].mxu0
      %v378 = vadd.f32 %v261, %v377
      %379 = vdwg.mxu0
      %380 = vmatprep.subr.bf16.mxu0 %v289
      %381 = vmatpush1.bf16.msra.mxu0 %v288
      %382 = vmatprep.subr.bf16.mxu0 0
      %383 = vmatpush1.bf16.msra.mxu0 0
      %384 = vmatprep.subr.bf16.mxu0 0
      %385 = vmatpush1.bf16.msra.mxu0 0
      %386 = vmatprep.subr.bf16.mxu0 0
      %387 = vmatpush1.bf16.msra.mxu0 0
      %388 = vmatprep.subr.bf16.mxu0 0
      %389 = vmatpush1.bf16.msra.mxu0 0
      %390 = vmatprep.subr.bf16.mxu0 0
      %391 = vmatpush1.bf16.msra.mxu0 0
      %392 = vmatprep.subr.bf16.mxu0 0
      %393 = vmatpush1.bf16.msra.mxu0 0
      %394 = vmatprep.subr.bf16.mxu0 0
      %395 = vmatpush1.bf16.msra.mxu0 0
      %396 = vmatprep.subr.bf16.mxu0 0
      %397 = vmatpush1.bf16.msra.mxu0 0
      %398 = vmatprep.subr.bf16.mxu0 0
      %399 = vmatpush1.bf16.msra.mxu0 0
      %400 = vmatprep.subr.bf16.mxu0 0
      %401 = vmatpush1.bf16.msra.mxu0 0
      %402 = vmatprep.subr.bf16.mxu0 0
      %403 = vmatpush1.bf16.msra.mxu0 0
      %404 = vmatprep.subr.bf16.mxu0 0
      %405 = vmatpush1.bf16.msra.mxu0 0
      %406 = vmatprep.subr.bf16.mxu0 0
      %407 = vmatpush1.bf16.msra.mxu0 0
      %408 = vmatprep.subr.bf16.mxu0 0
      %409 = vmatpush1.bf16.msra.mxu0 0
      %410 = vmatprep.subr.bf16.mxu0 0
      %411 = vmatpush1.bf16.msra.mxu0 0
      %412 = vmatprep.mubr.bf16.mxu0 0
      %413 = vmatmul.mubr.bf16.gmra.mrb[0].mxu0 %v296
      %v414 = vpop.f32.mrb[0].mxu0
      %v415 = vadd.f32 %v265, %v414
      %v416 = vpop.f32.mrb[0].mxu0
      %v417 = vadd.f32 %v269, %v416
      %v418 = vpop.f32.mrb[0].mxu0
      %v419 = vadd.f32 %v265, %v418
      %v420 = vpop.f32.mrb[0].mxu0
      %v421 = vadd.f32 %v269, %v420
      %422 = vmatprep.mubr.bf16.mxu0 0
      %423 = vmatmul.mubr.bf16.gmra.mrb[0].mxu0 %v299
      %v424 = vpop.f32.mrb[0].mxu0
      %v425 = vadd.f32 %v265, %v424
      %v426 = vpop.f32.mrb[0].mxu0
      %v427 = vadd.f32 %v269, %v426
      %v428 = vpop.f32.mrb[0].mxu0
      %v429 = vadd.f32 %v265, %v428
      %v430 = vpop.f32.mrb[0].mxu0
      %v431 = vadd.f32 %v269, %v430
      %432 = vmatprep.mubr.bf16.mxu0 0
      %433 = vmatmul.mubr.bf16.gmra.mrb[0].mxu0 %v302
      %v434 = vpop.f32.mrb[0].mxu0
      %v435 = vadd.f32 %v265, %v434
      %v436 = vpop.f32.mrb[0].mxu0
      %v437 = vadd.f32 %v269, %v436
      %v438 = vpop.f32.mrb[0].mxu0
      %v439 = vadd.f32 %v265, %v438
      %v440 = vpop.f32.mrb[0].mxu0
      %v441 = vadd.f32 %v269, %v440
      %442 = vmatprep.mubr.bf16.mxu0 0
      %443 = vmatmul.mubr.bf16.gmra.mrb[0].mxu0 %v305
      %v444 = vpop.f32.mrb[0].mxu0
      %v445 = vadd.f32 %v265, %v444
      %v446 = vpop.f32.mrb[0].mxu0
      %v447 = vadd.f32 %v269, %v446
      %v448 = vpop.f32.mrb[0].mxu0
      %v449 = vadd.f32 %v265, %v448
      %v450 = vpop.f32.mrb[0].mxu0
      %v451 = vadd.f32 %v269, %v450
      %452 = vdwg.mxu0
      %453 = vst [vmem:[#allocation2] sm:$0xff] %v342
      %454 = vst [vmem:[#allocation2 + $0x8] sm:$0xff] %v344
      %455 = vst [vmem:[#allocation2 + $0x10] sm:$0xff] %v415
      %456 = vst [vmem:[#allocation2 + $0x18] sm:$0xff] %v417
      %457 = vst [vmem:[#allocation2 + $0x20] sm:$0xff] %v346
      %458 = vst [vmem:[#allocation2 + $0x28] sm:$0xff] %v348
      %459 = vst [vmem:[#allocation2 + $0x30] sm:$0xff] %v419
      %460 = vst [vmem:[#allocation2 + $0x38] sm:$0xff] %v421
      %461 = vst [vmem:[#allocation2 + $0x40] sm:$0xff] %v352
      %462 = vst [vmem:[#allocation2 + $0x48] sm:$0xff] %v354
      %463 = vst [vmem:[#allocation2 + $0x50] sm:$0xff] %v425
      %464 = vst [vmem:[#allocation2 + $0x58] sm:$0xff] %v427
      %465 = vst [vmem:[#allocation2 + $0x60] sm:$0xff] %v356
      %466 = vst [vmem:[#allocation2 + $0x68] sm:$0xff] %v358
      %467 = vst [vmem:[#allocation2 + $0x70] sm:$0xff] %v429
      %468 = vst [vmem:[#allocation2 + $0x78] sm:$0xff] %v431
      %469 = vst [vmem:[#allocation2 + $0x80] sm:$0xff] %v362
      %470 = vst [vmem:[#allocation2 + $0x88] sm:$0xff] %v364
      %471 = vst [vmem:[#allocation2 + $0x90] sm:$0xff] %v435
      %472 = vst [vmem:[#allocation2 + $0x98] sm:$0xff] %v437
      %473 = vst [vmem:[#allocation2 + $0xa0] sm:$0xff] %v366
      %474 = vst [vmem:[#allocation2 + $0xa8] sm:$0xff] %v368
      %475 = vst [vmem:[#allocation2 + $0xb0] sm:$0xff] %v439
      %476 = vst [vmem:[#allocation2 + $0xb8] sm:$0xff] %v441
      %477 = vst [vmem:[#allocation2 + $0xc0] sm:$0xff] %v372
      %478 = vst [vmem:[#allocation2 + $0xc8] sm:$0xff] %v374
      %479 = vst [vmem:[#allocation2 + $0xd0] sm:$0xff] %v445
      %480 = vst [vmem:[#allocation2 + $0xd8] sm:$0xff] %v447
      %481 = vst [vmem:[#allocation2 + $0xe0] sm:$0xff] %v376
      %482 = vst [vmem:[#allocation2 + $0xe8] sm:$0xff] %v378
      %483 = vst [vmem:[#allocation2 + $0xf0] sm:$0xff] %v449
      %484 = vst [vmem:[#allocation2 + $0xf8] sm:$0xff] %v451
      %p485 = scmp.eq.s32.totalorder %s15, 0
      %s486 = scalar_select %p485, 0, 7
      %s487 = smul.u32 %s486, 8
      %s488 = sshra.s32 %s487, 3
      %s489 = sand.u32 %s487, 7
      %s490 = smul.u32 %s488, 4
      %s491 = smul.addr %s490, 8
      %s492 = scalar_lea.vmem [#allocation2], %s491
      %v493 = vld [vmem:[%s492] sm:$0xff]
      %v494 = vld [vmem:[%s492 + $0x8] sm:$0xff]
      %v495 = vld [vmem:[%s492 + $0x10] sm:$0xff]
      %v496 = vld [vmem:[%s492 + $0x18] sm:$0xff]
      %v497 = vld [vmem:[%s225] sm:$0xff]
      %v498 = vld [vmem:[%s225 + $0x8] sm:$0xff]
      %v499 = vld [vmem:[%s225 + $0x10] sm:$0xff]
      %v500 = vld [vmem:[%s225 + $0x18] sm:$0xff]
      %v501 = vld [vmem:[%s225 + $0x20] sm:$0xff]
      %v502 = vld [vmem:[%s225 + $0x28] sm:$0xff]
      %v503 = vld [vmem:[%s225 + $0x30] sm:$0xff]
      %v504 = vld [vmem:[%s225 + $0x38] sm:$0xff]
      %v505 = vld [vmem:[%s225 + $0x40] sm:$0xff]
      %v506 = vld [vmem:[%s225 + $0x48] sm:$0xff]
      %v507 = vld [vmem:[%s225 + $0x50] sm:$0xff]
      %v508 = vld [vmem:[%s225 + $0x58] sm:$0xff]
      %v509 = vld [vmem:[%s225 + $0x60] sm:$0xff]
      %v510 = vld [vmem:[%s225 + $0x68] sm:$0xff]
      %v511 = vld [vmem:[%s225 + $0x70] sm:$0xff]
      %v512 = vld [vmem:[%s225 + $0x78] sm:$0xff]
      %v513 = vld [vmem:[%s225 + $0x80] sm:$0xff]
      %v514 = vld [vmem:[%s225 + $0x88] sm:$0xff]
      %v515 = vld [vmem:[%s225 + $0x90] sm:$0xff]
      %v516 = vld [vmem:[%s225 + $0x98] sm:$0xff]
      %v517 = vld [vmem:[%s225 + $0xa0] sm:$0xff]
      %v518 = vld [vmem:[%s225 + $0xa8] sm:$0xff]
      %v519 = vld [vmem:[%s225 + $0xb0] sm:$0xff]
      %v520 = vld [vmem:[%s225 + $0xb8] sm:$0xff]
      %v521 = vld [vmem:[%s225 + $0xc0] sm:$0xff]
      %v522 = vld [vmem:[%s225 + $0xc8] sm:$0xff]
      %v523 = vld [vmem:[%s225 + $0xd0] sm:$0xff]
      %v524 = vld [vmem:[%s225 + $0xd8] sm:$0xff]
      %v525 = vld [vmem:[%s225 + $0xe0] sm:$0xff]
      %v526 = vld [vmem:[%s225 + $0xe8] sm:$0xff]
      %v527 = vld [vmem:[%s225 + $0xf0] sm:$0xff]
      %v528 = vld [vmem:[%s225 + $0xf8] sm:$0xff]
      %v561 = vunpack.c.l.b16 %v497
      %v562 = vunpack.c.h.b16 %v497
      %v563 = vunpack.c.l.b16 %v498
      %v564 = vunpack.c.h.b16 %v498
      %v565 = vunpack.c.l.b16 %v499
      %v566 = vunpack.c.h.b16 %v499
      %v567 = vunpack.c.l.b16 %v500
      %v568 = vunpack.c.h.b16 %v500
      %v569 = vunpack.c.l.b16 %v501
      %v570 = vunpack.c.h.b16 %v501
      %v571 = vunpack.c.l.b16 %v502
      %v572 = vunpack.c.h.b16 %v502
      %v573 = vunpack.c.l.b16 %v503
      %v574 = vunpack.c.h.b16 %v503
      %v575 = vunpack.c.l.b16 %v504
      %v576 = vunpack.c.h.b16 %v504
      %v577 = vunpack.c.l.b16 %v505
      %v578 = vunpack.c.h.b16 %v505
      %v579 = vunpack.c.l.b16 %v506
      %v580 = vunpack.c.h.b16 %v506
      %v581 = vunpack.c.l.b16 %v507
      %v582 = vunpack.c.h.b16 %v507
      %v583 = vunpack.c.l.b16 %v508
      %v584 = vunpack.c.h.b16 %v508
      %v585 = vunpack.c.l.b16 %v509
      %v586 = vunpack.c.h.b16 %v509
      %v587 = vunpack.c.l.b16 %v510
      %v588 = vunpack.c.h.b16 %v510
      %v589 = vunpack.c.l.b16 %v511
      %v590 = vunpack.c.h.b16 %v511
      %v591 = vunpack.c.l.b16 %v512
      %v592 = vunpack.c.h.b16 %v512
      %v593 = vunpack.c.l.b16 %v513
      %v594 = vunpack.c.h.b16 %v513
      %v595 = vunpack.c.l.b16 %v514
      %v596 = vunpack.c.h.b16 %v514
      %v597 = vunpack.c.l.b16 %v515
      %v598 = vunpack.c.h.b16 %v515
      %v599 = vunpack.c.l.b16 %v516
      %v600 = vunpack.c.h.b16 %v516
      %v601 = vunpack.c.l.b16 %v517
      %v602 = vunpack.c.h.b16 %v517
      %v603 = vunpack.c.l.b16 %v518
      %v604 = vunpack.c.h.b16 %v518
      %v605 = vunpack.c.l.b16 %v519
      %v606 = vunpack.c.h.b16 %v519
      %v607 = vunpack.c.l.b16 %v520
      %v608 = vunpack.c.h.b16 %v520
      %v609 = vunpack.c.l.b16 %v521
      %v610 = vunpack.c.h.b16 %v521
      %v611 = vunpack.c.l.b16 %v522
      %v612 = vunpack.c.h.b16 %v522
      %v613 = vunpack.c.l.b16 %v523
      %v614 = vunpack.c.h.b16 %v523
      %v615 = vunpack.c.l.b16 %v524
      %v616 = vunpack.c.h.b16 %v524
      %v617 = vunpack.c.l.b16 %v525
      %v618 = vunpack.c.h.b16 %v525
      %v619 = vunpack.c.l.b16 %v526
      %v620 = vunpack.c.h.b16 %v526
      %v621 = vunpack.c.l.b16 %v527
      %v622 = vunpack.c.h.b16 %v527
      %v623 = vunpack.c.l.b16 %v528
      %v624 = vunpack.c.h.b16 %v528
      %v625 = vpack.c.b16 %v565, %v561
      %v626 = vpack.c.b16 %v566, %v562
      %v627 = vpack.c.b16 %v567, %v563
      %v628 = vpack.c.b16 %v568, %v564
      %v629 = vpack.c.b16 %v573, %v569
      %v630 = vpack.c.b16 %v574, %v570
      %v631 = vpack.c.b16 %v575, %v571
      %v632 = vpack.c.b16 %v576, %v572
      %v633 = vpack.c.b16 %v581, %v577
      %v634 = vpack.c.b16 %v582, %v578
      %v635 = vpack.c.b16 %v583, %v579
      %v636 = vpack.c.b16 %v584, %v580
      %v637 = vpack.c.b16 %v589, %v585
      %v638 = vpack.c.b16 %v590, %v586
      %v639 = vpack.c.b16 %v591, %v587
      %v640 = vpack.c.b16 %v592, %v588
      %v641 = vpack.c.b16 %v597, %v593
      %v642 = vpack.c.b16 %v598, %v594
      %v643 = vpack.c.b16 %v599, %v595
      %v644 = vpack.c.b16 %v600, %v596
      %v645 = vpack.c.b16 %v605, %v601
      %v646 = vpack.c.b16 %v606, %v602
      %v647 = vpack.c.b16 %v607, %v603
      %v648 = vpack.c.b16 %v608, %v604
      %v649 = vpack.c.b16 %v613, %v609
      %v650 = vpack.c.b16 %v614, %v610
      %v651 = vpack.c.b16 %v615, %v611
      %v652 = vpack.c.b16 %v616, %v612
      %v653 = vpack.c.b16 %v621, %v617
      %v654 = vpack.c.b16 %v622, %v618
      %v655 = vpack.c.b16 %v623, %v619
      %v656 = vpack.c.b16 %v624, %v620
      %689 = vmatprep.subr.bf16.mxu0 %v626
      %690 = vmatpush1.bf16.msra.mxu0 %v625
      %691 = vmatprep.subr.bf16.mxu0 %v630
      %692 = vmatpush1.bf16.msra.mxu0 %v629
      %693 = vmatprep.subr.bf16.mxu0 %v634
      %694 = vmatpush1.bf16.msra.mxu0 %v633
      %695 = vmatprep.subr.bf16.mxu0 %v638
      %696 = vmatpush1.bf16.msra.mxu0 %v637
      %697 = vmatprep.subr.bf16.mxu0 %v642
      %698 = vmatpush1.bf16.msra.mxu0 %v641
      %699 = vmatprep.subr.bf16.mxu0 %v646
      %700 = vmatpush1.bf16.msra.mxu0 %v645
      %701 = vmatprep.subr.bf16.mxu0 %v650
      %702 = vmatpush1.bf16.msra.mxu0 %v649
      %703 = vmatprep.subr.bf16.mxu0 %v654
      %704 = vmatpush1.bf16.msra.mxu0 %v653
      %705 = vmatprep.subr.bf16.mxu0 0
      %706 = vmatpush1.bf16.msra.mxu0 0
      %707 = vmatprep.subr.bf16.mxu0 0
      %708 = vmatpush1.bf16.msra.mxu0 0
      %709 = vmatprep.subr.bf16.mxu0 0
      %710 = vmatpush1.bf16.msra.mxu0 0
      %711 = vmatprep.subr.bf16.mxu0 0
      %712 = vmatpush1.bf16.msra.mxu0 0
      %713 = vmatprep.subr.bf16.mxu0 0
      %714 = vmatpush1.bf16.msra.mxu0 0
      %715 = vmatprep.subr.bf16.mxu0 0
      %716 = vmatpush1.bf16.msra.mxu0 0
      %717 = vmatprep.subr.bf16.mxu0 0
      %718 = vmatpush1.bf16.msra.mxu0 0
      %719 = vmatprep.subr.bf16.mxu0 0
      %720 = vmatpush1.bf16.msra.mxu0 0
      %721 = vmatprep.mubr.bf16.mxu0 0
      %722 = vmatmul.mubr.bf16.gmra.mrb[0].mxu0 0
      %v723 = vpop.f32.mrb[0].mxu0
      %v724 = vadd.f32 0.0, %v723
      %v725 = vpop.f32.mrb[0].mxu0
      %v726 = vadd.f32 0.0, %v725
      %v727 = vpop.f32.mrb[0].mxu0
      %v728 = vpop.f32.mrb[0].mxu0
      %729 = vdwg.mxu0
      %730 = vmatprep.subr.bf16.mxu0 %v628
      %731 = vmatpush1.bf16.msra.mxu0 %v627
      %732 = vmatprep.subr.bf16.mxu0 %v632
      %733 = vmatpush1.bf16.msra.mxu0 %v631
      %734 = vmatprep.subr.bf16.mxu0 %v636
      %735 = vmatpush1.bf16.msra.mxu0 %v635
      %736 = vmatprep.subr.bf16.mxu0 %v640
      %737 = vmatpush1.bf16.msra.mxu0 %v639
      %738 = vmatprep.subr.bf16.mxu0 %v644
      %739 = vmatpush1.bf16.msra.mxu0 %v643
      %740 = vmatprep.subr.bf16.mxu0 %v648
      %741 = vmatpush1.bf16.msra.mxu0 %v647
      %742 = vmatprep.subr.bf16.mxu0 %v652
      %743 = vmatpush1.bf16.msra.mxu0 %v651
      %744 = vmatprep.subr.bf16.mxu0 %v656
      %745 = vmatpush1.bf16.msra.mxu0 %v655
      %746 = vmatprep.subr.bf16.mxu0 0
      %747 = vmatpush1.bf16.msra.mxu0 0
      %748 = vmatprep.subr.bf16.mxu0 0
      %749 = vmatpush1.bf16.msra.mxu0 0
      %750 = vmatprep.subr.bf16.mxu0 0
      %751 = vmatpush1.bf16.msra.mxu0 0
      %752 = vmatprep.subr.bf16.mxu0 0
      %753 = vmatpush1.bf16.msra.mxu0 0
      %754 = vmatprep.subr.bf16.mxu0 0
      %755 = vmatpush1.bf16.msra.mxu0 0
      %756 = vmatprep.subr.bf16.mxu0 0
      %757 = vmatpush1.bf16.msra.mxu0 0
      %758 = vmatprep.subr.bf16.mxu0 0
      %759 = vmatpush1.bf16.msra.mxu0 0
      %760 = vmatprep.subr.bf16.mxu0 0
      %761 = vmatpush1.bf16.msra.mxu0 0
      %762 = vmatprep.mubr.bf16.mxu0 0
      %763 = vmatmul.mubr.bf16.gmra.mrb[0].mxu0 0
      %v764 = vpop.f32.mrb[0].mxu0
      %v765 = vadd.f32 0.0, %v764
      %v766 = vpop.f32.mrb[0].mxu0
      %v767 = vadd.f32 0.0, %v766
      %v768 = vpop.f32.mrb[0].mxu0
      %v769 = vpop.f32.mrb[0].mxu0
      %770 = vdwg.mxu0
      %v771 = vadd.f32 %v493, %v724
      %v772 = vadd.f32 %v494, %v726
      %v773 = vadd.f32 %v495, %v765
      %v774 = vadd.f32 %v496, %v767
      %v775 = vxor.u32 %v771, 2147483648
      %v776 = vmul.f32 %v775, 1.442695
      %v777 = vpow.pop %v776
      %v778 = vadd.f32 %v777, 1.0
      %v779 = vrcp.pop %v778
      %v780 = vmul.f32 1.0, %v779
      %v781 = vxor.u32 %v772, 2147483648
      %v782 = vmul.f32 %v781, 1.442695
      %v783 = vpow.pop %v782
      %v784 = vadd.f32 %v783, 1.0
      %v785 = vrcp.pop %v784
      %v786 = vmul.f32 1.0, %v785
      %v787 = vtanh.pop %v773
      %v788 = vxor.u32 %v774, 2147483648
      %v789 = vmul.f32 %v788, 1.442695
      %v790 = vpow.pop %v789
      %v791 = vadd.f32 %v790, 1.0
      %v792 = vrcp.pop %v791
      %v793 = vmul.f32 1.0, %v792
      %v794 = vmul.f32 %v786, 0.0
      %v795 = vmul.f32 %v780, %v787
      %v796 = vadd.f32 %v794, %v795
      %v797 = vtanh.pop %v796
      %v798 = vmul.f32 %v793, %v797
      %s799 = scalar_lea.vmem %s234, %s487
      %800 = vst [vmem:[%s799] sm:$0xff] %v798
      %s801 = scalar_select %p485, 1, 6
      %s802 = smul.u32 %s801, 8
      %s803 = sshra.s32 %s802, 3
      %s804 = sand.u32 %s802, 7
      %s805 = smul.u32 %s803, 4
      %s806 = smul.addr %s805, 8
      %s807 = scalar_lea.vmem [#allocation2], %s806
      %v808 = vld [vmem:[%s807] sm:$0xff]
      %v809 = vld [vmem:[%s807 + $0x8] sm:$0xff]
      %v810 = vld [vmem:[%s807 + $0x10] sm:$0xff]
      %v811 = vld [vmem:[%s807 + $0x18] sm:$0xff]
      %v812 = vpack.c.bf16 %v798, %v798
      %v813 = vld [vmem:[%s225] sm:$0xff]
      %v814 = vld [vmem:[%s225 + $0x8] sm:$0xff]
      %v815 = vld [vmem:[%s225 + $0x10] sm:$0xff]
      %v816 = vld [vmem:[%s225 + $0x18] sm:$0xff]
      %v817 = vld [vmem:[%s225 + $0x20] sm:$0xff]
      %v818 = vld [vmem:[%s225 + $0x28] sm:$0xff]
      %v819 = vld [vmem:[%s225 + $0x30] sm:$0xff]
      %v820 = vld [vmem:[%s225 + $0x38] sm:$0xff]
      %v821 = vld [vmem:[%s225 + $0x40] sm:$0xff]
      %v822 = vld [vmem:[%s225 + $0x48] sm:$0xff]
      %v823 = vld [vmem:[%s225 + $0x50] sm:$0xff]
      %v824 = vld [vmem:[%s225 + $0x58] sm:$0xff]
      %v825 = vld [vmem:[%s225 + $0x60] sm:$0xff]
      %v826 = vld [vmem:[%s225 + $0x68] sm:$0xff]
      %v827 = vld [vmem:[%s225 + $0x70] sm:$0xff]
      %v828 = vld [vmem:[%s225 + $0x78] sm:$0xff]
      %v829 = vld [vmem:[%s225 + $0x80] sm:$0xff]
      %v830 = vld [vmem:[%s225 + $0x88] sm:$0xff]
      %v831 = vld [vmem:[%s225 + $0x90] sm:$0xff]
      %v832 = vld [vmem:[%s225 + $0x98] sm:$0xff]
      %v833 = vld [vmem:[%s225 + $0xa0] sm:$0xff]
      %v834 = vld [vmem:[%s225 + $0xa8] sm:$0xff]
      %v835 = vld [vmem:[%s225 + $0xb0] sm:$0xff]
      %v836 = vld [vmem:[%s225 + $0xb8] sm:$0xff]
      %v837 = vld [vmem:[%s225 + $0xc0] sm:$0xff]
      %v838 = vld [vmem:[%s225 + $0xc8] sm:$0xff]
      %v839 = vld [vmem:[%s225 + $0xd0] sm:$0xff]
      %v840 = vld [vmem:[%s225 + $0xd8] sm:$0xff]
      %v841 = vld [vmem:[%s225 + $0xe0] sm:$0xff]
      %v842 = vld [vmem:[%s225 + $0xe8] sm:$0xff]
      %v843 = vld [vmem:[%s225 + $0xf0] sm:$0xff]
      %v844 = vld [vmem:[%s225 + $0xf8] sm:$0xff]
      %v877 = vunpack.c.l.b16 %v813
      %v878 = vunpack.c.h.b16 %v813
      %v879 = vunpack.c.l.b16 %v814
      %v880 = vunpack.c.h.b16 %v814
      %v881 = vunpack.c.l.b16 %v815
      %v882 = vunpack.c.h.b16 %v815
      %v883 = vunpack.c.l.b16 %v816
      %v884 = vunpack.c.h.b16 %v816
      %v885 = vunpack.c.l.b16 %v817
      %v886 = vunpack.c.h.b16 %v817
      %v887 = vunpack.c.l.b16 %v818
      %v888 = vunpack.c.h.b16 %v818
      %v889 = vunpack.c.l.b16 %v819
      %v890 = vunpack.c.h.b16 %v819
      %v891 = vunpack.c.l.b16 %v820
      %v892 = vunpack.c.h.b16 %v820
      %v893 = vunpack.c.l.b16 %v821
      %v894 = vunpack.c.h.b16 %v821
      %v895 = vunpack.c.l.b16 %v822
      %v896 = vunpack.c.h.b16 %v822
      %v897 = vunpack.c.l.b16 %v823
      %v898 = vunpack.c.h.b16 %v823
      %v899 = vunpack.c.l.b16 %v824
      %v900 = vunpack.c.h.b16 %v824
      %v901 = vunpack.c.l.b16 %v825
      %v902 = vunpack.c.h.b16 %v825
      %v903 = vunpack.c.l.b16 %v826
      %v904 = vunpack.c.h.b16 %v826
      %v905 = vunpack.c.l.b16 %v827
      %v906 = vunpack.c.h.b16 %v827
      %v907 = vunpack.c.l.b16 %v828
      %v908 = vunpack.c.h.b16 %v828
      %v909 = vunpack.c.l.b16 %v829
      %v910 = vunpack.c.h.b16 %v829
      %v911 = vunpack.c.l.b16 %v830
      %v912 = vunpack.c.h.b16 %v830
      %v913 = vunpack.c.l.b16 %v831
      %v914 = vunpack.c.h.b16 %v831
      %v915 = vunpack.c.l.b16 %v832
      %v916 = vunpack.c.h.b16 %v832
      %v917 = vunpack.c.l.b16 %v833
      %v918 = vunpack.c.h.b16 %v833
      %v919 = vunpack.c.l.b16 %v834
      %v920 = vunpack.c.h.b16 %v834
      %v921 = vunpack.c.l.b16 %v835
      %v922 = vunpack.c.h.b16 %v835
      %v923 = vunpack.c.l.b16 %v836
      %v924 = vunpack.c.h.b16 %v836
      %v925 = vunpack.c.l.b16 %v837
      %v926 = vunpack.c.h.b16 %v837
      %v927 = vunpack.c.l.b16 %v838
      %v928 = vunpack.c.h.b16 %v838
      %v929 = vunpack.c.l.b16 %v839
      %v930 = vunpack.c.h.b16 %v839
      %v931 = vunpack.c.l.b16 %v840
      %v932 = vunpack.c.h.b16 %v840
      %v933 = vunpack.c.l.b16 %v841
      %v934 = vunpack.c.h.b16 %v841
      %v935 = vunpack.c.l.b16 %v842
      %v936 = vunpack.c.h.b16 %v842
      %v937 = vunpack.c.l.b16 %v843
      %v938 = vunpack.c.h.b16 %v843
      %v939 = vunpack.c.l.b16 %v844
      %v940 = vunpack.c.h.b16 %v844
      %v941 = vpack.c.b16 %v881, %v877
      %v942 = vpack.c.b16 %v882, %v878
      %v943 = vpack.c.b16 %v883, %v879
      %v944 = vpack.c.b16 %v884, %v880
      %v945 = vpack.c.b16 %v889, %v885
      %v946 = vpack.c.b16 %v890, %v886
      %v947 = vpack.c.b16 %v891, %v887
      %v948 = vpack.c.b16 %v892, %v888
      %v949 = vpack.c.b16 %v897, %v893
      %v950 = vpack.c.b16 %v898, %v894
      %v951 = vpack.c.b16 %v899, %v895
      %v952 = vpack.c.b16 %v900, %v896
      %v953 = vpack.c.b16 %v905, %v901
      %v954 = vpack.c.b16 %v906, %v902
      %v955 = vpack.c.b16 %v907, %v903
      %v956 = vpack.c.b16 %v908, %v904
      %v957 = vpack.c.b16 %v913, %v909
      %v958 = vpack.c.b16 %v914, %v910
      %v959 = vpack.c.b16 %v915, %v911
      %v960 = vpack.c.b16 %v916, %v912
      %v961 = vpack.c.b16 %v921, %v917
      %v962 = vpack.c.b16 %v922, %v918
      %v963 = vpack.c.b16 %v923, %v919
      %v964 = vpack.c.b16 %v924, %v920
      %v965 = vpack.c.b16 %v929, %v925
      %v966 = vpack.c.b16 %v930, %v926
      %v967 = vpack.c.b16 %v931, %v927
      %v968 = vpack.c.b16 %v932, %v928
      %v969 = vpack.c.b16 %v937, %v933
      %v970 = vpack.c.b16 %v938, %v934
      %v971 = vpack.c.b16 %v939, %v935
      %v972 = vpack.c.b16 %v940, %v936
      %1005 = vmatprep.subr.bf16.mxu0 %v942
      %1006 = vmatpush1.bf16.msra.mxu0 %v941
      %1007 = vmatprep.subr.bf16.mxu0 %v946
      %1008 = vmatpush1.bf16.msra.mxu0 %v945
      %1009 = vmatprep.subr.bf16.mxu0 %v950
      %1010 = vmatpush1.bf16.msra.mxu0 %v949
      %1011 = vmatprep.subr.bf16.mxu0 %v954
      %1012 = vmatpush1.bf16.msra.mxu0 %v953
      %1013 = vmatprep.subr.bf16.mxu0 %v958
      %1014 = vmatpush1.bf16.msra.mxu0 %v957
      %1015 = vmatprep.subr.bf16.mxu0 %v962
      %1016 = vmatpush1.bf16.msra.mxu0 %v961
      %1017 = vmatprep.subr.bf16.mxu0 %v966
      %1018 = vmatpush1.bf16.msra.mxu0 %v965
      %1019 = vmatprep.subr.bf16.mxu0 %v970
      %1020 = vmatpush1.bf16.msra.mxu0 %v969
      %1021 = vmatprep.subr.bf16.mxu0 0
      %1022 = vmatpush1.bf16.msra.mxu0 0
      %1023 = vmatprep.subr.bf16.mxu0 0
      %1024 = vmatpush1.bf16.msra.mxu0 0
      %1025 = vmatprep.subr.bf16.mxu0 0
      %1026 = vmatpush1.bf16.msra.mxu0 0
      %1027 = vmatprep.subr.bf16.mxu0 0
      %1028 = vmatpush1.bf16.msra.mxu0 0
      %1029 = vmatprep.subr.bf16.mxu0 0
      %1030 = vmatpush1.bf16.msra.mxu0 0
      %1031 = vmatprep.subr.bf16.mxu0 0
      %1032 = vmatpush1.bf16.msra.mxu0 0
      %1033 = vmatprep.subr.bf16.mxu0 0
      %1034 = vmatpush1.bf16.msra.mxu0 0
      %1035 = vmatprep.subr.bf16.mxu0 0
      %1036 = vmatpush1.bf16.msra.mxu0 0
      %1037 = vmatprep.mubr.bf16.mxu0 0
      %1038 = vmatmul.mubr.bf16.gmra.mrb[0].mxu0 %v812
      %v1039 = vpop.f32.mrb[0].mxu0
      %v1040 = vadd.f32 0.0, %v1039
      %v1041 = vpop.f32.mrb[0].mxu0
      %v1042 = vadd.f32 0.0, %v1041
      %v1043 = vpop.f32.mrb[0].mxu0
      %v1044 = vpop.f32.mrb[0].mxu0
      %1045 = vdwg.mxu0
      %1046 = vmatprep.subr.bf16.mxu0 %v944
      %1047 = vmatpush1.bf16.msra.mxu0 %v943
      %1048 = vmatprep.subr.bf16.mxu0 %v948
      %1049 = vmatpush1.bf16.msra.mxu0 %v947
      %1050 = vmatprep.subr.bf16.mxu0 %v952
      %1051 = vmatpush1.bf16.msra.mxu0 %v951
      %1052 = vmatprep.subr.bf16.mxu0 %v956
      %1053 = vmatpush1.bf16.msra.mxu0 %v955
      %1054 = vmatprep.subr.bf16.mxu0 %v960
      %1055 = vmatpush1.bf16.msra.mxu0 %v959
      %1056 = vmatprep.subr.bf16.mxu0 %v964
      %1057 = vmatpush1.bf16.msra.mxu0 %v963
      %1058 = vmatprep.subr.bf16.mxu0 %v968
      %1059 = vmatpush1.bf16.msra.mxu0 %v967
      %1060 = vmatprep.subr.bf16.mxu0 %v972
      %1061 = vmatpush1.bf16.msra.mxu0 %v971
      %1062 = vmatprep.subr.bf16.mxu0 0
      %1063 = vmatpush1.bf16.msra.mxu0 0
      %1064 = vmatprep.subr.bf16.mxu0 0
      %1065 = vmatpush1.bf16.msra.mxu0 0
      %1066 = vmatprep.subr.bf16.mxu0 0
      %1067 = vmatpush1.bf16.msra.mxu0 0
      %1068 = vmatprep.subr.bf16.mxu0 0
      %1069 = vmatpush1.bf16.msra.mxu0 0
      %1070 = vmatprep.subr.bf16.mxu0 0
      %1071 = vmatpush1.bf16.msra.mxu0 0
      %1072 = vmatprep.subr.bf16.mxu0 0
      %1073 = vmatpush1.bf16.msra.mxu0 0
      %1074 = vmatprep.subr.bf16.mxu0 0
      %1075 = vmatpush1.bf16.msra.mxu0 0
      %1076 = vmatprep.subr.bf16.mxu0 0
      %1077 = vmatpush1.bf16.msra.mxu0 0
      %1078 = vmatprep.mubr.bf16.mxu0 0
      %1079 = vmatmul.mubr.bf16.gmra.mrb[0].mxu0 %v812
      %v1080 = vpop.f32.mrb[0].mxu0
      %v1081 = vadd.f32 0.0, %v1080
      %v1082 = vpop.f32.mrb[0].mxu0
      %v1083 = vadd.f32 0.0, %v1082
      %v1084 = vpop.f32.mrb[0].mxu0
      %v1085 = vpop.f32.mrb[0].mxu0
      %1086 = vdwg.mxu0
      %v1087 = vadd.f32 %v808, %v1040
      %v1088 = vadd.f32 %v809, %v1042
      %v1089 = vadd.f32 %v810, %v1081
      %v1090 = vadd.f32 %v811, %v1083
      %v1091 = vxor.u32 %v1087, 2147483648
      %v1092 = vmul.f32 %v1091, 1.442695
      %v1093 = vpow.pop %v1092
      %v1094 = vadd.f32 %v1093, 1.0
      %v1095 = vrcp.pop %v1094
      %v1096 = vmul.f32 1.0, %v1095
      %v1097 = vxor.u32 %v1088, 2147483648
      %v1098 = vmul.f32 %v1097, 1.442695
      %v1099 = vpow.pop %v1098
      %v1100 = vadd.f32 %v1099, 1.0
      %v1101 = vrcp.pop %v1100
      %v1102 = vmul.f32 1.0, %v1101
      %v1103 = vtanh.pop %v1089
      %v1104 = vxor.u32 %v1090, 2147483648
      %v1105 = vmul.f32 %v1104, 1.442695
      %v1106 = vpow.pop %v1105
      %v1107 = vadd.f32 %v1106, 1.0
      %v1108 = vrcp.pop %v1107
      %v1109 = vmul.f32 1.0, %v1108
      %v1110 = vmul.f32 %v1102, %v796
      %v1111 = vmul.f32 %v1096, %v1103
      %v1112 = vadd.f32 %v1110, %v1111
      %v1113 = vtanh.pop %v1112
      %v1114 = vmul.f32 %v1109, %v1113
      %s1115 = scalar_lea.vmem %s234, %s802
      %1116 = vst [vmem:[%s1115] sm:$0xff] %v1114
      %s1117 = scalar_select %p485, 2, 5
      %s1118 = smul.u32 %s1117, 8
      %s1119 = sshra.s32 %s1118, 3
      %s1120 = sand.u32 %s1118, 7
      %s1121 = smul.u32 %s1119, 4
      %s1122 = smul.addr %s1121, 8
      %s1123 = scalar_lea.vmem [#allocation2], %s1122
      %v1124 = vld [vmem:[%s1123] sm:$0xff]
      %v1125 = vld [vmem:[%s1123 + $0x8] sm:$0xff]
      %v1126 = vld [vmem:[%s1123 + $0x10] sm:$0xff]
      %v1127 = vld [vmem:[%s1123 + $0x18] sm:$0xff]
      %v1128 = vpack.c.bf16 %v1114, %v1114
      %v1129 = vld [vmem:[%s225] sm:$0xff]
      %v1130 = vld [vmem:[%s225 + $0x8] sm:$0xff]
      %v1131 = vld [vmem:[%s225 + $0x10] sm:$0xff]
      %v1132 = vld [vmem:[%s225 + $0x18] sm:$0xff]
      %v1133 = vld [vmem:[%s225 + $0x20] sm:$0xff]
      %v1134 = vld [vmem:[%s225 + $0x28] sm:$0xff]
      %v1135 = vld [vmem:[%s225 + $0x30] sm:$0xff]
      %v1136 = vld [vmem:[%s225 + $0x38] sm:$0xff]
      %v1137 = vld [vmem:[%s225 + $0x40] sm:$0xff]
      %v1138 = vld [vmem:[%s225 + $0x48] sm:$0xff]
      %v1139 = vld [vmem:[%s225 + $0x50] sm:$0xff]
      %v1140 = vld [vmem:[%s225 + $0x58] sm:$0xff]
      %v1141 = vld [vmem:[%s225 + $0x60] sm:$0xff]
      %v1142 = vld [vmem:[%s225 + $0x68] sm:$0xff]
      %v1143 = vld [vmem:[%s225 + $0x70] sm:$0xff]
      %v1144 = vld [vmem:[%s225 + $0x78] sm:$0xff]
      %v1145 = vld [vmem:[%s225 + $0x80] sm:$0xff]
      %v1146 = vld [vmem:[%s225 + $0x88] sm:$0xff]
      %v1147 = vld [vmem:[%s225 + $0x90] sm:$0xff]
      %v1148 = vld [vmem:[%s225 + $0x98] sm:$0xff]
      %v1149 = vld [vmem:[%s225 + $0xa0] sm:$0xff]
      %v1150 = vld [vmem:[%s225 + $0xa8] sm:$0xff]
      %v1151 = vld [vmem:[%s225 + $0xb0] sm:$0xff]
      %v1152 = vld [vmem:[%s225 + $0xb8] sm:$0xff]
      %v1153 = vld [vmem:[%s225 + $0xc0] sm:$0xff]
      %v1154 = vld [vmem:[%s225 + $0xc8] sm:$0xff]
      %v1155 = vld [vmem:[%s225 + $0xd0] sm:$0xff]
      %v1156 = vld [vmem:[%s225 + $0xd8] sm:$0xff]
      %v1157 = vld [vmem:[%s225 + $0xe0] sm:$0xff]
      %v1158 = vld [vmem:[%s225 + $0xe8] sm:$0xff]
      %v1159 = vld [vmem:[%s225 + $0xf0] sm:$0xff]
      %v1160 = vld [vmem:[%s225 + $0xf8] sm:$0xff]
      %v1193 = vunpack.c.l.b16 %v1129
      %v1194 = vunpack.c.h.b16 %v1129
      %v1195 = vunpack.c.l.b16 %v1130
      %v1196 = vunpack.c.h.b16 %v1130
      %v1197 = vunpack.c.l.b16 %v1131
      %v1198 = vunpack.c.h.b16 %v1131
      %v1199 = vunpack.c.l.b16 %v1132
      %v1200 = vunpack.c.h.b16 %v1132
      %v1201 = vunpack.c.l.b16 %v1133
      %v1202 = vunpack.c.h.b16 %v1133
      %v1203 = vunpack.c.l.b16 %v1134
      %v1204 = vunpack.c.h.b16 %v1134
      %v1205 = vunpack.c.l.b16 %v1135
      %v1206 = vunpack.c.h.b16 %v1135
      %v1207 = vunpack.c.l.b16 %v1136
      %v1208 = vunpack.c.h.b16 %v1136
      %v1209 = vunpack.c.l.b16 %v1137
      %v1210 = vunpack.c.h.b16 %v1137
      %v1211 = vunpack.c.l.b16 %v1138
      %v1212 = vunpack.c.h.b16 %v1138
      %v1213 = vunpack.c.l.b16 %v1139
      %v1214 = vunpack.c.h.b16 %v1139
      %v1215 = vunpack.c.l.b16 %v1140
      %v1216 = vunpack.c.h.b16 %v1140
      %v1217 = vunpack.c.l.b16 %v1141
      %v1218 = vunpack.c.h.b16 %v1141
      %v1219 = vunpack.c.l.b16 %v1142
      %v1220 = vunpack.c.h.b16 %v1142
      %v1221 = vunpack.c.l.b16 %v1143
      %v1222 = vunpack.c.h.b16 %v1143
      %v1223 = vunpack.c.l.b16 %v1144
      %v1224 = vunpack.c.h.b16 %v1144
      %v1225 = vunpack.c.l.b16 %v1145
      %v1226 = vunpack.c.h.b16 %v1145
      %v1227 = vunpack.c.l.b16 %v1146
      %v1228 = vunpack.c.h.b16 %v1146
      %v1229 = vunpack.c.l.b16 %v1147
      %v1230 = vunpack.c.h.b16 %v1147
      %v1231 = vunpack.c.l.b16 %v1148
      %v1232 = vunpack.c.h.b16 %v1148
      %v1233 = vunpack.c.l.b16 %v1149
      %v1234 = vunpack.c.h.b16 %v1149
      %v1235 = vunpack.c.l.b16 %v1150
      %v1236 = vunpack.c.h.b16 %v1150
      %v1237 = vunpack.c.l.b16 %v1151
      %v1238 = vunpack.c.h.b16 %v1151
      %v1239 = vunpack.c.l.b16 %v1152
      %v1240 = vunpack.c.h.b16 %v1152
      %v1241 = vunpack.c.l.b16 %v1153
      %v1242 = vunpack.c.h.b16 %v1153
      %v1243 = vunpack.c.l.b16 %v1154
      %v1244 = vunpack.c.h.b16 %v1154
      %v1245 = vunpack.c.l.b16 %v1155
      %v1246 = vunpack.c.h.b16 %v1155
      %v1247 = vunpack.c.l.b16 %v1156
      %v1248 = vunpack.c.h.b16 %v1156
      %v1249 = vunpack.c.l.b16 %v1157
      %v1250 = vunpack.c.h.b16 %v1157
      %v1251 = vunpack.c.l.b16 %v1158
      %v1252 = vunpack.c.h.b16 %v1158
      %v1253 = vunpack.c.l.b16 %v1159
      %v1254 = vunpack.c.h.b16 %v1159
      %v1255 = vunpack.c.l.b16 %v1160
      %v1256 = vunpack.c.h.b16 %v1160
      %v1257 = vpack.c.b16 %v1197, %v1193
      %v1258 = vpack.c.b16 %v1198, %v1194
      %v1259 = vpack.c.b16 %v1199, %v1195
      %v1260 = vpack.c.b16 %v1200, %v1196
      %v1261 = vpack.c.b16 %v1205, %v1201
      %v1262 = vpack.c.b16 %v1206, %v1202
      %v1263 = vpack.c.b16 %v1207, %v1203
      %v1264 = vpack.c.b16 %v1208, %v1204
      %v1265 = vpack.c.b16 %v1213, %v1209
      %v1266 = vpack.c.b16 %v1214, %v1210
      %v1267 = vpack.c.b16 %v1215, %v1211
      %v1268 = vpack.c.b16 %v1216, %v1212
      %v1269 = vpack.c.b16 %v1221, %v1217
      %v1270 = vpack.c.b16 %v1222, %v1218
      %v1271 = vpack.c.b16 %v1223, %v1219
      %v1272 = vpack.c.b16 %v1224, %v1220
      %v1273 = vpack.c.b16 %v1229, %v1225
      %v1274 = vpack.c.b16 %v1230, %v1226
      %v1275 = vpack.c.b16 %v1231, %v1227
      %v1276 = vpack.c.b16 %v1232, %v1228
      %v1277 = vpack.c.b16 %v1237, %v1233
      %v1278 = vpack.c.b16 %v1238, %v1234
      %v1279 = vpack.c.b16 %v1239, %v1235
      %v1280 = vpack.c.b16 %v1240, %v1236
      %v1281 = vpack.c.b16 %v1245, %v1241
      %v1282 = vpack.c.b16 %v1246, %v1242
      %v1283 = vpack.c.b16 %v1247, %v1243
      %v1284 = vpack.c.b16 %v1248, %v1244
      %v1285 = vpack.c.b16 %v1253, %v1249
      %v1286 = vpack.c.b16 %v1254, %v1250
      %v1287 = vpack.c.b16 %v1255, %v1251
      %v1288 = vpack.c.b16 %v1256, %v1252
      %1321 = vmatprep.subr.bf16.mxu0 %v1258
      %1322 = vmatpush1.bf16.msra.mxu0 %v1257
      %1323 = vmatprep.subr.bf16.mxu0 %v1262
      %1324 = vmatpush1.bf16.msra.mxu0 %v1261
      %1325 = vmatprep.subr.bf16.mxu0 %v1266
      %1326 = vmatpush1.bf16.msra.mxu0 %v1265
      %1327 = vmatprep.subr.bf16.mxu0 %v1270
      %1328 = vmatpush1.bf16.msra.mxu0 %v1269
      %1329 = vmatprep.subr.bf16.mxu0 %v1274
      %1330 = vmatpush1.bf16.msra.mxu0 %v1273
      %1331 = vmatprep.subr.bf16.mxu0 %v1278
      %1332 = vmatpush1.bf16.msra.mxu0 %v1277
      %1333 = vmatprep.subr.bf16.mxu0 %v1282
      %1334 = vmatpush1.bf16.msra.mxu0 %v1281
      %1335 = vmatprep.subr.bf16.mxu0 %v1286
      %1336 = vmatpush1.bf16.msra.mxu0 %v1285
      %1337 = vmatprep.subr.bf16.mxu0 0
      %1338 = vmatpush1.bf16.msra.mxu0 0
      %1339 = vmatprep.subr.bf16.mxu0 0
      %1340 = vmatpush1.bf16.msra.mxu0 0
      %1341 = vmatprep.subr.bf16.mxu0 0
      %1342 = vmatpush1.bf16.msra.mxu0 0
      %1343 = vmatprep.subr.bf16.mxu0 0
      %1344 = vmatpush1.bf16.msra.mxu0 0
      %1345 = vmatprep.subr.bf16.mxu0 0
      %1346 = vmatpush1.bf16.msra.mxu0 0
      %1347 = vmatprep.subr.bf16.mxu0 0
      %1348 = vmatpush1.bf16.msra.mxu0 0
      %1349 = vmatprep.subr.bf16.mxu0 0
      %1350 = vmatpush1.bf16.msra.mxu0 0
      %1351 = vmatprep.subr.bf16.mxu0 0
      %1352 = vmatpush1.bf16.msra.mxu0 0
      %1353 = vmatprep.mubr.bf16.mxu0 0
      %1354 = vmatmul.mubr.bf16.gmra.mrb[0].mxu0 %v1128
      %v1355 = vpop.f32.mrb[0].mxu0
      %v1356 = vadd.f32 0.0, %v1355
      %v1357 = vpop.f32.mrb[0].mxu0
      %v1358 = vadd.f32 0.0, %v1357
      %v1359 = vpop.f32.mrb[0].mxu0
      %v1360 = vpop.f32.mrb[0].mxu0
      %1361 = vdwg.mxu0
      %1362 = vmatprep.subr.bf16.mxu0 %v1260
      %1363 = vmatpush1.bf16.msra.mxu0 %v1259
      %1364 = vmatprep.subr.bf16.mxu0 %v1264
      %1365 = vmatpush1.bf16.msra.mxu0 %v1263
      %1366 = vmatprep.subr.bf16.mxu0 %v1268
      %1367 = vmatpush1.bf16.msra.mxu0 %v1267
      %1368 = vmatprep.subr.bf16.mxu0 %v1272
      %1369 = vmatpush1.bf16.msra.mxu0 %v1271
      %1370 = vmatprep.subr.bf16.mxu0 %v1276
      %1371 = vmatpush1.bf16.msra.mxu0 %v1275
      %1372 = vmatprep.subr.bf16.mxu0 %v1280
      %1373 = vmatpush1.bf16.msra.mxu0 %v1279
      %1374 = vmatprep.subr.bf16.mxu0 %v1284
      %1375 = vmatpush1.bf16.msra.mxu0 %v1283
      %1376 = vmatprep.subr.bf16.mxu0 %v1288
      %1377 = vmatpush1.bf16.msra.mxu0 %v1287
      %1378 = vmatprep.subr.bf16.mxu0 0
      %1379 = vmatpush1.bf16.msra.mxu0 0
      %1380 = vmatprep.subr.bf16.mxu0 0
      %1381 = vmatpush1.bf16.msra.mxu0 0
      %1382 = vmatprep.subr.bf16.mxu0 0
      %1383 = vmatpush1.bf16.msra.mxu0 0
      %1384 = vmatprep.subr.bf16.mxu0 0
      %1385 = vmatpush1.bf16.msra.mxu0 0
      %1386 = vmatprep.subr.bf16.mxu0 0
      %1387 = vmatpush1.bf16.msra.mxu0 0
      %1388 = vmatprep.subr.bf16.mxu0 0
      %1389 = vmatpush1.bf16.msra.mxu0 0
      %1390 = vmatprep.subr.bf16.mxu0 0
      %1391 = vmatpush1.bf16.msra.mxu0 0
      %1392 = vmatprep.subr.bf16.mxu0 0
      %1393 = vmatpush1.bf16.msra.mxu0 0
      %1394 = vmatprep.mubr.bf16.mxu0 0
      %1395 = vmatmul.mubr.bf16.gmra.mrb[0].mxu0 %v1128
      %v1396 = vpop.f32.mrb[0].mxu0
      %v1397 = vadd.f32 0.0, %v1396
      %v1398 = vpop.f32.mrb[0].mxu0
      %v1399 = vadd.f32 0.0, %v1398
      %v1400 = vpop.f32.mrb[0].mxu0
      %v1401 = vpop.f32.mrb[0].mxu0
      %1402 = vdwg.mxu0
      %v1403 = vadd.f32 %v1124, %v1356
      %v1404 = vadd.f32 %v1125, %v1358
      %v1405 = vadd.f32 %v1126, %v1397
      %v1406 = vadd.f32 %v1127, %v1399
      %v1407 = vxor.u32 %v1403, 2147483648
      %v1408 = vmul.f32 %v1407, 1.442695
      %v1409 = vpow.pop %v1408
      %v1410 = vadd.f32 %v1409, 1.0
      %v1411 = vrcp.pop %v1410
      %v1412 = vmul.f32 1.0, %v1411
      %v1413 = vxor.u32 %v1404, 2147483648
      %v1414 = vmul.f32 %v1413, 1.442695
      %v1415 = vpow.pop %v1414
      %v1416 = vadd.f32 %v1415, 1.0
      %v1417 = vrcp.pop %v1416
      %v1418 = vmul.f32 1.0, %v1417
      %v1419 = vtanh.pop %v1405
      %v1420 = vxor.u32 %v1406, 2147483648
      %v1421 = vmul.f32 %v1420, 1.442695
      %v1422 = vpow.pop %v1421
      %v1423 = vadd.f32 %v1422, 1.0
      %v1424 = vrcp.pop %v1423
      %v1425 = vmul.f32 1.0, %v1424
      %v1426 = vmul.f32 %v1418, %v1112
      %v1427 = vmul.f32 %v1412, %v1419
      %v1428 = vadd.f32 %v1426, %v1427
      %v1429 = vtanh.pop %v1428
      %v1430 = vmul.f32 %v1425, %v1429
      %s1431 = scalar_lea.vmem %s234, %s1118
      %1432 = vst [vmem:[%s1431] sm:$0xff] %v1430
      %s1433 = scalar_select %p485, 3, 4
      %s1434 = smul.u32 %s1433, 8
      %s1435 = sshra.s32 %s1434, 3
      %s1436 = sand.u32 %s1434, 7
      %s1437 = smul.u32 %s1435, 4
      %s1438 = smul.addr %s1437, 8
      %s1439 = scalar_lea.vmem [#allocation2], %s1438
      %v1440 = vld [vmem:[%s1439] sm:$0xff]
      %v1441 = vld [vmem:[%s1439 + $0x8] sm:$0xff]
      %v1442 = vld [vmem:[%s1439 + $0x10] sm:$0xff]
      %v1443 = vld [vmem:[%s1439 + $0x18] sm:$0xff]
      %v1444 = vpack.c.bf16 %v1430, %v1430
      %v1445 = vld [vmem:[%s225] sm:$0xff]
      %v1446 = vld [vmem:[%s225 + $0x8] sm:$0xff]
      %v1447 = vld [vmem:[%s225 + $0x10] sm:$0xff]
      %v1448 = vld [vmem:[%s225 + $0x18] sm:$0xff]
      %v1449 = vld [vmem:[%s225 + $0x20] sm:$0xff]
      %v1450 = vld [vmem:[%s225 + $0x28] sm:$0xff]
      %v1451 = vld [vmem:[%s225 + $0x30] sm:$0xff]
      %v1452 = vld [vmem:[%s225 + $0x38] sm:$0xff]
      %v1453 = vld [vmem:[%s225 + $0x40] sm:$0xff]
      %v1454 = vld [vmem:[%s225 + $0x48] sm:$0xff]
      %v1455 = vld [vmem:[%s225 + $0x50] sm:$0xff]
      %v1456 = vld [vmem:[%s225 + $0x58] sm:$0xff]
      %v1457 = vld [vmem:[%s225 + $0x60] sm:$0xff]
      %v1458 = vld [vmem:[%s225 + $0x68] sm:$0xff]
      %v1459 = vld [vmem:[%s225 + $0x70] sm:$0xff]
      %v1460 = vld [vmem:[%s225 + $0x78] sm:$0xff]
      %v1461 = vld [vmem:[%s225 + $0x80] sm:$0xff]
      %v1462 = vld [vmem:[%s225 + $0x88] sm:$0xff]
      %v1463 = vld [vmem:[%s225 + $0x90] sm:$0xff]
      %v1464 = vld [vmem:[%s225 + $0x98] sm:$0xff]
      %v1465 = vld [vmem:[%s225 + $0xa0] sm:$0xff]
      %v1466 = vld [vmem:[%s225 + $0xa8] sm:$0xff]
      %v1467 = vld [vmem:[%s225 + $0xb0] sm:$0xff]
      %v1468 = vld [vmem:[%s225 + $0xb8] sm:$0xff]
      %v1469 = vld [vmem:[%s225 + $0xc0] sm:$0xff]
      %v1470 = vld [vmem:[%s225 + $0xc8] sm:$0xff]
      %v1471 = vld [vmem:[%s225 + $0xd0] sm:$0xff]
      %v1472 = vld [vmem:[%s225 + $0xd8] sm:$0xff]
      %v1473 = vld [vmem:[%s225 + $0xe0] sm:$0xff]
      %v1474 = vld [vmem:[%s225 + $0xe8] sm:$0xff]
      %v1475 = vld [vmem:[%s225 + $0xf0] sm:$0xff]
      %v1476 = vld [vmem:[%s225 + $0xf8] sm:$0xff]
      %v1509 = vunpack.c.l.b16 %v1445
      %v1510 = vunpack.c.h.b16 %v1445
      %v1511 = vunpack.c.l.b16 %v1446
      %v1512 = vunpack.c.h.b16 %v1446
      %v1513 = vunpack.c.l.b16 %v1447
      %v1514 = vunpack.c.h.b16 %v1447
      %v1515 = vunpack.c.l.b16 %v1448
      %v1516 = vunpack.c.h.b16 %v1448
      %v1517 = vunpack.c.l.b16 %v1449
      %v1518 = vunpack.c.h.b16 %v1449
      %v1519 = vunpack.c.l.b16 %v1450
      %v1520 = vunpack.c.h.b16 %v1450
      %v1521 = vunpack.c.l.b16 %v1451
      %v1522 = vunpack.c.h.b16 %v1451
      %v1523 = vunpack.c.l.b16 %v1452
      %v1524 = vunpack.c.h.b16 %v1452
      %v1525 = vunpack.c.l.b16 %v1453
      %v1526 = vunpack.c.h.b16 %v1453
      %v1527 = vunpack.c.l.b16 %v1454
      %v1528 = vunpack.c.h.b16 %v1454
      %v1529 = vunpack.c.l.b16 %v1455
      %v1530 = vunpack.c.h.b16 %v1455
      %v1531 = vunpack.c.l.b16 %v1456
      %v1532 = vunpack.c.h.b16 %v1456
      %v1533 = vunpack.c.l.b16 %v1457
      %v1534 = vunpack.c.h.b16 %v1457
      %v1535 = vunpack.c.l.b16 %v1458
      %v1536 = vunpack.c.h.b16 %v1458
      %v1537 = vunpack.c.l.b16 %v1459
      %v1538 = vunpack.c.h.b16 %v1459
      %v1539 = vunpack.c.l.b16 %v1460
      %v1540 = vunpack.c.h.b16 %v1460
      %v1541 = vunpack.c.l.b16 %v1461
      %v1542 = vunpack.c.h.b16 %v1461
      %v1543 = vunpack.c.l.b16 %v1462
      %v1544 = vunpack.c.h.b16 %v1462
      %v1545 = vunpack.c.l.b16 %v1463
      %v1546 = vunpack.c.h.b16 %v1463
      %v1547 = vunpack.c.l.b16 %v1464
      %v1548 = vunpack.c.h.b16 %v1464
      %v1549 = vunpack.c.l.b16 %v1465
      %v1550 = vunpack.c.h.b16 %v1465
      %v1551 = vunpack.c.l.b16 %v1466
      %v1552 = vunpack.c.h.b16 %v1466
      %v1553 = vunpack.c.l.b16 %v1467
      %v1554 = vunpack.c.h.b16 %v1467
      %v1555 = vunpack.c.l.b16 %v1468
      %v1556 = vunpack.c.h.b16 %v1468
      %v1557 = vunpack.c.l.b16 %v1469
      %v1558 = vunpack.c.h.b16 %v1469
      %v1559 = vunpack.c.l.b16 %v1470
      %v1560 = vunpack.c.h.b16 %v1470
      %v1561 = vunpack.c.l.b16 %v1471
      %v1562 = vunpack.c.h.b16 %v1471
      %v1563 = vunpack.c.l.b16 %v1472
      %v1564 = vunpack.c.h.b16 %v1472
      %v1565 = vunpack.c.l.b16 %v1473
      %v1566 = vunpack.c.h.b16 %v1473
      %v1567 = vunpack.c.l.b16 %v1474
      %v1568 = vunpack.c.h.b16 %v1474
      %v1569 = vunpack.c.l.b16 %v1475
      %v1570 = vunpack.c.h.b16 %v1475
      %v1571 = vunpack.c.l.b16 %v1476
      %v1572 = vunpack.c.h.b16 %v1476
      %v1573 = vpack.c.b16 %v1513, %v1509
      %v1574 = vpack.c.b16 %v1514, %v1510
      %v1575 = vpack.c.b16 %v1515, %v1511
      %v1576 = vpack.c.b16 %v1516, %v1512
      %v1577 = vpack.c.b16 %v1521, %v1517
      %v1578 = vpack.c.b16 %v1522, %v1518
      %v1579 = vpack.c.b16 %v1523, %v1519
      %v1580 = vpack.c.b16 %v1524, %v1520
      %v1581 = vpack.c.b16 %v1529, %v1525
      %v1582 = vpack.c.b16 %v1530, %v1526
      %v1583 = vpack.c.b16 %v1531, %v1527
      %v1584 = vpack.c.b16 %v1532, %v1528
      %v1585 = vpack.c.b16 %v1537, %v1533
      %v1586 = vpack.c.b16 %v1538, %v1534
      %v1587 = vpack.c.b16 %v1539, %v1535
      %v1588 = vpack.c.b16 %v1540, %v1536
      %v1589 = vpack.c.b16 %v1545, %v1541
      %v1590 = vpack.c.b16 %v1546, %v1542
      %v1591 = vpack.c.b16 %v1547, %v1543
      %v1592 = vpack.c.b16 %v1548, %v1544
      %v1593 = vpack.c.b16 %v1553, %v1549
      %v1594 = vpack.c.b16 %v1554, %v1550
      %v1595 = vpack.c.b16 %v1555, %v1551
      %v1596 = vpack.c.b16 %v1556, %v1552
      %v1597 = vpack.c.b16 %v1561, %v1557
      %v1598 = vpack.c.b16 %v1562, %v1558
      %v1599 = vpack.c.b16 %v1563, %v1559
      %v1600 = vpack.c.b16 %v1564, %v1560
      %v1601 = vpack.c.b16 %v1569, %v1565
      %v1602 = vpack.c.b16 %v1570, %v1566
      %v1603 = vpack.c.b16 %v1571, %v1567
      %v1604 = vpack.c.b16 %v1572, %v1568
      %1637 = vmatprep.subr.bf16.mxu0 %v1574
      %1638 = vmatpush1.bf16.msra.mxu0 %v1573
      %1639 = vmatprep.subr.bf16.mxu0 %v1578
      %1640 = vmatpush1.bf16.msra.mxu0 %v1577
      %1641 = vmatprep.subr.bf16.mxu0 %v1582
      %1642 = vmatpush1.bf16.msra.mxu0 %v1581
      %1643 = vmatprep.subr.bf16.mxu0 %v1586
      %1644 = vmatpush1.bf16.msra.mxu0 %v1585
      %1645 = vmatprep.subr.bf16.mxu0 %v1590
      %1646 = vmatpush1.bf16.msra.mxu0 %v1589
      %1647 = vmatprep.subr.bf16.mxu0 %v1594
      %1648 = vmatpush1.bf16.msra.mxu0 %v1593
      %1649 = vmatprep.subr.bf16.mxu0 %v1598
      %1650 = vmatpush1.bf16.msra.mxu0 %v1597
      %1651 = vmatprep.subr.bf16.mxu0 %v1602
      %1652 = vmatpush1.bf16.msra.mxu0 %v1601
      %1653 = vmatprep.subr.bf16.mxu0 0
      %1654 = vmatpush1.bf16.msra.mxu0 0
      %1655 = vmatprep.subr.bf16.mxu0 0
      %1656 = vmatpush1.bf16.msra.mxu0 0
      %1657 = vmatprep.subr.bf16.mxu0 0
      %1658 = vmatpush1.bf16.msra.mxu0 0
      %1659 = vmatprep.subr.bf16.mxu0 0
      %1660 = vmatpush1.bf16.msra.mxu0 0
      %1661 = vmatprep.subr.bf16.mxu0 0
      %1662 = vmatpush1.bf16.msra.mxu0 0
      %1663 = vmatprep.subr.bf16.mxu0 0
      %1664 = vmatpush1.bf16.msra.mxu0 0
      %1665 = vmatprep.subr.bf16.mxu0 0
      %1666 = vmatpush1.bf16.msra.mxu0 0
      %1667 = vmatprep.subr.bf16.mxu0 0
      %1668 = vmatpush1.bf16.msra.mxu0 0
      %1669 = vmatprep.mubr.bf16.mxu0 0
      %1670 = vmatmul.mubr.bf16.gmra.mrb[0].mxu0 %v1444
      %v1671 = vpop.f32.mrb[0].mxu0
      %v1672 = vadd.f32 0.0, %v1671
      %v1673 = vpop.f32.mrb[0].mxu0
      %v1674 = vadd.f32 0.0, %v1673
      %v1675 = vpop.f32.mrb[0].mxu0
      %v1676 = vpop.f32.mrb[0].mxu0
      %1677 = vdwg.mxu0
      %1678 = vmatprep.subr.bf16.mxu0 %v1576
      %1679 = vmatpush1.bf16.msra.mxu0 %v1575
      %1680 = vmatprep.subr.bf16.mxu0 %v1580
      %1681 = vmatpush1.bf16.msra.mxu0 %v1579
      %1682 = vmatprep.subr.bf16.mxu0 %v1584
      %1683 = vmatpush1.bf16.msra.mxu0 %v1583
      %1684 = vmatprep.subr.bf16.mxu0 %v1588
      %1685 = vmatpush1.bf16.msra.mxu0 %v1587
      %1686 = vmatprep.subr.bf16.mxu0 %v1592
      %1687 = vmatpush1.bf16.msra.mxu0 %v1591
      %1688 = vmatprep.subr.bf16.mxu0 %v1596
      %1689 = vmatpush1.bf16.msra.mxu0 %v1595
      %1690 = vmatprep.subr.bf16.mxu0 %v1600
      %1691 = vmatpush1.bf16.msra.mxu0 %v1599
      %1692 = vmatprep.subr.bf16.mxu0 %v1604
      %1693 = vmatpush1.bf16.msra.mxu0 %v1603
      %1694 = vmatprep.subr.bf16.mxu0 0
      %1695 = vmatpush1.bf16.msra.mxu0 0
      %1696 = vmatprep.subr.bf16.mxu0 0
      %1697 = vmatpush1.bf16.msra.mxu0 0
      %1698 = vmatprep.subr.bf16.mxu0 0
      %1699 = vmatpush1.bf16.msra.mxu0 0
      %1700 = vmatprep.subr.bf16.mxu0 0
      %1701 = vmatpush1.bf16.msra.mxu0 0
      %1702 = vmatprep.subr.bf16.mxu0 0
      %1703 = vmatpush1.bf16.msra.mxu0 0
      %1704 = vmatprep.subr.bf16.mxu0 0
      %1705 = vmatpush1.bf16.msra.mxu0 0
      %1706 = vmatprep.subr.bf16.mxu0 0
      %1707 = vmatpush1.bf16.msra.mxu0 0
      %1708 = vmatprep.subr.bf16.mxu0 0
      %1709 = vmatpush1.bf16.msra.mxu0 0
      %1710 = vmatprep.mubr.bf16.mxu0 0
      %1711 = vmatmul.mubr.bf16.gmra.mrb[0].mxu0 %v1444
      %v1712 = vpop.f32.mrb[0].mxu0
      %v1713 = vadd.f32 0.0, %v1712
      %v1714 = vpop.f32.mrb[0].mxu0
      %v1715 = vadd.f32 0.0, %v1714
      %v1716 = vpop.f32.mrb[0].mxu0
      %v1717 = vpop.f32.mrb[0].mxu0
      %1718 = vdwg.mxu0
      %v1719 = vadd.f32 %v1440, %v1672
      %v1720 = vadd.f32 %v1441, %v1674
      %v1721 = vadd.f32 %v1442, %v1713
      %v1722 = vadd.f32 %v1443, %v1715
      %v1723 = vxor.u32 %v1719, 2147483648
      %v1724 = vmul.f32 %v1723, 1.442695
      %v1725 = vpow.pop %v1724
      %v1726 = vadd.f32 %v1725, 1.0
      %v1727 = vrcp.pop %v1726
      %v1728 = vmul.f32 1.0, %v1727
      %v1729 = vxor.u32 %v1720, 2147483648
      %v1730 = vmul.f32 %v1729, 1.442695
      %v1731 = vpow.pop %v1730
      %v1732 = vadd.f32 %v1731, 1.0
      %v1733 = vrcp.pop %v1732
      %v1734 = vmul.f32 1.0, %v1733
      %v1735 = vtanh.pop %v1721
      %v1736 = vxor.u32 %v1722, 2147483648
      %v1737 = vmul.f32 %v1736, 1.442695
      %v1738 = vpow.pop %v1737
      %v1739 = vadd.f32 %v1738, 1.0
      %v1740 = vrcp.pop %v1739
      %v1741 = vmul.f32 1.0, %v1740
      %v1742 = vmul.f32 %v1734, %v1428
      %v1743 = vmul.f32 %v1728, %v1735
      %v1744 = vadd.f32 %v1742, %v1743
      %v1745 = vtanh.pop %v1744
      %v1746 = vmul.f32 %v1741, %v1745
      %s1747 = scalar_lea.vmem %s234, %s1434
      %1748 = vst [vmem:[%s1747] sm:$0xff] %v1746
      %s1749 = scalar_select %p485, 4, 3
      %s1750 = smul.u32 %s1749, 8
      %s1751 = sshra.s32 %s1750, 3
      %s1752 = sand.u32 %s1750, 7
      %s1753 = smul.u32 %s1751, 4
      %s1754 = smul.addr %s1753, 8
      %s1755 = scalar_lea.vmem [#allocation2], %s1754
      %v1756 = vld [vmem:[%s1755] sm:$0xff]
      %v1757 = vld [vmem:[%s1755 + $0x8] sm:$0xff]
      %v1758 = vld [vmem:[%s1755 + $0x10] sm:$0xff]
      %v1759 = vld [vmem:[%s1755 + $0x18] sm:$0xff]
      %v1760 = vpack.c.bf16 %v1746, %v1746
      %v1761 = vld [vmem:[%s225] sm:$0xff]
      %v1762 = vld [vmem:[%s225 + $0x8] sm:$0xff]
      %v1763 = vld [vmem:[%s225 + $0x10] sm:$0xff]
      %v1764 = vld [vmem:[%s225 + $0x18] sm:$0xff]
      %v1765 = vld [vmem:[%s225 + $0x20] sm:$0xff]
      %v1766 = vld [vmem:[%s225 + $0x28] sm:$0xff]
      %v1767 = vld [vmem:[%s225 + $0x30] sm:$0xff]
      %v1768 = vld [vmem:[%s225 + $0x38] sm:$0xff]
      %v1769 = vld [vmem:[%s225 + $0x40] sm:$0xff]
      %v1770 = vld [vmem:[%s225 + $0x48] sm:$0xff]
      %v1771 = vld [vmem:[%s225 + $0x50] sm:$0xff]
      %v1772 = vld [vmem:[%s225 + $0x58] sm:$0xff]
      %v1773 = vld [vmem:[%s225 + $0x60] sm:$0xff]
      %v1774 = vld [vmem:[%s225 + $0x68] sm:$0xff]
      %v1775 = vld [vmem:[%s225 + $0x70] sm:$0xff]
      %v1776 = vld [vmem:[%s225 + $0x78] sm:$0xff]
      %v1777 = vld [vmem:[%s225 + $0x80] sm:$0xff]
      %v1778 = vld [vmem:[%s225 + $0x88] sm:$0xff]
      %v1779 = vld [vmem:[%s225 + $0x90] sm:$0xff]
      %v1780 = vld [vmem:[%s225 + $0x98] sm:$0xff]
      %v1781 = vld [vmem:[%s225 + $0xa0] sm:$0xff]
      %v1782 = vld [vmem:[%s225 + $0xa8] sm:$0xff]
      %v1783 = vld [vmem:[%s225 + $0xb0] sm:$0xff]
      %v1784 = vld [vmem:[%s225 + $0xb8] sm:$0xff]
      %v1785 = vld [vmem:[%s225 + $0xc0] sm:$0xff]
      %v1786 = vld [vmem:[%s225 + $0xc8] sm:$0xff]
      %v1787 = vld [vmem:[%s225 + $0xd0] sm:$0xff]
      %v1788 = vld [vmem:[%s225 + $0xd8] sm:$0xff]
      %v1789 = vld [vmem:[%s225 + $0xe0] sm:$0xff]
      %v1790 = vld [vmem:[%s225 + $0xe8] sm:$0xff]
      %v1791 = vld [vmem:[%s225 + $0xf0] sm:$0xff]
      %v1792 = vld [vmem:[%s225 + $0xf8] sm:$0xff]
      %v1825 = vunpack.c.l.b16 %v1761
      %v1826 = vunpack.c.h.b16 %v1761
      %v1827 = vunpack.c.l.b16 %v1762
      %v1828 = vunpack.c.h.b16 %v1762
      %v1829 = vunpack.c.l.b16 %v1763
      %v1830 = vunpack.c.h.b16 %v1763
      %v1831 = vunpack.c.l.b16 %v1764
      %v1832 = vunpack.c.h.b16 %v1764
      %v1833 = vunpack.c.l.b16 %v1765
      %v1834 = vunpack.c.h.b16 %v1765
      %v1835 = vunpack.c.l.b16 %v1766
      %v1836 = vunpack.c.h.b16 %v1766
      %v1837 = vunpack.c.l.b16 %v1767
      %v1838 = vunpack.c.h.b16 %v1767
      %v1839 = vunpack.c.l.b16 %v1768
      %v1840 = vunpack.c.h.b16 %v1768
      %v1841 = vunpack.c.l.b16 %v1769
      %v1842 = vunpack.c.h.b16 %v1769
      %v1843 = vunpack.c.l.b16 %v1770
      %v1844 = vunpack.c.h.b16 %v1770
      %v1845 = vunpack.c.l.b16 %v1771
      %v1846 = vunpack.c.h.b16 %v1771
      %v1847 = vunpack.c.l.b16 %v1772
      %v1848 = vunpack.c.h.b16 %v1772
      %v1849 = vunpack.c.l.b16 %v1773
      %v1850 = vunpack.c.h.b16 %v1773
      %v1851 = vunpack.c.l.b16 %v1774
      %v1852 = vunpack.c.h.b16 %v1774
      %v1853 = vunpack.c.l.b16 %v1775
      %v1854 = vunpack.c.h.b16 %v1775
      %v1855 = vunpack.c.l.b16 %v1776
      %v1856 = vunpack.c.h.b16 %v1776
      %v1857 = vunpack.c.l.b16 %v1777
      %v1858 = vunpack.c.h.b16 %v1777
      %v1859 = vunpack.c.l.b16 %v1778
      %v1860 = vunpack.c.h.b16 %v1778
      %v1861 = vunpack.c.l.b16 %v1779
      %v1862 = vunpack.c.h.b16 %v1779
      %v1863 = vunpack.c.l.b16 %v1780
      %v1864 = vunpack.c.h.b16 %v1780
      %v1865 = vunpack.c.l.b16 %v1781
      %v1866 = vunpack.c.h.b16 %v1781
      %v1867 = vunpack.c.l.b16 %v1782
      %v1868 = vunpack.c.h.b16 %v1782
      %v1869 = vunpack.c.l.b16 %v1783
      %v1870 = vunpack.c.h.b16 %v1783
      %v1871 = vunpack.c.l.b16 %v1784
      %v1872 = vunpack.c.h.b16 %v1784
      %v1873 = vunpack.c.l.b16 %v1785
      %v1874 = vunpack.c.h.b16 %v1785
      %v1875 = vunpack.c.l.b16 %v1786
      %v1876 = vunpack.c.h.b16 %v1786
      %v1877 = vunpack.c.l.b16 %v1787
      %v1878 = vunpack.c.h.b16 %v1787
      %v1879 = vunpack.c.l.b16 %v1788
      %v1880 = vunpack.c.h.b16 %v1788
      %v1881 = vunpack.c.l.b16 %v1789
      %v1882 = vunpack.c.h.b16 %v1789
      %v1883 = vunpack.c.l.b16 %v1790
      %v1884 = vunpack.c.h.b16 %v1790
      %v1885 = vunpack.c.l.b16 %v1791
      %v1886 = vunpack.c.h.b16 %v1791
      %v1887 = vunpack.c.l.b16 %v1792
      %v1888 = vunpack.c.h.b16 %v1792
      %v1889 = vpack.c.b16 %v1829, %v1825
      %v1890 = vpack.c.b16 %v1830, %v1826
      %v1891 = vpack.c.b16 %v1831, %v1827
      %v1892 = vpack.c.b16 %v1832, %v1828
      %v1893 = vpack.c.b16 %v1837, %v1833
      %v1894 = vpack.c.b16 %v1838, %v1834
      %v1895 = vpack.c.b16 %v1839, %v1835
      %v1896 = vpack.c.b16 %v1840, %v1836
      %v1897 = vpack.c.b16 %v1845, %v1841
      %v1898 = vpack.c.b16 %v1846, %v1842
      %v1899 = vpack.c.b16 %v1847, %v1843
      %v1900 = vpack.c.b16 %v1848, %v1844
      %v1901 = vpack.c.b16 %v1853, %v1849
      %v1902 = vpack.c.b16 %v1854, %v1850
      %v1903 = vpack.c.b16 %v1855, %v1851
      %v1904 = vpack.c.b16 %v1856, %v1852
      %v1905 = vpack.c.b16 %v1861, %v1857
      %v1906 = vpack.c.b16 %v1862, %v1858
      %v1907 = vpack.c.b16 %v1863, %v1859
      %v1908 = vpack.c.b16 %v1864, %v1860
      %v1909 = vpack.c.b16 %v1869, %v1865
      %v1910 = vpack.c.b16 %v1870, %v1866
      %v1911 = vpack.c.b16 %v1871, %v1867
      %v1912 = vpack.c.b16 %v1872, %v1868
      %v1913 = vpack.c.b16 %v1877, %v1873
      %v1914 = vpack.c.b16 %v1878, %v1874
      %v1915 = vpack.c.b16 %v1879, %v1875
      %v1916 = vpack.c.b16 %v1880, %v1876
      %v1917 = vpack.c.b16 %v1885, %v1881
      %v1918 = vpack.c.b16 %v1886, %v1882
      %v1919 = vpack.c.b16 %v1887, %v1883
      %v1920 = vpack.c.b16 %v1888, %v1884
      %1953 = vmatprep.subr.bf16.mxu0 %v1890
      %1954 = vmatpush1.bf16.msra.mxu0 %v1889
      %1955 = vmatprep.subr.bf16.mxu0 %v1894
      %1956 = vmatpush1.bf16.msra.mxu0 %v1893
      %1957 = vmatprep.subr.bf16.mxu0 %v1898
      %1958 = vmatpush1.bf16.msra.mxu0 %v1897
      %1959 = vmatprep.subr.bf16.mxu0 %v1902
      %1960 = vmatpush1.bf16.msra.mxu0 %v1901
      %1961 = vmatprep.subr.bf16.mxu0 %v1906
      %1962 = vmatpush1.bf16.msra.mxu0 %v1905
      %1963 = vmatprep.subr.bf16.mxu0 %v1910
      %1964 = vmatpush1.bf16.msra.mxu0 %v1909
      %1965 = vmatprep.subr.bf16.mxu0 %v1914
      %1966 = vmatpush1.bf16.msra.mxu0 %v1913
      %1967 = vmatprep.subr.bf16.mxu0 %v1918
      %1968 = vmatpush1.bf16.msra.mxu0 %v1917
      %1969 = vmatprep.subr.bf16.mxu0 0
      %1970 = vmatpush1.bf16.msra.mxu0 0
      %1971 = vmatprep.subr.bf16.mxu0 0
      %1972 = vmatpush1.bf16.msra.mxu0 0
      %1973 = vmatprep.subr.bf16.mxu0 0
      %1974 = vmatpush1.bf16.msra.mxu0 0
      %1975 = vmatprep.subr.bf16.mxu0 0
      %1976 = vmatpush1.bf16.msra.mxu0 0
      %1977 = vmatprep.subr.bf16.mxu0 0
      %1978 = vmatpush1.bf16.msra.mxu0 0
      %1979 = vmatprep.subr.bf16.mxu0 0
      %1980 = vmatpush1.bf16.msra.mxu0 0
      %1981 = vmatprep.subr.bf16.mxu0 0
      %1982 = vmatpush1.bf16.msra.mxu0 0
      %1983 = vmatprep.subr.bf16.mxu0 0
      %1984 = vmatpush1.bf16.msra.mxu0 0
      %1985 = vmatprep.mubr.bf16.mxu0 0
      %1986 = vmatmul.mubr.bf16.gmra.mrb[0].mxu0 %v1760
      %v1987 = vpop.f32.mrb[0].mxu0
      %v1988 = vadd.f32 0.0, %v1987
      %v1989 = vpop.f32.mrb[0].mxu0
      %v1990 = vadd.f32 0.0, %v1989
      %v1991 = vpop.f32.mrb[0].mxu0
      %v1992 = vpop.f32.mrb[0].mxu0
      %1993 = vdwg.mxu0
      %1994 = vmatprep.subr.bf16.mxu0 %v1892
      %1995 = vmatpush1.bf16.msra.mxu0 %v1891
      %1996 = vmatprep.subr.bf16.mxu0 %v1896
      %1997 = vmatpush1.bf16.msra.mxu0 %v1895
      %1998 = vmatprep.subr.bf16.mxu0 %v1900
      %1999 = vmatpush1.bf16.msra.mxu0 %v1899
      %2000 = vmatprep.subr.bf16.mxu0 %v1904
      %2001 = vmatpush1.bf16.msra.mxu0 %v1903
      %2002 = vmatprep.subr.bf16.mxu0 %v1908
      %2003 = vmatpush1.bf16.msra.mxu0 %v1907
      %2004 = vmatprep.subr.bf16.mxu0 %v1912
      %2005 = vmatpush1.bf16.msra.mxu0 %v1911
      %2006 = vmatprep.subr.bf16.mxu0 %v1916
      %2007 = vmatpush1.bf16.msra.mxu0 %v1915
      %2008 = vmatprep.subr.bf16.mxu0 %v1920
      %2009 = vmatpush1.bf16.msra.mxu0 %v1919
      %2010 = vmatprep.subr.bf16.mxu0 0
      %2011 = vmatpush1.bf16.msra.mxu0 0
      %2012 = vmatprep.subr.bf16.mxu0 0
      %2013 = vmatpush1.bf16.msra.mxu0 0
      %2014 = vmatprep.subr.bf16.mxu0 0
      %2015 = vmatpush1.bf16.msra.mxu0 0
      %2016 = vmatprep.subr.bf16.mxu0 0
      %2017 = vmatpush1.bf16.msra.mxu0 0
      %2018 = vmatprep.subr.bf16.mxu0 0
      %2019 = vmatpush1.bf16.msra.mxu0 0
      %2020 = vmatprep.subr.bf16.mxu0 0
      %2021 = vmatpush1.bf16.msra.mxu0 0
      %2022 = vmatprep.subr.bf16.mxu0 0
      %2023 = vmatpush1.bf16.msra.mxu0 0
      %2024 = vmatprep.subr.bf16.mxu0 0
      %2025 = vmatpush1.bf16.msra.mxu0 0
      %2026 = vmatprep.mubr.bf16.mxu0 0
      %2027 = vmatmul.mubr.bf16.gmra.mrb[0].mxu0 %v1760
      %v2028 = vpop.f32.mrb[0].mxu0
      %v2029 = vadd.f32 0.0, %v2028
      %v2030 = vpop.f32.mrb[0].mxu0
      %v2031 = vadd.f32 0.0, %v2030
      %v2032 = vpop.f32.mrb[0].mxu0
      %v2033 = vpop.f32.mrb[0].mxu0
      %2034 = vdwg.mxu0
      %v2035 = vadd.f32 %v1756, %v1988
      %v2036 = vadd.f32 %v1757, %v1990
      %v2037 = vadd.f32 %v1758, %v2029
      %v2038 = vadd.f32 %v1759, %v2031
      %v2039 = vxor.u32 %v2035, 2147483648
      %v2040 = vmul.f32 %v2039, 1.442695
      %v2041 = vpow.pop %v2040
      %v2042 = vadd.f32 %v2041, 1.0
      %v2043 = vrcp.pop %v2042
      %v2044 = vmul.f32 1.0, %v2043
      %v2045 = vxor.u32 %v2036, 2147483648
      %v2046 = vmul.f32 %v2045, 1.442695
      %v2047 = vpow.pop %v2046
      %v2048 = vadd.f32 %v2047, 1.0
      %v2049 = vrcp.pop %v2048
      %v2050 = vmul.f32 1.0, %v2049
      %v2051 = vtanh.pop %v2037
      %v2052 = vxor.u32 %v2038, 2147483648
      %v2053 = vmul.f32 %v2052, 1.442695
      %v2054 = vpow.pop %v2053
      %v2055 = vadd.f32 %v2054, 1.0
      %v2056 = vrcp.pop %v2055
      %v2057 = vmul.f32 1.0, %v2056
      %v2058 = vmul.f32 %v2050, %v1744
      %v2059 = vmul.f32 %v2044, %v2051
      %v2060 = vadd.f32 %v2058, %v2059
      %v2061 = vtanh.pop %v2060
      %v2062 = vmul.f32 %v2057, %v2061
      %s2063 = scalar_lea.vmem %s234, %s1750
      %2064 = vst [vmem:[%s2063] sm:$0xff] %v2062
      %s2065 = scalar_select %p485, 5, 2
      %s2066 = smul.u32 %s2065, 8
      %s2067 = sshra.s32 %s2066, 3
      %s2068 = sand.u32 %s2066, 7
      %s2069 = smul.u32 %s2067, 4
      %s2070 = smul.addr %s2069, 8
      %s2071 = scalar_lea.vmem [#allocation2], %s2070
      %v2072 = vld [vmem:[%s2071] sm:$0xff]
      %v2073 = vld [vmem:[%s2071 + $0x8] sm:$0xff]
      %v2074 = vld [vmem:[%s2071 + $0x10] sm:$0xff]
      %v2075 = vld [vmem:[%s2071 + $0x18] sm:$0xff]
      %v2076 = vpack.c.bf16 %v2062, %v2062
      %v2077 = vld [vmem:[%s225] sm:$0xff]
      %v2078 = vld [vmem:[%s225 + $0x8] sm:$0xff]
      %v2079 = vld [vmem:[%s225 + $0x10] sm:$0xff]
      %v2080 = vld [vmem:[%s225 + $0x18] sm:$0xff]
      %v2081 = vld [vmem:[%s225 + $0x20] sm:$0xff]
      %v2082 = vld [vmem:[%s225 + $0x28] sm:$0xff]
      %v2083 = vld [vmem:[%s225 + $0x30] sm:$0xff]
      %v2084 = vld [vmem:[%s225 + $0x38] sm:$0xff]
      %v2085 = vld [vmem:[%s225 + $0x40] sm:$0xff]
      %v2086 = vld [vmem:[%s225 + $0x48] sm:$0xff]
      %v2087 = vld [vmem:[%s225 + $0x50] sm:$0xff]
      %v2088 = vld [vmem:[%s225 + $0x58] sm:$0xff]
      %v2089 = vld [vmem:[%s225 + $0x60] sm:$0xff]
      %v2090 = vld [vmem:[%s225 + $0x68] sm:$0xff]
      %v2091 = vld [vmem:[%s225 + $0x70] sm:$0xff]
      %v2092 = vld [vmem:[%s225 + $0x78] sm:$0xff]
      %v2093 = vld [vmem:[%s225 + $0x80] sm:$0xff]
      %v2094 = vld [vmem:[%s225 + $0x88] sm:$0xff]
      %v2095 = vld [vmem:[%s225 + $0x90] sm:$0xff]
      %v2096 = vld [vmem:[%s225 + $0x98] sm:$0xff]
      %v2097 = vld [vmem:[%s225 + $0xa0] sm:$0xff]
      %v2098 = vld [vmem:[%s225 + $0xa8] sm:$0xff]
      %v2099 = vld [vmem:[%s225 + $0xb0] sm:$0xff]
      %v2100 = vld [vmem:[%s225 + $0xb8] sm:$0xff]
      %v2101 = vld [vmem:[%s225 + $0xc0] sm:$0xff]
      %v2102 = vld [vmem:[%s225 + $0xc8] sm:$0xff]
      %v2103 = vld [vmem:[%s225 + $0xd0] sm:$0xff]
      %v2104 = vld [vmem:[%s225 + $0xd8] sm:$0xff]
      %v2105 = vld [vmem:[%s225 + $0xe0] sm:$0xff]
      %v2106 = vld [vmem:[%s225 + $0xe8] sm:$0xff]
      %v2107 = vld [vmem:[%s225 + $0xf0] sm:$0xff]
      %v2108 = vld [vmem:[%s225 + $0xf8] sm:$0xff]
      %v2141 = vunpack.c.l.b16 %v2077
      %v2142 = vunpack.c.h.b16 %v2077
      %v2143 = vunpack.c.l.b16 %v2078
      %v2144 = vunpack.c.h.b16 %v2078
      %v2145 = vunpack.c.l.b16 %v2079
      %v2146 = vunpack.c.h.b16 %v2079
      %v2147 = vunpack.c.l.b16 %v2080
      %v2148 = vunpack.c.h.b16 %v2080
      %v2149 = vunpack.c.l.b16 %v2081
      %v2150 = vunpack.c.h.b16 %v2081
      %v2151 = vunpack.c.l.b16 %v2082
      %v2152 = vunpack.c.h.b16 %v2082
      %v2153 = vunpack.c.l.b16 %v2083
      %v2154 = vunpack.c.h.b16 %v2083
      %v2155 = vunpack.c.l.b16 %v2084
      %v2156 = vunpack.c.h.b16 %v2084
      %v2157 = vunpack.c.l.b16 %v2085
      %v2158 = vunpack.c.h.b16 %v2085
      %v2159 = vunpack.c.l.b16 %v2086
      %v2160 = vunpack.c.h.b16 %v2086
      %v2161 = vunpack.c.l.b16 %v2087
      %v2162 = vunpack.c.h.b16 %v2087
      %v2163 = vunpack.c.l.b16 %v2088
      %v2164 = vunpack.c.h.b16 %v2088
      %v2165 = vunpack.c.l.b16 %v2089
      %v2166 = vunpack.c.h.b16 %v2089
      %v2167 = vunpack.c.l.b16 %v2090
      %v2168 = vunpack.c.h.b16 %v2090
      %v2169 = vunpack.c.l.b16 %v2091
      %v2170 = vunpack.c.h.b16 %v2091
      %v2171 = vunpack.c.l.b16 %v2092
      %v2172 = vunpack.c.h.b16 %v2092
      %v2173 = vunpack.c.l.b16 %v2093
      %v2174 = vunpack.c.h.b16 %v2093
      %v2175 = vunpack.c.l.b16 %v2094
      %v2176 = vunpack.c.h.b16 %v2094
      %v2177 = vunpack.c.l.b16 %v2095
      %v2178 = vunpack.c.h.b16 %v2095
      %v2179 = vunpack.c.l.b16 %v2096
      %v2180 = vunpack.c.h.b16 %v2096
      %v2181 = vunpack.c.l.b16 %v2097
      %v2182 = vunpack.c.h.b16 %v2097
      %v2183 = vunpack.c.l.b16 %v2098
      %v2184 = vunpack.c.h.b16 %v2098
      %v2185 = vunpack.c.l.b16 %v2099
      %v2186 = vunpack.c.h.b16 %v2099
      %v2187 = vunpack.c.l.b16 %v2100
      %v2188 = vunpack.c.h.b16 %v2100
      %v2189 = vunpack.c.l.b16 %v2101
      %v2190 = vunpack.c.h.b16 %v2101
      %v2191 = vunpack.c.l.b16 %v2102
      %v2192 = vunpack.c.h.b16 %v2102
      %v2193 = vunpack.c.l.b16 %v2103
      %v2194 = vunpack.c.h.b16 %v2103
      %v2195 = vunpack.c.l.b16 %v2104
      %v2196 = vunpack.c.h.b16 %v2104
      %v2197 = vunpack.c.l.b16 %v2105
      %v2198 = vunpack.c.h.b16 %v2105
      %v2199 = vunpack.c.l.b16 %v2106
      %v2200 = vunpack.c.h.b16 %v2106
      %v2201 = vunpack.c.l.b16 %v2107
      %v2202 = vunpack.c.h.b16 %v2107
      %v2203 = vunpack.c.l.b16 %v2108
      %v2204 = vunpack.c.h.b16 %v2108
      %v2205 = vpack.c.b16 %v2145, %v2141
      %v2206 = vpack.c.b16 %v2146, %v2142
      %v2207 = vpack.c.b16 %v2147, %v2143
      %v2208 = vpack.c.b16 %v2148, %v2144
      %v2209 = vpack.c.b16 %v2153, %v2149
      %v2210 = vpack.c.b16 %v2154, %v2150
      %v2211 = vpack.c.b16 %v2155, %v2151
      %v2212 = vpack.c.b16 %v2156, %v2152
      %v2213 = vpack.c.b16 %v2161, %v2157
      %v2214 = vpack.c.b16 %v2162, %v2158
      %v2215 = vpack.c.b16 %v2163, %v2159
      %v2216 = vpack.c.b16 %v2164, %v2160
      %v2217 = vpack.c.b16 %v2169, %v2165
      %v2218 = vpack.c.b16 %v2170, %v2166
      %v2219 = vpack.c.b16 %v2171, %v2167
      %v2220 = vpack.c.b16 %v2172, %v2168
      %v2221 = vpack.c.b16 %v2177, %v2173
      %v2222 = vpack.c.b16 %v2178, %v2174
      %v2223 = vpack.c.b16 %v2179, %v2175
      %v2224 = vpack.c.b16 %v2180, %v2176
      %v2225 = vpack.c.b16 %v2185, %v2181
      %v2226 = vpack.c.b16 %v2186, %v2182
      %v2227 = vpack.c.b16 %v2187, %v2183
      %v2228 = vpack.c.b16 %v2188, %v2184
      %v2229 = vpack.c.b16 %v2193, %v2189
      %v2230 = vpack.c.b16 %v2194, %v2190
      %v2231 = vpack.c.b16 %v2195, %v2191
      %v2232 = vpack.c.b16 %v2196, %v2192
      %v2233 = vpack.c.b16 %v2201, %v2197
      %v2234 = vpack.c.b16 %v2202, %v2198
      %v2235 = vpack.c.b16 %v2203, %v2199
      %v2236 = vpack.c.b16 %v2204, %v2200
      %2269 = vmatprep.subr.bf16.mxu0 %v2206
      %2270 = vmatpush1.bf16.msra.mxu0 %v2205
      %2271 = vmatprep.subr.bf16.mxu0 %v2210
      %2272 = vmatpush1.bf16.msra.mxu0 %v2209
      %2273 = vmatprep.subr.bf16.mxu0 %v2214
      %2274 = vmatpush1.bf16.msra.mxu0 %v2213
      %2275 = vmatprep.subr.bf16.mxu0 %v2218
      %2276 = vmatpush1.bf16.msra.mxu0 %v2217
      %2277 = vmatprep.subr.bf16.mxu0 %v2222
      %2278 = vmatpush1.bf16.msra.mxu0 %v2221
      %2279 = vmatprep.subr.bf16.mxu0 %v2226
      %2280 = vmatpush1.bf16.msra.mxu0 %v2225
      %2281 = vmatprep.subr.bf16.mxu0 %v2230
      %2282 = vmatpush1.bf16.msra.mxu0 %v2229
      %2283 = vmatprep.subr.bf16.mxu0 %v2234
      %2284 = vmatpush1.bf16.msra.mxu0 %v2233
      %2285 = vmatprep.subr.bf16.mxu0 0
      %2286 = vmatpush1.bf16.msra.mxu0 0
      %2287 = vmatprep.subr.bf16.mxu0 0
      %2288 = vmatpush1.bf16.msra.mxu0 0
      %2289 = vmatprep.subr.bf16.mxu0 0
      %2290 = vmatpush1.bf16.msra.mxu0 0
      %2291 = vmatprep.subr.bf16.mxu0 0
      %2292 = vmatpush1.bf16.msra.mxu0 0
      %2293 = vmatprep.subr.bf16.mxu0 0
      %2294 = vmatpush1.bf16.msra.mxu0 0
      %2295 = vmatprep.subr.bf16.mxu0 0
      %2296 = vmatpush1.bf16.msra.mxu0 0
      %2297 = vmatprep.subr.bf16.mxu0 0
      %2298 = vmatpush1.bf16.msra.mxu0 0
      %2299 = vmatprep.subr.bf16.mxu0 0
      %2300 = vmatpush1.bf16.msra.mxu0 0
      %2301 = vmatprep.mubr.bf16.mxu0 0
      %2302 = vmatmul.mubr.bf16.gmra.mrb[0].mxu0 %v2076
      %v2303 = vpop.f32.mrb[0].mxu0
      %v2304 = vadd.f32 0.0, %v2303
      %v2305 = vpop.f32.mrb[0].mxu0
      %v2306 = vadd.f32 0.0, %v2305
      %v2307 = vpop.f32.mrb[0].mxu0
      %v2308 = vpop.f32.mrb[0].mxu0
      %2309 = vdwg.mxu0
      %2310 = vmatprep.subr.bf16.mxu0 %v2208
      %2311 = vmatpush1.bf16.msra.mxu0 %v2207
      %2312 = vmatprep.subr.bf16.mxu0 %v2212
      %2313 = vmatpush1.bf16.msra.mxu0 %v2211
      %2314 = vmatprep.subr.bf16.mxu0 %v2216
      %2315 = vmatpush1.bf16.msra.mxu0 %v2215
      %2316 = vmatprep.subr.bf16.mxu0 %v2220
      %2317 = vmatpush1.bf16.msra.mxu0 %v2219
      %2318 = vmatprep.subr.bf16.mxu0 %v2224
      %2319 = vmatpush1.bf16.msra.mxu0 %v2223
      %2320 = vmatprep.subr.bf16.mxu0 %v2228
      %2321 = vmatpush1.bf16.msra.mxu0 %v2227
      %2322 = vmatprep.subr.bf16.mxu0 %v2232
      %2323 = vmatpush1.bf16.msra.mxu0 %v2231
      %2324 = vmatprep.subr.bf16.mxu0 %v2236
      %2325 = vmatpush1.bf16.msra.mxu0 %v2235
      %2326 = vmatprep.subr.bf16.mxu0 0
      %2327 = vmatpush1.bf16.msra.mxu0 0
      %2328 = vmatprep.subr.bf16.mxu0 0
      %2329 = vmatpush1.bf16.msra.mxu0 0
      %2330 = vmatprep.subr.bf16.mxu0 0
      %2331 = vmatpush1.bf16.msra.mxu0 0
      %2332 = vmatprep.subr.bf16.mxu0 0
      %2333 = vmatpush1.bf16.msra.mxu0 0
      %2334 = vmatprep.subr.bf16.mxu0 0
      %2335 = vmatpush1.bf16.msra.mxu0 0
      %2336 = vmatprep.subr.bf16.mxu0 0
      %2337 = vmatpush1.bf16.msra.mxu0 0
      %2338 = vmatprep.subr.bf16.mxu0 0
      %2339 = vmatpush1.bf16.msra.mxu0 0
      %2340 = vmatprep.subr.bf16.mxu0 0
      %2341 = vmatpush1.bf16.msra.mxu0 0
      %2342 = vmatprep.mubr.bf16.mxu0 0
      %2343 = vmatmul.mubr.bf16.gmra.mrb[0].mxu0 %v2076
      %v2344 = vpop.f32.mrb[0].mxu0
      %v2345 = vadd.f32 0.0, %v2344
      %v2346 = vpop.f32.mrb[0].mxu0
      %v2347 = vadd.f32 0.0, %v2346
      %v2348 = vpop.f32.mrb[0].mxu0
      %v2349 = vpop.f32.mrb[0].mxu0
      %2350 = vdwg.mxu0
      %v2351 = vadd.f32 %v2072, %v2304
      %v2352 = vadd.f32 %v2073, %v2306
      %v2353 = vadd.f32 %v2074, %v2345
      %v2354 = vadd.f32 %v2075, %v2347
      %v2355 = vxor.u32 %v2351, 2147483648
      %v2356 = vmul.f32 %v2355, 1.442695
      %v2357 = vpow.pop %v2356
      %v2358 = vadd.f32 %v2357, 1.0
      %v2359 = vrcp.pop %v2358
      %v2360 = vmul.f32 1.0, %v2359
      %v2361 = vxor.u32 %v2352, 2147483648
      %v2362 = vmul.f32 %v2361, 1.442695
      %v2363 = vpow.pop %v2362
      %v2364 = vadd.f32 %v2363, 1.0
      %v2365 = vrcp.pop %v2364
      %v2366 = vmul.f32 1.0, %v2365
      %v2367 = vtanh.pop %v2353
      %v2368 = vxor.u32 %v2354, 2147483648
      %v2369 = vmul.f32 %v2368, 1.442695
      %v2370 = vpow.pop %v2369
      %v2371 = vadd.f32 %v2370, 1.0
      %v2372 = vrcp.pop %v2371
      %v2373 = vmul.f32 1.0, %v2372
      %v2374 = vmul.f32 %v2366, %v2060
      %v2375 = vmul.f32 %v2360, %v2367
      %v2376 = vadd.f32 %v2374, %v2375
      %v2377 = vtanh.pop %v2376
      %v2378 = vmul.f32 %v2373, %v2377
      %s2379 = scalar_lea.vmem %s234, %s2066
      %2380 = vst [vmem:[%s2379] sm:$0xff] %v2378
      %s2381 = scalar_select %p485, 6, 1
      %s2382 = smul.u32 %s2381, 8
      %s2383 = sshra.s32 %s2382, 3
      %s2384 = sand.u32 %s2382, 7
      %s2385 = smul.u32 %s2383, 4
      %s2386 = smul.addr %s2385, 8
      %s2387 = scalar_lea.vmem [#allocation2], %s2386
      %v2388 = vld [vmem:[%s2387] sm:$0xff]
      %v2389 = vld [vmem:[%s2387 + $0x8] sm:$0xff]
      %v2390 = vld [vmem:[%s2387 + $0x10] sm:$0xff]
      %v2391 = vld [vmem:[%s2387 + $0x18] sm:$0xff]
      %v2392 = vpack.c.bf16 %v2378, %v2378
      %v2393 = vld [vmem:[%s225] sm:$0xff]
      %v2394 = vld [vmem:[%s225 + $0x8] sm:$0xff]
      %v2395 = vld [vmem:[%s225 + $0x10] sm:$0xff]
      %v2396 = vld [vmem:[%s225 + $0x18] sm:$0xff]
      %v2397 = vld [vmem:[%s225 + $0x20] sm:$0xff]
      %v2398 = vld [vmem:[%s225 + $0x28] sm:$0xff]
      %v2399 = vld [vmem:[%s225 + $0x30] sm:$0xff]
      %v2400 = vld [vmem:[%s225 + $0x38] sm:$0xff]
      %v2401 = vld [vmem:[%s225 + $0x40] sm:$0xff]
      %v2402 = vld [vmem:[%s225 + $0x48] sm:$0xff]
      %v2403 = vld [vmem:[%s225 + $0x50] sm:$0xff]
      %v2404 = vld [vmem:[%s225 + $0x58] sm:$0xff]
      %v2405 = vld [vmem:[%s225 + $0x60] sm:$0xff]
      %v2406 = vld [vmem:[%s225 + $0x68] sm:$0xff]
      %v2407 = vld [vmem:[%s225 + $0x70] sm:$0xff]
      %v2408 = vld [vmem:[%s225 + $0x78] sm:$0xff]
      %v2409 = vld [vmem:[%s225 + $0x80] sm:$0xff]
      %v2410 = vld [vmem:[%s225 + $0x88] sm:$0xff]
      %v2411 = vld [vmem:[%s225 + $0x90] sm:$0xff]
      %v2412 = vld [vmem:[%s225 + $0x98] sm:$0xff]
      %v2413 = vld [vmem:[%s225 + $0xa0] sm:$0xff]
      %v2414 = vld [vmem:[%s225 + $0xa8] sm:$0xff]
      %v2415 = vld [vmem:[%s225 + $0xb0] sm:$0xff]
      %v2416 = vld [vmem:[%s225 + $0xb8] sm:$0xff]
      %v2417 = vld [vmem:[%s225 + $0xc0] sm:$0xff]
      %v2418 = vld [vmem:[%s225 + $0xc8] sm:$0xff]
      %v2419 = vld [vmem:[%s225 + $0xd0] sm:$0xff]
      %v2420 = vld [vmem:[%s225 + $0xd8] sm:$0xff]
      %v2421 = vld [vmem:[%s225 + $0xe0] sm:$0xff]
      %v2422 = vld [vmem:[%s225 + $0xe8] sm:$0xff]
      %v2423 = vld [vmem:[%s225 + $0xf0] sm:$0xff]
      %v2424 = vld [vmem:[%s225 + $0xf8] sm:$0xff]
      %v2457 = vunpack.c.l.b16 %v2393
      %v2458 = vunpack.c.h.b16 %v2393
      %v2459 = vunpack.c.l.b16 %v2394
      %v2460 = vunpack.c.h.b16 %v2394
      %v2461 = vunpack.c.l.b16 %v2395
      %v2462 = vunpack.c.h.b16 %v2395
      %v2463 = vunpack.c.l.b16 %v2396
      %v2464 = vunpack.c.h.b16 %v2396
      %v2465 = vunpack.c.l.b16 %v2397
      %v2466 = vunpack.c.h.b16 %v2397
      %v2467 = vunpack.c.l.b16 %v2398
      %v2468 = vunpack.c.h.b16 %v2398
      %v2469 = vunpack.c.l.b16 %v2399
      %v2470 = vunpack.c.h.b16 %v2399
      %v2471 = vunpack.c.l.b16 %v2400
      %v2472 = vunpack.c.h.b16 %v2400
      %v2473 = vunpack.c.l.b16 %v2401
      %v2474 = vunpack.c.h.b16 %v2401
      %v2475 = vunpack.c.l.b16 %v2402
      %v2476 = vunpack.c.h.b16 %v2402
      %v2477 = vunpack.c.l.b16 %v2403
      %v2478 = vunpack.c.h.b16 %v2403
      %v2479 = vunpack.c.l.b16 %v2404
      %v2480 = vunpack.c.h.b16 %v2404
      %v2481 = vunpack.c.l.b16 %v2405
      %v2482 = vunpack.c.h.b16 %v2405
      %v2483 = vunpack.c.l.b16 %v2406
      %v2484 = vunpack.c.h.b16 %v2406
      %v2485 = vunpack.c.l.b16 %v2407
      %v2486 = vunpack.c.h.b16 %v2407
      %v2487 = vunpack.c.l.b16 %v2408
      %v2488 = vunpack.c.h.b16 %v2408
      %v2489 = vunpack.c.l.b16 %v2409
      %v2490 = vunpack.c.h.b16 %v2409
      %v2491 = vunpack.c.l.b16 %v2410
      %v2492 = vunpack.c.h.b16 %v2410
      %v2493 = vunpack.c.l.b16 %v2411
      %v2494 = vunpack.c.h.b16 %v2411
      %v2495 = vunpack.c.l.b16 %v2412
      %v2496 = vunpack.c.h.b16 %v2412
      %v2497 = vunpack.c.l.b16 %v2413
      %v2498 = vunpack.c.h.b16 %v2413
      %v2499 = vunpack.c.l.b16 %v2414
      %v2500 = vunpack.c.h.b16 %v2414
      %v2501 = vunpack.c.l.b16 %v2415
      %v2502 = vunpack.c.h.b16 %v2415
      %v2503 = vunpack.c.l.b16 %v2416
      %v2504 = vunpack.c.h.b16 %v2416
      %v2505 = vunpack.c.l.b16 %v2417
      %v2506 = vunpack.c.h.b16 %v2417
      %v2507 = vunpack.c.l.b16 %v2418
      %v2508 = vunpack.c.h.b16 %v2418
      %v2509 = vunpack.c.l.b16 %v2419
      %v2510 = vunpack.c.h.b16 %v2419
      %v2511 = vunpack.c.l.b16 %v2420
      %v2512 = vunpack.c.h.b16 %v2420
      %v2513 = vunpack.c.l.b16 %v2421
      %v2514 = vunpack.c.h.b16 %v2421
      %v2515 = vunpack.c.l.b16 %v2422
      %v2516 = vunpack.c.h.b16 %v2422
      %v2517 = vunpack.c.l.b16 %v2423
      %v2518 = vunpack.c.h.b16 %v2423
      %v2519 = vunpack.c.l.b16 %v2424
      %v2520 = vunpack.c.h.b16 %v2424
      %v2521 = vpack.c.b16 %v2461, %v2457
      %v2522 = vpack.c.b16 %v2462, %v2458
      %v2523 = vpack.c.b16 %v2463, %v2459
      %v2524 = vpack.c.b16 %v2464, %v2460
      %v2525 = vpack.c.b16 %v2469, %v2465
      %v2526 = vpack.c.b16 %v2470, %v2466
      %v2527 = vpack.c.b16 %v2471, %v2467
      %v2528 = vpack.c.b16 %v2472, %v2468
      %v2529 = vpack.c.b16 %v2477, %v2473
      %v2530 = vpack.c.b16 %v2478, %v2474
      %v2531 = vpack.c.b16 %v2479, %v2475
      %v2532 = vpack.c.b16 %v2480, %v2476
      %v2533 = vpack.c.b16 %v2485, %v2481
      %v2534 = vpack.c.b16 %v2486, %v2482
      %v2535 = vpack.c.b16 %v2487, %v2483
      %v2536 = vpack.c.b16 %v2488, %v2484
      %v2537 = vpack.c.b16 %v2493, %v2489
      %v2538 = vpack.c.b16 %v2494, %v2490
      %v2539 = vpack.c.b16 %v2495, %v2491
      %v2540 = vpack.c.b16 %v2496, %v2492
      %v2541 = vpack.c.b16 %v2501, %v2497
      %v2542 = vpack.c.b16 %v2502, %v2498
      %v2543 = vpack.c.b16 %v2503, %v2499
      %v2544 = vpack.c.b16 %v2504, %v2500
      %v2545 = vpack.c.b16 %v2509, %v2505
      %v2546 = vpack.c.b16 %v2510, %v2506
      %v2547 = vpack.c.b16 %v2511, %v2507
      %v2548 = vpack.c.b16 %v2512, %v2508
      %v2549 = vpack.c.b16 %v2517, %v2513
      %v2550 = vpack.c.b16 %v2518, %v2514
      %v2551 = vpack.c.b16 %v2519, %v2515
      %v2552 = vpack.c.b16 %v2520, %v2516
      %2585 = vmatprep.subr.bf16.mxu0 %v2522
      %2586 = vmatpush1.bf16.msra.mxu0 %v2521
      %2587 = vmatprep.subr.bf16.mxu0 %v2526
      %2588 = vmatpush1.bf16.msra.mxu0 %v2525
      %2589 = vmatprep.subr.bf16.mxu0 %v2530
      %2590 = vmatpush1.bf16.msra.mxu0 %v2529
      %2591 = vmatprep.subr.bf16.mxu0 %v2534
      %2592 = vmatpush1.bf16.msra.mxu0 %v2533
      %2593 = vmatprep.subr.bf16.mxu0 %v2538
      %2594 = vmatpush1.bf16.msra.mxu0 %v2537
      %2595 = vmatprep.subr.bf16.mxu0 %v2542
      %2596 = vmatpush1.bf16.msra.mxu0 %v2541
      %2597 = vmatprep.subr.bf16.mxu0 %v2546
      %2598 = vmatpush1.bf16.msra.mxu0 %v2545
      %2599 = vmatprep.subr.bf16.mxu0 %v2550
      %2600 = vmatpush1.bf16.msra.mxu0 %v2549
      %2601 = vmatprep.subr.bf16.mxu0 0
      %2602 = vmatpush1.bf16.msra.mxu0 0
      %2603 = vmatprep.subr.bf16.mxu0 0
      %2604 = vmatpush1.bf16.msra.mxu0 0
      %2605 = vmatprep.subr.bf16.mxu0 0
      %2606 = vmatpush1.bf16.msra.mxu0 0
      %2607 = vmatprep.subr.bf16.mxu0 0
      %2608 = vmatpush1.bf16.msra.mxu0 0
      %2609 = vmatprep.subr.bf16.mxu0 0
      %2610 = vmatpush1.bf16.msra.mxu0 0
      %2611 = vmatprep.subr.bf16.mxu0 0
      %2612 = vmatpush1.bf16.msra.mxu0 0
      %2613 = vmatprep.subr.bf16.mxu0 0
      %2614 = vmatpush1.bf16.msra.mxu0 0
      %2615 = vmatprep.subr.bf16.mxu0 0
      %2616 = vmatpush1.bf16.msra.mxu0 0
      %2617 = vmatprep.mubr.bf16.mxu0 0
      %2618 = vmatmul.mubr.bf16.gmra.mrb[0].mxu0 %v2392
      %v2619 = vpop.f32.mrb[0].mxu0
      %v2620 = vadd.f32 0.0, %v2619
      %v2621 = vpop.f32.mrb[0].mxu0
      %v2622 = vadd.f32 0.0, %v2621
      %v2623 = vpop.f32.mrb[0].mxu0
      %v2624 = vpop.f32.mrb[0].mxu0
      %2625 = vdwg.mxu0
      %2626 = vmatprep.subr.bf16.mxu0 %v2524
      %2627 = vmatpush1.bf16.msra.mxu0 %v2523
      %2628 = vmatprep.subr.bf16.mxu0 %v2528
      %2629 = vmatpush1.bf16.msra.mxu0 %v2527
      %2630 = vmatprep.subr.bf16.mxu0 %v2532
      %2631 = vmatpush1.bf16.msra.mxu0 %v2531
      %2632 = vmatprep.subr.bf16.mxu0 %v2536
      %2633 = vmatpush1.bf16.msra.mxu0 %v2535
      %2634 = vmatprep.subr.bf16.mxu0 %v2540
      %2635 = vmatpush1.bf16.msra.mxu0 %v2539
      %2636 = vmatprep.subr.bf16.mxu0 %v2544
      %2637 = vmatpush1.bf16.msra.mxu0 %v2543
      %2638 = vmatprep.subr.bf16.mxu0 %v2548
      %2639 = vmatpush1.bf16.msra.mxu0 %v2547
      %2640 = vmatprep.subr.bf16.mxu0 %v2552
      %2641 = vmatpush1.bf16.msra.mxu0 %v2551
      %2642 = vmatprep.subr.bf16.mxu0 0
      %2643 = vmatpush1.bf16.msra.mxu0 0
      %2644 = vmatprep.subr.bf16.mxu0 0
      %2645 = vmatpush1.bf16.msra.mxu0 0
      %2646 = vmatprep.subr.bf16.mxu0 0
      %2647 = vmatpush1.bf16.msra.mxu0 0
      %2648 = vmatprep.subr.bf16.mxu0 0
      %2649 = vmatpush1.bf16.msra.mxu0 0
      %2650 = vmatprep.subr.bf16.mxu0 0
      %2651 = vmatpush1.bf16.msra.mxu0 0
      %2652 = vmatprep.subr.bf16.mxu0 0
      %2653 = vmatpush1.bf16.msra.mxu0 0
      %2654 = vmatprep.subr.bf16.mxu0 0
      %2655 = vmatpush1.bf16.msra.mxu0 0
      %2656 = vmatprep.subr.bf16.mxu0 0
      %2657 = vmatpush1.bf16.msra.mxu0 0
      %2658 = vmatprep.mubr.bf16.mxu0 0
      %2659 = vmatmul.mubr.bf16.gmra.mrb[0].mxu0 %v2392
      %v2660 = vpop.f32.mrb[0].mxu0
      %v2661 = vadd.f32 0.0, %v2660
      %v2662 = vpop.f32.mrb[0].mxu0
      %v2663 = vadd.f32 0.0, %v2662
      %v2664 = vpop.f32.mrb[0].mxu0
      %v2665 = vpop.f32.mrb[0].mxu0
      %2666 = vdwg.mxu0
      %v2667 = vadd.f32 %v2388, %v2620
      %v2668 = vadd.f32 %v2389, %v2622
      %v2669 = vadd.f32 %v2390, %v2661
      %v2670 = vadd.f32 %v2391, %v2663
      %v2671 = vxor.u32 %v2667, 2147483648
      %v2672 = vmul.f32 %v2671, 1.442695
      %v2673 = vpow.pop %v2672
      %v2674 = vadd.f32 %v2673, 1.0
      %v2675 = vrcp.pop %v2674
      %v2676 = vmul.f32 1.0, %v2675
      %v2677 = vxor.u32 %v2668, 2147483648
      %v2678 = vmul.f32 %v2677, 1.442695
      %v2679 = vpow.pop %v2678
      %v2680 = vadd.f32 %v2679, 1.0
      %v2681 = vrcp.pop %v2680
      %v2682 = vmul.f32 1.0, %v2681
      %v2683 = vtanh.pop %v2669
      %v2684 = vxor.u32 %v2670, 2147483648
      %v2685 = vmul.f32 %v2684, 1.442695
      %v2686 = vpow.pop %v2685
      %v2687 = vadd.f32 %v2686, 1.0
      %v2688 = vrcp.pop %v2687
      %v2689 = vmul.f32 1.0, %v2688
      %v2690 = vmul.f32 %v2682, %v2376
      %v2691 = vmul.f32 %v2676, %v2683
      %v2692 = vadd.f32 %v2690, %v2691
      %v2693 = vtanh.pop %v2692
      %v2694 = vmul.f32 %v2689, %v2693
      %s2695 = scalar_lea.vmem %s234, %s2382
      %2696 = vst [vmem:[%s2695] sm:$0xff] %v2694
      %s2697 = scalar_select %p485, 7, 0
      %s2698 = smul.u32 %s2697, 8
      %s2699 = sshra.s32 %s2698, 3
      %s2700 = sand.u32 %s2698, 7
      %s2701 = smul.u32 %s2699, 4
      %s2702 = smul.addr %s2701, 8
      %s2703 = scalar_lea.vmem [#allocation2], %s2702
      %v2704 = vld [vmem:[%s2703] sm:$0xff]
      %v2705 = vld [vmem:[%s2703 + $0x8] sm:$0xff]
      %v2706 = vld [vmem:[%s2703 + $0x10] sm:$0xff]
      %v2707 = vld [vmem:[%s2703 + $0x18] sm:$0xff]
      %v2708 = vpack.c.bf16 %v2694, %v2694
      %v2709 = vld [vmem:[%s225] sm:$0xff]
      %v2710 = vld [vmem:[%s225 + $0x8] sm:$0xff]
      %v2711 = vld [vmem:[%s225 + $0x10] sm:$0xff]
      %v2712 = vld [vmem:[%s225 + $0x18] sm:$0xff]
      %v2713 = vld [vmem:[%s225 + $0x20] sm:$0xff]
      %v2714 = vld [vmem:[%s225 + $0x28] sm:$0xff]
      %v2715 = vld [vmem:[%s225 + $0x30] sm:$0xff]
      %v2716 = vld [vmem:[%s225 + $0x38] sm:$0xff]
      %v2717 = vld [vmem:[%s225 + $0x40] sm:$0xff]
      %v2718 = vld [vmem:[%s225 + $0x48] sm:$0xff]
      %v2719 = vld [vmem:[%s225 + $0x50] sm:$0xff]
      %v2720 = vld [vmem:[%s225 + $0x58] sm:$0xff]
      %v2721 = vld [vmem:[%s225 + $0x60] sm:$0xff]
      %v2722 = vld [vmem:[%s225 + $0x68] sm:$0xff]
      %v2723 = vld [vmem:[%s225 + $0x70] sm:$0xff]
      %v2724 = vld [vmem:[%s225 + $0x78] sm:$0xff]
      %v2725 = vld [vmem:[%s225 + $0x80] sm:$0xff]
      %v2726 = vld [vmem:[%s225 + $0x88] sm:$0xff]
      %v2727 = vld [vmem:[%s225 + $0x90] sm:$0xff]
      %v2728 = vld [vmem:[%s225 + $0x98] sm:$0xff]
      %v2729 = vld [vmem:[%s225 + $0xa0] sm:$0xff]
      %v2730 = vld [vmem:[%s225 + $0xa8] sm:$0xff]
      %v2731 = vld [vmem:[%s225 + $0xb0] sm:$0xff]
      %v2732 = vld [vmem:[%s225 + $0xb8] sm:$0xff]
      %v2733 = vld [vmem:[%s225 + $0xc0] sm:$0xff]
      %v2734 = vld [vmem:[%s225 + $0xc8] sm:$0xff]
      %v2735 = vld [vmem:[%s225 + $0xd0] sm:$0xff]
      %v2736 = vld [vmem:[%s225 + $0xd8] sm:$0xff]
      %v2737 = vld [vmem:[%s225 + $0xe0] sm:$0xff]
      %v2738 = vld [vmem:[%s225 + $0xe8] sm:$0xff]
      %v2739 = vld [vmem:[%s225 + $0xf0] sm:$0xff]
      %v2740 = vld [vmem:[%s225 + $0xf8] sm:$0xff]
      %v2773 = vunpack.c.l.b16 %v2709
      %v2774 = vunpack.c.h.b16 %v2709
      %v2775 = vunpack.c.l.b16 %v2710
      %v2776 = vunpack.c.h.b16 %v2710
      %v2777 = vunpack.c.l.b16 %v2711
      %v2778 = vunpack.c.h.b16 %v2711
      %v2779 = vunpack.c.l.b16 %v2712
      %v2780 = vunpack.c.h.b16 %v2712
      %v2781 = vunpack.c.l.b16 %v2713
      %v2782 = vunpack.c.h.b16 %v2713
      %v2783 = vunpack.c.l.b16 %v2714
      %v2784 = vunpack.c.h.b16 %v2714
      %v2785 = vunpack.c.l.b16 %v2715
      %v2786 = vunpack.c.h.b16 %v2715
      %v2787 = vunpack.c.l.b16 %v2716
      %v2788 = vunpack.c.h.b16 %v2716
      %v2789 = vunpack.c.l.b16 %v2717
      %v2790 = vunpack.c.h.b16 %v2717
      %v2791 = vunpack.c.l.b16 %v2718
      %v2792 = vunpack.c.h.b16 %v2718
      %v2793 = vunpack.c.l.b16 %v2719
      %v2794 = vunpack.c.h.b16 %v2719
      %v2795 = vunpack.c.l.b16 %v2720
      %v2796 = vunpack.c.h.b16 %v2720
      %v2797 = vunpack.c.l.b16 %v2721
      %v2798 = vunpack.c.h.b16 %v2721
      %v2799 = vunpack.c.l.b16 %v2722
      %v2800 = vunpack.c.h.b16 %v2722
      %v2801 = vunpack.c.l.b16 %v2723
      %v2802 = vunpack.c.h.b16 %v2723
      %v2803 = vunpack.c.l.b16 %v2724
      %v2804 = vunpack.c.h.b16 %v2724
      %v2805 = vunpack.c.l.b16 %v2725
      %v2806 = vunpack.c.h.b16 %v2725
      %v2807 = vunpack.c.l.b16 %v2726
      %v2808 = vunpack.c.h.b16 %v2726
      %v2809 = vunpack.c.l.b16 %v2727
      %v2810 = vunpack.c.h.b16 %v2727
      %v2811 = vunpack.c.l.b16 %v2728
      %v2812 = vunpack.c.h.b16 %v2728
      %v2813 = vunpack.c.l.b16 %v2729
      %v2814 = vunpack.c.h.b16 %v2729
      %v2815 = vunpack.c.l.b16 %v2730
      %v2816 = vunpack.c.h.b16 %v2730
      %v2817 = vunpack.c.l.b16 %v2731
      %v2818 = vunpack.c.h.b16 %v2731
      %v2819 = vunpack.c.l.b16 %v2732
      %v2820 = vunpack.c.h.b16 %v2732
      %v2821 = vunpack.c.l.b16 %v2733
      %v2822 = vunpack.c.h.b16 %v2733
      %v2823 = vunpack.c.l.b16 %v2734
      %v2824 = vunpack.c.h.b16 %v2734
      %v2825 = vunpack.c.l.b16 %v2735
      %v2826 = vunpack.c.h.b16 %v2735
      %v2827 = vunpack.c.l.b16 %v2736
      %v2828 = vunpack.c.h.b16 %v2736
      %v2829 = vunpack.c.l.b16 %v2737
      %v2830 = vunpack.c.h.b16 %v2737
      %v2831 = vunpack.c.l.b16 %v2738
      %v2832 = vunpack.c.h.b16 %v2738
      %v2833 = vunpack.c.l.b16 %v2739
      %v2834 = vunpack.c.h.b16 %v2739
      %v2835 = vunpack.c.l.b16 %v2740
      %v2836 = vunpack.c.h.b16 %v2740
      %v2837 = vpack.c.b16 %v2777, %v2773
      %v2838 = vpack.c.b16 %v2778, %v2774
      %v2839 = vpack.c.b16 %v2779, %v2775
      %v2840 = vpack.c.b16 %v2780, %v2776
      %v2841 = vpack.c.b16 %v2785, %v2781
      %v2842 = vpack.c.b16 %v2786, %v2782
      %v2843 = vpack.c.b16 %v2787, %v2783
      %v2844 = vpack.c.b16 %v2788, %v2784
      %v2845 = vpack.c.b16 %v2793, %v2789
      %v2846 = vpack.c.b16 %v2794, %v2790
      %v2847 = vpack.c.b16 %v2795, %v2791
      %v2848 = vpack.c.b16 %v2796, %v2792
      %v2849 = vpack.c.b16 %v2801, %v2797
      %v2850 = vpack.c.b16 %v2802, %v2798
      %v2851 = vpack.c.b16 %v2803, %v2799
      %v2852 = vpack.c.b16 %v2804, %v2800
      %v2853 = vpack.c.b16 %v2809, %v2805
      %v2854 = vpack.c.b16 %v2810, %v2806
      %v2855 = vpack.c.b16 %v2811, %v2807
      %v2856 = vpack.c.b16 %v2812, %v2808
      %v2857 = vpack.c.b16 %v2817, %v2813
      %v2858 = vpack.c.b16 %v2818, %v2814
      %v2859 = vpack.c.b16 %v2819, %v2815
      %v2860 = vpack.c.b16 %v2820, %v2816
      %v2861 = vpack.c.b16 %v2825, %v2821
      %v2862 = vpack.c.b16 %v2826, %v2822
      %v2863 = vpack.c.b16 %v2827, %v2823
      %v2864 = vpack.c.b16 %v2828, %v2824
      %v2865 = vpack.c.b16 %v2833, %v2829
      %v2866 = vpack.c.b16 %v2834, %v2830
      %v2867 = vpack.c.b16 %v2835, %v2831
      %v2868 = vpack.c.b16 %v2836, %v2832
      %2901 = vmatprep.subr.bf16.mxu0 %v2838
      %2902 = vmatpush1.bf16.msra.mxu0 %v2837
      %2903 = vmatprep.subr.bf16.mxu0 %v2842
      %2904 = vmatpush1.bf16.msra.mxu0 %v2841
      %2905 = vmatprep.subr.bf16.mxu0 %v2846
      %2906 = vmatpush1.bf16.msra.mxu0 %v2845
      %2907 = vmatprep.subr.bf16.mxu0 %v2850
      %2908 = vmatpush1.bf16.msra.mxu0 %v2849
      %2909 = vmatprep.subr.bf16.mxu0 %v2854
      %2910 = vmatpush1.bf16.msra.mxu0 %v2853
      %2911 = vmatprep.subr.bf16.mxu0 %v2858
      %2912 = vmatpush1.bf16.msra.mxu0 %v2857
      %2913 = vmatprep.subr.bf16.mxu0 %v2862
      %2914 = vmatpush1.bf16.msra.mxu0 %v2861
      %2915 = vmatprep.subr.bf16.mxu0 %v2866
      %2916 = vmatpush1.bf16.msra.mxu0 %v2865
      %2917 = vmatprep.subr.bf16.mxu0 0
      %2918 = vmatpush1.bf16.msra.mxu0 0
      %2919 = vmatprep.subr.bf16.mxu0 0
      %2920 = vmatpush1.bf16.msra.mxu0 0
      %2921 = vmatprep.subr.bf16.mxu0 0
      %2922 = vmatpush1.bf16.msra.mxu0 0
      %2923 = vmatprep.subr.bf16.mxu0 0
      %2924 = vmatpush1.bf16.msra.mxu0 0
      %2925 = vmatprep.subr.bf16.mxu0 0
      %2926 = vmatpush1.bf16.msra.mxu0 0
      %2927 = vmatprep.subr.bf16.mxu0 0
      %2928 = vmatpush1.bf16.msra.mxu0 0
      %2929 = vmatprep.subr.bf16.mxu0 0
      %2930 = vmatpush1.bf16.msra.mxu0 0
      %2931 = vmatprep.subr.bf16.mxu0 0
      %2932 = vmatpush1.bf16.msra.mxu0 0
      %2933 = vmatprep.mubr.bf16.mxu0 0
      %2934 = vmatmul.mubr.bf16.gmra.mrb[0].mxu0 %v2708
      %v2935 = vpop.f32.mrb[0].mxu0
      %v2936 = vadd.f32 0.0, %v2935
      %v2937 = vpop.f32.mrb[0].mxu0
      %v2938 = vadd.f32 0.0, %v2937
      %v2939 = vpop.f32.mrb[0].mxu0
      %v2940 = vpop.f32.mrb[0].mxu0
      %2941 = vdwg.mxu0
      %2942 = vmatprep.subr.bf16.mxu0 %v2840
      %2943 = vmatpush1.bf16.msra.mxu0 %v2839
      %2944 = vmatprep.subr.bf16.mxu0 %v2844
      %2945 = vmatpush1.bf16.msra.mxu0 %v2843
      %2946 = vmatprep.subr.bf16.mxu0 %v2848
      %2947 = vmatpush1.bf16.msra.mxu0 %v2847
      %2948 = vmatprep.subr.bf16.mxu0 %v2852
      %2949 = vmatpush1.bf16.msra.mxu0 %v2851
      %2950 = vmatprep.subr.bf16.mxu0 %v2856
      %2951 = vmatpush1.bf16.msra.mxu0 %v2855
      %2952 = vmatprep.subr.bf16.mxu0 %v2860
      %2953 = vmatpush1.bf16.msra.mxu0 %v2859
      %2954 = vmatprep.subr.bf16.mxu0 %v2864
      %2955 = vmatpush1.bf16.msra.mxu0 %v2863
      %2956 = vmatprep.subr.bf16.mxu0 %v2868
      %2957 = vmatpush1.bf16.msra.mxu0 %v2867
      %2958 = vmatprep.subr.bf16.mxu0 0
      %2959 = vmatpush1.bf16.msra.mxu0 0
      %2960 = vmatprep.subr.bf16.mxu0 0
      %2961 = vmatpush1.bf16.msra.mxu0 0
      %2962 = vmatprep.subr.bf16.mxu0 0
      %2963 = vmatpush1.bf16.msra.mxu0 0
      %2964 = vmatprep.subr.bf16.mxu0 0
      %2965 = vmatpush1.bf16.msra.mxu0 0
      %2966 = vmatprep.subr.bf16.mxu0 0
      %2967 = vmatpush1.bf16.msra.mxu0 0
      %2968 = vmatprep.subr.bf16.mxu0 0
      %2969 = vmatpush1.bf16.msra.mxu0 0
      %2970 = vmatprep.subr.bf16.mxu0 0
      %2971 = vmatpush1.bf16.msra.mxu0 0
      %2972 = vmatprep.subr.bf16.mxu0 0
      %2973 = vmatpush1.bf16.msra.mxu0 0
      %2974 = vmatprep.mubr.bf16.mxu0 0
      %2975 = vmatmul.mubr.bf16.gmra.mrb[0].mxu0 %v2708
      %v2976 = vpop.f32.mrb[0].mxu0
      %v2977 = vadd.f32 0.0, %v2976
      %v2978 = vpop.f32.mrb[0].mxu0
      %v2979 = vadd.f32 0.0, %v2978
      %v2980 = vpop.f32.mrb[0].mxu0
      %v2981 = vpop.f32.mrb[0].mxu0
      %2982 = vdwg.mxu0
      %v2983 = vadd.f32 %v2704, %v2936
      %v2984 = vadd.f32 %v2705, %v2938
      %v2985 = vadd.f32 %v2706, %v2977
      %v2986 = vadd.f32 %v2707, %v2979
      %v2987 = vxor.u32 %v2983, 2147483648
      %v2988 = vmul.f32 %v2987, 1.442695
      %v2989 = vpow.pop %v2988
      %v2990 = vadd.f32 %v2989, 1.0
      %v2991 = vrcp.pop %v2990
      %v2992 = vmul.f32 1.0, %v2991
      %v2993 = vxor.u32 %v2984, 2147483648
      %v2994 = vmul.f32 %v2993, 1.442695
      %v2995 = vpow.pop %v2994
      %v2996 = vadd.f32 %v2995, 1.0
      %v2997 = vrcp.pop %v2996
      %v2998 = vmul.f32 1.0, %v2997
      %v2999 = vtanh.pop %v2985
      %v3000 = vxor.u32 %v2986, 2147483648
      %v3001 = vmul.f32 %v3000, 1.442695
      %v3002 = vpow.pop %v3001
      %v3003 = vadd.f32 %v3002, 1.0
      %v3004 = vrcp.pop %v3003
      %v3005 = vmul.f32 1.0, %v3004
      %v3006 = vmul.f32 %v2998, %v2692
      %v3007 = vmul.f32 %v2992, %v2999
      %v3008 = vadd.f32 %v3006, %v3007
      %v3009 = vtanh.pop %v3008
      %v3010 = vmul.f32 %v3005, %v3009
      %s3011 = scalar_lea.vmem %s234, %s2698
      %3012 = vst [vmem:[%s3011] sm:$0xff] %v3010
      %p3013 = scmp.lt.s32.totalorder %s15, 1
      %s3014 = scalar_select %p3013, %s15, 1
      %s3015 = smul.addr %s3014, 8
      %s3016 = smul.addr %s3015, 8
      %s3017 = scalar_lea.vmem %s4, %s3016
      // Predicated region
      $region37: #{optimized_lstm_forward.3} parent=35 // pred_check
        %p3018 = pneg %p132
      $region38: #{optimized_lstm_forward.3} parent=35 // pred_check_branch
        %3020 = sbr.rel (%p3018) target = $region40
      $region39: #{optimized_lstm_forward.3} parent=35 // pred_region
        _
      $region40: #{optimized_lstm_forward.3} parent=35 // pred_fallthru
        _
    $region36: #{optimized_lstm_forward.3} parent=5 // pred_fallthru
      _
    %p3021 = scmp.le.s32.totalorder 2, %s10
    // Predicated region
    $region41: #{optimized_lstm_forward.3} parent=5 // pred_check
      %p3022 = pneg %p3021
    $region42: #{optimized_lstm_forward.3} parent=5 // pred_check_branch
      %3024 = sbr.rel (%p3022) target = $region44
    $region43: #{optimized_lstm_forward.3} parent=5 // pred_region
      %s3025 = ssub.s32 %s10, 2
      // Predicated region
      $region45: #{optimized_lstm_forward.3} parent=43 // pred_check
        %p3026 = pneg %p138
      $region46: #{optimized_lstm_forward.3} parent=43 // pred_check_branch
        %3028 = sbr.rel (%p3026) target = $region48
      $region47: #{optimized_lstm_forward.3} parent=43 // pred_region
        %p3029 = scmp.lt.s32.totalorder %s16, 1
        %s3030 = scalar_select %p3029, %s16, 1
        %s3031 = smul.addr %s3030, 8
        %s3032 = smul.addr %s3031, 8
        %s3033 = scalar_lea.vmem %s4, %s3032
      $region48: #{optimized_lstm_forward.3} parent=43 // pred_fallthru
        _
    $region44: #{optimized_lstm_forward.3} parent=5 // pred_fallthru
      _
  $region6: #{optimized_lstm_forward.3} parent=0 // loop_footer
    %s14 = sadd.s32 1, %s10
  $region7: #{optimized_lstm_forward.3} parent=0 // loop_footer_branch
    %9 = sbr.rel target = $region3
  $region8: #{optimized_lstm_forward.3} parent=0 // loop_exit
    _

// kernel: optimized_lstm_forward.4
$region0: #{optimized_lstm_forward.4}
  #allocation0 [shape = 'u32[]', space=smem, size = 0x4, offset = 0x4, fixed_abs, tag = 'smem constant byte address 0x4 - core index']
  #allocation1 [shape = 'u32[144,128]{1,0:T(1,128)}', space=vmem, size = 0x12000, scoped, tag = 'internal scratch']
  #allocation2 [shape = 'f32[64,512]{1,0:T(8,128)}', space=vmem, size = 0x20000, scoped, tag = 'scratch operand']
  %s0 = inlined_call_operand.vmem [shape: f32[64,64], index: 0, kind: input, shape index: {}]
  %s1 = inlined_call_operand.vmem [shape: bf16[2,64,512], index: 1, kind: input, shape index: {}]
  %s2 = inlined_call_operand.vmem [shape: bf16[2,128,512], index: 2, kind: input, shape index: {}]
  %s3 = inlined_call_operand.vmem [shape: f32[2,1,512], index: 3, kind: input, shape index: {}]
  %s4 = inlined_call_operand.vmem [shape: f32[2,64,128], index: 4, kind: output, shape index: {}]
  %s5 = sld [smem:[#allocation0]]
  $region49: #{optimized_lstm_forward.4} parent=0
    _
  %s7 = ssub.s32 1, %s5
  %s8 = scalar_select 0, %s7, %s5
  loop: start=0, step=1, limit=4
  $region2: #{optimized_lstm_forward.4} parent=0 // loop_pre_header
    _
  $region3: #{optimized_lstm_forward.4} parent=0 // loop_header
    %s10 = sphi 0, %s14
    %p11 = scmp.ge.s32.totalorder %s10, 4
    %s18 = sphi 0, %s18
    %s20 = sphi 0, %s18
    %s21 = sphi 0, %s20
    %s35 = sphi 0, %s21
    %s41 = sphi 0, %s43
    %s44 = sphi 0, %s41
    %s45 = sphi 0, %s44
    %s61 = sphi 0, %s45
    %s67 = sphi 0, %s69
    %s70 = sphi 0, %s67
    %s71 = sphi 0, %s70
    %s87 = sphi 0, %s71
    %s93 = sphi 0, %s95
    %s96 = sphi 0, %s93
    %s97 = sphi 0, %s96
    %s113 = sphi 0, %s97
    %s119 = sphi 0, %s121
    %s122 = sphi 0, %s119
    %s123 = sphi 0, %s122
    %s139 = sphi 0, %s123
  $region4: #{optimized_lstm_forward.4} parent=0 // loop_header_branch
    %13 = sbr.rel (%p11) target = $region8
  $region5: #{optimized_lstm_forward.4} parent=0 // loop_body
    %s15 = ssub.s32 %s10, 1
    %s16 = ssub.s32 %s10, 2
    %s17 = sadd.s32 %s10, 1
    %s19 = sadd.s32 %s18, 1
    %p22 = scmp.eq.s32.totalorder %s10, 1
    %p23 = scmp.ne.s32.totalorder %s18, %s20
    %p24 = scmp.eq.s32.totalorder %s10, 0
    %p25 = por %p23, %p24
    %p26 = scmp.ne.s32.totalorder %s18, %s20
    %p27 = scmp.eq.s32.totalorder %s15, 1
    %p28 = por %p26, %p27
    %p29 = scmp.ne.s32.totalorder %s20, %s21
    %p30 = scmp.eq.s32.totalorder %s15, 0
    %p31 = por %p29, %p30
    %p32 = scmp.ne.s32.totalorder %s20, %s21
    %p33 = scmp.eq.s32.totalorder %s16, 1
    %p34 = por %p32, %p33
    %p36 = scmp.ne.s32.totalorder %s21, %s35
    %p37 = scmp.eq.s32.totalorder %s16, 0
    %p38 = por %p36, %p37
    %s39 = ssub.s32 %s10, %s17
    %p40 = scmp.eq.s32.totalorder %s39, 0
    %s42 = sadd.s32 %s41, 1
    %s43 = scalar_select %p40, %s41, %s42
    %p46 = pneg %p40
    %p47 = scmp.eq.s32.totalorder %s10, 1
    %p48 = por %p46, %p47
    %p49 = scmp.ne.s32.totalorder %s41, %s44
    %p50 = scmp.eq.s32.totalorder %s10, 0
    %p51 = por %p49, %p50
    %p52 = scmp.ne.s32.totalorder %s41, %s44
    %p53 = scmp.eq.s32.totalorder %s15, 1
    %p54 = por %p52, %p53
    %p55 = scmp.ne.s32.totalorder %s44, %s45
    %p56 = scmp.eq.s32.totalorder %s15, 0
    %p57 = por %p55, %p56
    %p58 = scmp.ne.s32.totalorder %s44, %s45
    %p59 = scmp.eq.s32.totalorder %s16, 1
    %p60 = por %p58, %p59
    %p62 = scmp.ne.s32.totalorder %s45, %s61
    %p63 = scmp.eq.s32.totalorder %s16, 0
    %p64 = por %p62, %p63
    %s65 = ssub.s32 %s10, %s17
    %p66 = scmp.eq.s32.totalorder %s65, 0
    %s68 = sadd.s32 %s67, 1
    %s69 = scalar_select %p66, %s67, %s68
    %p72 = pneg %p66
    %p73 = scmp.eq.s32.totalorder %s10, 1
    %p74 = por %p72, %p73
    %p75 = scmp.ne.s32.totalorder %s67, %s70
    %p76 = scmp.eq.s32.totalorder %s10, 0
    %p77 = por %p75, %p76
    %p78 = scmp.ne.s32.totalorder %s67, %s70
    %p79 = scmp.eq.s32.totalorder %s15, 1
    %p80 = por %p78, %p79
    %p81 = scmp.ne.s32.totalorder %s70, %s71
    %p82 = scmp.eq.s32.totalorder %s15, 0
    %p83 = por %p81, %p82
    %p84 = scmp.ne.s32.totalorder %s70, %s71
    %p85 = scmp.eq.s32.totalorder %s16, 1
    %p86 = por %p84, %p85
    %p88 = scmp.ne.s32.totalorder %s71, %s87
    %p89 = scmp.eq.s32.totalorder %s16, 0
    %p90 = por %p88, %p89
    %s91 = ssub.s32 %s10, %s17
    %p92 = scmp.eq.s32.totalorder %s91, 0
    %s94 = sadd.s32 %s93, 1
    %s95 = scalar_select %p92, %s93, %s94
    %p98 = pneg %p92
    %p99 = scmp.eq.s32.totalorder %s10, 1
    %p100 = por %p98, %p99
    %p101 = scmp.ne.s32.totalorder %s93, %s96
    %p102 = scmp.eq.s32.totalorder %s10, 0
    %p103 = por %p101, %p102
    %p104 = scmp.ne.s32.totalorder %s93, %s96
    %p105 = scmp.eq.s32.totalorder %s15, 1
    %p106 = por %p104, %p105
    %p107 = scmp.ne.s32.totalorder %s96, %s97
    %p108 = scmp.eq.s32.totalorder %s15, 0
    %p109 = por %p107, %p108
    %p110 = scmp.ne.s32.totalorder %s96, %s97
    %p111 = scmp.eq.s32.totalorder %s16, 1
    %p112 = por %p110, %p111
    %p114 = scmp.ne.s32.totalorder %s97, %s113
    %p115 = scmp.eq.s32.totalorder %s16, 0
    %p116 = por %p114, %p115
    %s117 = ssub.s32 %s10, %s17
    %p118 = scmp.eq.s32.totalorder %s117, 0
    %s120 = sadd.s32 %s119, 1
    %s121 = scalar_select %p118, %s119, %s120
    %p124 = pneg %p118
    %p125 = scmp.eq.s32.totalorder %s10, 1
    %p126 = por %p124, %p125
    %p127 = scmp.ne.s32.totalorder %s119, %s122
    %p128 = scmp.eq.s32.totalorder %s10, 0
    %p129 = por %p127, %p128
    %p130 = scmp.ne.s32.totalorder %s119, %s122
    %p131 = scmp.eq.s32.totalorder %s15, 1
    %p132 = por %p130, %p131
    %p133 = scmp.ne.s32.totalorder %s122, %s123
    %p134 = scmp.eq.s32.totalorder %s15, 0
    %p135 = por %p133, %p134
    %p136 = scmp.ne.s32.totalorder %s122, %s123
    %p137 = scmp.eq.s32.totalorder %s16, 1
    %p138 = por %p136, %p137
    %p140 = scmp.ne.s32.totalorder %s123, %s139
    %p141 = scmp.eq.s32.totalorder %s16, 0
    %p142 = por %p140, %p141
    %p143 = scmp.le.s32.totalorder 1, %s10
    %p144 = scmp.lt.s32.totalorder %s10, 3
    %p145 = pnand %p143, %p144
    %p146 = pneg %p145
    // Predicated region
    $region9: #{optimized_lstm_forward.4} parent=5 // pred_check
      _
    $region10: #{optimized_lstm_forward.4} parent=5 // pred_check_branch
      %148 = sbr.rel (%p145) target = $region12
    $region11: #{optimized_lstm_forward.4} parent=5 // pred_region
      %s149 = ssub.s32 %s10, 1
      // Predicated region
      $region13: #{optimized_lstm_forward.4} parent=11 // pred_check
        %p150 = pneg %p31
      $region14: #{optimized_lstm_forward.4} parent=11 // pred_check_branch
        %152 = sbr.rel (%p150) target = $region16
      $region15: #{optimized_lstm_forward.4} parent=11 // pred_region
        _
      $region16: #{optimized_lstm_forward.4} parent=11 // pred_fallthru
        _
    $region12: #{optimized_lstm_forward.4} parent=5 // pred_fallthru
      _
    %p153 = scmp.lt.s32.totalorder %s10, 2
    // Predicated region
    $region17: #{optimized_lstm_forward.4} parent=5 // pred_check
      %p154 = pneg %p153
    $region18: #{optimized_lstm_forward.4} parent=5 // pred_check_branch
      %156 = sbr.rel (%p154) target = $region20
    $region19: #{optimized_lstm_forward.4} parent=5 // pred_region
      // Predicated region
      $region21: #{optimized_lstm_forward.4} parent=19 // pred_check
        %p157 = pneg %p51
      $region22: #{optimized_lstm_forward.4} parent=19 // pred_check_branch
        %159 = sbr.rel (%p157) target = $region24
      $region23: #{optimized_lstm_forward.4} parent=19 // pred_region
        %p160 = scmp.lt.s32.totalorder %s10, 1
        %s161 = scalar_select %p160, %s10, 1
        %s162 = smul.addr %s161, 32
        %s163 = smul.addr %s162, 4
        %s164 = scalar_lea.vmem %s1, %s163
      $region24: #{optimized_lstm_forward.4} parent=19 // pred_fallthru
        _
      // Predicated region
      $region25: #{optimized_lstm_forward.4} parent=19 // pred_check
        %p165 = pneg %p77
      $region26: #{optimized_lstm_forward.4} parent=19 // pred_check_branch
        %167 = sbr.rel (%p165) target = $region28
      $region27: #{optimized_lstm_forward.4} parent=19 // pred_region
        %p168 = scmp.lt.s32.totalorder %s10, 1
        %s169 = scalar_select %p168, %s10, 1
        %s170 = smul.addr %s169, 64
        %s171 = smul.addr %s170, 4
        %s172 = scalar_lea.vmem %s2, %s171
      $region28: #{optimized_lstm_forward.4} parent=19 // pred_fallthru
        _
      // Predicated region
      $region29: #{optimized_lstm_forward.4} parent=19 // pred_check
        %p173 = pneg %p103
      $region30: #{optimized_lstm_forward.4} parent=19 // pred_check_branch
        %175 = sbr.rel (%p173) target = $region32
      $region31: #{optimized_lstm_forward.4} parent=19 // pred_region
        %p176 = scmp.lt.s32.totalorder %s10, 1
        %s177 = scalar_select %p176, %s10, 1
        %s178 = smul.addr %s177, 4
        %s179 = scalar_lea.vmem %s3, %s178
      $region32: #{optimized_lstm_forward.4} parent=19 // pred_fallthru
        _
    $region20: #{optimized_lstm_forward.4} parent=5 // pred_fallthru
      _
    %p180 = scmp.le.s32.totalorder 1, %s10
    %p181 = scmp.lt.s32.totalorder %s10, 3
    %p182 = pnand %p180, %p181
    %p183 = pneg %p182
    // Predicated region
    $region33: #{optimized_lstm_forward.4} parent=5 // pred_check
      _
    $region34: #{optimized_lstm_forward.4} parent=5 // pred_check_branch
      %185 = sbr.rel (%p182) target = $region36
    $region35: #{optimized_lstm_forward.4} parent=5 // pred_region
      %s186 = ssub.s32 %s10, 1
      %p187 = pneg %p31
      %p188 = pneg %p28
      %p189 = scmp.lt.s32.totalorder %s15, 1
      %s190 = scalar_select %p189, %s15, 1
      %s191 = smul.addr %s190, 32
      %s192 = smul.addr %s191, 4
      %s193 = scalar_lea.vmem %s1, %s192
      %p194 = pneg %p57
      %p195 = pneg %p54
      %p196 = scmp.lt.s32.totalorder %s15, 1
      %s197 = scalar_select %p196, %s15, 1
      %s198 = smul.addr %s197, 64
      %s199 = smul.addr %s198, 4
      %s200 = scalar_lea.vmem %s2, %s199
      %p201 = pneg %p83
      %p202 = pneg %p80
      %p203 = scmp.lt.s32.totalorder %s15, 1
      %s204 = scalar_select %p203, %s15, 1
      %s205 = smul.addr %s204, 4
      %s206 = scalar_lea.vmem %s3, %s205
      %p207 = pneg %p109
      %p208 = pneg %p106
      %p209 = pneg %p135
      %p210 = pneg %p132
      %p211 = scmp.lt.s32.totalorder %s15, 1
      %s212 = scalar_select %p211, %s15, 1
      %s213 = smul.addr %s212, 8
      %s214 = smul.addr %s213, 8
      %s215 = scalar_lea.vmem %s4, %s214
      %p216 = scmp.lt.s32.totalorder %s15, 1
      %s217 = scalar_select %p216, %s15, 1
      %s218 = smul.addr %s217, 32
      %s219 = smul.addr %s218, 4
      %s220 = scalar_lea.vmem %s1, %s219
      %p221 = scmp.lt.s32.totalorder %s15, 1
      %s222 = scalar_select %p221, %s15, 1
      %s223 = smul.addr %s222, 64
      %s224 = smul.addr %s223, 4
      %s225 = scalar_lea.vmem %s2, %s224
      %p226 = scmp.lt.s32.totalorder %s15, 1
      %s227 = scalar_select %p226, %s15, 1
      %s228 = smul.addr %s227, 4
      %s229 = scalar_lea.vmem %s3, %s228
      %p230 = scmp.lt.s32.totalorder %s15, 1
      %s231 = scalar_select %p230, %s15, 1
      %s232 = smul.addr %s231, 8
      %s233 = smul.addr %s232, 8
      %s234 = scalar_lea.vmem %s4, %s233
      %v236 = vld [vmem:[%s0] sm:$0xff]
      %v237 = vld [vmem:[%s0 + $0x8] sm:$0xff]
      %v238 = vld [vmem:[%s0 + $0x10] sm:$0xff]
      %v239 = vld [vmem:[%s0 + $0x18] sm:$0xff]
      %v240 = vld [vmem:[%s0 + $0x20] sm:$0xff]
      %v241 = vld [vmem:[%s0 + $0x28] sm:$0xff]
      %v242 = vld [vmem:[%s0 + $0x30] sm:$0xff]
      %v243 = vld [vmem:[%s0 + $0x38] sm:$0xff]
      %v244 = vpack.c.bf16 %v237, %v236
      %v245 = vpack.c.bf16 %v239, %v238
      %v246 = vpack.c.bf16 %v241, %v240
      %v247 = vpack.c.bf16 %v243, %v242
      %v248 = vld [vmem:[%s220] sm:$0xff]
      %v249 = vld [vmem:[%s220 + $0x8] sm:$0xff]
      %v250 = vld [vmem:[%s220 + $0x10] sm:$0xff]
      %v251 = vld [vmem:[%s220 + $0x18] sm:$0xff]
      %v252 = vld [vmem:[%s220 + $0x20] sm:$0xff]
      %v253 = vld [vmem:[%s220 + $0x28] sm:$0xff]
      %v254 = vld [vmem:[%s220 + $0x30] sm:$0xff]
      %v255 = vld [vmem:[%s220 + $0x38] sm:$0xff]
      %v256 = vld [vmem:[%s220 + $0x40] sm:$0xff]
      %v257 = vld [vmem:[%s220 + $0x48] sm:$0xff]
      %v258 = vld [vmem:[%s220 + $0x50] sm:$0xff]
      %v259 = vld [vmem:[%s220 + $0x58] sm:$0xff]
      %v260 = vld [vmem:[%s220 + $0x60] sm:$0xff]
      %v261 = vld [vmem:[%s220 + $0x68] sm:$0xff]
      %v262 = vld [vmem:[%s220 + $0x70] sm:$0xff]
      %v263 = vld [vmem:[%s220 + $0x78] sm:$0xff]
      %v264 = vld [vmem:[%s229] sm:$0xf]
      %v266 = vlaneseq
      %v267 = vshrl.u32 %v266, 7
      %v268 = vsub.s32 0, %v267
      %v269 = vrot.slane %v264, %v268
      %v270 = vlaneseq
      %v271 = vshrl.u32 %v270, 7
      %v272 = vsub.s32 1, %v271
      %v273 = vrot.slane %v264, %v272
      %v274 = vlaneseq
      %v275 = vshrl.u32 %v274, 7
      %v276 = vsub.s32 2, %v275
      %v277 = vrot.slane %v264, %v276
      %v278 = vlaneseq
      %v279 = vshrl.u32 %v278, 7
      %v280 = vsub.s32 3, %v279
      %v281 = vrot.slane %v264, %v280
      %v302 = vunpack.c.l.b16 %v248
      %v303 = vunpack.c.h.b16 %v248
      %v304 = vunpack.c.l.b16 %v249
      %v305 = vunpack.c.h.b16 %v249
      %v306 = vunpack.c.l.b16 %v250
      %v307 = vunpack.c.h.b16 %v250
      %v308 = vunpack.c.l.b16 %v251
      %v309 = vunpack.c.h.b16 %v251
      %v310 = vunpack.c.l.b16 %v252
      %v311 = vunpack.c.h.b16 %v252
      %v312 = vunpack.c.l.b16 %v253
      %v313 = vunpack.c.h.b16 %v253
      %v314 = vunpack.c.l.b16 %v254
      %v315 = vunpack.c.h.b16 %v254
      %v316 = vunpack.c.l.b16 %v255
      %v317 = vunpack.c.h.b16 %v255
      %v318 = vunpack.c.l.b16 %v256
      %v319 = vunpack.c.h.b16 %v256
      %v320 = vunpack.c.l.b16 %v257
      %v321 = vunpack.c.h.b16 %v257
      %v322 = vunpack.c.l.b16 %v258
      %v323 = vunpack.c.h.b16 %v258
      %v324 = vunpack.c.l.b16 %v259
      %v325 = vunpack.c.h.b16 %v259
      %v326 = vunpack.c.l.b16 %v260
      %v327 = vunpack.c.h.b16 %v260
      %v328 = vunpack.c.l.b16 %v261
      %v329 = vunpack.c.h.b16 %v261
      %v330 = vunpack.c.l.b16 %v262
      %v331 = vunpack.c.h.b16 %v262
      %v332 = vunpack.c.l.b16 %v263
      %v333 = vunpack.c.h.b16 %v263
      %v334 = vpack.c.b16 %v306, %v302
      %v335 = vpack.c.b16 %v307, %v303
      %v336 = vpack.c.b16 %v308, %v304
      %v337 = vpack.c.b16 %v309, %v305
      %v338 = vpack.c.b16 %v314, %v310
      %v339 = vpack.c.b16 %v315, %v311
      %v340 = vpack.c.b16 %v316, %v312
      %v341 = vpack.c.b16 %v317, %v313
      %v342 = vpack.c.b16 %v322, %v318
      %v343 = vpack.c.b16 %v323, %v319
      %v344 = vpack.c.b16 %v324, %v320
      %v345 = vpack.c.b16 %v325, %v321
      %v346 = vpack.c.b16 %v330, %v326
      %v347 = vpack.c.b16 %v331, %v327
      %v348 = vpack.c.b16 %v332, %v328
      %v349 = vpack.c.b16 %v333, %v329
      %vm366 = vcmask 523264
      %v368 = vsel %vm366, %v244, 0
      %v371 = vsel %vm366, %v245, 0
      %v374 = vsel %vm366, %v246, 0
      %v377 = vsel %vm366, %v247, 0
      %379 = vmatprep.subr.bf16.mxu0 %v335
      %380 = vmatpush1.bf16.msra.mxu0 %v334
      %381 = vmatprep.subr.bf16.mxu0 %v339
      %382 = vmatpush1.bf16.msra.mxu0 %v338
      %383 = vmatprep.subr.bf16.mxu0 %v343
      %384 = vmatpush1.bf16.msra.mxu0 %v342
      %385 = vmatprep.subr.bf16.mxu0 %v347
      %386 = vmatpush1.bf16.msra.mxu0 %v346
      %387 = vmatprep.subr.bf16.mxu0 0
      %388 = vmatpush1.bf16.msra.mxu0 0
      %389 = vmatprep.subr.bf16.mxu0 0
      %390 = vmatpush1.bf16.msra.mxu0 0
      %391 = vmatprep.subr.bf16.mxu0 0
      %392 = vmatpush1.bf16.msra.mxu0 0
      %393 = vmatprep.subr.bf16.mxu0 0
      %394 = vmatpush1.bf16.msra.mxu0 0
      %395 = vmatprep.subr.bf16.mxu0 0
      %396 = vmatpush1.bf16.msra.mxu0 0
      %397 = vmatprep.subr.bf16.mxu0 0
      %398 = vmatpush1.bf16.msra.mxu0 0
      %399 = vmatprep.subr.bf16.mxu0 0
      %400 = vmatpush1.bf16.msra.mxu0 0
      %401 = vmatprep.subr.bf16.mxu0 0
      %402 = vmatpush1.bf16.msra.mxu0 0
      %403 = vmatprep.subr.bf16.mxu0 0
      %404 = vmatpush1.bf16.msra.mxu0 0
      %405 = vmatprep.subr.bf16.mxu0 0
      %406 = vmatpush1.bf16.msra.mxu0 0
      %407 = vmatprep.subr.bf16.mxu0 0
      %408 = vmatpush1.bf16.msra.mxu0 0
      %409 = vmatprep.subr.bf16.mxu0 0
      %410 = vmatpush1.bf16.msra.mxu0 0
      %411 = vmatprep.mubr.bf16.mxu0 0
      %412 = vmatmul.mubr.bf16.gmra.mrb[0].mxu0 %v368
      %v413 = vpop.f32.mrb[0].mxu0
      %v414 = vadd.f32 %v269, %v413
      %v415 = vpop.f32.mrb[0].mxu0
      %v416 = vadd.f32 %v273, %v415
      %v417 = vpop.f32.mrb[0].mxu0
      %v418 = vadd.f32 %v269, %v417
      %v419 = vpop.f32.mrb[0].mxu0
      %v420 = vadd.f32 %v273, %v419
      %421 = vmatprep.mubr.bf16.mxu0 0
      %422 = vmatmul.mubr.bf16.gmra.mrb[0].mxu0 %v371
      %v423 = vpop.f32.mrb[0].mxu0
      %v424 = vadd.f32 %v269, %v423
      %v425 = vpop.f32.mrb[0].mxu0
      %v426 = vadd.f32 %v273, %v425
      %v427 = vpop.f32.mrb[0].mxu0
      %v428 = vadd.f32 %v269, %v427
      %v429 = vpop.f32.mrb[0].mxu0
      %v430 = vadd.f32 %v273, %v429
      %431 = vmatprep.mubr.bf16.mxu0 0
      %432 = vmatmul.mubr.bf16.gmra.mrb[0].mxu0 %v374
      %v433 = vpop.f32.mrb[0].mxu0
      %v434 = vadd.f32 %v269, %v433
      %v435 = vpop.f32.mrb[0].mxu0
      %v436 = vadd.f32 %v273, %v435
      %v437 = vpop.f32.mrb[0].mxu0
      %v438 = vadd.f32 %v269, %v437
      %v439 = vpop.f32.mrb[0].mxu0
      %v440 = vadd.f32 %v273, %v439
      %441 = vmatprep.mubr.bf16.mxu0 0
      %442 = vmatmul.mubr.bf16.gmra.mrb[0].mxu0 %v377
      %v443 = vpop.f32.mrb[0].mxu0
      %v444 = vadd.f32 %v269, %v443
      %v445 = vpop.f32.mrb[0].mxu0
      %v446 = vadd.f32 %v273, %v445
      %v447 = vpop.f32.mrb[0].mxu0
      %v448 = vadd.f32 %v269, %v447
      %v449 = vpop.f32.mrb[0].mxu0
      %v450 = vadd.f32 %v273, %v449
      %451 = vdwg.mxu0
      %452 = vmatprep.subr.bf16.mxu0 %v337
      %453 = vmatpush1.bf16.msra.mxu0 %v336
      %454 = vmatprep.subr.bf16.mxu0 %v341
      %455 = vmatpush1.bf16.msra.mxu0 %v340
      %456 = vmatprep.subr.bf16.mxu0 %v345
      %457 = vmatpush1.bf16.msra.mxu0 %v344
      %458 = vmatprep.subr.bf16.mxu0 %v349
      %459 = vmatpush1.bf16.msra.mxu0 %v348
      %460 = vmatprep.subr.bf16.mxu0 0
      %461 = vmatpush1.bf16.msra.mxu0 0
      %462 = vmatprep.subr.bf16.mxu0 0
      %463 = vmatpush1.bf16.msra.mxu0 0
      %464 = vmatprep.subr.bf16.mxu0 0
      %465 = vmatpush1.bf16.msra.mxu0 0
      %466 = vmatprep.subr.bf16.mxu0 0
      %467 = vmatpush1.bf16.msra.mxu0 0
      %468 = vmatprep.subr.bf16.mxu0 0
      %469 = vmatpush1.bf16.msra.mxu0 0
      %470 = vmatprep.subr.bf16.mxu0 0
      %471 = vmatpush1.bf16.msra.mxu0 0
      %472 = vmatprep.subr.bf16.mxu0 0
      %473 = vmatpush1.bf16.msra.mxu0 0
      %474 = vmatprep.subr.bf16.mxu0 0
      %475 = vmatpush1.bf16.msra.mxu0 0
      %476 = vmatprep.subr.bf16.mxu0 0
      %477 = vmatpush1.bf16.msra.mxu0 0
      %478 = vmatprep.subr.bf16.mxu0 0
      %479 = vmatpush1.bf16.msra.mxu0 0
      %480 = vmatprep.subr.bf16.mxu0 0
      %481 = vmatpush1.bf16.msra.mxu0 0
      %482 = vmatprep.subr.bf16.mxu0 0
      %483 = vmatpush1.bf16.msra.mxu0 0
      %484 = vmatprep.mubr.bf16.mxu0 0
      %485 = vmatmul.mubr.bf16.gmra.mrb[0].mxu0 %v368
      %v486 = vpop.f32.mrb[0].mxu0
      %v487 = vadd.f32 %v277, %v486
      %v488 = vpop.f32.mrb[0].mxu0
      %v489 = vadd.f32 %v281, %v488
      %v490 = vpop.f32.mrb[0].mxu0
      %v491 = vadd.f32 %v277, %v490
      %v492 = vpop.f32.mrb[0].mxu0
      %v493 = vadd.f32 %v281, %v492
      %494 = vmatprep.mubr.bf16.mxu0 0
      %495 = vmatmul.mubr.bf16.gmra.mrb[0].mxu0 %v371
      %v496 = vpop.f32.mrb[0].mxu0
      %v497 = vadd.f32 %v277, %v496
      %v498 = vpop.f32.mrb[0].mxu0
      %v499 = vadd.f32 %v281, %v498
      %v500 = vpop.f32.mrb[0].mxu0
      %v501 = vadd.f32 %v277, %v500
      %v502 = vpop.f32.mrb[0].mxu0
      %v503 = vadd.f32 %v281, %v502
      %504 = vmatprep.mubr.bf16.mxu0 0
      %505 = vmatmul.mubr.bf16.gmra.mrb[0].mxu0 %v374
      %v506 = vpop.f32.mrb[0].mxu0
      %v507 = vadd.f32 %v277, %v506
      %v508 = vpop.f32.mrb[0].mxu0
      %v509 = vadd.f32 %v281, %v508
      %v510 = vpop.f32.mrb[0].mxu0
      %v511 = vadd.f32 %v277, %v510
      %v512 = vpop.f32.mrb[0].mxu0
      %v513 = vadd.f32 %v281, %v512
      %514 = vmatprep.mubr.bf16.mxu0 0
      %515 = vmatmul.mubr.bf16.gmra.mrb[0].mxu0 %v377
      %v516 = vpop.f32.mrb[0].mxu0
      %v517 = vadd.f32 %v277, %v516
      %v518 = vpop.f32.mrb[0].mxu0
      %v519 = vadd.f32 %v281, %v518
      %v520 = vpop.f32.mrb[0].mxu0
      %v521 = vadd.f32 %v277, %v520
      %v522 = vpop.f32.mrb[0].mxu0
      %v523 = vadd.f32 %v281, %v522
      %524 = vdwg.mxu0
      %525 = vst [vmem:[#allocation2] sm:$0xff] %v414
      %526 = vst [vmem:[#allocation2 + $0x8] sm:$0xff] %v416
      %527 = vst [vmem:[#allocation2 + $0x10] sm:$0xff] %v487
      %528 = vst [vmem:[#allocation2 + $0x18] sm:$0xff] %v489
      %529 = vst [vmem:[#allocation2 + $0x20] sm:$0xff] %v418
      %530 = vst [vmem:[#allocation2 + $0x28] sm:$0xff] %v420
      %531 = vst [vmem:[#allocation2 + $0x30] sm:$0xff] %v491
      %532 = vst [vmem:[#allocation2 + $0x38] sm:$0xff] %v493
      %533 = vst [vmem:[#allocation2 + $0x40] sm:$0xff] %v424
      %534 = vst [vmem:[#allocation2 + $0x48] sm:$0xff] %v426
      %535 = vst [vmem:[#allocation2 + $0x50] sm:$0xff] %v497
      %536 = vst [vmem:[#allocation2 + $0x58] sm:$0xff] %v499
      %537 = vst [vmem:[#allocation2 + $0x60] sm:$0xff] %v428
      %538 = vst [vmem:[#allocation2 + $0x68] sm:$0xff] %v430
      %539 = vst [vmem:[#allocation2 + $0x70] sm:$0xff] %v501
      %540 = vst [vmem:[#allocation2 + $0x78] sm:$0xff] %v503
      %541 = vst [vmem:[#allocation2 + $0x80] sm:$0xff] %v434
      %542 = vst [vmem:[#allocation2 + $0x88] sm:$0xff] %v436
      %543 = vst [vmem:[#allocation2 + $0x90] sm:$0xff] %v507
      %544 = vst [vmem:[#allocation2 + $0x98] sm:$0xff] %v509
      %545 = vst [vmem:[#allocation2 + $0xa0] sm:$0xff] %v438
      %546 = vst [vmem:[#allocation2 + $0xa8] sm:$0xff] %v440
      %547 = vst [vmem:[#allocation2 + $0xb0] sm:$0xff] %v511
      %548 = vst [vmem:[#allocation2 + $0xb8] sm:$0xff] %v513
      %549 = vst [vmem:[#allocation2 + $0xc0] sm:$0xff] %v444
      %550 = vst [vmem:[#allocation2 + $0xc8] sm:$0xff] %v446
      %551 = vst [vmem:[#allocation2 + $0xd0] sm:$0xff] %v517
      %552 = vst [vmem:[#allocation2 + $0xd8] sm:$0xff] %v519
      %553 = vst [vmem:[#allocation2 + $0xe0] sm:$0xff] %v448
      %554 = vst [vmem:[#allocation2 + $0xe8] sm:$0xff] %v450
      %555 = vst [vmem:[#allocation2 + $0xf0] sm:$0xff] %v521
      %556 = vst [vmem:[#allocation2 + $0xf8] sm:$0xff] %v523
      %p557 = scmp.eq.s32.totalorder %s15, 0
      %s558 = scalar_select %p557, 0, 7
      %s559 = smul.u32 %s558, 8
      %s560 = sshra.s32 %s559, 3
      %s561 = sand.u32 %s559, 7
      %s562 = smul.u32 %s560, 4
      %s563 = smul.addr %s562, 8
      %s564 = scalar_lea.vmem [#allocation2], %s563
      %v565 = vld [vmem:[%s564] sm:$0xff]
      %v566 = vld [vmem:[%s564 + $0x8] sm:$0xff]
      %v567 = vld [vmem:[%s564 + $0x10] sm:$0xff]
      %v568 = vld [vmem:[%s564 + $0x18] sm:$0xff]
      %v569 = vld [vmem:[%s225] sm:$0xff]
      %v570 = vld [vmem:[%s225 + $0x8] sm:$0xff]
      %v571 = vld [vmem:[%s225 + $0x10] sm:$0xff]
      %v572 = vld [vmem:[%s225 + $0x18] sm:$0xff]
      %v573 = vld [vmem:[%s225 + $0x20] sm:$0xff]
      %v574 = vld [vmem:[%s225 + $0x28] sm:$0xff]
      %v575 = vld [vmem:[%s225 + $0x30] sm:$0xff]
      %v576 = vld [vmem:[%s225 + $0x38] sm:$0xff]
      %v577 = vld [vmem:[%s225 + $0x40] sm:$0xff]
      %v578 = vld [vmem:[%s225 + $0x48] sm:$0xff]
      %v579 = vld [vmem:[%s225 + $0x50] sm:$0xff]
      %v580 = vld [vmem:[%s225 + $0x58] sm:$0xff]
      %v581 = vld [vmem:[%s225 + $0x60] sm:$0xff]
      %v582 = vld [vmem:[%s225 + $0x68] sm:$0xff]
      %v583 = vld [vmem:[%s225 + $0x70] sm:$0xff]
      %v584 = vld [vmem:[%s225 + $0x78] sm:$0xff]
      %v585 = vld [vmem:[%s225 + $0x80] sm:$0xff]
      %v586 = vld [vmem:[%s225 + $0x88] sm:$0xff]
      %v587 = vld [vmem:[%s225 + $0x90] sm:$0xff]
      %v588 = vld [vmem:[%s225 + $0x98] sm:$0xff]
      %v589 = vld [vmem:[%s225 + $0xa0] sm:$0xff]
      %v590 = vld [vmem:[%s225 + $0xa8] sm:$0xff]
      %v591 = vld [vmem:[%s225 + $0xb0] sm:$0xff]
      %v592 = vld [vmem:[%s225 + $0xb8] sm:$0xff]
      %v593 = vld [vmem:[%s225 + $0xc0] sm:$0xff]
      %v594 = vld [vmem:[%s225 + $0xc8] sm:$0xff]
      %v595 = vld [vmem:[%s225 + $0xd0] sm:$0xff]
      %v596 = vld [vmem:[%s225 + $0xd8] sm:$0xff]
      %v597 = vld [vmem:[%s225 + $0xe0] sm:$0xff]
      %v598 = vld [vmem:[%s225 + $0xe8] sm:$0xff]
      %v599 = vld [vmem:[%s225 + $0xf0] sm:$0xff]
      %v600 = vld [vmem:[%s225 + $0xf8] sm:$0xff]
      %v633 = vunpack.c.l.b16 %v569
      %v634 = vunpack.c.h.b16 %v569
      %v635 = vunpack.c.l.b16 %v570
      %v636 = vunpack.c.h.b16 %v570
      %v637 = vunpack.c.l.b16 %v571
      %v638 = vunpack.c.h.b16 %v571
      %v639 = vunpack.c.l.b16 %v572
      %v640 = vunpack.c.h.b16 %v572
      %v641 = vunpack.c.l.b16 %v573
      %v642 = vunpack.c.h.b16 %v573
      %v643 = vunpack.c.l.b16 %v574
      %v644 = vunpack.c.h.b16 %v574
      %v645 = vunpack.c.l.b16 %v575
      %v646 = vunpack.c.h.b16 %v575
      %v647 = vunpack.c.l.b16 %v576
      %v648 = vunpack.c.h.b16 %v576
      %v649 = vunpack.c.l.b16 %v577
      %v650 = vunpack.c.h.b16 %v577
      %v651 = vunpack.c.l.b16 %v578
      %v652 = vunpack.c.h.b16 %v578
      %v653 = vunpack.c.l.b16 %v579
      %v654 = vunpack.c.h.b16 %v579
      %v655 = vunpack.c.l.b16 %v580
      %v656 = vunpack.c.h.b16 %v580
      %v657 = vunpack.c.l.b16 %v581
      %v658 = vunpack.c.h.b16 %v581
      %v659 = vunpack.c.l.b16 %v582
      %v660 = vunpack.c.h.b16 %v582
      %v661 = vunpack.c.l.b16 %v583
      %v662 = vunpack.c.h.b16 %v583
      %v663 = vunpack.c.l.b16 %v584
      %v664 = vunpack.c.h.b16 %v584
      %v665 = vunpack.c.l.b16 %v585
      %v666 = vunpack.c.h.b16 %v585
      %v667 = vunpack.c.l.b16 %v586
      %v668 = vunpack.c.h.b16 %v586
      %v669 = vunpack.c.l.b16 %v587
      %v670 = vunpack.c.h.b16 %v587
      %v671 = vunpack.c.l.b16 %v588
      %v672 = vunpack.c.h.b16 %v588
      %v673 = vunpack.c.l.b16 %v589
      %v674 = vunpack.c.h.b16 %v589
      %v675 = vunpack.c.l.b16 %v590
      %v676 = vunpack.c.h.b16 %v590
      %v677 = vunpack.c.l.b16 %v591
      %v678 = vunpack.c.h.b16 %v591
      %v679 = vunpack.c.l.b16 %v592
      %v680 = vunpack.c.h.b16 %v592
      %v681 = vunpack.c.l.b16 %v593
      %v682 = vunpack.c.h.b16 %v593
      %v683 = vunpack.c.l.b16 %v594
      %v684 = vunpack.c.h.b16 %v594
      %v685 = vunpack.c.l.b16 %v595
      %v686 = vunpack.c.h.b16 %v595
      %v687 = vunpack.c.l.b16 %v596
      %v688 = vunpack.c.h.b16 %v596
      %v689 = vunpack.c.l.b16 %v597
      %v690 = vunpack.c.h.b16 %v597
      %v691 = vunpack.c.l.b16 %v598
      %v692 = vunpack.c.h.b16 %v598
      %v693 = vunpack.c.l.b16 %v599
      %v694 = vunpack.c.h.b16 %v599
      %v695 = vunpack.c.l.b16 %v600
      %v696 = vunpack.c.h.b16 %v600
      %v697 = vpack.c.b16 %v637, %v633
      %v698 = vpack.c.b16 %v638, %v634
      %v699 = vpack.c.b16 %v639, %v635
      %v700 = vpack.c.b16 %v640, %v636
      %v701 = vpack.c.b16 %v645, %v641
      %v702 = vpack.c.b16 %v646, %v642
      %v703 = vpack.c.b16 %v647, %v643
      %v704 = vpack.c.b16 %v648, %v644
      %v705 = vpack.c.b16 %v653, %v649
      %v706 = vpack.c.b16 %v654, %v650
      %v707 = vpack.c.b16 %v655, %v651
      %v708 = vpack.c.b16 %v656, %v652
      %v709 = vpack.c.b16 %v661, %v657
      %v710 = vpack.c.b16 %v662, %v658
      %v711 = vpack.c.b16 %v663, %v659
      %v712 = vpack.c.b16 %v664, %v660
      %v713 = vpack.c.b16 %v669, %v665
      %v714 = vpack.c.b16 %v670, %v666
      %v715 = vpack.c.b16 %v671, %v667
      %v716 = vpack.c.b16 %v672, %v668
      %v717 = vpack.c.b16 %v677, %v673
      %v718 = vpack.c.b16 %v678, %v674
      %v719 = vpack.c.b16 %v679, %v675
      %v720 = vpack.c.b16 %v680, %v676
      %v721 = vpack.c.b16 %v685, %v681
      %v722 = vpack.c.b16 %v686, %v682
      %v723 = vpack.c.b16 %v687, %v683
      %v724 = vpack.c.b16 %v688, %v684
      %v725 = vpack.c.b16 %v693, %v689
      %v726 = vpack.c.b16 %v694, %v690
      %v727 = vpack.c.b16 %v695, %v691
      %v728 = vpack.c.b16 %v696, %v692
      %761 = vmatprep.subr.bf16.mxu0 %v698
      %762 = vmatpush1.bf16.msra.mxu0 %v697
      %763 = vmatprep.subr.bf16.mxu0 %v702
      %764 = vmatpush1.bf16.msra.mxu0 %v701
      %765 = vmatprep.subr.bf16.mxu0 %v706
      %766 = vmatpush1.bf16.msra.mxu0 %v705
      %767 = vmatprep.subr.bf16.mxu0 %v710
      %768 = vmatpush1.bf16.msra.mxu0 %v709
      %769 = vmatprep.subr.bf16.mxu0 %v714
      %770 = vmatpush1.bf16.msra.mxu0 %v713
      %771 = vmatprep.subr.bf16.mxu0 %v718
      %772 = vmatpush1.bf16.msra.mxu0 %v717
      %773 = vmatprep.subr.bf16.mxu0 %v722
      %774 = vmatpush1.bf16.msra.mxu0 %v721
      %775 = vmatprep.subr.bf16.mxu0 %v726
      %776 = vmatpush1.bf16.msra.mxu0 %v725
      %777 = vmatprep.subr.bf16.mxu0 0
      %778 = vmatpush1.bf16.msra.mxu0 0
      %779 = vmatprep.subr.bf16.mxu0 0
      %780 = vmatpush1.bf16.msra.mxu0 0
      %781 = vmatprep.subr.bf16.mxu0 0
      %782 = vmatpush1.bf16.msra.mxu0 0
      %783 = vmatprep.subr.bf16.mxu0 0
      %784 = vmatpush1.bf16.msra.mxu0 0
      %785 = vmatprep.subr.bf16.mxu0 0
      %786 = vmatpush1.bf16.msra.mxu0 0
      %787 = vmatprep.subr.bf16.mxu0 0
      %788 = vmatpush1.bf16.msra.mxu0 0
      %789 = vmatprep.subr.bf16.mxu0 0
      %790 = vmatpush1.bf16.msra.mxu0 0
      %791 = vmatprep.subr.bf16.mxu0 0
      %792 = vmatpush1.bf16.msra.mxu0 0
      %793 = vmatprep.mubr.bf16.mxu0 0
      %794 = vmatmul.mubr.bf16.gmra.mrb[0].mxu0 0
      %v795 = vpop.f32.mrb[0].mxu0
      %v796 = vadd.f32 0.0, %v795
      %v797 = vpop.f32.mrb[0].mxu0
      %v798 = vadd.f32 0.0, %v797
      %v799 = vpop.f32.mrb[0].mxu0
      %v800 = vpop.f32.mrb[0].mxu0
      %801 = vdwg.mxu0
      %802 = vmatprep.subr.bf16.mxu0 %v700
      %803 = vmatpush1.bf16.msra.mxu0 %v699
      %804 = vmatprep.subr.bf16.mxu0 %v704
      %805 = vmatpush1.bf16.msra.mxu0 %v703
      %806 = vmatprep.subr.bf16.mxu0 %v708
      %807 = vmatpush1.bf16.msra.mxu0 %v707
      %808 = vmatprep.subr.bf16.mxu0 %v712
      %809 = vmatpush1.bf16.msra.mxu0 %v711
      %810 = vmatprep.subr.bf16.mxu0 %v716
      %811 = vmatpush1.bf16.msra.mxu0 %v715
      %812 = vmatprep.subr.bf16.mxu0 %v720
      %813 = vmatpush1.bf16.msra.mxu0 %v719
      %814 = vmatprep.subr.bf16.mxu0 %v724
      %815 = vmatpush1.bf16.msra.mxu0 %v723
      %816 = vmatprep.subr.bf16.mxu0 %v728
      %817 = vmatpush1.bf16.msra.mxu0 %v727
      %818 = vmatprep.subr.bf16.mxu0 0
      %819 = vmatpush1.bf16.msra.mxu0 0
      %820 = vmatprep.subr.bf16.mxu0 0
      %821 = vmatpush1.bf16.msra.mxu0 0
      %822 = vmatprep.subr.bf16.mxu0 0
      %823 = vmatpush1.bf16.msra.mxu0 0
      %824 = vmatprep.subr.bf16.mxu0 0
      %825 = vmatpush1.bf16.msra.mxu0 0
      %826 = vmatprep.subr.bf16.mxu0 0
      %827 = vmatpush1.bf16.msra.mxu0 0
      %828 = vmatprep.subr.bf16.mxu0 0
      %829 = vmatpush1.bf16.msra.mxu0 0
      %830 = vmatprep.subr.bf16.mxu0 0
      %831 = vmatpush1.bf16.msra.mxu0 0
      %832 = vmatprep.subr.bf16.mxu0 0
      %833 = vmatpush1.bf16.msra.mxu0 0
      %834 = vmatprep.mubr.bf16.mxu0 0
      %835 = vmatmul.mubr.bf16.gmra.mrb[0].mxu0 0
      %v836 = vpop.f32.mrb[0].mxu0
      %v837 = vadd.f32 0.0, %v836
      %v838 = vpop.f32.mrb[0].mxu0
      %v839 = vadd.f32 0.0, %v838
      %v840 = vpop.f32.mrb[0].mxu0
      %v841 = vpop.f32.mrb[0].mxu0
      %842 = vdwg.mxu0
      %v843 = vadd.f32 %v565, %v796
      %v844 = vadd.f32 %v566, %v798
      %v845 = vadd.f32 %v567, %v837
      %v846 = vadd.f32 %v568, %v839
      %v847 = vxor.u32 %v843, 2147483648
      %v848 = vmul.f32 %v847, 1.442695
      %v849 = vpow.pop %v848
      %v850 = vadd.f32 %v849, 1.0
      %v851 = vrcp.pop %v850
      %v852 = vmul.f32 1.0, %v851
      %v853 = vxor.u32 %v844, 2147483648
      %v854 = vmul.f32 %v853, 1.442695
      %v855 = vpow.pop %v854
      %v856 = vadd.f32 %v855, 1.0
      %v857 = vrcp.pop %v856
      %v858 = vmul.f32 1.0, %v857
      %v859 = vtanh.pop %v845
      %v860 = vxor.u32 %v846, 2147483648
      %v861 = vmul.f32 %v860, 1.442695
      %v862 = vpow.pop %v861
      %v863 = vadd.f32 %v862, 1.0
      %v864 = vrcp.pop %v863
      %v865 = vmul.f32 1.0, %v864
      %v866 = vmul.f32 %v858, 0.0
      %v867 = vmul.f32 %v852, %v859
      %v868 = vadd.f32 %v866, %v867
      %v869 = vtanh.pop %v868
      %v870 = vmul.f32 %v865, %v869
      %s871 = scalar_lea.vmem %s234, %s559
      %872 = vst [vmem:[%s871] sm:$0xff] %v870
      %s873 = scalar_select %p557, 1, 6
      %s874 = smul.u32 %s873, 8
      %s875 = sshra.s32 %s874, 3
      %s876 = sand.u32 %s874, 7
      %s877 = smul.u32 %s875, 4
      %s878 = smul.addr %s877, 8
      %s879 = scalar_lea.vmem [#allocation2], %s878
      %v880 = vld [vmem:[%s879] sm:$0xff]
      %v881 = vld [vmem:[%s879 + $0x8] sm:$0xff]
      %v882 = vld [vmem:[%s879 + $0x10] sm:$0xff]
      %v883 = vld [vmem:[%s879 + $0x18] sm:$0xff]
      %v884 = vpack.c.bf16 %v870, %v870
      %v885 = vld [vmem:[%s225] sm:$0xff]
      %v886 = vld [vmem:[%s225 + $0x8] sm:$0xff]
      %v887 = vld [vmem:[%s225 + $0x10] sm:$0xff]
      %v888 = vld [vmem:[%s225 + $0x18] sm:$0xff]
      %v889 = vld [vmem:[%s225 + $0x20] sm:$0xff]
      %v890 = vld [vmem:[%s225 + $0x28] sm:$0xff]
      %v891 = vld [vmem:[%s225 + $0x30] sm:$0xff]
      %v892 = vld [vmem:[%s225 + $0x38] sm:$0xff]
      %v893 = vld [vmem:[%s225 + $0x40] sm:$0xff]
      %v894 = vld [vmem:[%s225 + $0x48] sm:$0xff]
      %v895 = vld [vmem:[%s225 + $0x50] sm:$0xff]
      %v896 = vld [vmem:[%s225 + $0x58] sm:$0xff]
      %v897 = vld [vmem:[%s225 + $0x60] sm:$0xff]
      %v898 = vld [vmem:[%s225 + $0x68] sm:$0xff]
      %v899 = vld [vmem:[%s225 + $0x70] sm:$0xff]
      %v900 = vld [vmem:[%s225 + $0x78] sm:$0xff]
      %v901 = vld [vmem:[%s225 + $0x80] sm:$0xff]
      %v902 = vld [vmem:[%s225 + $0x88] sm:$0xff]
      %v903 = vld [vmem:[%s225 + $0x90] sm:$0xff]
      %v904 = vld [vmem:[%s225 + $0x98] sm:$0xff]
      %v905 = vld [vmem:[%s225 + $0xa0] sm:$0xff]
      %v906 = vld [vmem:[%s225 + $0xa8] sm:$0xff]
      %v907 = vld [vmem:[%s225 + $0xb0] sm:$0xff]
      %v908 = vld [vmem:[%s225 + $0xb8] sm:$0xff]
      %v909 = vld [vmem:[%s225 + $0xc0] sm:$0xff]
      %v910 = vld [vmem:[%s225 + $0xc8] sm:$0xff]
      %v911 = vld [vmem:[%s225 + $0xd0] sm:$0xff]
      %v912 = vld [vmem:[%s225 + $0xd8] sm:$0xff]
      %v913 = vld [vmem:[%s225 + $0xe0] sm:$0xff]
      %v914 = vld [vmem:[%s225 + $0xe8] sm:$0xff]
      %v915 = vld [vmem:[%s225 + $0xf0] sm:$0xff]
      %v916 = vld [vmem:[%s225 + $0xf8] sm:$0xff]
      %v949 = vunpack.c.l.b16 %v885
      %v950 = vunpack.c.h.b16 %v885
      %v951 = vunpack.c.l.b16 %v886
      %v952 = vunpack.c.h.b16 %v886
      %v953 = vunpack.c.l.b16 %v887
      %v954 = vunpack.c.h.b16 %v887
      %v955 = vunpack.c.l.b16 %v888
      %v956 = vunpack.c.h.b16 %v888
      %v957 = vunpack.c.l.b16 %v889
      %v958 = vunpack.c.h.b16 %v889
      %v959 = vunpack.c.l.b16 %v890
      %v960 = vunpack.c.h.b16 %v890
      %v961 = vunpack.c.l.b16 %v891
      %v962 = vunpack.c.h.b16 %v891
      %v963 = vunpack.c.l.b16 %v892
      %v964 = vunpack.c.h.b16 %v892
      %v965 = vunpack.c.l.b16 %v893
      %v966 = vunpack.c.h.b16 %v893
      %v967 = vunpack.c.l.b16 %v894
      %v968 = vunpack.c.h.b16 %v894
      %v969 = vunpack.c.l.b16 %v895
      %v970 = vunpack.c.h.b16 %v895
      %v971 = vunpack.c.l.b16 %v896
      %v972 = vunpack.c.h.b16 %v896
      %v973 = vunpack.c.l.b16 %v897
      %v974 = vunpack.c.h.b16 %v897
      %v975 = vunpack.c.l.b16 %v898
      %v976 = vunpack.c.h.b16 %v898
      %v977 = vunpack.c.l.b16 %v899
      %v978 = vunpack.c.h.b16 %v899
      %v979 = vunpack.c.l.b16 %v900
      %v980 = vunpack.c.h.b16 %v900
      %v981 = vunpack.c.l.b16 %v901
      %v982 = vunpack.c.h.b16 %v901
      %v983 = vunpack.c.l.b16 %v902
      %v984 = vunpack.c.h.b16 %v902
      %v985 = vunpack.c.l.b16 %v903
      %v986 = vunpack.c.h.b16 %v903
      %v987 = vunpack.c.l.b16 %v904
      %v988 = vunpack.c.h.b16 %v904
      %v989 = vunpack.c.l.b16 %v905
      %v990 = vunpack.c.h.b16 %v905
      %v991 = vunpack.c.l.b16 %v906
      %v992 = vunpack.c.h.b16 %v906
      %v993 = vunpack.c.l.b16 %v907
      %v994 = vunpack.c.h.b16 %v907
      %v995 = vunpack.c.l.b16 %v908
      %v996 = vunpack.c.h.b16 %v908
      %v997 = vunpack.c.l.b16 %v909
      %v998 = vunpack.c.h.b16 %v909
      %v999 = vunpack.c.l.b16 %v910
      %v1000 = vunpack.c.h.b16 %v910
      %v1001 = vunpack.c.l.b16 %v911
      %v1002 = vunpack.c.h.b16 %v911
      %v1003 = vunpack.c.l.b16 %v912
      %v1004 = vunpack.c.h.b16 %v912
      %v1005 = vunpack.c.l.b16 %v913
      %v1006 = vunpack.c.h.b16 %v913
      %v1007 = vunpack.c.l.b16 %v914
      %v1008 = vunpack.c.h.b16 %v914
      %v1009 = vunpack.c.l.b16 %v915
      %v1010 = vunpack.c.h.b16 %v915
      %v1011 = vunpack.c.l.b16 %v916
      %v1012 = vunpack.c.h.b16 %v916
      %v1013 = vpack.c.b16 %v953, %v949
      %v1014 = vpack.c.b16 %v954, %v950
      %v1015 = vpack.c.b16 %v955, %v951
      %v1016 = vpack.c.b16 %v956, %v952
      %v1017 = vpack.c.b16 %v961, %v957
      %v1018 = vpack.c.b16 %v962, %v958
      %v1019 = vpack.c.b16 %v963, %v959
      %v1020 = vpack.c.b16 %v964, %v960
      %v1021 = vpack.c.b16 %v969, %v965
      %v1022 = vpack.c.b16 %v970, %v966
      %v1023 = vpack.c.b16 %v971, %v967
      %v1024 = vpack.c.b16 %v972, %v968
      %v1025 = vpack.c.b16 %v977, %v973
      %v1026 = vpack.c.b16 %v978, %v974
      %v1027 = vpack.c.b16 %v979, %v975
      %v1028 = vpack.c.b16 %v980, %v976
      %v1029 = vpack.c.b16 %v985, %v981
      %v1030 = vpack.c.b16 %v986, %v982
      %v1031 = vpack.c.b16 %v987, %v983
      %v1032 = vpack.c.b16 %v988, %v984
      %v1033 = vpack.c.b16 %v993, %v989
      %v1034 = vpack.c.b16 %v994, %v990
      %v1035 = vpack.c.b16 %v995, %v991
      %v1036 = vpack.c.b16 %v996, %v992
      %v1037 = vpack.c.b16 %v1001, %v997
      %v1038 = vpack.c.b16 %v1002, %v998
      %v1039 = vpack.c.b16 %v1003, %v999
      %v1040 = vpack.c.b16 %v1004, %v1000
      %v1041 = vpack.c.b16 %v1009, %v1005
      %v1042 = vpack.c.b16 %v1010, %v1006
      %v1043 = vpack.c.b16 %v1011, %v1007
      %v1044 = vpack.c.b16 %v1012, %v1008
      %1077 = vmatprep.subr.bf16.mxu0 %v1014
      %1078 = vmatpush1.bf16.msra.mxu0 %v1013
      %1079 = vmatprep.subr.bf16.mxu0 %v1018
      %1080 = vmatpush1.bf16.msra.mxu0 %v1017
      %1081 = vmatprep.subr.bf16.mxu0 %v1022
      %1082 = vmatpush1.bf16.msra.mxu0 %v1021
      %1083 = vmatprep.subr.bf16.mxu0 %v1026
      %1084 = vmatpush1.bf16.msra.mxu0 %v1025
      %1085 = vmatprep.subr.bf16.mxu0 %v1030
      %1086 = vmatpush1.bf16.msra.mxu0 %v1029
      %1087 = vmatprep.subr.bf16.mxu0 %v1034
      %1088 = vmatpush1.bf16.msra.mxu0 %v1033
      %1089 = vmatprep.subr.bf16.mxu0 %v1038
      %1090 = vmatpush1.bf16.msra.mxu0 %v1037
      %1091 = vmatprep.subr.bf16.mxu0 %v1042
      %1092 = vmatpush1.bf16.msra.mxu0 %v1041
      %1093 = vmatprep.subr.bf16.mxu0 0
      %1094 = vmatpush1.bf16.msra.mxu0 0
      %1095 = vmatprep.subr.bf16.mxu0 0
      %1096 = vmatpush1.bf16.msra.mxu0 0
      %1097 = vmatprep.subr.bf16.mxu0 0
      %1098 = vmatpush1.bf16.msra.mxu0 0
      %1099 = vmatprep.subr.bf16.mxu0 0
      %1100 = vmatpush1.bf16.msra.mxu0 0
      %1101 = vmatprep.subr.bf16.mxu0 0
      %1102 = vmatpush1.bf16.msra.mxu0 0
      %1103 = vmatprep.subr.bf16.mxu0 0
      %1104 = vmatpush1.bf16.msra.mxu0 0
      %1105 = vmatprep.subr.bf16.mxu0 0
      %1106 = vmatpush1.bf16.msra.mxu0 0
      %1107 = vmatprep.subr.bf16.mxu0 0
      %1108 = vmatpush1.bf16.msra.mxu0 0
      %1109 = vmatprep.mubr.bf16.mxu0 0
      %1110 = vmatmul.mubr.bf16.gmra.mrb[0].mxu0 %v884
      %v1111 = vpop.f32.mrb[0].mxu0
      %v1112 = vadd.f32 0.0, %v1111
      %v1113 = vpop.f32.mrb[0].mxu0
      %v1114 = vadd.f32 0.0, %v1113
      %v1115 = vpop.f32.mrb[0].mxu0
      %v1116 = vpop.f32.mrb[0].mxu0
      %1117 = vdwg.mxu0
      %1118 = vmatprep.subr.bf16.mxu0 %v1016
      %1119 = vmatpush1.bf16.msra.mxu0 %v1015
      %1120 = vmatprep.subr.bf16.mxu0 %v1020
      %1121 = vmatpush1.bf16.msra.mxu0 %v1019
      %1122 = vmatprep.subr.bf16.mxu0 %v1024
      %1123 = vmatpush1.bf16.msra.mxu0 %v1023
      %1124 = vmatprep.subr.bf16.mxu0 %v1028
      %1125 = vmatpush1.bf16.msra.mxu0 %v1027
      %1126 = vmatprep.subr.bf16.mxu0 %v1032
      %1127 = vmatpush1.bf16.msra.mxu0 %v1031
      %1128 = vmatprep.subr.bf16.mxu0 %v1036
      %1129 = vmatpush1.bf16.msra.mxu0 %v1035
      %1130 = vmatprep.subr.bf16.mxu0 %v1040
      %1131 = vmatpush1.bf16.msra.mxu0 %v1039
      %1132 = vmatprep.subr.bf16.mxu0 %v1044
      %1133 = vmatpush1.bf16.msra.mxu0 %v1043
      %1134 = vmatprep.subr.bf16.mxu0 0
      %1135 = vmatpush1.bf16.msra.mxu0 0
      %1136 = vmatprep.subr.bf16.mxu0 0
      %1137 = vmatpush1.bf16.msra.mxu0 0
      %1138 = vmatprep.subr.bf16.mxu0 0
      %1139 = vmatpush1.bf16.msra.mxu0 0
      %1140 = vmatprep.subr.bf16.mxu0 0
      %1141 = vmatpush1.bf16.msra.mxu0 0
      %1142 = vmatprep.subr.bf16.mxu0 0
      %1143 = vmatpush1.bf16.msra.mxu0 0
      %1144 = vmatprep.subr.bf16.mxu0 0
      %1145 = vmatpush1.bf16.msra.mxu0 0
      %1146 = vmatprep.subr.bf16.mxu0 0
      %1147 = vmatpush1.bf16.msra.mxu0 0
      %1148 = vmatprep.subr.bf16.mxu0 0
      %1149 = vmatpush1.bf16.msra.mxu0 0
      %1150 = vmatprep.mubr.bf16.mxu0 0
      %1151 = vmatmul.mubr.bf16.gmra.mrb[0].mxu0 %v884
      %v1152 = vpop.f32.mrb[0].mxu0
      %v1153 = vadd.f32 0.0, %v1152
      %v1154 = vpop.f32.mrb[0].mxu0
      %v1155 = vadd.f32 0.0, %v1154
      %v1156 = vpop.f32.mrb[0].mxu0
      %v1157 = vpop.f32.mrb[0].mxu0
      %1158 = vdwg.mxu0
      %v1159 = vadd.f32 %v880, %v1112
      %v1160 = vadd.f32 %v881, %v1114
      %v1161 = vadd.f32 %v882, %v1153
      %v1162 = vadd.f32 %v883, %v1155
      %v1163 = vxor.u32 %v1159, 2147483648
      %v1164 = vmul.f32 %v1163, 1.442695
      %v1165 = vpow.pop %v1164
      %v1166 = vadd.f32 %v1165, 1.0
      %v1167 = vrcp.pop %v1166
      %v1168 = vmul.f32 1.0, %v1167
      %v1169 = vxor.u32 %v1160, 2147483648
      %v1170 = vmul.f32 %v1169, 1.442695
      %v1171 = vpow.pop %v1170
      %v1172 = vadd.f32 %v1171, 1.0
      %v1173 = vrcp.pop %v1172
      %v1174 = vmul.f32 1.0, %v1173
      %v1175 = vtanh.pop %v1161
      %v1176 = vxor.u32 %v1162, 2147483648
      %v1177 = vmul.f32 %v1176, 1.442695
      %v1178 = vpow.pop %v1177
      %v1179 = vadd.f32 %v1178, 1.0
      %v1180 = vrcp.pop %v1179
      %v1181 = vmul.f32 1.0, %v1180
      %v1182 = vmul.f32 %v1174, %v868
      %v1183 = vmul.f32 %v1168, %v1175
      %v1184 = vadd.f32 %v1182, %v1183
      %v1185 = vtanh.pop %v1184
      %v1186 = vmul.f32 %v1181, %v1185
      %s1187 = scalar_lea.vmem %s234, %s874
      %1188 = vst [vmem:[%s1187] sm:$0xff] %v1186
      %s1189 = scalar_select %p557, 2, 5
      %s1190 = smul.u32 %s1189, 8
      %s1191 = sshra.s32 %s1190, 3
      %s1192 = sand.u32 %s1190, 7
      %s1193 = smul.u32 %s1191, 4
      %s1194 = smul.addr %s1193, 8
      %s1195 = scalar_lea.vmem [#allocation2], %s1194
      %v1196 = vld [vmem:[%s1195] sm:$0xff]
      %v1197 = vld [vmem:[%s1195 + $0x8] sm:$0xff]
      %v1198 = vld [vmem:[%s1195 + $0x10] sm:$0xff]
      %v1199 = vld [vmem:[%s1195 + $0x18] sm:$0xff]
      %v1200 = vpack.c.bf16 %v1186, %v1186
      %v1201 = vld [vmem:[%s225] sm:$0xff]
      %v1202 = vld [vmem:[%s225 + $0x8] sm:$0xff]
      %v1203 = vld [vmem:[%s225 + $0x10] sm:$0xff]
      %v1204 = vld [vmem:[%s225 + $0x18] sm:$0xff]
      %v1205 = vld [vmem:[%s225 + $0x20] sm:$0xff]
      %v1206 = vld [vmem:[%s225 + $0x28] sm:$0xff]
      %v1207 = vld [vmem:[%s225 + $0x30] sm:$0xff]
      %v1208 = vld [vmem:[%s225 + $0x38] sm:$0xff]
      %v1209 = vld [vmem:[%s225 + $0x40] sm:$0xff]
      %v1210 = vld [vmem:[%s225 + $0x48] sm:$0xff]
      %v1211 = vld [vmem:[%s225 + $0x50] sm:$0xff]
      %v1212 = vld [vmem:[%s225 + $0x58] sm:$0xff]
      %v1213 = vld [vmem:[%s225 + $0x60] sm:$0xff]
      %v1214 = vld [vmem:[%s225 + $0x68] sm:$0xff]
      %v1215 = vld [vmem:[%s225 + $0x70] sm:$0xff]
      %v1216 = vld [vmem:[%s225 + $0x78] sm:$0xff]
      %v1217 = vld [vmem:[%s225 + $0x80] sm:$0xff]
      %v1218 = vld [vmem:[%s225 + $0x88] sm:$0xff]
      %v1219 = vld [vmem:[%s225 + $0x90] sm:$0xff]
      %v1220 = vld [vmem:[%s225 + $0x98] sm:$0xff]
      %v1221 = vld [vmem:[%s225 + $0xa0] sm:$0xff]
      %v1222 = vld [vmem:[%s225 + $0xa8] sm:$0xff]
      %v1223 = vld [vmem:[%s225 + $0xb0] sm:$0xff]
      %v1224 = vld [vmem:[%s225 + $0xb8] sm:$0xff]
      %v1225 = vld [vmem:[%s225 + $0xc0] sm:$0xff]
      %v1226 = vld [vmem:[%s225 + $0xc8] sm:$0xff]
      %v1227 = vld [vmem:[%s225 + $0xd0] sm:$0xff]
      %v1228 = vld [vmem:[%s225 + $0xd8] sm:$0xff]
      %v1229 = vld [vmem:[%s225 + $0xe0] sm:$0xff]
      %v1230 = vld [vmem:[%s225 + $0xe8] sm:$0xff]
      %v1231 = vld [vmem:[%s225 + $0xf0] sm:$0xff]
      %v1232 = vld [vmem:[%s225 + $0xf8] sm:$0xff]
      %v1265 = vunpack.c.l.b16 %v1201
      %v1266 = vunpack.c.h.b16 %v1201
      %v1267 = vunpack.c.l.b16 %v1202
      %v1268 = vunpack.c.h.b16 %v1202
      %v1269 = vunpack.c.l.b16 %v1203
      %v1270 = vunpack.c.h.b16 %v1203
      %v1271 = vunpack.c.l.b16 %v1204
      %v1272 = vunpack.c.h.b16 %v1204
      %v1273 = vunpack.c.l.b16 %v1205
      %v1274 = vunpack.c.h.b16 %v1205
      %v1275 = vunpack.c.l.b16 %v1206
      %v1276 = vunpack.c.h.b16 %v1206
      %v1277 = vunpack.c.l.b16 %v1207
      %v1278 = vunpack.c.h.b16 %v1207
      %v1279 = vunpack.c.l.b16 %v1208
      %v1280 = vunpack.c.h.b16 %v1208
      %v1281 = vunpack.c.l.b16 %v1209
      %v1282 = vunpack.c.h.b16 %v1209
      %v1283 = vunpack.c.l.b16 %v1210
      %v1284 = vunpack.c.h.b16 %v1210
      %v1285 = vunpack.c.l.b16 %v1211
      %v1286 = vunpack.c.h.b16 %v1211
      %v1287 = vunpack.c.l.b16 %v1212
      %v1288 = vunpack.c.h.b16 %v1212
      %v1289 = vunpack.c.l.b16 %v1213
      %v1290 = vunpack.c.h.b16 %v1213
      %v1291 = vunpack.c.l.b16 %v1214
      %v1292 = vunpack.c.h.b16 %v1214
      %v1293 = vunpack.c.l.b16 %v1215
      %v1294 = vunpack.c.h.b16 %v1215
      %v1295 = vunpack.c.l.b16 %v1216
      %v1296 = vunpack.c.h.b16 %v1216
      %v1297 = vunpack.c.l.b16 %v1217
      %v1298 = vunpack.c.h.b16 %v1217
      %v1299 = vunpack.c.l.b16 %v1218
      %v1300 = vunpack.c.h.b16 %v1218
      %v1301 = vunpack.c.l.b16 %v1219
      %v1302 = vunpack.c.h.b16 %v1219
      %v1303 = vunpack.c.l.b16 %v1220
      %v1304 = vunpack.c.h.b16 %v1220
      %v1305 = vunpack.c.l.b16 %v1221
      %v1306 = vunpack.c.h.b16 %v1221
      %v1307 = vunpack.c.l.b16 %v1222
      %v1308 = vunpack.c.h.b16 %v1222
      %v1309 = vunpack.c.l.b16 %v1223
      %v1310 = vunpack.c.h.b16 %v1223
      %v1311 = vunpack.c.l.b16 %v1224
      %v1312 = vunpack.c.h.b16 %v1224
      %v1313 = vunpack.c.l.b16 %v1225
      %v1314 = vunpack.c.h.b16 %v1225
      %v1315 = vunpack.c.l.b16 %v1226
      %v1316 = vunpack.c.h.b16 %v1226
      %v1317 = vunpack.c.l.b16 %v1227
      %v1318 = vunpack.c.h.b16 %v1227
      %v1319 = vunpack.c.l.b16 %v1228
      %v1320 = vunpack.c.h.b16 %v1228
      %v1321 = vunpack.c.l.b16 %v1229
      %v1322 = vunpack.c.h.b16 %v1229
      %v1323 = vunpack.c.l.b16 %v1230
      %v1324 = vunpack.c.h.b16 %v1230
      %v1325 = vunpack.c.l.b16 %v1231
      %v1326 = vunpack.c.h.b16 %v1231
      %v1327 = vunpack.c.l.b16 %v1232
      %v1328 = vunpack.c.h.b16 %v1232
      %v1329 = vpack.c.b16 %v1269, %v1265
      %v1330 = vpack.c.b16 %v1270, %v1266
      %v1331 = vpack.c.b16 %v1271, %v1267
      %v1332 = vpack.c.b16 %v1272, %v1268
      %v1333 = vpack.c.b16 %v1277, %v1273
      %v1334 = vpack.c.b16 %v1278, %v1274
      %v1335 = vpack.c.b16 %v1279, %v1275
      %v1336 = vpack.c.b16 %v1280, %v1276
      %v1337 = vpack.c.b16 %v1285, %v1281
      %v1338 = vpack.c.b16 %v1286, %v1282
      %v1339 = vpack.c.b16 %v1287, %v1283
      %v1340 = vpack.c.b16 %v1288, %v1284
      %v1341 = vpack.c.b16 %v1293, %v1289
      %v1342 = vpack.c.b16 %v1294, %v1290
      %v1343 = vpack.c.b16 %v1295, %v1291
      %v1344 = vpack.c.b16 %v1296, %v1292
      %v1345 = vpack.c.b16 %v1301, %v1297
      %v1346 = vpack.c.b16 %v1302, %v1298
      %v1347 = vpack.c.b16 %v1303, %v1299
      %v1348 = vpack.c.b16 %v1304, %v1300
      %v1349 = vpack.c.b16 %v1309, %v1305
      %v1350 = vpack.c.b16 %v1310, %v1306
      %v1351 = vpack.c.b16 %v1311, %v1307
      %v1352 = vpack.c.b16 %v1312, %v1308
      %v1353 = vpack.c.b16 %v1317, %v1313
      %v1354 = vpack.c.b16 %v1318, %v1314
      %v1355 = vpack.c.b16 %v1319, %v1315
      %v1356 = vpack.c.b16 %v1320, %v1316
      %v1357 = vpack.c.b16 %v1325, %v1321
      %v1358 = vpack.c.b16 %v1326, %v1322
      %v1359 = vpack.c.b16 %v1327, %v1323
      %v1360 = vpack.c.b16 %v1328, %v1324
      %1393 = vmatprep.subr.bf16.mxu0 %v1330
      %1394 = vmatpush1.bf16.msra.mxu0 %v1329
      %1395 = vmatprep.subr.bf16.mxu0 %v1334
      %1396 = vmatpush1.bf16.msra.mxu0 %v1333
      %1397 = vmatprep.subr.bf16.mxu0 %v1338
      %1398 = vmatpush1.bf16.msra.mxu0 %v1337
      %1399 = vmatprep.subr.bf16.mxu0 %v1342
      %1400 = vmatpush1.bf16.msra.mxu0 %v1341
      %1401 = vmatprep.subr.bf16.mxu0 %v1346
      %1402 = vmatpush1.bf16.msra.mxu0 %v1345
      %1403 = vmatprep.subr.bf16.mxu0 %v1350
      %1404 = vmatpush1.bf16.msra.mxu0 %v1349
      %1405 = vmatprep.subr.bf16.mxu0 %v1354
      %1406 = vmatpush1.bf16.msra.mxu0 %v1353
      %1407 = vmatprep.subr.bf16.mxu0 %v1358
      %1408 = vmatpush1.bf16.msra.mxu0 %v1357
      %1409 = vmatprep.subr.bf16.mxu0 0
      %1410 = vmatpush1.bf16.msra.mxu0 0
      %1411 = vmatprep.subr.bf16.mxu0 0
      %1412 = vmatpush1.bf16.msra.mxu0 0
      %1413 = vmatprep.subr.bf16.mxu0 0
      %1414 = vmatpush1.bf16.msra.mxu0 0
      %1415 = vmatprep.subr.bf16.mxu0 0
      %1416 = vmatpush1.bf16.msra.mxu0 0
      %1417 = vmatprep.subr.bf16.mxu0 0
      %1418 = vmatpush1.bf16.msra.mxu0 0
      %1419 = vmatprep.subr.bf16.mxu0 0
      %1420 = vmatpush1.bf16.msra.mxu0 0
      %1421 = vmatprep.subr.bf16.mxu0 0
      %1422 = vmatpush1.bf16.msra.mxu0 0
      %1423 = vmatprep.subr.bf16.mxu0 0
      %1424 = vmatpush1.bf16.msra.mxu0 0
      %1425 = vmatprep.mubr.bf16.mxu0 0
      %1426 = vmatmul.mubr.bf16.gmra.mrb[0].mxu0 %v1200
      %v1427 = vpop.f32.mrb[0].mxu0
      %v1428 = vadd.f32 0.0, %v1427
      %v1429 = vpop.f32.mrb[0].mxu0
      %v1430 = vadd.f32 0.0, %v1429
      %v1431 = vpop.f32.mrb[0].mxu0
      %v1432 = vpop.f32.mrb[0].mxu0
      %1433 = vdwg.mxu0
      %1434 = vmatprep.subr.bf16.mxu0 %v1332
      %1435 = vmatpush1.bf16.msra.mxu0 %v1331
      %1436 = vmatprep.subr.bf16.mxu0 %v1336
      %1437 = vmatpush1.bf16.msra.mxu0 %v1335
      %1438 = vmatprep.subr.bf16.mxu0 %v1340
      %1439 = vmatpush1.bf16.msra.mxu0 %v1339
      %1440 = vmatprep.subr.bf16.mxu0 %v1344
      %1441 = vmatpush1.bf16.msra.mxu0 %v1343
      %1442 = vmatprep.subr.bf16.mxu0 %v1348
      %1443 = vmatpush1.bf16.msra.mxu0 %v1347
      %1444 = vmatprep.subr.bf16.mxu0 %v1352
      %1445 = vmatpush1.bf16.msra.mxu0 %v1351
      %1446 = vmatprep.subr.bf16.mxu0 %v1356
      %1447 = vmatpush1.bf16.msra.mxu0 %v1355
      %1448 = vmatprep.subr.bf16.mxu0 %v1360
      %1449 = vmatpush1.bf16.msra.mxu0 %v1359
      %1450 = vmatprep.subr.bf16.mxu0 0
      %1451 = vmatpush1.bf16.msra.mxu0 0
      %1452 = vmatprep.subr.bf16.mxu0 0
      %1453 = vmatpush1.bf16.msra.mxu0 0
      %1454 = vmatprep.subr.bf16.mxu0 0
      %1455 = vmatpush1.bf16.msra.mxu0 0
      %1456 = vmatprep.subr.bf16.mxu0 0
      %1457 = vmatpush1.bf16.msra.mxu0 0
      %1458 = vmatprep.subr.bf16.mxu0 0
      %1459 = vmatpush1.bf16.msra.mxu0 0
      %1460 = vmatprep.subr.bf16.mxu0 0
      %1461 = vmatpush1.bf16.msra.mxu0 0
      %1462 = vmatprep.subr.bf16.mxu0 0
      %1463 = vmatpush1.bf16.msra.mxu0 0
      %1464 = vmatprep.subr.bf16.mxu0 0
      %1465 = vmatpush1.bf16.msra.mxu0 0
      %1466 = vmatprep.mubr.bf16.mxu0 0
      %1467 = vmatmul.mubr.bf16.gmra.mrb[0].mxu0 %v1200
      %v1468 = vpop.f32.mrb[0].mxu0
      %v1469 = vadd.f32 0.0, %v1468
      %v1470 = vpop.f32.mrb[0].mxu0
      %v1471 = vadd.f32 0.0, %v1470
      %v1472 = vpop.f32.mrb[0].mxu0
      %v1473 = vpop.f32.mrb[0].mxu0
      %1474 = vdwg.mxu0
      %v1475 = vadd.f32 %v1196, %v1428
      %v1476 = vadd.f32 %v1197, %v1430
      %v1477 = vadd.f32 %v1198, %v1469
      %v1478 = vadd.f32 %v1199, %v1471
      %v1479 = vxor.u32 %v1475, 2147483648
      %v1480 = vmul.f32 %v1479, 1.442695
      %v1481 = vpow.pop %v1480
      %v1482 = vadd.f32 %v1481, 1.0
      %v1483 = vrcp.pop %v1482
      %v1484 = vmul.f32 1.0, %v1483
      %v1485 = vxor.u32 %v1476, 2147483648
      %v1486 = vmul.f32 %v1485, 1.442695
      %v1487 = vpow.pop %v1486
      %v1488 = vadd.f32 %v1487, 1.0
      %v1489 = vrcp.pop %v1488
      %v1490 = vmul.f32 1.0, %v1489
      %v1491 = vtanh.pop %v1477
      %v1492 = vxor.u32 %v1478, 2147483648
      %v1493 = vmul.f32 %v1492, 1.442695
      %v1494 = vpow.pop %v1493
      %v1495 = vadd.f32 %v1494, 1.0
      %v1496 = vrcp.pop %v1495
      %v1497 = vmul.f32 1.0, %v1496
      %v1498 = vmul.f32 %v1490, %v1184
      %v1499 = vmul.f32 %v1484, %v1491
      %v1500 = vadd.f32 %v1498, %v1499
      %v1501 = vtanh.pop %v1500
      %v1502 = vmul.f32 %v1497, %v1501
      %s1503 = scalar_lea.vmem %s234, %s1190
      %1504 = vst [vmem:[%s1503] sm:$0xff] %v1502
      %s1505 = scalar_select %p557, 3, 4
      %s1506 = smul.u32 %s1505, 8
      %s1507 = sshra.s32 %s1506, 3
      %s1508 = sand.u32 %s1506, 7
      %s1509 = smul.u32 %s1507, 4
      %s1510 = smul.addr %s1509, 8
      %s1511 = scalar_lea.vmem [#allocation2], %s1510
      %v1512 = vld [vmem:[%s1511] sm:$0xff]
      %v1513 = vld [vmem:[%s1511 + $0x8] sm:$0xff]
      %v1514 = vld [vmem:[%s1511 + $0x10] sm:$0xff]
      %v1515 = vld [vmem:[%s1511 + $0x18] sm:$0xff]
      %v1516 = vpack.c.bf16 %v1502, %v1502
      %v1517 = vld [vmem:[%s225] sm:$0xff]
      %v1518 = vld [vmem:[%s225 + $0x8] sm:$0xff]
      %v1519 = vld [vmem:[%s225 + $0x10] sm:$0xff]
      %v1520 = vld [vmem:[%s225 + $0x18] sm:$0xff]
      %v1521 = vld [vmem:[%s225 + $0x20] sm:$0xff]
      %v1522 = vld [vmem:[%s225 + $0x28] sm:$0xff]
      %v1523 = vld [vmem:[%s225 + $0x30] sm:$0xff]
      %v1524 = vld [vmem:[%s225 + $0x38] sm:$0xff]
      %v1525 = vld [vmem:[%s225 + $0x40] sm:$0xff]
      %v1526 = vld [vmem:[%s225 + $0x48] sm:$0xff]
      %v1527 = vld [vmem:[%s225 + $0x50] sm:$0xff]
      %v1528 = vld [vmem:[%s225 + $0x58] sm:$0xff]
      %v1529 = vld [vmem:[%s225 + $0x60] sm:$0xff]
      %v1530 = vld [vmem:[%s225 + $0x68] sm:$0xff]
      %v1531 = vld [vmem:[%s225 + $0x70] sm:$0xff]
      %v1532 = vld [vmem:[%s225 + $0x78] sm:$0xff]
      %v1533 = vld [vmem:[%s225 + $0x80] sm:$0xff]
      %v1534 = vld [vmem:[%s225 + $0x88] sm:$0xff]
      %v1535 = vld [vmem:[%s225 + $0x90] sm:$0xff]
      %v1536 = vld [vmem:[%s225 + $0x98] sm:$0xff]
      %v1537 = vld [vmem:[%s225 + $0xa0] sm:$0xff]
      %v1538 = vld [vmem:[%s225 + $0xa8] sm:$0xff]
      %v1539 = vld [vmem:[%s225 + $0xb0] sm:$0xff]
      %v1540 = vld [vmem:[%s225 + $0xb8] sm:$0xff]
      %v1541 = vld [vmem:[%s225 + $0xc0] sm:$0xff]
      %v1542 = vld [vmem:[%s225 + $0xc8] sm:$0xff]
      %v1543 = vld [vmem:[%s225 + $0xd0] sm:$0xff]
      %v1544 = vld [vmem:[%s225 + $0xd8] sm:$0xff]
      %v1545 = vld [vmem:[%s225 + $0xe0] sm:$0xff]
      %v1546 = vld [vmem:[%s225 + $0xe8] sm:$0xff]
      %v1547 = vld [vmem:[%s225 + $0xf0] sm:$0xff]
      %v1548 = vld [vmem:[%s225 + $0xf8] sm:$0xff]
      %v1581 = vunpack.c.l.b16 %v1517
      %v1582 = vunpack.c.h.b16 %v1517
      %v1583 = vunpack.c.l.b16 %v1518
      %v1584 = vunpack.c.h.b16 %v1518
      %v1585 = vunpack.c.l.b16 %v1519
      %v1586 = vunpack.c.h.b16 %v1519
      %v1587 = vunpack.c.l.b16 %v1520
      %v1588 = vunpack.c.h.b16 %v1520
      %v1589 = vunpack.c.l.b16 %v1521
      %v1590 = vunpack.c.h.b16 %v1521
      %v1591 = vunpack.c.l.b16 %v1522
      %v1592 = vunpack.c.h.b16 %v1522
      %v1593 = vunpack.c.l.b16 %v1523
      %v1594 = vunpack.c.h.b16 %v1523
      %v1595 = vunpack.c.l.b16 %v1524
      %v1596 = vunpack.c.h.b16 %v1524
      %v1597 = vunpack.c.l.b16 %v1525
      %v1598 = vunpack.c.h.b16 %v1525
      %v1599 = vunpack.c.l.b16 %v1526
      %v1600 = vunpack.c.h.b16 %v1526
      %v1601 = vunpack.c.l.b16 %v1527
      %v1602 = vunpack.c.h.b16 %v1527
      %v1603 = vunpack.c.l.b16 %v1528
      %v1604 = vunpack.c.h.b16 %v1528
      %v1605 = vunpack.c.l.b16 %v1529
      %v1606 = vunpack.c.h.b16 %v1529
      %v1607 = vunpack.c.l.b16 %v1530
      %v1608 = vunpack.c.h.b16 %v1530
      %v1609 = vunpack.c.l.b16 %v1531
      %v1610 = vunpack.c.h.b16 %v1531
      %v1611 = vunpack.c.l.b16 %v1532
      %v1612 = vunpack.c.h.b16 %v1532
      %v1613 = vunpack.c.l.b16 %v1533
      %v1614 = vunpack.c.h.b16 %v1533
      %v1615 = vunpack.c.l.b16 %v1534
      %v1616 = vunpack.c.h.b16 %v1534
      %v1617 = vunpack.c.l.b16 %v1535
      %v1618 = vunpack.c.h.b16 %v1535
      %v1619 = vunpack.c.l.b16 %v1536
      %v1620 = vunpack.c.h.b16 %v1536
      %v1621 = vunpack.c.l.b16 %v1537
      %v1622 = vunpack.c.h.b16 %v1537
      %v1623 = vunpack.c.l.b16 %v1538
      %v1624 = vunpack.c.h.b16 %v1538
      %v1625 = vunpack.c.l.b16 %v1539
      %v1626 = vunpack.c.h.b16 %v1539
      %v1627 = vunpack.c.l.b16 %v1540
      %v1628 = vunpack.c.h.b16 %v1540
      %v1629 = vunpack.c.l.b16 %v1541
      %v1630 = vunpack.c.h.b16 %v1541
      %v1631 = vunpack.c.l.b16 %v1542
      %v1632 = vunpack.c.h.b16 %v1542
      %v1633 = vunpack.c.l.b16 %v1543
      %v1634 = vunpack.c.h.b16 %v1543
      %v1635 = vunpack.c.l.b16 %v1544
      %v1636 = vunpack.c.h.b16 %v1544
      %v1637 = vunpack.c.l.b16 %v1545
      %v1638 = vunpack.c.h.b16 %v1545
      %v1639 = vunpack.c.l.b16 %v1546
      %v1640 = vunpack.c.h.b16 %v1546
      %v1641 = vunpack.c.l.b16 %v1547
      %v1642 = vunpack.c.h.b16 %v1547
      %v1643 = vunpack.c.l.b16 %v1548
      %v1644 = vunpack.c.h.b16 %v1548
      %v1645 = vpack.c.b16 %v1585, %v1581
      %v1646 = vpack.c.b16 %v1586, %v1582
      %v1647 = vpack.c.b16 %v1587, %v1583
      %v1648 = vpack.c.b16 %v1588, %v1584
      %v1649 = vpack.c.b16 %v1593, %v1589
      %v1650 = vpack.c.b16 %v1594, %v1590
      %v1651 = vpack.c.b16 %v1595, %v1591
      %v1652 = vpack.c.b16 %v1596, %v1592
      %v1653 = vpack.c.b16 %v1601, %v1597
      %v1654 = vpack.c.b16 %v1602, %v1598
      %v1655 = vpack.c.b16 %v1603, %v1599
      %v1656 = vpack.c.b16 %v1604, %v1600
      %v1657 = vpack.c.b16 %v1609, %v1605
      %v1658 = vpack.c.b16 %v1610, %v1606
      %v1659 = vpack.c.b16 %v1611, %v1607
      %v1660 = vpack.c.b16 %v1612, %v1608
      %v1661 = vpack.c.b16 %v1617, %v1613
      %v1662 = vpack.c.b16 %v1618, %v1614
      %v1663 = vpack.c.b16 %v1619, %v1615
      %v1664 = vpack.c.b16 %v1620, %v1616
      %v1665 = vpack.c.b16 %v1625, %v1621
      %v1666 = vpack.c.b16 %v1626, %v1622
      %v1667 = vpack.c.b16 %v1627, %v1623
      %v1668 = vpack.c.b16 %v1628, %v1624
      %v1669 = vpack.c.b16 %v1633, %v1629
      %v1670 = vpack.c.b16 %v1634, %v1630
      %v1671 = vpack.c.b16 %v1635, %v1631
      %v1672 = vpack.c.b16 %v1636, %v1632
      %v1673 = vpack.c.b16 %v1641, %v1637
      %v1674 = vpack.c.b16 %v1642, %v1638
      %v1675 = vpack.c.b16 %v1643, %v1639
      %v1676 = vpack.c.b16 %v1644, %v1640
      %1709 = vmatprep.subr.bf16.mxu0 %v1646
      %1710 = vmatpush1.bf16.msra.mxu0 %v1645
      %1711 = vmatprep.subr.bf16.mxu0 %v1650
      %1712 = vmatpush1.bf16.msra.mxu0 %v1649
      %1713 = vmatprep.subr.bf16.mxu0 %v1654
      %1714 = vmatpush1.bf16.msra.mxu0 %v1653
      %1715 = vmatprep.subr.bf16.mxu0 %v1658
      %1716 = vmatpush1.bf16.msra.mxu0 %v1657
      %1717 = vmatprep.subr.bf16.mxu0 %v1662
      %1718 = vmatpush1.bf16.msra.mxu0 %v1661
      %1719 = vmatprep.subr.bf16.mxu0 %v1666
      %1720 = vmatpush1.bf16.msra.mxu0 %v1665
      %1721 = vmatprep.subr.bf16.mxu0 %v1670
      %1722 = vmatpush1.bf16.msra.mxu0 %v1669
      %1723 = vmatprep.subr.bf16.mxu0 %v1674
      %1724 = vmatpush1.bf16.msra.mxu0 %v1673
      %1725 = vmatprep.subr.bf16.mxu0 0
      %1726 = vmatpush1.bf16.msra.mxu0 0
      %1727 = vmatprep.subr.bf16.mxu0 0
      %1728 = vmatpush1.bf16.msra.mxu0 0
      %1729 = vmatprep.subr.bf16.mxu0 0
      %1730 = vmatpush1.bf16.msra.mxu0 0
      %1731 = vmatprep.subr.bf16.mxu0 0
      %1732 = vmatpush1.bf16.msra.mxu0 0
      %1733 = vmatprep.subr.bf16.mxu0 0
      %1734 = vmatpush1.bf16.msra.mxu0 0
      %1735 = vmatprep.subr.bf16.mxu0 0
      %1736 = vmatpush1.bf16.msra.mxu0 0
      %1737 = vmatprep.subr.bf16.mxu0 0
      %1738 = vmatpush1.bf16.msra.mxu0 0
      %1739 = vmatprep.subr.bf16.mxu0 0
      %1740 = vmatpush1.bf16.msra.mxu0 0
      %1741 = vmatprep.mubr.bf16.mxu0 0
      %1742 = vmatmul.mubr.bf16.gmra.mrb[0].mxu0 %v1516
      %v1743 = vpop.f32.mrb[0].mxu0
      %v1744 = vadd.f32 0.0, %v1743
      %v1745 = vpop.f32.mrb[0].mxu0
      %v1746 = vadd.f32 0.0, %v1745
      %v1747 = vpop.f32.mrb[0].mxu0
      %v1748 = vpop.f32.mrb[0].mxu0
      %1749 = vdwg.mxu0
      %1750 = vmatprep.subr.bf16.mxu0 %v1648
      %1751 = vmatpush1.bf16.msra.mxu0 %v1647
      %1752 = vmatprep.subr.bf16.mxu0 %v1652
      %1753 = vmatpush1.bf16.msra.mxu0 %v1651
      %1754 = vmatprep.subr.bf16.mxu0 %v1656
      %1755 = vmatpush1.bf16.msra.mxu0 %v1655
      %1756 = vmatprep.subr.bf16.mxu0 %v1660
      %1757 = vmatpush1.bf16.msra.mxu0 %v1659
      %1758 = vmatprep.subr.bf16.mxu0 %v1664
      %1759 = vmatpush1.bf16.msra.mxu0 %v1663
      %1760 = vmatprep.subr.bf16.mxu0 %v1668
      %1761 = vmatpush1.bf16.msra.mxu0 %v1667
      %1762 = vmatprep.subr.bf16.mxu0 %v1672
      %1763 = vmatpush1.bf16.msra.mxu0 %v1671
      %1764 = vmatprep.subr.bf16.mxu0 %v1676
      %1765 = vmatpush1.bf16.msra.mxu0 %v1675
      %1766 = vmatprep.subr.bf16.mxu0 0
      %1767 = vmatpush1.bf16.msra.mxu0 0
      %1768 = vmatprep.subr.bf16.mxu0 0
      %1769 = vmatpush1.bf16.msra.mxu0 0
      %1770 = vmatprep.subr.bf16.mxu0 0
      %1771 = vmatpush1.bf16.msra.mxu0 0
      %1772 = vmatprep.subr.bf16.mxu0 0
      %1773 = vmatpush1.bf16.msra.mxu0 0
      %1774 = vmatprep.subr.bf16.mxu0 0
      %1775 = vmatpush1.bf16.msra.mxu0 0
      %1776 = vmatprep.subr.bf16.mxu0 0
      %1777 = vmatpush1.bf16.msra.mxu0 0
      %1778 = vmatprep.subr.bf16.mxu0 0
      %1779 = vmatpush1.bf16.msra.mxu0 0
      %1780 = vmatprep.subr.bf16.mxu0 0
      %1781 = vmatpush1.bf16.msra.mxu0 0
      %1782 = vmatprep.mubr.bf16.mxu0 0
      %1783 = vmatmul.mubr.bf16.gmra.mrb[0].mxu0 %v1516
      %v1784 = vpop.f32.mrb[0].mxu0
      %v1785 = vadd.f32 0.0, %v1784
      %v1786 = vpop.f32.mrb[0].mxu0
      %v1787 = vadd.f32 0.0, %v1786
      %v1788 = vpop.f32.mrb[0].mxu0
      %v1789 = vpop.f32.mrb[0].mxu0
      %1790 = vdwg.mxu0
      %v1791 = vadd.f32 %v1512, %v1744
      %v1792 = vadd.f32 %v1513, %v1746
      %v1793 = vadd.f32 %v1514, %v1785
      %v1794 = vadd.f32 %v1515, %v1787
      %v1795 = vxor.u32 %v1791, 2147483648
      %v1796 = vmul.f32 %v1795, 1.442695
      %v1797 = vpow.pop %v1796
      %v1798 = vadd.f32 %v1797, 1.0
      %v1799 = vrcp.pop %v1798
      %v1800 = vmul.f32 1.0, %v1799
      %v1801 = vxor.u32 %v1792, 2147483648
      %v1802 = vmul.f32 %v1801, 1.442695
      %v1803 = vpow.pop %v1802
      %v1804 = vadd.f32 %v1803, 1.0
      %v1805 = vrcp.pop %v1804
      %v1806 = vmul.f32 1.0, %v1805
      %v1807 = vtanh.pop %v1793
      %v1808 = vxor.u32 %v1794, 2147483648
      %v1809 = vmul.f32 %v1808, 1.442695
      %v1810 = vpow.pop %v1809
      %v1811 = vadd.f32 %v1810, 1.0
      %v1812 = vrcp.pop %v1811
      %v1813 = vmul.f32 1.0, %v1812
      %v1814 = vmul.f32 %v1806, %v1500
      %v1815 = vmul.f32 %v1800, %v1807
      %v1816 = vadd.f32 %v1814, %v1815
      %v1817 = vtanh.pop %v1816
      %v1818 = vmul.f32 %v1813, %v1817
      %s1819 = scalar_lea.vmem %s234, %s1506
      %1820 = vst [vmem:[%s1819] sm:$0xff] %v1818
      %s1821 = scalar_select %p557, 4, 3
      %s1822 = smul.u32 %s1821, 8
      %s1823 = sshra.s32 %s1822, 3
      %s1824 = sand.u32 %s1822, 7
      %s1825 = smul.u32 %s1823, 4
      %s1826 = smul.addr %s1825, 8
      %s1827 = scalar_lea.vmem [#allocation2], %s1826
      %v1828 = vld [vmem:[%s1827] sm:$0xff]
      %v1829 = vld [vmem:[%s1827 + $0x8] sm:$0xff]
      %v1830 = vld [vmem:[%s1827 + $0x10] sm:$0xff]
      %v1831 = vld [vmem:[%s1827 + $0x18] sm:$0xff]
      %v1832 = vpack.c.bf16 %v1818, %v1818
      %v1833 = vld [vmem:[%s225] sm:$0xff]
      %v1834 = vld [vmem:[%s225 + $0x8] sm:$0xff]
      %v1835 = vld [vmem:[%s225 + $0x10] sm:$0xff]
      %v1836 = vld [vmem:[%s225 + $0x18] sm:$0xff]
      %v1837 = vld [vmem:[%s225 + $0x20] sm:$0xff]
      %v1838 = vld [vmem:[%s225 + $0x28] sm:$0xff]
      %v1839 = vld [vmem:[%s225 + $0x30] sm:$0xff]
      %v1840 = vld [vmem:[%s225 + $0x38] sm:$0xff]
      %v1841 = vld [vmem:[%s225 + $0x40] sm:$0xff]
      %v1842 = vld [vmem:[%s225 + $0x48] sm:$0xff]
      %v1843 = vld [vmem:[%s225 + $0x50] sm:$0xff]
      %v1844 = vld [vmem:[%s225 + $0x58] sm:$0xff]
      %v1845 = vld [vmem:[%s225 + $0x60] sm:$0xff]
      %v1846 = vld [vmem:[%s225 + $0x68] sm:$0xff]
      %v1847 = vld [vmem:[%s225 + $0x70] sm:$0xff]
      %v1848 = vld [vmem:[%s225 + $0x78] sm:$0xff]
      %v1849 = vld [vmem:[%s225 + $0x80] sm:$0xff]
      %v1850 = vld [vmem:[%s225 + $0x88] sm:$0xff]
      %v1851 = vld [vmem:[%s225 + $0x90] sm:$0xff]
      %v1852 = vld [vmem:[%s225 + $0x98] sm:$0xff]
      %v1853 = vld [vmem:[%s225 + $0xa0] sm:$0xff]
      %v1854 = vld [vmem:[%s225 + $0xa8] sm:$0xff]
      %v1855 = vld [vmem:[%s225 + $0xb0] sm:$0xff]
      %v1856 = vld [vmem:[%s225 + $0xb8] sm:$0xff]
      %v1857 = vld [vmem:[%s225 + $0xc0] sm:$0xff]
      %v1858 = vld [vmem:[%s225 + $0xc8] sm:$0xff]
      %v1859 = vld [vmem:[%s225 + $0xd0] sm:$0xff]
      %v1860 = vld [vmem:[%s225 + $0xd8] sm:$0xff]
      %v1861 = vld [vmem:[%s225 + $0xe0] sm:$0xff]
      %v1862 = vld [vmem:[%s225 + $0xe8] sm:$0xff]
      %v1863 = vld [vmem:[%s225 + $0xf0] sm:$0xff]
      %v1864 = vld [vmem:[%s225 + $0xf8] sm:$0xff]
      %v1897 = vunpack.c.l.b16 %v1833
      %v1898 = vunpack.c.h.b16 %v1833
      %v1899 = vunpack.c.l.b16 %v1834
      %v1900 = vunpack.c.h.b16 %v1834
      %v1901 = vunpack.c.l.b16 %v1835
      %v1902 = vunpack.c.h.b16 %v1835
      %v1903 = vunpack.c.l.b16 %v1836
      %v1904 = vunpack.c.h.b16 %v1836
      %v1905 = vunpack.c.l.b16 %v1837
      %v1906 = vunpack.c.h.b16 %v1837
      %v1907 = vunpack.c.l.b16 %v1838
      %v1908 = vunpack.c.h.b16 %v1838
      %v1909 = vunpack.c.l.b16 %v1839
      %v1910 = vunpack.c.h.b16 %v1839
      %v1911 = vunpack.c.l.b16 %v1840
      %v1912 = vunpack.c.h.b16 %v1840
      %v1913 = vunpack.c.l.b16 %v1841
      %v1914 = vunpack.c.h.b16 %v1841
      %v1915 = vunpack.c.l.b16 %v1842
      %v1916 = vunpack.c.h.b16 %v1842
      %v1917 = vunpack.c.l.b16 %v1843
      %v1918 = vunpack.c.h.b16 %v1843
      %v1919 = vunpack.c.l.b16 %v1844
      %v1920 = vunpack.c.h.b16 %v1844
      %v1921 = vunpack.c.l.b16 %v1845
      %v1922 = vunpack.c.h.b16 %v1845
      %v1923 = vunpack.c.l.b16 %v1846
      %v1924 = vunpack.c.h.b16 %v1846
      %v1925 = vunpack.c.l.b16 %v1847
      %v1926 = vunpack.c.h.b16 %v1847
      %v1927 = vunpack.c.l.b16 %v1848
      %v1928 = vunpack.c.h.b16 %v1848
      %v1929 = vunpack.c.l.b16 %v1849
      %v1930 = vunpack.c.h.b16 %v1849
      %v1931 = vunpack.c.l.b16 %v1850
      %v1932 = vunpack.c.h.b16 %v1850
      %v1933 = vunpack.c.l.b16 %v1851
      %v1934 = vunpack.c.h.b16 %v1851
      %v1935 = vunpack.c.l.b16 %v1852
      %v1936 = vunpack.c.h.b16 %v1852
      %v1937 = vunpack.c.l.b16 %v1853
      %v1938 = vunpack.c.h.b16 %v1853
      %v1939 = vunpack.c.l.b16 %v1854
      %v1940 = vunpack.c.h.b16 %v1854
      %v1941 = vunpack.c.l.b16 %v1855
      %v1942 = vunpack.c.h.b16 %v1855
      %v1943 = vunpack.c.l.b16 %v1856
      %v1944 = vunpack.c.h.b16 %v1856
      %v1945 = vunpack.c.l.b16 %v1857
      %v1946 = vunpack.c.h.b16 %v1857
      %v1947 = vunpack.c.l.b16 %v1858
      %v1948 = vunpack.c.h.b16 %v1858
      %v1949 = vunpack.c.l.b16 %v1859
      %v1950 = vunpack.c.h.b16 %v1859
      %v1951 = vunpack.c.l.b16 %v1860
      %v1952 = vunpack.c.h.b16 %v1860
      %v1953 = vunpack.c.l.b16 %v1861
      %v1954 = vunpack.c.h.b16 %v1861
      %v1955 = vunpack.c.l.b16 %v1862
      %v1956 = vunpack.c.h.b16 %v1862
      %v1957 = vunpack.c.l.b16 %v1863
      %v1958 = vunpack.c.h.b16 %v1863
      %v1959 = vunpack.c.l.b16 %v1864
      %v1960 = vunpack.c.h.b16 %v1864
      %v1961 = vpack.c.b16 %v1901, %v1897
      %v1962 = vpack.c.b16 %v1902, %v1898
      %v1963 = vpack.c.b16 %v1903, %v1899
      %v1964 = vpack.c.b16 %v1904, %v1900
      %v1965 = vpack.c.b16 %v1909, %v1905
      %v1966 = vpack.c.b16 %v1910, %v1906
      %v1967 = vpack.c.b16 %v1911, %v1907
      %v1968 = vpack.c.b16 %v1912, %v1908
      %v1969 = vpack.c.b16 %v1917, %v1913
      %v1970 = vpack.c.b16 %v1918, %v1914
      %v1971 = vpack.c.b16 %v1919, %v1915
      %v1972 = vpack.c.b16 %v1920, %v1916
      %v1973 = vpack.c.b16 %v1925, %v1921
      %v1974 = vpack.c.b16 %v1926, %v1922
      %v1975 = vpack.c.b16 %v1927, %v1923
      %v1976 = vpack.c.b16 %v1928, %v1924
      %v1977 = vpack.c.b16 %v1933, %v1929
      %v1978 = vpack.c.b16 %v1934, %v1930
      %v1979 = vpack.c.b16 %v1935, %v1931
      %v1980 = vpack.c.b16 %v1936, %v1932
      %v1981 = vpack.c.b16 %v1941, %v1937
      %v1982 = vpack.c.b16 %v1942, %v1938
      %v1983 = vpack.c.b16 %v1943, %v1939
      %v1984 = vpack.c.b16 %v1944, %v1940
      %v1985 = vpack.c.b16 %v1949, %v1945
      %v1986 = vpack.c.b16 %v1950, %v1946
      %v1987 = vpack.c.b16 %v1951, %v1947
      %v1988 = vpack.c.b16 %v1952, %v1948
      %v1989 = vpack.c.b16 %v1957, %v1953
      %v1990 = vpack.c.b16 %v1958, %v1954
      %v1991 = vpack.c.b16 %v1959, %v1955
      %v1992 = vpack.c.b16 %v1960, %v1956
      %2025 = vmatprep.subr.bf16.mxu0 %v1962
      %2026 = vmatpush1.bf16.msra.mxu0 %v1961
      %2027 = vmatprep.subr.bf16.mxu0 %v1966
      %2028 = vmatpush1.bf16.msra.mxu0 %v1965
      %2029 = vmatprep.subr.bf16.mxu0 %v1970
      %2030 = vmatpush1.bf16.msra.mxu0 %v1969
      %2031 = vmatprep.subr.bf16.mxu0 %v1974
      %2032 = vmatpush1.bf16.msra.mxu0 %v1973
      %2033 = vmatprep.subr.bf16.mxu0 %v1978
      %2034 = vmatpush1.bf16.msra.mxu0 %v1977
      %2035 = vmatprep.subr.bf16.mxu0 %v1982
      %2036 = vmatpush1.bf16.msra.mxu0 %v1981
      %2037 = vmatprep.subr.bf16.mxu0 %v1986
      %2038 = vmatpush1.bf16.msra.mxu0 %v1985
      %2039 = vmatprep.subr.bf16.mxu0 %v1990
      %2040 = vmatpush1.bf16.msra.mxu0 %v1989
      %2041 = vmatprep.subr.bf16.mxu0 0
      %2042 = vmatpush1.bf16.msra.mxu0 0
      %2043 = vmatprep.subr.bf16.mxu0 0
      %2044 = vmatpush1.bf16.msra.mxu0 0
      %2045 = vmatprep.subr.bf16.mxu0 0
      %2046 = vmatpush1.bf16.msra.mxu0 0
      %2047 = vmatprep.subr.bf16.mxu0 0
      %2048 = vmatpush1.bf16.msra.mxu0 0
      %2049 = vmatprep.subr.bf16.mxu0 0
      %2050 = vmatpush1.bf16.msra.mxu0 0
      %2051 = vmatprep.subr.bf16.mxu0 0
      %2052 = vmatpush1.bf16.msra.mxu0 0
      %2053 = vmatprep.subr.bf16.mxu0 0
      %2054 = vmatpush1.bf16.msra.mxu0 0
      %2055 = vmatprep.subr.bf16.mxu0 0
      %2056 = vmatpush1.bf16.msra.mxu0 0
      %2057 = vmatprep.mubr.bf16.mxu0 0
      %2058 = vmatmul.mubr.bf16.gmra.mrb[0].mxu0 %v1832
      %v2059 = vpop.f32.mrb[0].mxu0
      %v2060 = vadd.f32 0.0, %v2059
      %v2061 = vpop.f32.mrb[0].mxu0
      %v2062 = vadd.f32 0.0, %v2061
      %v2063 = vpop.f32.mrb[0].mxu0
      %v2064 = vpop.f32.mrb[0].mxu0
      %2065 = vdwg.mxu0
      %2066 = vmatprep.subr.bf16.mxu0 %v1964
      %2067 = vmatpush1.bf16.msra.mxu0 %v1963
      %2068 = vmatprep.subr.bf16.mxu0 %v1968
      %2069 = vmatpush1.bf16.msra.mxu0 %v1967
      %2070 = vmatprep.subr.bf16.mxu0 %v1972
      %2071 = vmatpush1.bf16.msra.mxu0 %v1971
      %2072 = vmatprep.subr.bf16.mxu0 %v1976
      %2073 = vmatpush1.bf16.msra.mxu0 %v1975
      %2074 = vmatprep.subr.bf16.mxu0 %v1980
      %2075 = vmatpush1.bf16.msra.mxu0 %v1979
      %2076 = vmatprep.subr.bf16.mxu0 %v1984
      %2077 = vmatpush1.bf16.msra.mxu0 %v1983
      %2078 = vmatprep.subr.bf16.mxu0 %v1988
      %2079 = vmatpush1.bf16.msra.mxu0 %v1987
      %2080 = vmatprep.subr.bf16.mxu0 %v1992
      %2081 = vmatpush1.bf16.msra.mxu0 %v1991
      %2082 = vmatprep.subr.bf16.mxu0 0
      %2083 = vmatpush1.bf16.msra.mxu0 0
      %2084 = vmatprep.subr.bf16.mxu0 0
      %2085 = vmatpush1.bf16.msra.mxu0 0
      %2086 = vmatprep.subr.bf16.mxu0 0
      %2087 = vmatpush1.bf16.msra.mxu0 0
      %2088 = vmatprep.subr.bf16.mxu0 0
      %2089 = vmatpush1.bf16.msra.mxu0 0
      %2090 = vmatprep.subr.bf16.mxu0 0
      %2091 = vmatpush1.bf16.msra.mxu0 0
      %2092 = vmatprep.subr.bf16.mxu0 0
      %2093 = vmatpush1.bf16.msra.mxu0 0
      %2094 = vmatprep.subr.bf16.mxu0 0
      %2095 = vmatpush1.bf16.msra.mxu0 0
      %2096 = vmatprep.subr.bf16.mxu0 0
      %2097 = vmatpush1.bf16.msra.mxu0 0
      %2098 = vmatprep.mubr.bf16.mxu0 0
      %2099 = vmatmul.mubr.bf16.gmra.mrb[0].mxu0 %v1832
      %v2100 = vpop.f32.mrb[0].mxu0
      %v2101 = vadd.f32 0.0, %v2100
      %v2102 = vpop.f32.mrb[0].mxu0
      %v2103 = vadd.f32 0.0, %v2102
      %v2104 = vpop.f32.mrb[0].mxu0
      %v2105 = vpop.f32.mrb[0].mxu0
      %2106 = vdwg.mxu0
      %v2107 = vadd.f32 %v1828, %v2060
      %v2108 = vadd.f32 %v1829, %v2062
      %v2109 = vadd.f32 %v1830, %v2101
      %v2110 = vadd.f32 %v1831, %v2103
      %v2111 = vxor.u32 %v2107, 2147483648
      %v2112 = vmul.f32 %v2111, 1.442695
      %v2113 = vpow.pop %v2112
      %v2114 = vadd.f32 %v2113, 1.0
      %v2115 = vrcp.pop %v2114
      %v2116 = vmul.f32 1.0, %v2115
      %v2117 = vxor.u32 %v2108, 2147483648
      %v2118 = vmul.f32 %v2117, 1.442695
      %v2119 = vpow.pop %v2118
      %v2120 = vadd.f32 %v2119, 1.0
      %v2121 = vrcp.pop %v2120
      %v2122 = vmul.f32 1.0, %v2121
      %v2123 = vtanh.pop %v2109
      %v2124 = vxor.u32 %v2110, 2147483648
      %v2125 = vmul.f32 %v2124, 1.442695
      %v2126 = vpow.pop %v2125
      %v2127 = vadd.f32 %v2126, 1.0
      %v2128 = vrcp.pop %v2127
      %v2129 = vmul.f32 1.0, %v2128
      %v2130 = vmul.f32 %v2122, %v1816
      %v2131 = vmul.f32 %v2116, %v2123
      %v2132 = vadd.f32 %v2130, %v2131
      %v2133 = vtanh.pop %v2132
      %v2134 = vmul.f32 %v2129, %v2133
      %s2135 = scalar_lea.vmem %s234, %s1822
      %2136 = vst [vmem:[%s2135] sm:$0xff] %v2134
      %s2137 = scalar_select %p557, 5, 2
      %s2138 = smul.u32 %s2137, 8
      %s2139 = sshra.s32 %s2138, 3
      %s2140 = sand.u32 %s2138, 7
      %s2141 = smul.u32 %s2139, 4
      %s2142 = smul.addr %s2141, 8
      %s2143 = scalar_lea.vmem [#allocation2], %s2142
      %v2144 = vld [vmem:[%s2143] sm:$0xff]
      %v2145 = vld [vmem:[%s2143 + $0x8] sm:$0xff]
      %v2146 = vld [vmem:[%s2143 + $0x10] sm:$0xff]
      %v2147 = vld [vmem:[%s2143 + $0x18] sm:$0xff]
      %v2148 = vpack.c.bf16 %v2134, %v2134
      %v2149 = vld [vmem:[%s225] sm:$0xff]
      %v2150 = vld [vmem:[%s225 + $0x8] sm:$0xff]
      %v2151 = vld [vmem:[%s225 + $0x10] sm:$0xff]
      %v2152 = vld [vmem:[%s225 + $0x18] sm:$0xff]
      %v2153 = vld [vmem:[%s225 + $0x20] sm:$0xff]
      %v2154 = vld [vmem:[%s225 + $0x28] sm:$0xff]
      %v2155 = vld [vmem:[%s225 + $0x30] sm:$0xff]
      %v2156 = vld [vmem:[%s225 + $0x38] sm:$0xff]
      %v2157 = vld [vmem:[%s225 + $0x40] sm:$0xff]
      %v2158 = vld [vmem:[%s225 + $0x48] sm:$0xff]
      %v2159 = vld [vmem:[%s225 + $0x50] sm:$0xff]
      %v2160 = vld [vmem:[%s225 + $0x58] sm:$0xff]
      %v2161 = vld [vmem:[%s225 + $0x60] sm:$0xff]
      %v2162 = vld [vmem:[%s225 + $0x68] sm:$0xff]
      %v2163 = vld [vmem:[%s225 + $0x70] sm:$0xff]
      %v2164 = vld [vmem:[%s225 + $0x78] sm:$0xff]
      %v2165 = vld [vmem:[%s225 + $0x80] sm:$0xff]
      %v2166 = vld [vmem:[%s225 + $0x88] sm:$0xff]
      %v2167 = vld [vmem:[%s225 + $0x90] sm:$0xff]
      %v2168 = vld [vmem:[%s225 + $0x98] sm:$0xff]
      %v2169 = vld [vmem:[%s225 + $0xa0] sm:$0xff]
      %v2170 = vld [vmem:[%s225 + $0xa8] sm:$0xff]
      %v2171 = vld [vmem:[%s225 + $0xb0] sm:$0xff]
      %v2172 = vld [vmem:[%s225 + $0xb8] sm:$0xff]
      %v2173 = vld [vmem:[%s225 + $0xc0] sm:$0xff]
      %v2174 = vld [vmem:[%s225 + $0xc8] sm:$0xff]
      %v2175 = vld [vmem:[%s225 + $0xd0] sm:$0xff]
      %v2176 = vld [vmem:[%s225 + $0xd8] sm:$0xff]
      %v2177 = vld [vmem:[%s225 + $0xe0] sm:$0xff]
      %v2178 = vld [vmem:[%s225 + $0xe8] sm:$0xff]
      %v2179 = vld [vmem:[%s225 + $0xf0] sm:$0xff]
      %v2180 = vld [vmem:[%s225 + $0xf8] sm:$0xff]
      %v2213 = vunpack.c.l.b16 %v2149
      %v2214 = vunpack.c.h.b16 %v2149
      %v2215 = vunpack.c.l.b16 %v2150
      %v2216 = vunpack.c.h.b16 %v2150
      %v2217 = vunpack.c.l.b16 %v2151
      %v2218 = vunpack.c.h.b16 %v2151
      %v2219 = vunpack.c.l.b16 %v2152
      %v2220 = vunpack.c.h.b16 %v2152
      %v2221 = vunpack.c.l.b16 %v2153
      %v2222 = vunpack.c.h.b16 %v2153
      %v2223 = vunpack.c.l.b16 %v2154
      %v2224 = vunpack.c.h.b16 %v2154
      %v2225 = vunpack.c.l.b16 %v2155
      %v2226 = vunpack.c.h.b16 %v2155
      %v2227 = vunpack.c.l.b16 %v2156
      %v2228 = vunpack.c.h.b16 %v2156
      %v2229 = vunpack.c.l.b16 %v2157
      %v2230 = vunpack.c.h.b16 %v2157
      %v2231 = vunpack.c.l.b16 %v2158
      %v2232 = vunpack.c.h.b16 %v2158
      %v2233 = vunpack.c.l.b16 %v2159
      %v2234 = vunpack.c.h.b16 %v2159
      %v2235 = vunpack.c.l.b16 %v2160
      %v2236 = vunpack.c.h.b16 %v2160
      %v2237 = vunpack.c.l.b16 %v2161
      %v2238 = vunpack.c.h.b16 %v2161
      %v2239 = vunpack.c.l.b16 %v2162
      %v2240 = vunpack.c.h.b16 %v2162
      %v2241 = vunpack.c.l.b16 %v2163
      %v2242 = vunpack.c.h.b16 %v2163
      %v2243 = vunpack.c.l.b16 %v2164
      %v2244 = vunpack.c.h.b16 %v2164
      %v2245 = vunpack.c.l.b16 %v2165
      %v2246 = vunpack.c.h.b16 %v2165
      %v2247 = vunpack.c.l.b16 %v2166
      %v2248 = vunpack.c.h.b16 %v2166
      %v2249 = vunpack.c.l.b16 %v2167
      %v2250 = vunpack.c.h.b16 %v2167
      %v2251 = vunpack.c.l.b16 %v2168
      %v2252 = vunpack.c.h.b16 %v2168
      %v2253 = vunpack.c.l.b16 %v2169
      %v2254 = vunpack.c.h.b16 %v2169
      %v2255 = vunpack.c.l.b16 %v2170
      %v2256 = vunpack.c.h.b16 %v2170
      %v2257 = vunpack.c.l.b16 %v2171
      %v2258 = vunpack.c.h.b16 %v2171
      %v2259 = vunpack.c.l.b16 %v2172
      %v2260 = vunpack.c.h.b16 %v2172
      %v2261 = vunpack.c.l.b16 %v2173
      %v2262 = vunpack.c.h.b16 %v2173
      %v2263 = vunpack.c.l.b16 %v2174
      %v2264 = vunpack.c.h.b16 %v2174
      %v2265 = vunpack.c.l.b16 %v2175
      %v2266 = vunpack.c.h.b16 %v2175
      %v2267 = vunpack.c.l.b16 %v2176
      %v2268 = vunpack.c.h.b16 %v2176
      %v2269 = vunpack.c.l.b16 %v2177
      %v2270 = vunpack.c.h.b16 %v2177
      %v2271 = vunpack.c.l.b16 %v2178
      %v2272 = vunpack.c.h.b16 %v2178
      %v2273 = vunpack.c.l.b16 %v2179
      %v2274 = vunpack.c.h.b16 %v2179
      %v2275 = vunpack.c.l.b16 %v2180
      %v2276 = vunpack.c.h.b16 %v2180
      %v2277 = vpack.c.b16 %v2217, %v2213
      %v2278 = vpack.c.b16 %v2218, %v2214
      %v2279 = vpack.c.b16 %v2219, %v2215
      %v2280 = vpack.c.b16 %v2220, %v2216
      %v2281 = vpack.c.b16 %v2225, %v2221
      %v2282 = vpack.c.b16 %v2226, %v2222
      %v2283 = vpack.c.b16 %v2227, %v2223
      %v2284 = vpack.c.b16 %v2228, %v2224
      %v2285 = vpack.c.b16 %v2233, %v2229
      %v2286 = vpack.c.b16 %v2234, %v2230
      %v2287 = vpack.c.b16 %v2235, %v2231
      %v2288 = vpack.c.b16 %v2236, %v2232
      %v2289 = vpack.c.b16 %v2241, %v2237
      %v2290 = vpack.c.b16 %v2242, %v2238
      %v2291 = vpack.c.b16 %v2243, %v2239
      %v2292 = vpack.c.b16 %v2244, %v2240
      %v2293 = vpack.c.b16 %v2249, %v2245
      %v2294 = vpack.c.b16 %v2250, %v2246
      %v2295 = vpack.c.b16 %v2251, %v2247
      %v2296 = vpack.c.b16 %v2252, %v2248
      %v2297 = vpack.c.b16 %v2257, %v2253
      %v2298 = vpack.c.b16 %v2258, %v2254
      %v2299 = vpack.c.b16 %v2259, %v2255
      %v2300 = vpack.c.b16 %v2260, %v2256
      %v2301 = vpack.c.b16 %v2265, %v2261
      %v2302 = vpack.c.b16 %v2266, %v2262
      %v2303 = vpack.c.b16 %v2267, %v2263
      %v2304 = vpack.c.b16 %v2268, %v2264
      %v2305 = vpack.c.b16 %v2273, %v2269
      %v2306 = vpack.c.b16 %v2274, %v2270
      %v2307 = vpack.c.b16 %v2275, %v2271
      %v2308 = vpack.c.b16 %v2276, %v2272
      %2341 = vmatprep.subr.bf16.mxu0 %v2278
      %2342 = vmatpush1.bf16.msra.mxu0 %v2277
      %2343 = vmatprep.subr.bf16.mxu0 %v2282
      %2344 = vmatpush1.bf16.msra.mxu0 %v2281
      %2345 = vmatprep.subr.bf16.mxu0 %v2286
      %2346 = vmatpush1.bf16.msra.mxu0 %v2285
      %2347 = vmatprep.subr.bf16.mxu0 %v2290
      %2348 = vmatpush1.bf16.msra.mxu0 %v2289
      %2349 = vmatprep.subr.bf16.mxu0 %v2294
      %2350 = vmatpush1.bf16.msra.mxu0 %v2293
      %2351 = vmatprep.subr.bf16.mxu0 %v2298
      %2352 = vmatpush1.bf16.msra.mxu0 %v2297
      %2353 = vmatprep.subr.bf16.mxu0 %v2302
      %2354 = vmatpush1.bf16.msra.mxu0 %v2301
      %2355 = vmatprep.subr.bf16.mxu0 %v2306
      %2356 = vmatpush1.bf16.msra.mxu0 %v2305
      %2357 = vmatprep.subr.bf16.mxu0 0
      %2358 = vmatpush1.bf16.msra.mxu0 0
      %2359 = vmatprep.subr.bf16.mxu0 0
      %2360 = vmatpush1.bf16.msra.mxu0 0
      %2361 = vmatprep.subr.bf16.mxu0 0
      %2362 = vmatpush1.bf16.msra.mxu0 0
      %2363 = vmatprep.subr.bf16.mxu0 0
      %2364 = vmatpush1.bf16.msra.mxu0 0
      %2365 = vmatprep.subr.bf16.mxu0 0
      %2366 = vmatpush1.bf16.msra.mxu0 0
      %2367 = vmatprep.subr.bf16.mxu0 0
      %2368 = vmatpush1.bf16.msra.mxu0 0
      %2369 = vmatprep.subr.bf16.mxu0 0
      %2370 = vmatpush1.bf16.msra.mxu0 0
      %2371 = vmatprep.subr.bf16.mxu0 0
      %2372 = vmatpush1.bf16.msra.mxu0 0
      %2373 = vmatprep.mubr.bf16.mxu0 0
      %2374 = vmatmul.mubr.bf16.gmra.mrb[0].mxu0 %v2148
      %v2375 = vpop.f32.mrb[0].mxu0
      %v2376 = vadd.f32 0.0, %v2375
      %v2377 = vpop.f32.mrb[0].mxu0
      %v2378 = vadd.f32 0.0, %v2377
      %v2379 = vpop.f32.mrb[0].mxu0
      %v2380 = vpop.f32.mrb[0].mxu0
      %2381 = vdwg.mxu0
      %2382 = vmatprep.subr.bf16.mxu0 %v2280
      %2383 = vmatpush1.bf16.msra.mxu0 %v2279
      %2384 = vmatprep.subr.bf16.mxu0 %v2284
      %2385 = vmatpush1.bf16.msra.mxu0 %v2283
      %2386 = vmatprep.subr.bf16.mxu0 %v2288
      %2387 = vmatpush1.bf16.msra.mxu0 %v2287
      %2388 = vmatprep.subr.bf16.mxu0 %v2292
      %2389 = vmatpush1.bf16.msra.mxu0 %v2291
      %2390 = vmatprep.subr.bf16.mxu0 %v2296
      %2391 = vmatpush1.bf16.msra.mxu0 %v2295
      %2392 = vmatprep.subr.bf16.mxu0 %v2300
      %2393 = vmatpush1.bf16.msra.mxu0 %v2299
      %2394 = vmatprep.subr.bf16.mxu0 %v2304
      %2395 = vmatpush1.bf16.msra.mxu0 %v2303
      %2396 = vmatprep.subr.bf16.mxu0 %v2308
      %2397 = vmatpush1.bf16.msra.mxu0 %v2307
      %2398 = vmatprep.subr.bf16.mxu0 0
      %2399 = vmatpush1.bf16.msra.mxu0 0
      %2400 = vmatprep.subr.bf16.mxu0 0
      %2401 = vmatpush1.bf16.msra.mxu0 0
      %2402 = vmatprep.subr.bf16.mxu0 0
      %2403 = vmatpush1.bf16.msra.mxu0 0
      %2404 = vmatprep.subr.bf16.mxu0 0
      %2405 = vmatpush1.bf16.msra.mxu0 0
      %2406 = vmatprep.subr.bf16.mxu0 0
      %2407 = vmatpush1.bf16.msra.mxu0 0
      %2408 = vmatprep.subr.bf16.mxu0 0
      %2409 = vmatpush1.bf16.msra.mxu0 0
      %2410 = vmatprep.subr.bf16.mxu0 0
      %2411 = vmatpush1.bf16.msra.mxu0 0
      %2412 = vmatprep.subr.bf16.mxu0 0
      %2413 = vmatpush1.bf16.msra.mxu0 0
      %2414 = vmatprep.mubr.bf16.mxu0 0
      %2415 = vmatmul.mubr.bf16.gmra.mrb[0].mxu0 %v2148
      %v2416 = vpop.f32.mrb[0].mxu0
      %v2417 = vadd.f32 0.0, %v2416
      %v2418 = vpop.f32.mrb[0].mxu0
      %v2419 = vadd.f32 0.0, %v2418
      %v2420 = vpop.f32.mrb[0].mxu0
      %v2421 = vpop.f32.mrb[0].mxu0
      %2422 = vdwg.mxu0
      %v2423 = vadd.f32 %v2144, %v2376
      %v2424 = vadd.f32 %v2145, %v2378
      %v2425 = vadd.f32 %v2146, %v2417
      %v2426 = vadd.f32 %v2147, %v2419
      %v2427 = vxor.u32 %v2423, 2147483648
      %v2428 = vmul.f32 %v2427, 1.442695
      %v2429 = vpow.pop %v2428
      %v2430 = vadd.f32 %v2429, 1.0
      %v2431 = vrcp.pop %v2430
      %v2432 = vmul.f32 1.0, %v2431
      %v2433 = vxor.u32 %v2424, 2147483648
      %v2434 = vmul.f32 %v2433, 1.442695
      %v2435 = vpow.pop %v2434
      %v2436 = vadd.f32 %v2435, 1.0
      %v2437 = vrcp.pop %v2436
      %v2438 = vmul.f32 1.0, %v2437
      %v2439 = vtanh.pop %v2425
      %v2440 = vxor.u32 %v2426, 2147483648
      %v2441 = vmul.f32 %v2440, 1.442695
      %v2442 = vpow.pop %v2441
      %v2443 = vadd.f32 %v2442, 1.0
      %v2444 = vrcp.pop %v2443
      %v2445 = vmul.f32 1.0, %v2444
      %v2446 = vmul.f32 %v2438, %v2132
      %v2447 = vmul.f32 %v2432, %v2439
      %v2448 = vadd.f32 %v2446, %v2447
      %v2449 = vtanh.pop %v2448
      %v2450 = vmul.f32 %v2445, %v2449
      %s2451 = scalar_lea.vmem %s234, %s2138
      %2452 = vst [vmem:[%s2451] sm:$0xff] %v2450
      %s2453 = scalar_select %p557, 6, 1
      %s2454 = smul.u32 %s2453, 8
      %s2455 = sshra.s32 %s2454, 3
      %s2456 = sand.u32 %s2454, 7
      %s2457 = smul.u32 %s2455, 4
      %s2458 = smul.addr %s2457, 8
      %s2459 = scalar_lea.vmem [#allocation2], %s2458
      %v2460 = vld [vmem:[%s2459] sm:$0xff]
      %v2461 = vld [vmem:[%s2459 + $0x8] sm:$0xff]
      %v2462 = vld [vmem:[%s2459 + $0x10] sm:$0xff]
      %v2463 = vld [vmem:[%s2459 + $0x18] sm:$0xff]
      %v2464 = vpack.c.bf16 %v2450, %v2450
      %v2465 = vld [vmem:[%s225] sm:$0xff]
      %v2466 = vld [vmem:[%s225 + $0x8] sm:$0xff]
      %v2467 = vld [vmem:[%s225 + $0x10] sm:$0xff]
      %v2468 = vld [vmem:[%s225 + $0x18] sm:$0xff]
      %v2469 = vld [vmem:[%s225 + $0x20] sm:$0xff]
      %v2470 = vld [vmem:[%s225 + $0x28] sm:$0xff]
      %v2471 = vld [vmem:[%s225 + $0x30] sm:$0xff]
      %v2472 = vld [vmem:[%s225 + $0x38] sm:$0xff]
      %v2473 = vld [vmem:[%s225 + $0x40] sm:$0xff]
      %v2474 = vld [vmem:[%s225 + $0x48] sm:$0xff]
      %v2475 = vld [vmem:[%s225 + $0x50] sm:$0xff]
      %v2476 = vld [vmem:[%s225 + $0x58] sm:$0xff]
      %v2477 = vld [vmem:[%s225 + $0x60] sm:$0xff]
      %v2478 = vld [vmem:[%s225 + $0x68] sm:$0xff]
      %v2479 = vld [vmem:[%s225 + $0x70] sm:$0xff]
      %v2480 = vld [vmem:[%s225 + $0x78] sm:$0xff]
      %v2481 = vld [vmem:[%s225 + $0x80] sm:$0xff]
      %v2482 = vld [vmem:[%s225 + $0x88] sm:$0xff]
      %v2483 = vld [vmem:[%s225 + $0x90] sm:$0xff]
      %v2484 = vld [vmem:[%s225 + $0x98] sm:$0xff]
      %v2485 = vld [vmem:[%s225 + $0xa0] sm:$0xff]
      %v2486 = vld [vmem:[%s225 + $0xa8] sm:$0xff]
      %v2487 = vld [vmem:[%s225 + $0xb0] sm:$0xff]
      %v2488 = vld [vmem:[%s225 + $0xb8] sm:$0xff]
      %v2489 = vld [vmem:[%s225 + $0xc0] sm:$0xff]
      %v2490 = vld [vmem:[%s225 + $0xc8] sm:$0xff]
      %v2491 = vld [vmem:[%s225 + $0xd0] sm:$0xff]
      %v2492 = vld [vmem:[%s225 + $0xd8] sm:$0xff]
      %v2493 = vld [vmem:[%s225 + $0xe0] sm:$0xff]
      %v2494 = vld [vmem:[%s225 + $0xe8] sm:$0xff]
      %v2495 = vld [vmem:[%s225 + $0xf0] sm:$0xff]
      %v2496 = vld [vmem:[%s225 + $0xf8] sm:$0xff]
      %v2529 = vunpack.c.l.b16 %v2465
      %v2530 = vunpack.c.h.b16 %v2465
      %v2531 = vunpack.c.l.b16 %v2466
      %v2532 = vunpack.c.h.b16 %v2466
      %v2533 = vunpack.c.l.b16 %v2467
      %v2534 = vunpack.c.h.b16 %v2467
      %v2535 = vunpack.c.l.b16 %v2468
      %v2536 = vunpack.c.h.b16 %v2468
      %v2537 = vunpack.c.l.b16 %v2469
      %v2538 = vunpack.c.h.b16 %v2469
      %v2539 = vunpack.c.l.b16 %v2470
      %v2540 = vunpack.c.h.b16 %v2470
      %v2541 = vunpack.c.l.b16 %v2471
      %v2542 = vunpack.c.h.b16 %v2471
      %v2543 = vunpack.c.l.b16 %v2472
      %v2544 = vunpack.c.h.b16 %v2472
      %v2545 = vunpack.c.l.b16 %v2473
      %v2546 = vunpack.c.h.b16 %v2473
      %v2547 = vunpack.c.l.b16 %v2474
      %v2548 = vunpack.c.h.b16 %v2474
      %v2549 = vunpack.c.l.b16 %v2475
      %v2550 = vunpack.c.h.b16 %v2475
      %v2551 = vunpack.c.l.b16 %v2476
      %v2552 = vunpack.c.h.b16 %v2476
      %v2553 = vunpack.c.l.b16 %v2477
      %v2554 = vunpack.c.h.b16 %v2477
      %v2555 = vunpack.c.l.b16 %v2478
      %v2556 = vunpack.c.h.b16 %v2478
      %v2557 = vunpack.c.l.b16 %v2479
      %v2558 = vunpack.c.h.b16 %v2479
      %v2559 = vunpack.c.l.b16 %v2480
      %v2560 = vunpack.c.h.b16 %v2480
      %v2561 = vunpack.c.l.b16 %v2481
      %v2562 = vunpack.c.h.b16 %v2481
      %v2563 = vunpack.c.l.b16 %v2482
      %v2564 = vunpack.c.h.b16 %v2482
      %v2565 = vunpack.c.l.b16 %v2483
      %v2566 = vunpack.c.h.b16 %v2483
      %v2567 = vunpack.c.l.b16 %v2484
      %v2568 = vunpack.c.h.b16 %v2484
      %v2569 = vunpack.c.l.b16 %v2485
      %v2570 = vunpack.c.h.b16 %v2485
      %v2571 = vunpack.c.l.b16 %v2486
      %v2572 = vunpack.c.h.b16 %v2486
      %v2573 = vunpack.c.l.b16 %v2487
      %v2574 = vunpack.c.h.b16 %v2487
      %v2575 = vunpack.c.l.b16 %v2488
      %v2576 = vunpack.c.h.b16 %v2488
      %v2577 = vunpack.c.l.b16 %v2489
      %v2578 = vunpack.c.h.b16 %v2489
      %v2579 = vunpack.c.l.b16 %v2490
      %v2580 = vunpack.c.h.b16 %v2490
      %v2581 = vunpack.c.l.b16 %v2491
      %v2582 = vunpack.c.h.b16 %v2491
      %v2583 = vunpack.c.l.b16 %v2492
      %v2584 = vunpack.c.h.b16 %v2492
      %v2585 = vunpack.c.l.b16 %v2493
      %v2586 = vunpack.c.h.b16 %v2493
      %v2587 = vunpack.c.l.b16 %v2494
      %v2588 = vunpack.c.h.b16 %v2494
      %v2589 = vunpack.c.l.b16 %v2495
      %v2590 = vunpack.c.h.b16 %v2495
      %v2591 = vunpack.c.l.b16 %v2496
      %v2592 = vunpack.c.h.b16 %v2496
      %v2593 = vpack.c.b16 %v2533, %v2529
      %v2594 = vpack.c.b16 %v2534, %v2530
      %v2595 = vpack.c.b16 %v2535, %v2531
      %v2596 = vpack.c.b16 %v2536, %v2532
      %v2597 = vpack.c.b16 %v2541, %v2537
      %v2598 = vpack.c.b16 %v2542, %v2538
      %v2599 = vpack.c.b16 %v2543, %v2539
      %v2600 = vpack.c.b16 %v2544, %v2540
      %v2601 = vpack.c.b16 %v2549, %v2545
      %v2602 = vpack.c.b16 %v2550, %v2546
      %v2603 = vpack.c.b16 %v2551, %v2547
      %v2604 = vpack.c.b16 %v2552, %v2548
      %v2605 = vpack.c.b16 %v2557, %v2553
      %v2606 = vpack.c.b16 %v2558, %v2554
      %v2607 = vpack.c.b16 %v2559, %v2555
      %v2608 = vpack.c.b16 %v2560, %v2556
      %v2609 = vpack.c.b16 %v2565, %v2561
      %v2610 = vpack.c.b16 %v2566, %v2562
      %v2611 = vpack.c.b16 %v2567, %v2563
      %v2612 = vpack.c.b16 %v2568, %v2564
      %v2613 = vpack.c.b16 %v2573, %v2569
      %v2614 = vpack.c.b16 %v2574, %v2570
      %v2615 = vpack.c.b16 %v2575, %v2571
      %v2616 = vpack.c.b16 %v2576, %v2572
      %v2617 = vpack.c.b16 %v2581, %v2577
      %v2618 = vpack.c.b16 %v2582, %v2578
      %v2619 = vpack.c.b16 %v2583, %v2579
      %v2620 = vpack.c.b16 %v2584, %v2580
      %v2621 = vpack.c.b16 %v2589, %v2585
      %v2622 = vpack.c.b16 %v2590, %v2586
      %v2623 = vpack.c.b16 %v2591, %v2587
      %v2624 = vpack.c.b16 %v2592, %v2588
      %2657 = vmatprep.subr.bf16.mxu0 %v2594
      %2658 = vmatpush1.bf16.msra.mxu0 %v2593
      %2659 = vmatprep.subr.bf16.mxu0 %v2598
      %2660 = vmatpush1.bf16.msra.mxu0 %v2597
      %2661 = vmatprep.subr.bf16.mxu0 %v2602
      %2662 = vmatpush1.bf16.msra.mxu0 %v2601
      %2663 = vmatprep.subr.bf16.mxu0 %v2606
      %2664 = vmatpush1.bf16.msra.mxu0 %v2605
      %2665 = vmatprep.subr.bf16.mxu0 %v2610
      %2666 = vmatpush1.bf16.msra.mxu0 %v2609
      %2667 = vmatprep.subr.bf16.mxu0 %v2614
      %2668 = vmatpush1.bf16.msra.mxu0 %v2613
      %2669 = vmatprep.subr.bf16.mxu0 %v2618
      %2670 = vmatpush1.bf16.msra.mxu0 %v2617
      %2671 = vmatprep.subr.bf16.mxu0 %v2622
      %2672 = vmatpush1.bf16.msra.mxu0 %v2621
      %2673 = vmatprep.subr.bf16.mxu0 0
      %2674 = vmatpush1.bf16.msra.mxu0 0
      %2675 = vmatprep.subr.bf16.mxu0 0
      %2676 = vmatpush1.bf16.msra.mxu0 0
      %2677 = vmatprep.subr.bf16.mxu0 0
      %2678 = vmatpush1.bf16.msra.mxu0 0
      %2679 = vmatprep.subr.bf16.mxu0 0
      %2680 = vmatpush1.bf16.msra.mxu0 0
      %2681 = vmatprep.subr.bf16.mxu0 0
      %2682 = vmatpush1.bf16.msra.mxu0 0
      %2683 = vmatprep.subr.bf16.mxu0 0
      %2684 = vmatpush1.bf16.msra.mxu0 0
      %2685 = vmatprep.subr.bf16.mxu0 0
      %2686 = vmatpush1.bf16.msra.mxu0 0
      %2687 = vmatprep.subr.bf16.mxu0 0
      %2688 = vmatpush1.bf16.msra.mxu0 0
      %2689 = vmatprep.mubr.bf16.mxu0 0
      %2690 = vmatmul.mubr.bf16.gmra.mrb[0].mxu0 %v2464
      %v2691 = vpop.f32.mrb[0].mxu0
      %v2692 = vadd.f32 0.0, %v2691
      %v2693 = vpop.f32.mrb[0].mxu0
      %v2694 = vadd.f32 0.0, %v2693
      %v2695 = vpop.f32.mrb[0].mxu0
      %v2696 = vpop.f32.mrb[0].mxu0
      %2697 = vdwg.mxu0
      %2698 = vmatprep.subr.bf16.mxu0 %v2596
      %2699 = vmatpush1.bf16.msra.mxu0 %v2595
      %2700 = vmatprep.subr.bf16.mxu0 %v2600
      %2701 = vmatpush1.bf16.msra.mxu0 %v2599
      %2702 = vmatprep.subr.bf16.mxu0 %v2604
      %2703 = vmatpush1.bf16.msra.mxu0 %v2603
      %2704 = vmatprep.subr.bf16.mxu0 %v2608
      %2705 = vmatpush1.bf16.msra.mxu0 %v2607
      %2706 = vmatprep.subr.bf16.mxu0 %v2612
      %2707 = vmatpush1.bf16.msra.mxu0 %v2611
      %2708 = vmatprep.subr.bf16.mxu0 %v2616
      %2709 = vmatpush1.bf16.msra.mxu0 %v2615
      %2710 = vmatprep.subr.bf16.mxu0 %v2620
      %2711 = vmatpush1.bf16.msra.mxu0 %v2619
      %2712 = vmatprep.subr.bf16.mxu0 %v2624
      %2713 = vmatpush1.bf16.msra.mxu0 %v2623
      %2714 = vmatprep.subr.bf16.mxu0 0
      %2715 = vmatpush1.bf16.msra.mxu0 0
      %2716 = vmatprep.subr.bf16.mxu0 0
      %2717 = vmatpush1.bf16.msra.mxu0 0
      %2718 = vmatprep.subr.bf16.mxu0 0
      %2719 = vmatpush1.bf16.msra.mxu0 0
      %2720 = vmatprep.subr.bf16.mxu0 0
      %2721 = vmatpush1.bf16.msra.mxu0 0
      %2722 = vmatprep.subr.bf16.mxu0 0
      %2723 = vmatpush1.bf16.msra.mxu0 0
      %2724 = vmatprep.subr.bf16.mxu0 0
      %2725 = vmatpush1.bf16.msra.mxu0 0
      %2726 = vmatprep.subr.bf16.mxu0 0
      %2727 = vmatpush1.bf16.msra.mxu0 0
      %2728 = vmatprep.subr.bf16.mxu0 0
      %2729 = vmatpush1.bf16.msra.mxu0 0
      %2730 = vmatprep.mubr.bf16.mxu0 0
      %2731 = vmatmul.mubr.bf16.gmra.mrb[0].mxu0 %v2464
      %v2732 = vpop.f32.mrb[0].mxu0
      %v2733 = vadd.f32 0.0, %v2732
      %v2734 = vpop.f32.mrb[0].mxu0
      %v2735 = vadd.f32 0.0, %v2734
      %v2736 = vpop.f32.mrb[0].mxu0
      %v2737 = vpop.f32.mrb[0].mxu0
      %2738 = vdwg.mxu0
      %v2739 = vadd.f32 %v2460, %v2692
      %v2740 = vadd.f32 %v2461, %v2694
      %v2741 = vadd.f32 %v2462, %v2733
      %v2742 = vadd.f32 %v2463, %v2735
      %v2743 = vxor.u32 %v2739, 2147483648
      %v2744 = vmul.f32 %v2743, 1.442695
      %v2745 = vpow.pop %v2744
      %v2746 = vadd.f32 %v2745, 1.0
      %v2747 = vrcp.pop %v2746
      %v2748 = vmul.f32 1.0, %v2747
      %v2749 = vxor.u32 %v2740, 2147483648
      %v2750 = vmul.f32 %v2749, 1.442695
      %v2751 = vpow.pop %v2750
      %v2752 = vadd.f32 %v2751, 1.0
      %v2753 = vrcp.pop %v2752
      %v2754 = vmul.f32 1.0, %v2753
      %v2755 = vtanh.pop %v2741
      %v2756 = vxor.u32 %v2742, 2147483648
      %v2757 = vmul.f32 %v2756, 1.442695
      %v2758 = vpow.pop %v2757
      %v2759 = vadd.f32 %v2758, 1.0
      %v2760 = vrcp.pop %v2759
      %v2761 = vmul.f32 1.0, %v2760
      %v2762 = vmul.f32 %v2754, %v2448
      %v2763 = vmul.f32 %v2748, %v2755
      %v2764 = vadd.f32 %v2762, %v2763
      %v2765 = vtanh.pop %v2764
      %v2766 = vmul.f32 %v2761, %v2765
      %s2767 = scalar_lea.vmem %s234, %s2454
      %2768 = vst [vmem:[%s2767] sm:$0xff] %v2766
      %s2769 = scalar_select %p557, 7, 0
      %s2770 = smul.u32 %s2769, 8
      %s2771 = sshra.s32 %s2770, 3
      %s2772 = sand.u32 %s2770, 7
      %s2773 = smul.u32 %s2771, 4
      %s2774 = smul.addr %s2773, 8
      %s2775 = scalar_lea.vmem [#allocation2], %s2774
      %v2776 = vld [vmem:[%s2775] sm:$0xff]
      %v2777 = vld [vmem:[%s2775 + $0x8] sm:$0xff]
      %v2778 = vld [vmem:[%s2775 + $0x10] sm:$0xff]
      %v2779 = vld [vmem:[%s2775 + $0x18] sm:$0xff]
      %v2780 = vpack.c.bf16 %v2766, %v2766
      %v2781 = vld [vmem:[%s225] sm:$0xff]
      %v2782 = vld [vmem:[%s225 + $0x8] sm:$0xff]
      %v2783 = vld [vmem:[%s225 + $0x10] sm:$0xff]
      %v2784 = vld [vmem:[%s225 + $0x18] sm:$0xff]
      %v2785 = vld [vmem:[%s225 + $0x20] sm:$0xff]
      %v2786 = vld [vmem:[%s225 + $0x28] sm:$0xff]
      %v2787 = vld [vmem:[%s225 + $0x30] sm:$0xff]
      %v2788 = vld [vmem:[%s225 + $0x38] sm:$0xff]
      %v2789 = vld [vmem:[%s225 + $0x40] sm:$0xff]
      %v2790 = vld [vmem:[%s225 + $0x48] sm:$0xff]
      %v2791 = vld [vmem:[%s225 + $0x50] sm:$0xff]
      %v2792 = vld [vmem:[%s225 + $0x58] sm:$0xff]
      %v2793 = vld [vmem:[%s225 + $0x60] sm:$0xff]
      %v2794 = vld [vmem:[%s225 + $0x68] sm:$0xff]
      %v2795 = vld [vmem:[%s225 + $0x70] sm:$0xff]
      %v2796 = vld [vmem:[%s225 + $0x78] sm:$0xff]
      %v2797 = vld [vmem:[%s225 + $0x80] sm:$0xff]
      %v2798 = vld [vmem:[%s225 + $0x88] sm:$0xff]
      %v2799 = vld [vmem:[%s225 + $0x90] sm:$0xff]
      %v2800 = vld [vmem:[%s225 + $0x98] sm:$0xff]
      %v2801 = vld [vmem:[%s225 + $0xa0] sm:$0xff]
      %v2802 = vld [vmem:[%s225 + $0xa8] sm:$0xff]
      %v2803 = vld [vmem:[%s225 + $0xb0] sm:$0xff]
      %v2804 = vld [vmem:[%s225 + $0xb8] sm:$0xff]
      %v2805 = vld [vmem:[%s225 + $0xc0] sm:$0xff]
      %v2806 = vld [vmem:[%s225 + $0xc8] sm:$0xff]
      %v2807 = vld [vmem:[%s225 + $0xd0] sm:$0xff]
      %v2808 = vld [vmem:[%s225 + $0xd8] sm:$0xff]
      %v2809 = vld [vmem:[%s225 + $0xe0] sm:$0xff]
      %v2810 = vld [vmem:[%s225 + $0xe8] sm:$0xff]
      %v2811 = vld [vmem:[%s225 + $0xf0] sm:$0xff]
      %v2812 = vld [vmem:[%s225 + $0xf8] sm:$0xff]
      %v2845 = vunpack.c.l.b16 %v2781
      %v2846 = vunpack.c.h.b16 %v2781
      %v2847 = vunpack.c.l.b16 %v2782
      %v2848 = vunpack.c.h.b16 %v2782
      %v2849 = vunpack.c.l.b16 %v2783
      %v2850 = vunpack.c.h.b16 %v2783
      %v2851 = vunpack.c.l.b16 %v2784
      %v2852 = vunpack.c.h.b16 %v2784
      %v2853 = vunpack.c.l.b16 %v2785
      %v2854 = vunpack.c.h.b16 %v2785
      %v2855 = vunpack.c.l.b16 %v2786
      %v2856 = vunpack.c.h.b16 %v2786
      %v2857 = vunpack.c.l.b16 %v2787
      %v2858 = vunpack.c.h.b16 %v2787
      %v2859 = vunpack.c.l.b16 %v2788
      %v2860 = vunpack.c.h.b16 %v2788
      %v2861 = vunpack.c.l.b16 %v2789
      %v2862 = vunpack.c.h.b16 %v2789
      %v2863 = vunpack.c.l.b16 %v2790
      %v2864 = vunpack.c.h.b16 %v2790
      %v2865 = vunpack.c.l.b16 %v2791
      %v2866 = vunpack.c.h.b16 %v2791
      %v2867 = vunpack.c.l.b16 %v2792
      %v2868 = vunpack.c.h.b16 %v2792
      %v2869 = vunpack.c.l.b16 %v2793
      %v2870 = vunpack.c.h.b16 %v2793
      %v2871 = vunpack.c.l.b16 %v2794
      %v2872 = vunpack.c.h.b16 %v2794
      %v2873 = vunpack.c.l.b16 %v2795
      %v2874 = vunpack.c.h.b16 %v2795
      %v2875 = vunpack.c.l.b16 %v2796
      %v2876 = vunpack.c.h.b16 %v2796
      %v2877 = vunpack.c.l.b16 %v2797
      %v2878 = vunpack.c.h.b16 %v2797
      %v2879 = vunpack.c.l.b16 %v2798
      %v2880 = vunpack.c.h.b16 %v2798
      %v2881 = vunpack.c.l.b16 %v2799
      %v2882 = vunpack.c.h.b16 %v2799
      %v2883 = vunpack.c.l.b16 %v2800
      %v2884 = vunpack.c.h.b16 %v2800
      %v2885 = vunpack.c.l.b16 %v2801
      %v2886 = vunpack.c.h.b16 %v2801
      %v2887 = vunpack.c.l.b16 %v2802
      %v2888 = vunpack.c.h.b16 %v2802
      %v2889 = vunpack.c.l.b16 %v2803
      %v2890 = vunpack.c.h.b16 %v2803
      %v2891 = vunpack.c.l.b16 %v2804
      %v2892 = vunpack.c.h.b16 %v2804
      %v2893 = vunpack.c.l.b16 %v2805
      %v2894 = vunpack.c.h.b16 %v2805
      %v2895 = vunpack.c.l.b16 %v2806
      %v2896 = vunpack.c.h.b16 %v2806
      %v2897 = vunpack.c.l.b16 %v2807
      %v2898 = vunpack.c.h.b16 %v2807
      %v2899 = vunpack.c.l.b16 %v2808
      %v2900 = vunpack.c.h.b16 %v2808
      %v2901 = vunpack.c.l.b16 %v2809
      %v2902 = vunpack.c.h.b16 %v2809
      %v2903 = vunpack.c.l.b16 %v2810
      %v2904 = vunpack.c.h.b16 %v2810
      %v2905 = vunpack.c.l.b16 %v2811
      %v2906 = vunpack.c.h.b16 %v2811
      %v2907 = vunpack.c.l.b16 %v2812
      %v2908 = vunpack.c.h.b16 %v2812
      %v2909 = vpack.c.b16 %v2849, %v2845
      %v2910 = vpack.c.b16 %v2850, %v2846
      %v2911 = vpack.c.b16 %v2851, %v2847
      %v2912 = vpack.c.b16 %v2852, %v2848
      %v2913 = vpack.c.b16 %v2857, %v2853
      %v2914 = vpack.c.b16 %v2858, %v2854
      %v2915 = vpack.c.b16 %v2859, %v2855
      %v2916 = vpack.c.b16 %v2860, %v2856
      %v2917 = vpack.c.b16 %v2865, %v2861
      %v2918 = vpack.c.b16 %v2866, %v2862
      %v2919 = vpack.c.b16 %v2867, %v2863
      %v2920 = vpack.c.b16 %v2868, %v2864
      %v2921 = vpack.c.b16 %v2873, %v2869
      %v2922 = vpack.c.b16 %v2874, %v2870
      %v2923 = vpack.c.b16 %v2875, %v2871
      %v2924 = vpack.c.b16 %v2876, %v2872
      %v2925 = vpack.c.b16 %v2881, %v2877
      %v2926 = vpack.c.b16 %v2882, %v2878
      %v2927 = vpack.c.b16 %v2883, %v2879
      %v2928 = vpack.c.b16 %v2884, %v2880
      %v2929 = vpack.c.b16 %v2889, %v2885
      %v2930 = vpack.c.b16 %v2890, %v2886
      %v2931 = vpack.c.b16 %v2891, %v2887
      %v2932 = vpack.c.b16 %v2892, %v2888
      %v2933 = vpack.c.b16 %v2897, %v2893
      %v2934 = vpack.c.b16 %v2898, %v2894
      %v2935 = vpack.c.b16 %v2899, %v2895
      %v2936 = vpack.c.b16 %v2900, %v2896
      %v2937 = vpack.c.b16 %v2905, %v2901
      %v2938 = vpack.c.b16 %v2906, %v2902
      %v2939 = vpack.c.b16 %v2907, %v2903
      %v2940 = vpack.c.b16 %v2908, %v2904
      %2973 = vmatprep.subr.bf16.mxu0 %v2910
      %2974 = vmatpush1.bf16.msra.mxu0 %v2909
      %2975 = vmatprep.subr.bf16.mxu0 %v2914
      %2976 = vmatpush1.bf16.msra.mxu0 %v2913
      %2977 = vmatprep.subr.bf16.mxu0 %v2918
      %2978 = vmatpush1.bf16.msra.mxu0 %v2917
      %2979 = vmatprep.subr.bf16.mxu0 %v2922
      %2980 = vmatpush1.bf16.msra.mxu0 %v2921
      %2981 = vmatprep.subr.bf16.mxu0 %v2926
      %2982 = vmatpush1.bf16.msra.mxu0 %v2925
      %2983 = vmatprep.subr.bf16.mxu0 %v2930
      %2984 = vmatpush1.bf16.msra.mxu0 %v2929
      %2985 = vmatprep.subr.bf16.mxu0 %v2934
      %2986 = vmatpush1.bf16.msra.mxu0 %v2933
      %2987 = vmatprep.subr.bf16.mxu0 %v2938
      %2988 = vmatpush1.bf16.msra.mxu0 %v2937
      %2989 = vmatprep.subr.bf16.mxu0 0
      %2990 = vmatpush1.bf16.msra.mxu0 0
      %2991 = vmatprep.subr.bf16.mxu0 0
      %2992 = vmatpush1.bf16.msra.mxu0 0
      %2993 = vmatprep.subr.bf16.mxu0 0
      %2994 = vmatpush1.bf16.msra.mxu0 0
      %2995 = vmatprep.subr.bf16.mxu0 0
      %2996 = vmatpush1.bf16.msra.mxu0 0
      %2997 = vmatprep.subr.bf16.mxu0 0
      %2998 = vmatpush1.bf16.msra.mxu0 0
      %2999 = vmatprep.subr.bf16.mxu0 0
      %3000 = vmatpush1.bf16.msra.mxu0 0
      %3001 = vmatprep.subr.bf16.mxu0 0
      %3002 = vmatpush1.bf16.msra.mxu0 0
      %3003 = vmatprep.subr.bf16.mxu0 0
      %3004 = vmatpush1.bf16.msra.mxu0 0
      %3005 = vmatprep.mubr.bf16.mxu0 0
      %3006 = vmatmul.mubr.bf16.gmra.mrb[0].mxu0 %v2780
      %v3007 = vpop.f32.mrb[0].mxu0
      %v3008 = vadd.f32 0.0, %v3007
      %v3009 = vpop.f32.mrb[0].mxu0
      %v3010 = vadd.f32 0.0, %v3009
      %v3011 = vpop.f32.mrb[0].mxu0
      %v3012 = vpop.f32.mrb[0].mxu0
      %3013 = vdwg.mxu0
      %3014 = vmatprep.subr.bf16.mxu0 %v2912
      %3015 = vmatpush1.bf16.msra.mxu0 %v2911
      %3016 = vmatprep.subr.bf16.mxu0 %v2916
      %3017 = vmatpush1.bf16.msra.mxu0 %v2915
      %3018 = vmatprep.subr.bf16.mxu0 %v2920
      %3019 = vmatpush1.bf16.msra.mxu0 %v2919
      %3020 = vmatprep.subr.bf16.mxu0 %v2924
      %3021 = vmatpush1.bf16.msra.mxu0 %v2923
      %3022 = vmatprep.subr.bf16.mxu0 %v2928
      %3023 = vmatpush1.bf16.msra.mxu0 %v2927
      %3024 = vmatprep.subr.bf16.mxu0 %v2932
      %3025 = vmatpush1.bf16.msra.mxu0 %v2931
      %3026 = vmatprep.subr.bf16.mxu0 %v2936
      %3027 = vmatpush1.bf16.msra.mxu0 %v2935
      %3028 = vmatprep.subr.bf16.mxu0 %v2940
      %3029 = vmatpush1.bf16.msra.mxu0 %v2939
      %3030 = vmatprep.subr.bf16.mxu0 0
      %3031 = vmatpush1.bf16.msra.mxu0 0
      %3032 = vmatprep.subr.bf16.mxu0 0
      %3033 = vmatpush1.bf16.msra.mxu0 0
      %3034 = vmatprep.subr.bf16.mxu0 0
      %3035 = vmatpush1.bf16.msra.mxu0 0
      %3036 = vmatprep.subr.bf16.mxu0 0
      %3037 = vmatpush1.bf16.msra.mxu0 0
      %3038 = vmatprep.subr.bf16.mxu0 0
      %3039 = vmatpush1.bf16.msra.mxu0 0
      %3040 = vmatprep.subr.bf16.mxu0 0
      %3041 = vmatpush1.bf16.msra.mxu0 0
      %3042 = vmatprep.subr.bf16.mxu0 0
      %3043 = vmatpush1.bf16.msra.mxu0 0
      %3044 = vmatprep.subr.bf16.mxu0 0
      %3045 = vmatpush1.bf16.msra.mxu0 0
      %3046 = vmatprep.mubr.bf16.mxu0 0
      %3047 = vmatmul.mubr.bf16.gmra.mrb[0].mxu0 %v2780
      %v3048 = vpop.f32.mrb[0].mxu0
      %v3049 = vadd.f32 0.0, %v3048
      %v3050 = vpop.f32.mrb[0].mxu0
      %v3051 = vadd.f32 0.0, %v3050
      %v3052 = vpop.f32.mrb[0].mxu0
      %v3053 = vpop.f32.mrb[0].mxu0
      %3054 = vdwg.mxu0
      %v3055 = vadd.f32 %v2776, %v3008
      %v3056 = vadd.f32 %v2777, %v3010
      %v3057 = vadd.f32 %v2778, %v3049
      %v3058 = vadd.f32 %v2779, %v3051
      %v3059 = vxor.u32 %v3055, 2147483648
      %v3060 = vmul.f32 %v3059, 1.442695
      %v3061 = vpow.pop %v3060
      %v3062 = vadd.f32 %v3061, 1.0
      %v3063 = vrcp.pop %v3062
      %v3064 = vmul.f32 1.0, %v3063
      %v3065 = vxor.u32 %v3056, 2147483648
      %v3066 = vmul.f32 %v3065, 1.442695
      %v3067 = vpow.pop %v3066
      %v3068 = vadd.f32 %v3067, 1.0
      %v3069 = vrcp.pop %v3068
      %v3070 = vmul.f32 1.0, %v3069
      %v3071 = vtanh.pop %v3057
      %v3072 = vxor.u32 %v3058, 2147483648
      %v3073 = vmul.f32 %v3072, 1.442695
      %v3074 = vpow.pop %v3073
      %v3075 = vadd.f32 %v3074, 1.0
      %v3076 = vrcp.pop %v3075
      %v3077 = vmul.f32 1.0, %v3076
      %v3078 = vmul.f32 %v3070, %v2764
      %v3079 = vmul.f32 %v3064, %v3071
      %v3080 = vadd.f32 %v3078, %v3079
      %v3081 = vtanh.pop %v3080
      %v3082 = vmul.f32 %v3077, %v3081
      %s3083 = scalar_lea.vmem %s234, %s2770
      %3084 = vst [vmem:[%s3083] sm:$0xff] %v3082
      %p3085 = scmp.lt.s32.totalorder %s15, 1
      %s3086 = scalar_select %p3085, %s15, 1
      %s3087 = smul.addr %s3086, 8
      %s3088 = smul.addr %s3087, 8
      %s3089 = scalar_lea.vmem %s4, %s3088
      // Predicated region
      $region37: #{optimized_lstm_forward.4} parent=35 // pred_check
        %p3090 = pneg %p132
      $region38: #{optimized_lstm_forward.4} parent=35 // pred_check_branch
        %3092 = sbr.rel (%p3090) target = $region40
      $region39: #{optimized_lstm_forward.4} parent=35 // pred_region
        _
      $region40: #{optimized_lstm_forward.4} parent=35 // pred_fallthru
        _
    $region36: #{optimized_lstm_forward.4} parent=5 // pred_fallthru
      _
    %p3093 = scmp.le.s32.totalorder 2, %s10
    // Predicated region
    $region41: #{optimized_lstm_forward.4} parent=5 // pred_check
      %p3094 = pneg %p3093
    $region42: #{optimized_lstm_forward.4} parent=5 // pred_check_branch
      %3096 = sbr.rel (%p3094) target = $region44
    $region43: #{optimized_lstm_forward.4} parent=5 // pred_region
      %s3097 = ssub.s32 %s10, 2
      // Predicated region
      $region45: #{optimized_lstm_forward.4} parent=43 // pred_check
        %p3098 = pneg %p138
      $region46: #{optimized_lstm_forward.4} parent=43 // pred_check_branch
        %3100 = sbr.rel (%p3098) target = $region48
      $region47: #{optimized_lstm_forward.4} parent=43 // pred_region
        %p3101 = scmp.lt.s32.totalorder %s16, 1
        %s3102 = scalar_select %p3101, %s16, 1
        %s3103 = smul.addr %s3102, 8
        %s3104 = smul.addr %s3103, 8
        %s3105 = scalar_lea.vmem %s4, %s3104
      $region48: #{optimized_lstm_forward.4} parent=43 // pred_fallthru
        _
    $region44: #{optimized_lstm_forward.4} parent=5 // pred_fallthru
      _
  $region6: #{optimized_lstm_forward.4} parent=0 // loop_footer
    %s14 = sadd.s32 1, %s10
  $region7: #{optimized_lstm_forward.4} parent=0 // loop_footer_branch
    %9 = sbr.rel target = $region3
  $region8: #{optimized_lstm_forward.4} parent=0 // loop_exit
    _

</llo_original>
